<compile_context>
chip_gen: v7x
topology: tpu7x:2x2x1
jax: 0.10.0
libtpu: 0.0.40
codegen_flags: <defaults>
</compile_context>

<pallas_src>
import math
from functools import partial

import numpy as np
import jax
import jax.numpy as jnp
from jax.experimental import pallas as pl
from jax.experimental.pallas import tpu as pltpu

NEG_SLOPE = 0.01  # torch.nn.functional.leaky_relu default negative_slope


def _leaky_relu(x):
    return jnp.where(x >= 0.0, x, NEG_SLOPE * x)


# ---------------------------------------------------------------------------
# Parameter construction (deterministic, mimics torch Conv2d default init).
# Conv weights are stored HWIO = (3, 3, Cin, Cout).
# ---------------------------------------------------------------------------
def _init_conv(key, cin, cout, k=3):
    kw_, kb_ = jax.random.split(key)
    fan_in = cin * k * k
    bound = 1.0 / math.sqrt(fan_in)
    w = jax.random.uniform(kw_, (k, k, cin, cout), jnp.float32, -bound, bound)
    b = jax.random.uniform(kb_, (cout,), jnp.float32, -bound, bound)
    return w, b


def init_encoder_params(key, nin, channels_list, depth):
    params = {"convs": [None] * depth, "convs2": [None] * depth}
    key, k0 = jax.random.split(key)
    params["input_conv"] = _init_conv(k0, nin, channels_list[depth - 1])
    prev = channels_list[depth - 1]
    for d in range(depth - 1, 0, -1):
        key, k1, k2 = jax.random.split(key, 3)
        params["convs"][d] = _init_conv(k1, prev, prev)                     # stride 1, 'same'
        params["convs2"][d] = _init_conv(k2, prev, channels_list[d - 1])    # stride 2, valid
        prev = channels_list[d - 1]
    params["nout"] = prev
    return params


# ---------------------------------------------------------------------------
# Fused encoder forward (ArchType.BASE).  Takes / returns NCHW like PyTorch.
# ---------------------------------------------------------------------------
@partial(jax.jit, static_argnums=(2,))
def encoder_forward(x_nchw, params, depth):
    N, nin, H, W = x_nchw.shape
    p = W + 2                             # constant flat-row pitch for ALL levels
    w_in, b_in = params["input_conv"]
    c0 = w_in.shape[-1]

    # ---- static geometry -----------------------------------------------------
    Q0 = (H - 1) * p + W                  # rows of the input-conv output slab
    levels = []
    h, w, cprev = H, W, c0
    for d in range(depth - 1, 0, -1):
        assert h >= 3 and w >= 3, "spatial dims too small for a stride-2 3x3 conv"
        c2 = params["convs2"][d][0].shape[-1]
        Q = (h - 1) * p + w
        ho, wo = (h - 3) // 2 + 1, (w - 3) // 2 + 1
        Q2 = (ho - 1) * p + wo
        # Strided (stride-2) tap reads must stay inside the same-conv output
        # slab (review correctness concern: no runtime VMEM bounds checks).
        assert (2 * p + 2) + 2 * (Q2 - 1) < Q
        levels.append(dict(d=d, H=h, W=w, C=cprev, C2=c2, Q=Q, Q2=Q2))
        h, w, cprev = ho, wo, c2
    Hf, Wf, Cf = h, w, cprev
    Qf = (h - 1) * p + w
    n_lv = len(levels)

    Qmax = max([Q0] + [lv["Q"] for lv in levels])
    Cmax = max([nin, c0, Cf] + [lv["C"] for lv in levels])
    Kmax = 9 * Cmax
    Pmax = Qmax + 2 * p + 2               # == (H + 2) * (W + 2)

    # ---- boundary layout plumbing: pad + flatten the raw input ONCE ----------
    x_nhwc = jnp.transpose(x_nchw, (0, 2, 3, 1))
    xpad = jnp.pad(x_nhwc, ((0, 0), (1, 1), (1, 1), (0, 0)))
    P0 = (H + 2) * (W + 2)
    xpad_flat = xpad.reshape(N, P0, nin)

    def w_mat(wk):                        # (3,3,Cin,Cout) -> im2col (9*Cin, Cout)
        return wk.reshape(-1, wk.shape[-1])

    def row_bias(b):
        return b.reshape(1, -1)

    def valid_mask(Q, Wv):                # 1.0 on valid flat rows, 0.0 on junk
        q = np.arange(Q)
        return jnp.asarray(((q % p) < Wv).astype(np.float32).reshape(Q, 1))

    def full_spec(shape):
        nd = len(shape)
        return pl.BlockSpec(shape, lambda n, _nd=nd: (0,) * _nd)

    def batch_spec(tail):
        k = len(tail)
        return pl.BlockSpec((None,) + tuple(tail),
                            lambda n, _k=k: (n,) + (0,) * _k)

    in_args = [xpad_flat, w_mat(w_in), row_bias(b_in)]
    in_specs = [batch_spec((P0, nin)),
                full_spec((9 * nin, c0)), full_spec((1, c0))]
    for lv in levels:
        C, C2, Q = lv["C"], lv["C2"], lv["Q"]
        wc, bc = params["convs"][lv["d"]]
        ws, bs = params["convs2"][lv["d"]]
        in_args += [valid_mask(Q, lv["W"]), w_mat(wc), row_bias(bc),
                    w_mat(ws), row_bias(bs)]
        in_specs += [full_spec((Q, 1)),
                     full_spec((9 * C, C)), full_spec((1, C)),
                     full_spec((9 * C, C2)), full_spec((1, C2))]

    out_shape = [jax.ShapeDtypeStruct((N, Qf, Cf), jnp.float32)]
    out_specs = [batch_spec((Qf, Cf))]
    for lv in levels:
        out_shape.append(jax.ShapeDtypeStruct((N, lv["Q"], lv["C"]), jnp.float32))
        out_specs.append(batch_spec((lv["Q"], lv["C"])))

    scratch_shapes = [
        pltpu.VMEM((Pmax, Cmax), jnp.float32),   # zero-padded 'same'-conv input
        pltpu.VMEM((Qmax, Kmax), jnp.float32),   # shared im2col patch slab
        pltpu.VMEM((Qmax, Cmax), jnp.float32),   # same-conv output (strided taps)
    ]

    geom = tuple((lv["H"], lv["W"], lv["C"], lv["C2"], lv["Q"], lv["Q2"])
                 for lv in levels)
    taps = tuple(kh * p + kw for kh in range(3) for kw in range(3))

    def kernel(*refs):
        it = iter(refs)
        xpad_ref = next(it)
        w_in_ref, b_in_ref = next(it), next(it)
        lvl_refs = [tuple(next(it) for _ in range(5)) for _ in range(n_lv)]
        out_ref = next(it)
        skip_refs = [next(it) for _ in range(n_lv)]
        pad_scr, slab_scr, y_scr = next(it), next(it), next(it)

        def matmul_head(Qn, K, w_ref, b_ref):
            # ONE MXU matmul per conv (K = 9*Cin), f32 accumulation.
            z = jnp.dot(slab_scr[:Qn, :K], w_ref[...],
                        preferred_element_type=jnp.float32)
            return _leaky_relu(z + b_ref[...])

        # ---- input_conv: im2col taps straight off the padded input block ----
        for t, off in enumerate(taps):
            slab_scr[:Q0, t * nin:(t + 1) * nin] = xpad_ref[off:off + Q0, :]
        cur = matmul_head(Q0, 9 * nin, w_in_ref, b_in_ref)

        for li in range(n_lv):
            Hl, Wl, Cl, C2l, Ql, Q2l = geom[li]
            mask_ref, wc_ref, bc_ref, ws_ref, bs_ref = lvl_refs[li]

            # Zero the junk flat rows (x >= W_l); they double as the
            # left/right zero-padding columns of the 'same' conv below.
            cur = cur * mask_ref[...]

            # skips[d]: ONE bulk store of the whole slab (no per-row scatter).
            # TODO(synk): store transposed (C, H*W) for lane-dense HBM writes.
            skip_refs[li][...] = cur

            # Stage the zero-padded 'same'-conv input: only the 2*(p+1)
            # border rows are zero-filled; the interior is one bulk store.
            pad_scr[:p + 1, :Cl] = jnp.zeros((p + 1, Cl), jnp.float32)
            pad_scr[p + 1:p + 1 + Ql, :Cl] = cur
            pad_scr[p + 1 + Ql:Ql + 2 * p + 2, :Cl] = jnp.zeros((p + 1, Cl),
                                                                jnp.float32)

            # convs[d]  (3x3 / stride 1 / 'same'): im2col + ONE MXU matmul.
            for t, off in enumerate(taps):
                slab_scr[:Ql, t * Cl:(t + 1) * Cl] = pad_scr[off:off + Ql, :Cl]
            y_scr[:Ql, :Cl] = matmul_head(Ql, 9 * Cl, wc_ref, bc_ref)

            # convs2[d] (3x3 / stride 2 / valid): strided im2col + ONE matmul.
            # TODO(synk): even/odd row-parity compaction if the strided reads
            #             show up on the vld/XLU slots in a bundle dump.
            for t, off in enumerate(taps):
                slab_scr[:Q2l, t * Cl:(t + 1) * Cl] = \
                    y_scr[pl.ds(off, Q2l, stride=2), :Cl]
            cur = matmul_head(Q2l, 9 * Cl, ws_ref, bs_ref)

        out_ref[...] = cur

    # ---- advisory cost estimate (actual MXU work incl. junk rows) ------------
    flops = 2 * Q0 * (9 * nin) * c0 * N
    for lv in levels:
        flops += 2 * lv["Q"] * 9 * lv["C"] * lv["C"] * N
        flops += 2 * lv["Q2"] * 9 * lv["C"] * lv["C2"] * N
    bytes_accessed = 4 * (sum(int(np.prod(a.shape)) for a in in_args)
                          + sum(int(np.prod(s.shape)) for s in out_shape))

    # ---- derived VMEM budget (double-buffered blocks + scratch + headroom) ---
    in_blk = P0 * nin + sum(int(np.prod(a.shape)) for a in in_args[1:])
    out_blk = sum(int(np.prod(s.shape)) // N for s in out_shape)
    scr = Pmax * Cmax + Qmax * Kmax + Qmax * Cmax
    tmp = 4 * Qmax * Kmax                       # headroom for live temporaries
    vmem_limit = 4 * (2 * (in_blk + out_blk) + scr + tmp)
    vmem_limit = int(min(max(vmem_limit, 16 * 1024 * 1024), 64 * 1024 * 1024))

    outs = pl.pallas_call(
        kernel,
        out_shape=tuple(out_shape),
        grid=(N,),
        in_specs=in_specs,
        out_specs=tuple(out_specs),
        scratch_shapes=scratch_shapes,
        compiler_params=pltpu.CompilerParams(
            dimension_semantics=("parallel",),  # megacore batch sharding (v7x)
            vmem_limit_bytes=vmem_limit),
        cost_estimate=pl.CostEstimate(flops=flops, transcendentals=0,
                                      bytes_accessed=bytes_accessed),
    )(*in_args)

    # ---- back to PyTorch's NCHW at the boundary (pad/reshape/slice in XLA) ---
    def to_nchw(flat, Hs, Ws):
        Nb, Qs, Cs = flat.shape
        full = jnp.pad(flat, ((0, 0), (0, Hs * p - Qs), (0, 0)))
        img = full.reshape(Nb, Hs, p, Cs)[:, :, :Ws, :]
        return jnp.transpose(img, (0, 3, 1, 2))

    out = to_nchw(outs[0], Hf, Wf)
    skips = [None] * depth
    for li, lv in enumerate(levels):
        skips[lv["d"]] = to_nchw(outs[1 + li], lv["H"], lv["W"])
    return out, skips


# ---------------------------------------------------------------------------
# Pure-JAX reference (XLA convs) for correctness checking.
# ---------------------------------------------------------------------------
def _conv_ref(x, w, b, stride, pad):
    y = jax.lax.conv_general_dilated(
        x, w, window_strides=(stride, stride),
        padding=[(pad, pad), (pad, pad)],
        dimension_numbers=("NHWC", "HWIO", "NHWC"),
        precision=jax.lax.Precision.HIGHEST)
    y = y + b.reshape(1, 1, 1, -1)
    return jnp.where(y >= 0, y, NEG_SLOPE * y)


def encoder_forward_ref(x_nchw, params, depth):
    x = jnp.transpose(x_nchw, (0, 2, 3, 1))
    w, b = params["input_conv"]
    x = _conv_ref(x, w, b, 1, 1)
    skips = [None] * depth
    for d in range(depth - 1, 0, -1):
        skips[d] = jnp.transpose(x, (0, 3, 1, 2))
        w, b = params["convs"][d]
        x = _conv_ref(x, w, b, 1, 1)
        w, b = params["convs2"][d]
        x = _conv_ref(x, w, b, 2, 0)
    return jnp.transpose(x, (0, 3, 1, 2)), skips


if __name__ == "__main__":
    depth = 3
    nin = 4
    channels_list = [16, 8, 4]   # channels_list[depth-1] is used after input_conv
    batch, H, W = 2, 16, 16

    key = jax.random.PRNGKey(0)
    kx, kp = jax.random.split(key)
    x = jax.random.normal(kx, (batch, nin, H, W), jnp.float32)   # NCHW like PyTorch
    params = init_encoder_params(kp, nin, channels_list, depth)

    out, skips = encoder_forward(x, params, depth)
    out = jax.block_until_ready(out)
    skips = [s if s is None else jax.block_until_ready(s) for s in skips]

    # Verify against the plain-JAX reference.  Tolerance covers MXU
    # default-precision (bf16-multiply, f32-accumulate) vs the HIGHEST-precision
    # XLA reference convolution.
    out_ref, skips_ref = encoder_forward_ref(x, params, depth)
    np.testing.assert_allclose(np.asarray(out), np.asarray(out_ref),
                               rtol=2e-2, atol=2e-2)
    for s, sr in zip(skips, skips_ref):
        if s is not None:
            np.testing.assert_allclose(np.asarray(s), np.asarray(sr),
                                       rtol=2e-2, atol=2e-2)

    print("KERNEL_OK")
</pallas_src>

<mosaic_0001>
module attributes {stable_mosaic.version = 11 : i64} {
  func.func @kernel(%arg0: i32, %arg1: memref<1x324x4xf32, #tpu.memory_space<vmem>>, %arg2: memref<36x4xf32, #tpu.memory_space<vmem>>, %arg3: memref<1x4xf32, #tpu.memory_space<vmem>>, %arg4: memref<286x1xf32, #tpu.memory_space<vmem>>, %arg5: memref<36x4xf32, #tpu.memory_space<vmem>>, %arg6: memref<1x4xf32, #tpu.memory_space<vmem>>, %arg7: memref<36x8xf32, #tpu.memory_space<vmem>>, %arg8: memref<1x8xf32, #tpu.memory_space<vmem>>, %arg9: memref<115x1xf32, #tpu.memory_space<vmem>>, %arg10: memref<72x8xf32, #tpu.memory_space<vmem>>, %arg11: memref<1x8xf32, #tpu.memory_space<vmem>>, %arg12: memref<72x16xf32, #tpu.memory_space<vmem>>, %arg13: memref<1x16xf32, #tpu.memory_space<vmem>>, %arg14: memref<1x39x16xf32, #tpu.memory_space<vmem>>, %arg15: memref<1x286x4xf32, #tpu.memory_space<vmem>>, %arg16: memref<1x115x8xf32, #tpu.memory_space<vmem>>, %arg17: memref<324x16xf32, #tpu.memory_space<vmem>>, %arg18: memref<286x144xf32, #tpu.memory_space<vmem>>, %arg19: memref<286x16xf32, #tpu.memory_space<vmem>>) attributes {dimension_semantics = [#tpu.dimension_semantics<parallel>], iteration_bounds = array<i64: 2>, scalar_prefetch = 0 : i64, scratch_operands = 3 : i64, tpu.core_type = #tpu.core_type<tc>, window_params = [{transform_indices = @transform_0, window_bounds = array<i64: 1, 324, 4>}, {pipeline_mode = #tpu.pipeline_mode<synchronous>, transform_indices = @transform_1, window_bounds = array<i64: 36, 4>}, {pipeline_mode = #tpu.pipeline_mode<synchronous>, transform_indices = @transform_2, window_bounds = array<i64: 1, 4>}, {pipeline_mode = #tpu.pipeline_mode<synchronous>, transform_indices = @transform_3, window_bounds = array<i64: 286, 1>}, {pipeline_mode = #tpu.pipeline_mode<synchronous>, transform_indices = @transform_4, window_bounds = array<i64: 36, 4>}, {pipeline_mode = #tpu.pipeline_mode<synchronous>, transform_indices = @transform_5, window_bounds = array<i64: 1, 4>}, {pipeline_mode = #tpu.pipeline_mode<synchronous>, transform_indices = @transform_6, window_bounds = array<i64: 36, 8>}, {pipeline_mode = #tpu.pipeline_mode<synchronous>, transform_indices = @transform_7, window_bounds = array<i64: 1, 8>}, {pipeline_mode = #tpu.pipeline_mode<synchronous>, transform_indices = @transform_8, window_bounds = array<i64: 115, 1>}, {pipeline_mode = #tpu.pipeline_mode<synchronous>, transform_indices = @transform_9, window_bounds = array<i64: 72, 8>}, {pipeline_mode = #tpu.pipeline_mode<synchronous>, transform_indices = @transform_10, window_bounds = array<i64: 1, 8>}, {pipeline_mode = #tpu.pipeline_mode<synchronous>, transform_indices = @transform_11, window_bounds = array<i64: 72, 16>}, {pipeline_mode = #tpu.pipeline_mode<synchronous>, transform_indices = @transform_12, window_bounds = array<i64: 1, 16>}, {transform_indices = @transform_13, window_bounds = array<i64: 1, 39, 16>}, {transform_indices = @transform_14, window_bounds = array<i64: 1, 286, 4>}, {transform_indices = @transform_15, window_bounds = array<i64: 1, 115, 8>}]} {
    %c0 = arith.constant 0 : index
    %c0_0 = arith.constant 0 : index
    %c0_1 = arith.constant 0 : index
    %0 = vector.load %arg1[%c0, %c0_0, %c0_1] : memref<1x324x4xf32, #tpu.memory_space<vmem>>, vector<1x286x4xf32>
    %1 = vector.shape_cast %0 : vector<1x286x4xf32> to vector<286x4xf32>
    %c0_2 = arith.constant 0 : index
    %c0_3 = arith.constant 0 : index
    %2 = vector.load %arg18[%c0_2, %c0_3] : memref<286x144xf32, #tpu.memory_space<vmem>>, vector<286x4xf32>
    tpu.vector_store %arg18[%c0_2, %c0_3], %1 {strides = array<i32>} : memref<286x144xf32, #tpu.memory_space<vmem>>, vector<286x4xf32>,
    %c0_4 = arith.constant 0 : index
    %c1 = arith.constant 1 : index
    %c0_5 = arith.constant 0 : index
    %3 = vector.load %arg1[%c0_4, %c1, %c0_5] : memref<1x324x4xf32, #tpu.memory_space<vmem>>, vector<1x286x4xf32>
    %4 = vector.shape_cast %3 : vector<1x286x4xf32> to vector<286x4xf32>
    %c0_6 = arith.constant 0 : index
    %c4 = arith.constant 4 : index
    %5 = vector.load %arg18[%c0_6, %c4] : memref<286x144xf32, #tpu.memory_space<vmem>>, vector<286x4xf32>
    tpu.vector_store %arg18[%c0_6, %c4], %4 {strides = array<i32>} : memref<286x144xf32, #tpu.memory_space<vmem>>, vector<286x4xf32>,
    %c0_7 = arith.constant 0 : index
    %c2 = arith.constant 2 : index
    %c0_8 = arith.constant 0 : index
    %6 = vector.load %arg1[%c0_7, %c2, %c0_8] : memref<1x324x4xf32, #tpu.memory_space<vmem>>, vector<1x286x4xf32>
    %7 = vector.shape_cast %6 : vector<1x286x4xf32> to vector<286x4xf32>
    %c0_9 = arith.constant 0 : index
    %c8 = arith.constant 8 : index
    %8 = vector.load %arg18[%c0_9, %c8] : memref<286x144xf32, #tpu.memory_space<vmem>>, vector<286x4xf32>
    tpu.vector_store %arg18[%c0_9, %c8], %7 {strides = array<i32>} : memref<286x144xf32, #tpu.memory_space<vmem>>, vector<286x4xf32>,
    %c0_10 = arith.constant 0 : index
    %c18 = arith.constant 18 : index
    %c0_11 = arith.constant 0 : index
    %9 = vector.load %arg1[%c0_10, %c18, %c0_11] : memref<1x324x4xf32, #tpu.memory_space<vmem>>, vector<1x286x4xf32>
    %10 = vector.shape_cast %9 : vector<1x286x4xf32> to vector<286x4xf32>
    %c0_12 = arith.constant 0 : index
    %c12 = arith.constant 12 : index
    %11 = vector.load %arg18[%c0_12, %c12] : memref<286x144xf32, #tpu.memory_space<vmem>>, vector<286x4xf32>
    tpu.vector_store %arg18[%c0_12, %c12], %10 {strides = array<i32>} : memref<286x144xf32, #tpu.memory_space<vmem>>, vector<286x4xf32>,
    %c0_13 = arith.constant 0 : index
    %c19 = arith.constant 19 : index
    %c0_14 = arith.constant 0 : index
    %12 = vector.load %arg1[%c0_13, %c19, %c0_14] : memref<1x324x4xf32, #tpu.memory_space<vmem>>, vector<1x286x4xf32>
    %13 = vector.shape_cast %12 : vector<1x286x4xf32> to vector<286x4xf32>
    %c0_15 = arith.constant 0 : index
    %c16 = arith.constant 16 : index
    %14 = vector.load %arg18[%c0_15, %c16] : memref<286x144xf32, #tpu.memory_space<vmem>>, vector<286x4xf32>
    tpu.vector_store %arg18[%c0_15, %c16], %13 {strides = array<i32>} : memref<286x144xf32, #tpu.memory_space<vmem>>, vector<286x4xf32>,
    %c0_16 = arith.constant 0 : index
    %c20 = arith.constant 20 : index
    %c0_17 = arith.constant 0 : index
    %15 = vector.load %arg1[%c0_16, %c20, %c0_17] : memref<1x324x4xf32, #tpu.memory_space<vmem>>, vector<1x286x4xf32>
    %16 = vector.shape_cast %15 : vector<1x286x4xf32> to vector<286x4xf32>
    %c0_18 = arith.constant 0 : index
    %c20_19 = arith.constant 20 : index
    %17 = vector.load %arg18[%c0_18, %c20_19] : memref<286x144xf32, #tpu.memory_space<vmem>>, vector<286x4xf32>
    tpu.vector_store %arg18[%c0_18, %c20_19], %16 {strides = array<i32>} : memref<286x144xf32, #tpu.memory_space<vmem>>, vector<286x4xf32>,
    %c0_20 = arith.constant 0 : index
    %c36 = arith.constant 36 : index
    %c0_21 = arith.constant 0 : index
    %18 = vector.load %arg1[%c0_20, %c36, %c0_21] : memref<1x324x4xf32, #tpu.memory_space<vmem>>, vector<1x286x4xf32>
    %19 = vector.shape_cast %18 : vector<1x286x4xf32> to vector<286x4xf32>
    %c0_22 = arith.constant 0 : index
    %c24 = arith.constant 24 : index
    %20 = vector.load %arg18[%c0_22, %c24] : memref<286x144xf32, #tpu.memory_space<vmem>>, vector<286x4xf32>
    tpu.vector_store %arg18[%c0_22, %c24], %19 {strides = array<i32>} : memref<286x144xf32, #tpu.memory_space<vmem>>, vector<286x4xf32>,
    %c0_23 = arith.constant 0 : index
    %c37 = arith.constant 37 : index
    %c0_24 = arith.constant 0 : index
    %21 = vector.load %arg1[%c0_23, %c37, %c0_24] : memref<1x324x4xf32, #tpu.memory_space<vmem>>, vector<1x286x4xf32>
    %22 = vector.shape_cast %21 : vector<1x286x4xf32> to vector<286x4xf32>
    %c0_25 = arith.constant 0 : index
    %c28 = arith.constant 28 : index
    %23 = vector.load %arg18[%c0_25, %c28] : memref<286x144xf32, #tpu.memory_space<vmem>>, vector<286x4xf32>
    tpu.vector_store %arg18[%c0_25, %c28], %22 {strides = array<i32>} : memref<286x144xf32, #tpu.memory_space<vmem>>, vector<286x4xf32>,
    %c0_26 = arith.constant 0 : index
    %c38 = arith.constant 38 : index
    %c0_27 = arith.constant 0 : index
    %24 = vector.load %arg1[%c0_26, %c38, %c0_27] : memref<1x324x4xf32, #tpu.memory_space<vmem>>, vector<1x286x4xf32>
    %25 = vector.shape_cast %24 : vector<1x286x4xf32> to vector<286x4xf32>
    %c0_28 = arith.constant 0 : index
    %c32 = arith.constant 32 : index
    %26 = vector.load %arg18[%c0_28, %c32] : memref<286x144xf32, #tpu.memory_space<vmem>>, vector<286x4xf32>
    tpu.vector_store %arg18[%c0_28, %c32], %25 {strides = array<i32>} : memref<286x144xf32, #tpu.memory_space<vmem>>, vector<286x4xf32>,
    %c0_29 = arith.constant 0 : index
    %c0_30 = arith.constant 0 : index
    %27 = vector.load %arg18[%c0_29, %c0_30] : memref<286x144xf32, #tpu.memory_space<vmem>>, vector<286x36xf32>
    %c0_31 = arith.constant 0 : index
    %c0_32 = arith.constant 0 : index
    %28 = vector.load %arg2[%c0_31, %c0_32] : memref<36x4xf32, #tpu.memory_space<vmem>>, vector<36x4xf32>
    %cst = arith.constant dense<0.000000e+00> : vector<286x4xf32>
    %29 = tpu.matmul %27, %28, %cst {dimension_numbers = #tpu.dot_dimension_numbers<[1], [0], [0], [1], [0, 0, 1, 1], [], []>} : vector<286x36xf32>, vector<36x4xf32>, vector<286x4xf32> -> vector<286x4xf32>
    %c0_33 = arith.constant 0 : index
    %c0_34 = arith.constant 0 : index
    %30 = vector.load %arg3[%c0_33, %c0_34] : memref<1x4xf32, #tpu.memory_space<vmem>>, vector<1x4xf32>
    %31 = vector.broadcast %30 : vector<1x4xf32> to vector<286x4xf32>
    %32 = arith.addf %29, %31 : vector<286x4xf32>
    %cst_35 = arith.constant 0.000000e+00 : f32
    %33 = vector.broadcast %cst_35 : f32 to vector<286x4xf32>
    %34 = arith.cmpf oge, %32, %33 : vector<286x4xf32>
    %cst_36 = arith.constant 0.00999999977 : f32
    %35 = vector.broadcast %cst_36 : f32 to vector<286x4xf32>
    %36 = arith.mulf %35, %32 : vector<286x4xf32>
    %37 = arith.select %34, %32, %36 : vector<286x4xi1>, vector<286x4xf32>
    %c0_37 = arith.constant 0 : index
    %c0_38 = arith.constant 0 : index
    %38 = vector.load %arg4[%c0_37, %c0_38] : memref<286x1xf32, #tpu.memory_space<vmem>>, vector<286x1xf32>
    %39 = vector.broadcast %38 : vector<286x1xf32> to vector<286x4xf32>
    %40 = arith.mulf %37, %39 : vector<286x4xf32>
    %c0_39 = arith.constant 0 : index
    %c0_40 = arith.constant 0 : index
    %c0_41 = arith.constant 0 : index
    %41 = vector.load %arg15[%c0_39, %c0_40, %c0_41] : memref<1x286x4xf32, #tpu.memory_space<vmem>>, vector<1x286x4xf32>
    %42 = vector.shape_cast %41 : vector<1x286x4xf32> to vector<286x4xf32>
    %43 = vector.shape_cast %40 : vector<286x4xf32> to vector<1x286x4xf32>
    tpu.vector_store %arg15[%c0_39, %c0_40, %c0_41], %43 {strides = array<i32>} : memref<1x286x4xf32, #tpu.memory_space<vmem>>, vector<1x286x4xf32>,
    %cst_42 = arith.constant 0.000000e+00 : f32
    %44 = vector.broadcast %cst_42 : f32 to vector<19x4xf32>
    %c0_43 = arith.constant 0 : index
    %c0_44 = arith.constant 0 : index
    %45 = vector.load %arg17[%c0_43, %c0_44] : memref<324x16xf32, #tpu.memory_space<vmem>>, vector<19x4xf32>
    tpu.vector_store %arg17[%c0_43, %c0_44], %44 {strides = array<i32>} : memref<324x16xf32, #tpu.memory_space<vmem>>, vector<19x4xf32>,
    %c19_45 = arith.constant 19 : index
    %c0_46 = arith.constant 0 : index
    %46 = vector.load %arg17[%c19_45, %c0_46] : memref<324x16xf32, #tpu.memory_space<vmem>>, vector<286x4xf32>
    tpu.vector_store %arg17[%c19_45, %c0_46], %40 {strides = array<i32>} : memref<324x16xf32, #tpu.memory_space<vmem>>, vector<286x4xf32>,
    %cst_47 = arith.constant 0.000000e+00 : f32
    %47 = vector.broadcast %cst_47 : f32 to vector<19x4xf32>
    %c305 = arith.constant 305 : index
    %c0_48 = arith.constant 0 : index
    %48 = vector.load %arg17[%c305, %c0_48] : memref<324x16xf32, #tpu.memory_space<vmem>>, vector<19x4xf32>
    tpu.vector_store %arg17[%c305, %c0_48], %47 {strides = array<i32>} : memref<324x16xf32, #tpu.memory_space<vmem>>, vector<19x4xf32>,
    %c0_49 = arith.constant 0 : index
    %c0_50 = arith.constant 0 : index
    %49 = vector.load %arg17[%c0_49, %c0_50] : memref<324x16xf32, #tpu.memory_space<vmem>>, vector<286x4xf32>
    %c0_51 = arith.constant 0 : index
    %c0_52 = arith.constant 0 : index
    %50 = vector.load %arg18[%c0_51, %c0_52] : memref<286x144xf32, #tpu.memory_space<vmem>>, vector<286x4xf32>
    tpu.vector_store %arg18[%c0_51, %c0_52], %49 {strides = array<i32>} : memref<286x144xf32, #tpu.memory_space<vmem>>, vector<286x4xf32>,
    %c1_53 = arith.constant 1 : index
    %c0_54 = arith.constant 0 : index
    %51 = vector.load %arg17[%c1_53, %c0_54] : memref<324x16xf32, #tpu.memory_space<vmem>>, vector<286x4xf32>
    %c0_55 = arith.constant 0 : index
    %c4_56 = arith.constant 4 : index
    %52 = vector.load %arg18[%c0_55, %c4_56] : memref<286x144xf32, #tpu.memory_space<vmem>>, vector<286x4xf32>
    tpu.vector_store %arg18[%c0_55, %c4_56], %51 {strides = array<i32>} : memref<286x144xf32, #tpu.memory_space<vmem>>, vector<286x4xf32>,
    %c2_57 = arith.constant 2 : index
    %c0_58 = arith.constant 0 : index
    %53 = vector.load %arg17[%c2_57, %c0_58] : memref<324x16xf32, #tpu.memory_space<vmem>>, vector<286x4xf32>
    %c0_59 = arith.constant 0 : index
    %c8_60 = arith.constant 8 : index
    %54 = vector.load %arg18[%c0_59, %c8_60] : memref<286x144xf32, #tpu.memory_space<vmem>>, vector<286x4xf32>
    tpu.vector_store %arg18[%c0_59, %c8_60], %53 {strides = array<i32>} : memref<286x144xf32, #tpu.memory_space<vmem>>, vector<286x4xf32>,
    %c18_61 = arith.constant 18 : index
    %c0_62 = arith.constant 0 : index
    %55 = vector.load %arg17[%c18_61, %c0_62] : memref<324x16xf32, #tpu.memory_space<vmem>>, vector<286x4xf32>
    %c0_63 = arith.constant 0 : index
    %c12_64 = arith.constant 12 : index
    %56 = vector.load %arg18[%c0_63, %c12_64] : memref<286x144xf32, #tpu.memory_space<vmem>>, vector<286x4xf32>
    tpu.vector_store %arg18[%c0_63, %c12_64], %55 {strides = array<i32>} : memref<286x144xf32, #tpu.memory_space<vmem>>, vector<286x4xf32>,
    %c19_65 = arith.constant 19 : index
    %c0_66 = arith.constant 0 : index
    %57 = vector.load %arg17[%c19_65, %c0_66] : memref<324x16xf32, #tpu.memory_space<vmem>>, vector<286x4xf32>
    %c0_67 = arith.constant 0 : index
    %c16_68 = arith.constant 16 : index
    %58 = vector.load %arg18[%c0_67, %c16_68] : memref<286x144xf32, #tpu.memory_space<vmem>>, vector<286x4xf32>
    tpu.vector_store %arg18[%c0_67, %c16_68], %57 {strides = array<i32>} : memref<286x144xf32, #tpu.memory_space<vmem>>, vector<286x4xf32>,
    %c20_69 = arith.constant 20 : index
    %c0_70 = arith.constant 0 : index
    %59 = vector.load %arg17[%c20_69, %c0_70] : memref<324x16xf32, #tpu.memory_space<vmem>>, vector<286x4xf32>
    %c0_71 = arith.constant 0 : index
    %c20_72 = arith.constant 20 : index
    %60 = vector.load %arg18[%c0_71, %c20_72] : memref<286x144xf32, #tpu.memory_space<vmem>>, vector<286x4xf32>
    tpu.vector_store %arg18[%c0_71, %c20_72], %59 {strides = array<i32>} : memref<286x144xf32, #tpu.memory_space<vmem>>, vector<286x4xf32>,
    %c36_73 = arith.constant 36 : index
    %c0_74 = arith.constant 0 : index
    %61 = vector.load %arg17[%c36_73, %c0_74] : memref<324x16xf32, #tpu.memory_space<vmem>>, vector<286x4xf32>
    %c0_75 = arith.constant 0 : index
    %c24_76 = arith.constant 24 : index
    %62 = vector.load %arg18[%c0_75, %c24_76] : memref<286x144xf32, #tpu.memory_space<vmem>>, vector<286x4xf32>
    tpu.vector_store %arg18[%c0_75, %c24_76], %61 {strides = array<i32>} : memref<286x144xf32, #tpu.memory_space<vmem>>, vector<286x4xf32>,
    %c37_77 = arith.constant 37 : index
    %c0_78 = arith.constant 0 : index
    %63 = vector.load %arg17[%c37_77, %c0_78] : memref<324x16xf32, #tpu.memory_space<vmem>>, vector<286x4xf32>
    %c0_79 = arith.constant 0 : index
    %c28_80 = arith.constant 28 : index
    %64 = vector.load %arg18[%c0_79, %c28_80] : memref<286x144xf32, #tpu.memory_space<vmem>>, vector<286x4xf32>
    tpu.vector_store %arg18[%c0_79, %c28_80], %63 {strides = array<i32>} : memref<286x144xf32, #tpu.memory_space<vmem>>, vector<286x4xf32>,
    %c38_81 = arith.constant 38 : index
    %c0_82 = arith.constant 0 : index
    %65 = vector.load %arg17[%c38_81, %c0_82] : memref<324x16xf32, #tpu.memory_space<vmem>>, vector<286x4xf32>
    %c0_83 = arith.constant 0 : index
    %c32_84 = arith.constant 32 : index
    %66 = vector.load %arg18[%c0_83, %c32_84] : memref<286x144xf32, #tpu.memory_space<vmem>>, vector<286x4xf32>
    tpu.vector_store %arg18[%c0_83, %c32_84], %65 {strides = array<i32>} : memref<286x144xf32, #tpu.memory_space<vmem>>, vector<286x4xf32>,
    %c0_85 = arith.constant 0 : index
    %c0_86 = arith.constant 0 : index
    %67 = vector.load %arg18[%c0_85, %c0_86] : memref<286x144xf32, #tpu.memory_space<vmem>>, vector<286x36xf32>
    %c0_87 = arith.constant 0 : index
    %c0_88 = arith.constant 0 : index
    %68 = vector.load %arg5[%c0_87, %c0_88] : memref<36x4xf32, #tpu.memory_space<vmem>>, vector<36x4xf32>
    %cst_89 = arith.constant dense<0.000000e+00> : vector<286x4xf32>
    %69 = tpu.matmul %67, %68, %cst_89 {dimension_numbers = #tpu.dot_dimension_numbers<[1], [0], [0], [1], [0, 0, 1, 1], [], []>} : vector<286x36xf32>, vector<36x4xf32>, vector<286x4xf32> -> vector<286x4xf32>
    %c0_90 = arith.constant 0 : index
    %c0_91 = arith.constant 0 : index
    %70 = vector.load %arg6[%c0_90, %c0_91] : memref<1x4xf32, #tpu.memory_space<vmem>>, vector<1x4xf32>
    %71 = vector.broadcast %70 : vector<1x4xf32> to vector<286x4xf32>
    %72 = arith.addf %69, %71 : vector<286x4xf32>
    %cst_92 = arith.constant 0.000000e+00 : f32
    %73 = vector.broadcast %cst_92 : f32 to vector<286x4xf32>
    %74 = arith.cmpf oge, %72, %73 : vector<286x4xf32>
    %cst_93 = arith.constant 0.00999999977 : f32
    %75 = vector.broadcast %cst_93 : f32 to vector<286x4xf32>
    %76 = arith.mulf %75, %72 : vector<286x4xf32>
    %77 = arith.select %74, %72, %76 : vector<286x4xi1>, vector<286x4xf32>
    %c0_94 = arith.constant 0 : index
    %c0_95 = arith.constant 0 : index
    %78 = vector.load %arg19[%c0_94, %c0_95] : memref<286x16xf32, #tpu.memory_space<vmem>>, vector<286x4xf32>
    tpu.vector_store %arg19[%c0_94, %c0_95], %77 {strides = array<i32>} : memref<286x16xf32, #tpu.memory_space<vmem>>, vector<286x4xf32>,
    %c0_96 = arith.constant 0 : index
    %c0_97 = arith.constant 0 : index
    %79 = tpu.strided_load %arg19[%c0_96, %c0_97] {strides = array<i32: 2, 1>} : memref<286x16xf32, #tpu.memory_space<vmem>>, vector<115x4xf32>
    %c0_98 = arith.constant 0 : index
    %c0_99 = arith.constant 0 : index
    %80 = vector.load %arg18[%c0_98, %c0_99] : memref<286x144xf32, #tpu.memory_space<vmem>>, vector<115x4xf32>
    tpu.vector_store %arg18[%c0_98, %c0_99], %79 {strides = array<i32>} : memref<286x144xf32, #tpu.memory_space<vmem>>, vector<115x4xf32>,
    %c1_100 = arith.constant 1 : index
    %c0_101 = arith.constant 0 : index
    %81 = tpu.strided_load %arg19[%c1_100, %c0_101] {strides = array<i32: 2, 1>} : memref<286x16xf32, #tpu.memory_space<vmem>>, vector<115x4xf32>
    %c0_102 = arith.constant 0 : index
    %c4_103 = arith.constant 4 : index
    %82 = vector.load %arg18[%c0_102, %c4_103] : memref<286x144xf32, #tpu.memory_space<vmem>>, vector<115x4xf32>
    tpu.vector_store %arg18[%c0_102, %c4_103], %81 {strides = array<i32>} : memref<286x144xf32, #tpu.memory_space<vmem>>, vector<115x4xf32>,
    %c2_104 = arith.constant 2 : index
    %c0_105 = arith.constant 0 : index
    %83 = tpu.strided_load %arg19[%c2_104, %c0_105] {strides = array<i32: 2, 1>} : memref<286x16xf32, #tpu.memory_space<vmem>>, vector<115x4xf32>
    %c0_106 = arith.constant 0 : index
    %c8_107 = arith.constant 8 : index
    %84 = vector.load %arg18[%c0_106, %c8_107] : memref<286x144xf32, #tpu.memory_space<vmem>>, vector<115x4xf32>
    tpu.vector_store %arg18[%c0_106, %c8_107], %83 {strides = array<i32>} : memref<286x144xf32, #tpu.memory_space<vmem>>, vector<115x4xf32>,
    %c18_108 = arith.constant 18 : index
    %c0_109 = arith.constant 0 : index
    %85 = tpu.strided_load %arg19[%c18_108, %c0_109] {strides = array<i32: 2, 1>} : memref<286x16xf32, #tpu.memory_space<vmem>>, vector<115x4xf32>
    %c0_110 = arith.constant 0 : index
    %c12_111 = arith.constant 12 : index
    %86 = vector.load %arg18[%c0_110, %c12_111] : memref<286x144xf32, #tpu.memory_space<vmem>>, vector<115x4xf32>
    tpu.vector_store %arg18[%c0_110, %c12_111], %85 {strides = array<i32>} : memref<286x144xf32, #tpu.memory_space<vmem>>, vector<115x4xf32>,
    %c19_112 = arith.constant 19 : index
    %c0_113 = arith.constant 0 : index
    %87 = tpu.strided_load %arg19[%c19_112, %c0_113] {strides = array<i32: 2, 1>} : memref<286x16xf32, #tpu.memory_space<vmem>>, vector<115x4xf32>
    %c0_114 = arith.constant 0 : index
    %c16_115 = arith.constant 16 : index
    %88 = vector.load %arg18[%c0_114, %c16_115] : memref<286x144xf32, #tpu.memory_space<vmem>>, vector<115x4xf32>
    tpu.vector_store %arg18[%c0_114, %c16_115], %87 {strides = array<i32>} : memref<286x144xf32, #tpu.memory_space<vmem>>, vector<115x4xf32>,
    %c20_116 = arith.constant 20 : index
    %c0_117 = arith.constant 0 : index
    %89 = tpu.strided_load %arg19[%c20_116, %c0_117] {strides = array<i32: 2, 1>} : memref<286x16xf32, #tpu.memory_space<vmem>>, vector<115x4xf32>
    %c0_118 = arith.constant 0 : index
    %c20_119 = arith.constant 20 : index
    %90 = vector.load %arg18[%c0_118, %c20_119] : memref<286x144xf32, #tpu.memory_space<vmem>>, vector<115x4xf32>
    tpu.vector_store %arg18[%c0_118, %c20_119], %89 {strides = array<i32>} : memref<286x144xf32, #tpu.memory_space<vmem>>, vector<115x4xf32>,
    %c36_120 = arith.constant 36 : index
    %c0_121 = arith.constant 0 : index
    %91 = tpu.strided_load %arg19[%c36_120, %c0_121] {strides = array<i32: 2, 1>} : memref<286x16xf32, #tpu.memory_space<vmem>>, vector<115x4xf32>
    %c0_122 = arith.constant 0 : index
    %c24_123 = arith.constant 24 : index
    %92 = vector.load %arg18[%c0_122, %c24_123] : memref<286x144xf32, #tpu.memory_space<vmem>>, vector<115x4xf32>
    tpu.vector_store %arg18[%c0_122, %c24_123], %91 {strides = array<i32>} : memref<286x144xf32, #tpu.memory_space<vmem>>, vector<115x4xf32>,
    %c37_124 = arith.constant 37 : index
    %c0_125 = arith.constant 0 : index
    %93 = tpu.strided_load %arg19[%c37_124, %c0_125] {strides = array<i32: 2, 1>} : memref<286x16xf32, #tpu.memory_space<vmem>>, vector<115x4xf32>
    %c0_126 = arith.constant 0 : index
    %c28_127 = arith.constant 28 : index
    %94 = vector.load %arg18[%c0_126, %c28_127] : memref<286x144xf32, #tpu.memory_space<vmem>>, vector<115x4xf32>
    tpu.vector_store %arg18[%c0_126, %c28_127], %93 {strides = array<i32>} : memref<286x144xf32, #tpu.memory_space<vmem>>, vector<115x4xf32>,
    %c38_128 = arith.constant 38 : index
    %c0_129 = arith.constant 0 : index
    %95 = tpu.strided_load %arg19[%c38_128, %c0_129] {strides = array<i32: 2, 1>} : memref<286x16xf32, #tpu.memory_space<vmem>>, vector<115x4xf32>
    %c0_130 = arith.constant 0 : index
    %c32_131 = arith.constant 32 : index
    %96 = vector.load %arg18[%c0_130, %c32_131] : memref<286x144xf32, #tpu.memory_space<vmem>>, vector<115x4xf32>
    tpu.vector_store %arg18[%c0_130, %c32_131], %95 {strides = array<i32>} : memref<286x144xf32, #tpu.memory_space<vmem>>, vector<115x4xf32>,
    %c0_132 = arith.constant 0 : index
    %c0_133 = arith.constant 0 : index
    %97 = vector.load %arg18[%c0_132, %c0_133] : memref<286x144xf32, #tpu.memory_space<vmem>>, vector<115x36xf32>
    %c0_134 = arith.constant 0 : index
    %c0_135 = arith.constant 0 : index
    %98 = vector.load %arg7[%c0_134, %c0_135] : memref<36x8xf32, #tpu.memory_space<vmem>>, vector<36x8xf32>
    %cst_136 = arith.constant dense<0.000000e+00> : vector<115x8xf32>
    %99 = tpu.matmul %97, %98, %cst_136 {dimension_numbers = #tpu.dot_dimension_numbers<[1], [0], [0], [1], [0, 0, 1, 1], [], []>} : vector<115x36xf32>, vector<36x8xf32>, vector<115x8xf32> -> vector<115x8xf32>
    %c0_137 = arith.constant 0 : index
    %c0_138 = arith.constant 0 : index
    %100 = vector.load %arg8[%c0_137, %c0_138] : memref<1x8xf32, #tpu.memory_space<vmem>>, vector<1x8xf32>
    %101 = vector.broadcast %100 : vector<1x8xf32> to vector<115x8xf32>
    %102 = arith.addf %99, %101 : vector<115x8xf32>
    %cst_139 = arith.constant 0.000000e+00 : f32
    %103 = vector.broadcast %cst_139 : f32 to vector<115x8xf32>
    %104 = arith.cmpf oge, %102, %103 : vector<115x8xf32>
    %cst_140 = arith.constant 0.00999999977 : f32
    %105 = vector.broadcast %cst_140 : f32 to vector<115x8xf32>
    %106 = arith.mulf %105, %102 : vector<115x8xf32>
    %107 = arith.select %104, %102, %106 : vector<115x8xi1>, vector<115x8xf32>
    %c0_141 = arith.constant 0 : index
    %c0_142 = arith.constant 0 : index
    %108 = vector.load %arg9[%c0_141, %c0_142] : memref<115x1xf32, #tpu.memory_space<vmem>>, vector<115x1xf32>
    %109 = vector.broadcast %108 : vector<115x1xf32> to vector<115x8xf32>
    %110 = arith.mulf %107, %109 : vector<115x8xf32>
    %c0_143 = arith.constant 0 : index
    %c0_144 = arith.constant 0 : index
    %c0_145 = arith.constant 0 : index
    %111 = vector.load %arg16[%c0_143, %c0_144, %c0_145] : memref<1x115x8xf32, #tpu.memory_space<vmem>>, vector<1x115x8xf32>
    %112 = vector.shape_cast %111 : vector<1x115x8xf32> to vector<115x8xf32>
    %113 = vector.shape_cast %110 : vector<115x8xf32> to vector<1x115x8xf32>
    tpu.vector_store %arg16[%c0_143, %c0_144, %c0_145], %113 {strides = array<i32>} : memref<1x115x8xf32, #tpu.memory_space<vmem>>, vector<1x115x8xf32>,
    %cst_146 = arith.constant 0.000000e+00 : f32
    %114 = vector.broadcast %cst_146 : f32 to vector<19x8xf32>
    %c0_147 = arith.constant 0 : index
    %c0_148 = arith.constant 0 : index
    %115 = vector.load %arg17[%c0_147, %c0_148] : memref<324x16xf32, #tpu.memory_space<vmem>>, vector<19x8xf32>
    tpu.vector_store %arg17[%c0_147, %c0_148], %114 {strides = array<i32>} : memref<324x16xf32, #tpu.memory_space<vmem>>, vector<19x8xf32>,
    %c19_149 = arith.constant 19 : index
    %c0_150 = arith.constant 0 : index
    %116 = vector.load %arg17[%c19_149, %c0_150] : memref<324x16xf32, #tpu.memory_space<vmem>>, vector<115x8xf32>
    tpu.vector_store %arg17[%c19_149, %c0_150], %110 {strides = array<i32>} : memref<324x16xf32, #tpu.memory_space<vmem>>, vector<115x8xf32>,
    %cst_151 = arith.constant 0.000000e+00 : f32
    %117 = vector.broadcast %cst_151 : f32 to vector<19x8xf32>
    %c134 = arith.constant 134 : index
    %c0_152 = arith.constant 0 : index
    %118 = vector.load %arg17[%c134, %c0_152] : memref<324x16xf32, #tpu.memory_space<vmem>>, vector<19x8xf32>
    tpu.vector_store %arg17[%c134, %c0_152], %117 {strides = array<i32>} : memref<324x16xf32, #tpu.memory_space<vmem>>, vector<19x8xf32>,
    %c0_153 = arith.constant 0 : index
    %c0_154 = arith.constant 0 : index
    %119 = vector.load %arg17[%c0_153, %c0_154] : memref<324x16xf32, #tpu.memory_space<vmem>>, vector<115x8xf32>
    %c0_155 = arith.constant 0 : index
    %c0_156 = arith.constant 0 : index
    %120 = vector.load %arg18[%c0_155, %c0_156] : memref<286x144xf32, #tpu.memory_space<vmem>>, vector<115x8xf32>
    tpu.vector_store %arg18[%c0_155, %c0_156], %119 {strides = array<i32>} : memref<286x144xf32, #tpu.memory_space<vmem>>, vector<115x8xf32>,
    %c1_157 = arith.constant 1 : index
    %c0_158 = arith.constant 0 : index
    %121 = vector.load %arg17[%c1_157, %c0_158] : memref<324x16xf32, #tpu.memory_space<vmem>>, vector<115x8xf32>
    %c0_159 = arith.constant 0 : index
    %c8_160 = arith.constant 8 : index
    %122 = vector.load %arg18[%c0_159, %c8_160] : memref<286x144xf32, #tpu.memory_space<vmem>>, vector<115x8xf32>
    tpu.vector_store %arg18[%c0_159, %c8_160], %121 {strides = array<i32>} : memref<286x144xf32, #tpu.memory_space<vmem>>, vector<115x8xf32>,
    %c2_161 = arith.constant 2 : index
    %c0_162 = arith.constant 0 : index
    %123 = vector.load %arg17[%c2_161, %c0_162] : memref<324x16xf32, #tpu.memory_space<vmem>>, vector<115x8xf32>
    %c0_163 = arith.constant 0 : index
    %c16_164 = arith.constant 16 : index
    %124 = vector.load %arg18[%c0_163, %c16_164] : memref<286x144xf32, #tpu.memory_space<vmem>>, vector<115x8xf32>
    tpu.vector_store %arg18[%c0_163, %c16_164], %123 {strides = array<i32>} : memref<286x144xf32, #tpu.memory_space<vmem>>, vector<115x8xf32>,
    %c18_165 = arith.constant 18 : index
    %c0_166 = arith.constant 0 : index
    %125 = vector.load %arg17[%c18_165, %c0_166] : memref<324x16xf32, #tpu.memory_space<vmem>>, vector<115x8xf32>
    %c0_167 = arith.constant 0 : index
    %c24_168 = arith.constant 24 : index
    %126 = vector.load %arg18[%c0_167, %c24_168] : memref<286x144xf32, #tpu.memory_space<vmem>>, vector<115x8xf32>
    tpu.vector_store %arg18[%c0_167, %c24_168], %125 {strides = array<i32>} : memref<286x144xf32, #tpu.memory_space<vmem>>, vector<115x8xf32>,
    %c19_169 = arith.constant 19 : index
    %c0_170 = arith.constant 0 : index
    %127 = vector.load %arg17[%c19_169, %c0_170] : memref<324x16xf32, #tpu.memory_space<vmem>>, vector<115x8xf32>
    %c0_171 = arith.constant 0 : index
    %c32_172 = arith.constant 32 : index
    %128 = vector.load %arg18[%c0_171, %c32_172] : memref<286x144xf32, #tpu.memory_space<vmem>>, vector<115x8xf32>
    tpu.vector_store %arg18[%c0_171, %c32_172], %127 {strides = array<i32>} : memref<286x144xf32, #tpu.memory_space<vmem>>, vector<115x8xf32>,
    %c20_173 = arith.constant 20 : index
    %c0_174 = arith.constant 0 : index
    %129 = vector.load %arg17[%c20_173, %c0_174] : memref<324x16xf32, #tpu.memory_space<vmem>>, vector<115x8xf32>
    %c0_175 = arith.constant 0 : index
    %c40 = arith.constant 40 : index
    %130 = vector.load %arg18[%c0_175, %c40] : memref<286x144xf32, #tpu.memory_space<vmem>>, vector<115x8xf32>
    tpu.vector_store %arg18[%c0_175, %c40], %129 {strides = array<i32>} : memref<286x144xf32, #tpu.memory_space<vmem>>, vector<115x8xf32>,
    %c36_176 = arith.constant 36 : index
    %c0_177 = arith.constant 0 : index
    %131 = vector.load %arg17[%c36_176, %c0_177] : memref<324x16xf32, #tpu.memory_space<vmem>>, vector<115x8xf32>
    %c0_178 = arith.constant 0 : index
    %c48 = arith.constant 48 : index
    %132 = vector.load %arg18[%c0_178, %c48] : memref<286x144xf32, #tpu.memory_space<vmem>>, vector<115x8xf32>
    tpu.vector_store %arg18[%c0_178, %c48], %131 {strides = array<i32>} : memref<286x144xf32, #tpu.memory_space<vmem>>, vector<115x8xf32>,
    %c37_179 = arith.constant 37 : index
    %c0_180 = arith.constant 0 : index
    %133 = vector.load %arg17[%c37_179, %c0_180] : memref<324x16xf32, #tpu.memory_space<vmem>>, vector<115x8xf32>
    %c0_181 = arith.constant 0 : index
    %c56 = arith.constant 56 : index
    %134 = vector.load %arg18[%c0_181, %c56] : memref<286x144xf32, #tpu.memory_space<vmem>>, vector<115x8xf32>
    tpu.vector_store %arg18[%c0_181, %c56], %133 {strides = array<i32>} : memref<286x144xf32, #tpu.memory_space<vmem>>, vector<115x8xf32>,
    %c38_182 = arith.constant 38 : index
    %c0_183 = arith.constant 0 : index
    %135 = vector.load %arg17[%c38_182, %c0_183] : memref<324x16xf32, #tpu.memory_space<vmem>>, vector<115x8xf32>
    %c0_184 = arith.constant 0 : index
    %c64 = arith.constant 64 : index
    %136 = vector.load %arg18[%c0_184, %c64] : memref<286x144xf32, #tpu.memory_space<vmem>>, vector<115x8xf32>
    tpu.vector_store %arg18[%c0_184, %c64], %135 {strides = array<i32>} : memref<286x144xf32, #tpu.memory_space<vmem>>, vector<115x8xf32>,
    %c0_185 = arith.constant 0 : index
    %c0_186 = arith.constant 0 : index
    %137 = vector.load %arg18[%c0_185, %c0_186] : memref<286x144xf32, #tpu.memory_space<vmem>>, vector<115x72xf32>
    %c0_187 = arith.constant 0 : index
    %c0_188 = arith.constant 0 : index
    %138 = vector.load %arg10[%c0_187, %c0_188] : memref<72x8xf32, #tpu.memory_space<vmem>>, vector<72x8xf32>
    %cst_189 = arith.constant dense<0.000000e+00> : vector<115x8xf32>
    %139 = tpu.matmul %137, %138, %cst_189 {dimension_numbers = #tpu.dot_dimension_numbers<[1], [0], [0], [1], [0, 0, 1, 1], [], []>} : vector<115x72xf32>, vector<72x8xf32>, vector<115x8xf32> -> vector<115x8xf32>
    %c0_190 = arith.constant 0 : index
    %c0_191 = arith.constant 0 : index
    %140 = vector.load %arg11[%c0_190, %c0_191] : memref<1x8xf32, #tpu.memory_space<vmem>>, vector<1x8xf32>
    %141 = vector.broadcast %140 : vector<1x8xf32> to vector<115x8xf32>
    %142 = arith.addf %139, %141 : vector<115x8xf32>
    %cst_192 = arith.constant 0.000000e+00 : f32
    %143 = vector.broadcast %cst_192 : f32 to vector<115x8xf32>
    %144 = arith.cmpf oge, %142, %143 : vector<115x8xf32>
    %cst_193 = arith.constant 0.00999999977 : f32
    %145 = vector.broadcast %cst_193 : f32 to vector<115x8xf32>
    %146 = arith.mulf %145, %142 : vector<115x8xf32>
    %147 = arith.select %144, %142, %146 : vector<115x8xi1>, vector<115x8xf32>
    %c0_194 = arith.constant 0 : index
    %c0_195 = arith.constant 0 : index
    %148 = vector.load %arg19[%c0_194, %c0_195] : memref<286x16xf32, #tpu.memory_space<vmem>>, vector<115x8xf32>
    tpu.vector_store %arg19[%c0_194, %c0_195], %147 {strides = array<i32>} : memref<286x16xf32, #tpu.memory_space<vmem>>, vector<115x8xf32>,
    %c0_196 = arith.constant 0 : index
    %c0_197 = arith.constant 0 : index
    %149 = tpu.strided_load %arg19[%c0_196, %c0_197] {strides = array<i32: 2, 1>} : memref<286x16xf32, #tpu.memory_space<vmem>>, vector<39x8xf32>
    %c0_198 = arith.constant 0 : index
    %c0_199 = arith.constant 0 : index
    %150 = vector.load %arg18[%c0_198, %c0_199] : memref<286x144xf32, #tpu.memory_space<vmem>>, vector<39x8xf32>
    tpu.vector_store %arg18[%c0_198, %c0_199], %149 {strides = array<i32>} : memref<286x144xf32, #tpu.memory_space<vmem>>, vector<39x8xf32>,
    %c1_200 = arith.constant 1 : index
    %c0_201 = arith.constant 0 : index
    %151 = tpu.strided_load %arg19[%c1_200, %c0_201] {strides = array<i32: 2, 1>} : memref<286x16xf32, #tpu.memory_space<vmem>>, vector<39x8xf32>
    %c0_202 = arith.constant 0 : index
    %c8_203 = arith.constant 8 : index
    %152 = vector.load %arg18[%c0_202, %c8_203] : memref<286x144xf32, #tpu.memory_space<vmem>>, vector<39x8xf32>
    tpu.vector_store %arg18[%c0_202, %c8_203], %151 {strides = array<i32>} : memref<286x144xf32, #tpu.memory_space<vmem>>, vector<39x8xf32>,
    %c2_204 = arith.constant 2 : index
    %c0_205 = arith.constant 0 : index
    %153 = tpu.strided_load %arg19[%c2_204, %c0_205] {strides = array<i32: 2, 1>} : memref<286x16xf32, #tpu.memory_space<vmem>>, vector<39x8xf32>
    %c0_206 = arith.constant 0 : index
    %c16_207 = arith.constant 16 : index
    %154 = vector.load %arg18[%c0_206, %c16_207] : memref<286x144xf32, #tpu.memory_space<vmem>>, vector<39x8xf32>
    tpu.vector_store %arg18[%c0_206, %c16_207], %153 {strides = array<i32>} : memref<286x144xf32, #tpu.memory_space<vmem>>, vector<39x8xf32>,
    %c18_208 = arith.constant 18 : index
    %c0_209 = arith.constant 0 : index
    %155 = tpu.strided_load %arg19[%c18_208, %c0_209] {strides = array<i32: 2, 1>} : memref<286x16xf32, #tpu.memory_space<vmem>>, vector<39x8xf32>
    %c0_210 = arith.constant 0 : index
    %c24_211 = arith.constant 24 : index
    %156 = vector.load %arg18[%c0_210, %c24_211] : memref<286x144xf32, #tpu.memory_space<vmem>>, vector<39x8xf32>
    tpu.vector_store %arg18[%c0_210, %c24_211], %155 {strides = array<i32>} : memref<286x144xf32, #tpu.memory_space<vmem>>, vector<39x8xf32>,
    %c19_212 = arith.constant 19 : index
    %c0_213 = arith.constant 0 : index
    %157 = tpu.strided_load %arg19[%c19_212, %c0_213] {strides = array<i32: 2, 1>} : memref<286x16xf32, #tpu.memory_space<vmem>>, vector<39x8xf32>
    %c0_214 = arith.constant 0 : index
    %c32_215 = arith.constant 32 : index
    %158 = vector.load %arg18[%c0_214, %c32_215] : memref<286x144xf32, #tpu.memory_space<vmem>>, vector<39x8xf32>
    tpu.vector_store %arg18[%c0_214, %c32_215], %157 {strides = array<i32>} : memref<286x144xf32, #tpu.memory_space<vmem>>, vector<39x8xf32>,
    %c20_216 = arith.constant 20 : index
    %c0_217 = arith.constant 0 : index
    %159 = tpu.strided_load %arg19[%c20_216, %c0_217] {strides = array<i32: 2, 1>} : memref<286x16xf32, #tpu.memory_space<vmem>>, vector<39x8xf32>
    %c0_218 = arith.constant 0 : index
    %c40_219 = arith.constant 40 : index
    %160 = vector.load %arg18[%c0_218, %c40_219] : memref<286x144xf32, #tpu.memory_space<vmem>>, vector<39x8xf32>
    tpu.vector_store %arg18[%c0_218, %c40_219], %159 {strides = array<i32>} : memref<286x144xf32, #tpu.memory_space<vmem>>, vector<39x8xf32>,
    %c36_220 = arith.constant 36 : index
    %c0_221 = arith.constant 0 : index
    %161 = tpu.strided_load %arg19[%c36_220, %c0_221] {strides = array<i32: 2, 1>} : memref<286x16xf32, #tpu.memory_space<vmem>>, vector<39x8xf32>
    %c0_222 = arith.constant 0 : index
    %c48_223 = arith.constant 48 : index
    %162 = vector.load %arg18[%c0_222, %c48_223] : memref<286x144xf32, #tpu.memory_space<vmem>>, vector<39x8xf32>
    tpu.vector_store %arg18[%c0_222, %c48_223], %161 {strides = array<i32>} : memref<286x144xf32, #tpu.memory_space<vmem>>, vector<39x8xf32>,
    %c37_224 = arith.constant 37 : index
    %c0_225 = arith.constant 0 : index
    %163 = tpu.strided_load %arg19[%c37_224, %c0_225] {strides = array<i32: 2, 1>} : memref<286x16xf32, #tpu.memory_space<vmem>>, vector<39x8xf32>
    %c0_226 = arith.constant 0 : index
    %c56_227 = arith.constant 56 : index
    %164 = vector.load %arg18[%c0_226, %c56_227] : memref<286x144xf32, #tpu.memory_space<vmem>>, vector<39x8xf32>
    tpu.vector_store %arg18[%c0_226, %c56_227], %163 {strides = array<i32>} : memref<286x144xf32, #tpu.memory_space<vmem>>, vector<39x8xf32>,
    %c38_228 = arith.constant 38 : index
    %c0_229 = arith.constant 0 : index
    %165 = tpu.strided_load %arg19[%c38_228, %c0_229] {strides = array<i32: 2, 1>} : memref<286x16xf32, #tpu.memory_space<vmem>>, vector<39x8xf32>
    %c0_230 = arith.constant 0 : index
    %c64_231 = arith.constant 64 : index
    %166 = vector.load %arg18[%c0_230, %c64_231] : memref<286x144xf32, #tpu.memory_space<vmem>>, vector<39x8xf32>
    tpu.vector_store %arg18[%c0_230, %c64_231], %165 {strides = array<i32>} : memref<286x144xf32, #tpu.memory_space<vmem>>, vector<39x8xf32>,
    %c0_232 = arith.constant 0 : index
    %c0_233 = arith.constant 0 : index
    %167 = vector.load %arg18[%c0_232, %c0_233] : memref<286x144xf32, #tpu.memory_space<vmem>>, vector<39x72xf32>
    %c0_234 = arith.constant 0 : index
    %c0_235 = arith.constant 0 : index
    %168 = vector.load %arg12[%c0_234, %c0_235] : memref<72x16xf32, #tpu.memory_space<vmem>>, vector<72x16xf32>
    %cst_236 = arith.constant dense<0.000000e+00> : vector<39x16xf32>
    %169 = tpu.matmul %167, %168, %cst_236 {dimension_numbers = #tpu.dot_dimension_numbers<[1], [0], [0], [1], [0, 0, 1, 1], [], []>} : vector<39x72xf32>, vector<72x16xf32>, vector<39x16xf32> -> vector<39x16xf32>
    %c0_237 = arith.constant 0 : index
    %c0_238 = arith.constant 0 : index
    %170 = vector.load %arg13[%c0_237, %c0_238] : memref<1x16xf32, #tpu.memory_space<vmem>>, vector<1x16xf32>
    %171 = vector.broadcast %170 : vector<1x16xf32> to vector<39x16xf32>
    %172 = arith.addf %169, %171 : vector<39x16xf32>
    %cst_239 = arith.constant 0.000000e+00 : f32
    %173 = vector.broadcast %cst_239 : f32 to vector<39x16xf32>
    %174 = arith.cmpf oge, %172, %173 : vector<39x16xf32>
    %cst_240 = arith.constant 0.00999999977 : f32
    %175 = vector.broadcast %cst_240 : f32 to vector<39x16xf32>
    %176 = arith.mulf %175, %172 : vector<39x16xf32>
    %177 = arith.select %174, %172, %176 : vector<39x16xi1>, vector<39x16xf32>
    %c0_241 = arith.constant 0 : index
    %c0_242 = arith.constant 0 : index
    %c0_243 = arith.constant 0 : index
    %178 = vector.load %arg14[%c0_241, %c0_242, %c0_243] : memref<1x39x16xf32, #tpu.memory_space<vmem>>, vector<1x39x16xf32>
    %179 = vector.shape_cast %178 : vector<1x39x16xf32> to vector<39x16xf32>
    %180 = vector.shape_cast %177 : vector<39x16xf32> to vector<1x39x16xf32>
    tpu.vector_store %arg14[%c0_241, %c0_242, %c0_243], %180 {strides = array<i32>} : memref<1x39x16xf32, #tpu.memory_space<vmem>>, vector<1x39x16xf32>,
    return
  }
  func.func @transform_0(%arg0: i32) -> (i32, i32, i32) {
    %c0_i32 = arith.constant 0 : i32
    %c0_i32_0 = arith.constant 0 : i32
    %c0_i32_1 = arith.constant 0 : i32
    return %arg0, %c0_i32, %c0_i32_0 : i32, i32, i32
  }
  func.func @transform_1(%arg0: i32) -> (i32, i32) {
    %c0_i32 = arith.constant 0 : i32
    %c0_i32_0 = arith.constant 0 : i32
    %c0_i32_1 = arith.constant 0 : i32
    return %c0_i32, %c0_i32_0 : i32, i32
  }
  func.func @transform_2(%arg0: i32) -> (i32, i32) {
    %c0_i32 = arith.constant 0 : i32
    %c0_i32_0 = arith.constant 0 : i32
    %c0_i32_1 = arith.constant 0 : i32
    return %c0_i32, %c0_i32_0 : i32, i32
  }
  func.func @transform_3(%arg0: i32) -> (i32, i32) {
    %c0_i32 = arith.constant 0 : i32
    %c0_i32_0 = arith.constant 0 : i32
    %c0_i32_1 = arith.constant 0 : i32
    return %c0_i32, %c0_i32_0 : i32, i32
  }
  func.func @transform_4(%arg0: i32) -> (i32, i32) {
    %c0_i32 = arith.constant 0 : i32
    %c0_i32_0 = arith.constant 0 : i32
    %c0_i32_1 = arith.constant 0 : i32
    return %c0_i32, %c0_i32_0 : i32, i32
  }
  func.func @transform_5(%arg0: i32) -> (i32, i32) {
    %c0_i32 = arith.constant 0 : i32
    %c0_i32_0 = arith.constant 0 : i32
    %c0_i32_1 = arith.constant 0 : i32
    return %c0_i32, %c0_i32_0 : i32, i32
  }
  func.func @transform_6(%arg0: i32) -> (i32, i32) {
    %c0_i32 = arith.constant 0 : i32
    %c0_i32_0 = arith.constant 0 : i32
    %c0_i32_1 = arith.constant 0 : i32
    return %c0_i32, %c0_i32_0 : i32, i32
  }
  func.func @transform_7(%arg0: i32) -> (i32, i32) {
    %c0_i32 = arith.constant 0 : i32
    %c0_i32_0 = arith.constant 0 : i32
    %c0_i32_1 = arith.constant 0 : i32
    return %c0_i32, %c0_i32_0 : i32, i32
  }
  func.func @transform_8(%arg0: i32) -> (i32, i32) {
    %c0_i32 = arith.constant 0 : i32
    %c0_i32_0 = arith.constant 0 : i32
    %c0_i32_1 = arith.constant 0 : i32
    return %c0_i32, %c0_i32_0 : i32, i32
  }
  func.func @transform_9(%arg0: i32) -> (i32, i32) {
    %c0_i32 = arith.constant 0 : i32
    %c0_i32_0 = arith.constant 0 : i32
    %c0_i32_1 = arith.constant 0 : i32
    return %c0_i32, %c0_i32_0 : i32, i32
  }
  func.func @transform_10(%arg0: i32) -> (i32, i32) {
    %c0_i32 = arith.constant 0 : i32
    %c0_i32_0 = arith.constant 0 : i32
    %c0_i32_1 = arith.constant 0 : i32
    return %c0_i32, %c0_i32_0 : i32, i32
  }
  func.func @transform_11(%arg0: i32) -> (i32, i32) {
    %c0_i32 = arith.constant 0 : i32
    %c0_i32_0 = arith.constant 0 : i32
    %c0_i32_1 = arith.constant 0 : i32
    return %c0_i32, %c0_i32_0 : i32, i32
  }
  func.func @transform_12(%arg0: i32) -> (i32, i32) {
    %c0_i32 = arith.constant 0 : i32
    %c0_i32_0 = arith.constant 0 : i32
    %c0_i32_1 = arith.constant 0 : i32
    return %c0_i32, %c0_i32_0 : i32, i32
  }
  func.func @transform_13(%arg0: i32) -> (i32, i32, i32) {
    %c0_i32 = arith.constant 0 : i32
    %c0_i32_0 = arith.constant 0 : i32
    %c0_i32_1 = arith.constant 0 : i32
    return %arg0, %c0_i32, %c0_i32_0 : i32, i32, i32
  }
  func.func @transform_14(%arg0: i32) -> (i32, i32, i32) {
    %c0_i32 = arith.constant 0 : i32
    %c0_i32_0 = arith.constant 0 : i32
    %c0_i32_1 = arith.constant 0 : i32
    return %arg0, %c0_i32, %c0_i32_0 : i32, i32, i32
  }
  func.func @transform_15(%arg0: i32) -> (i32, i32, i32) {
    %c0_i32 = arith.constant 0 : i32
    %c0_i32_0 = arith.constant 0 : i32
    %c0_i32_1 = arith.constant 0 : i32
    return %arg0, %c0_i32, %c0_i32_0 : i32, i32, i32
  }
}

</mosaic_0001>

<llo_original>
// kernel: encoder_forward.1
$region0: #{encoder_forward.1}
  #allocation0 [shape = 'u32[]', space=smem, size = 0x4, offset = 0x4, fixed_abs, tag = 'smem constant byte address 0x4 - core index']
  #allocation1 [shape = 'u32[144,128]{1,0:T(1,128)}', space=vmem, size = 0x12000, scoped, tag = 'internal scratch']
  #allocation2 [shape = 'f32[324,16]{1,0:T(8,128)}', space=vmem, size = 0x29000, scoped, tag = 'scratch operand']
  #allocation3 [shape = 'f32[286,144]{1,0:T(8,128)}', space=vmem, size = 0x48000, scoped, tag = 'scratch operand']
  #allocation4 [shape = 'f32[286,16]{1,0:T(8,128)}', space=vmem, size = 0x24000, scoped, tag = 'scratch operand']
  %s0 = inlined_call_operand.vmem [shape: f32[2,324,4], index: 0, kind: input, shape index: {}]
  %s1 = inlined_call_operand.vmem [shape: f32[36,4], index: 1, kind: input, shape index: {}]
  %s2 = inlined_call_operand.vmem [shape: f32[1,4], index: 2, kind: input, shape index: {}]
  %s3 = inlined_call_operand.vmem [shape: f32[286,1], index: 3, kind: input, shape index: {}]
  %s4 = inlined_call_operand.vmem [shape: f32[36,4], index: 4, kind: input, shape index: {}]
  %s5 = inlined_call_operand.vmem [shape: f32[1,4], index: 5, kind: input, shape index: {}]
  %s6 = inlined_call_operand.vmem [shape: f32[36,8], index: 6, kind: input, shape index: {}]
  %s7 = inlined_call_operand.vmem [shape: f32[1,8], index: 7, kind: input, shape index: {}]
  %s8 = inlined_call_operand.vmem [shape: f32[115,1], index: 8, kind: input, shape index: {}]
  %s9 = inlined_call_operand.vmem [shape: f32[72,8], index: 9, kind: input, shape index: {}]
  %s10 = inlined_call_operand.vmem [shape: f32[1,8], index: 10, kind: input, shape index: {}]
  %s11 = inlined_call_operand.vmem [shape: f32[72,16], index: 11, kind: input, shape index: {}]
  %s12 = inlined_call_operand.vmem [shape: f32[1,16], index: 12, kind: input, shape index: {}]
  %s13 = inlined_call_operand.vmem [shape: f32[2,39,16], index: 13, kind: output, shape index: {0}]
  %s14 = inlined_call_operand.vmem [shape: f32[2,286,4], index: 14, kind: output, shape index: {1}]
  %s15 = inlined_call_operand.vmem [shape: f32[2,115,8], index: 15, kind: output, shape index: {2}]
  %16 = xla_tuple %s13, %s14, %s15
  %s17 = sld [smem:[#allocation0]]
  $region101: #{encoder_forward.1} parent=0
    _
  %s19 = ssub.s32 1, %s17
  %s20 = scalar_select 0, %s19, %s17
  loop: start=0, step=1, limit=4
  $region2: #{encoder_forward.1} parent=0 // loop_pre_header
    _
  $region3: #{encoder_forward.1} parent=0 // loop_header
    %s22 = sphi 0, %s26
    %p23 = scmp.ge.s32.totalorder %s22, 4
    %s32 = sphi 0, %s34
    %s35 = sphi 0, %s32
    %s36 = sphi 0, %s35
    %s52 = sphi 0, %s36
    %s56 = sphi 0, %s56
    %s58 = sphi 0, %s56
    %s59 = sphi 0, %s58
    %s73 = sphi 0, %s59
    %s77 = sphi 0, %s77
    %s79 = sphi 0, %s77
    %s80 = sphi 0, %s79
    %s94 = sphi 0, %s80
    %s98 = sphi 0, %s98
    %s100 = sphi 0, %s98
    %s101 = sphi 0, %s100
    %s115 = sphi 0, %s101
    %s119 = sphi 0, %s119
    %s121 = sphi 0, %s119
    %s122 = sphi 0, %s121
    %s136 = sphi 0, %s122
    %s140 = sphi 0, %s140
    %s142 = sphi 0, %s140
    %s143 = sphi 0, %s142
    %s157 = sphi 0, %s143
    %s161 = sphi 0, %s161
    %s163 = sphi 0, %s161
    %s164 = sphi 0, %s163
    %s178 = sphi 0, %s164
    %s182 = sphi 0, %s182
    %s184 = sphi 0, %s182
    %s185 = sphi 0, %s184
    %s199 = sphi 0, %s185
    %s203 = sphi 0, %s203
    %s205 = sphi 0, %s203
    %s206 = sphi 0, %s205
    %s220 = sphi 0, %s206
    %s224 = sphi 0, %s224
    %s226 = sphi 0, %s224
    %s227 = sphi 0, %s226
    %s241 = sphi 0, %s227
    %s245 = sphi 0, %s245
    %s247 = sphi 0, %s245
    %s248 = sphi 0, %s247
    %s262 = sphi 0, %s248
    %s266 = sphi 0, %s266
    %s268 = sphi 0, %s266
    %s269 = sphi 0, %s268
    %s283 = sphi 0, %s269
    %s287 = sphi 0, %s287
    %s289 = sphi 0, %s287
    %s290 = sphi 0, %s289
    %s304 = sphi 0, %s290
    %s310 = sphi 0, %s312
    %s313 = sphi 0, %s310
    %s314 = sphi 0, %s313
    %s330 = sphi 0, %s314
    %s336 = sphi 0, %s338
    %s339 = sphi 0, %s336
    %s340 = sphi 0, %s339
    %s356 = sphi 0, %s340
    %s362 = sphi 0, %s364
    %s365 = sphi 0, %s362
    %s366 = sphi 0, %s365
    %s382 = sphi 0, %s366
  $region4: #{encoder_forward.1} parent=0 // loop_header_branch
    %25 = sbr.rel (%p23) target = $region8
  $region5: #{encoder_forward.1} parent=0 // loop_body
    %s27 = ssub.s32 %s22, 1
    %s28 = ssub.s32 %s22, 2
    %s29 = sadd.s32 %s22, 1
    %s30 = ssub.s32 %s22, %s29
    %p31 = scmp.eq.s32.totalorder %s30, 0
    %s33 = sadd.s32 %s32, 1
    %s34 = scalar_select %p31, %s32, %s33
    %p37 = pneg %p31
    %p38 = scmp.eq.s32.totalorder %s22, 1
    %p39 = por %p37, %p38
    %p40 = scmp.ne.s32.totalorder %s32, %s35
    %p41 = scmp.eq.s32.totalorder %s22, 0
    %p42 = por %p40, %p41
    %p43 = scmp.ne.s32.totalorder %s32, %s35
    %p44 = scmp.eq.s32.totalorder %s27, 1
    %p45 = por %p43, %p44
    %p46 = scmp.ne.s32.totalorder %s35, %s36
    %p47 = scmp.eq.s32.totalorder %s27, 0
    %p48 = por %p46, %p47
    %p49 = scmp.ne.s32.totalorder %s35, %s36
    %p50 = scmp.eq.s32.totalorder %s28, 1
    %p51 = por %p49, %p50
    %p53 = scmp.ne.s32.totalorder %s36, %s52
    %p54 = scmp.eq.s32.totalorder %s28, 0
    %p55 = por %p53, %p54
    %s57 = sadd.s32 %s56, 1
    %p60 = scmp.eq.s32.totalorder %s22, 1
    %p61 = scmp.ne.s32.totalorder %s56, %s58
    %p62 = scmp.eq.s32.totalorder %s22, 0
    %p63 = por %p61, %p62
    %p64 = scmp.ne.s32.totalorder %s56, %s58
    %p65 = scmp.eq.s32.totalorder %s27, 1
    %p66 = por %p64, %p65
    %p67 = scmp.ne.s32.totalorder %s58, %s59
    %p68 = scmp.eq.s32.totalorder %s27, 0
    %p69 = por %p67, %p68
    %p70 = scmp.ne.s32.totalorder %s58, %s59
    %p71 = scmp.eq.s32.totalorder %s28, 1
    %p72 = por %p70, %p71
    %p74 = scmp.ne.s32.totalorder %s59, %s73
    %p75 = scmp.eq.s32.totalorder %s28, 0
    %p76 = por %p74, %p75
    %s78 = sadd.s32 %s77, 1
    %p81 = scmp.eq.s32.totalorder %s22, 1
    %p82 = scmp.ne.s32.totalorder %s77, %s79
    %p83 = scmp.eq.s32.totalorder %s22, 0
    %p84 = por %p82, %p83
    %p85 = scmp.ne.s32.totalorder %s77, %s79
    %p86 = scmp.eq.s32.totalorder %s27, 1
    %p87 = por %p85, %p86
    %p88 = scmp.ne.s32.totalorder %s79, %s80
    %p89 = scmp.eq.s32.totalorder %s27, 0
    %p90 = por %p88, %p89
    %p91 = scmp.ne.s32.totalorder %s79, %s80
    %p92 = scmp.eq.s32.totalorder %s28, 1
    %p93 = por %p91, %p92
    %p95 = scmp.ne.s32.totalorder %s80, %s94
    %p96 = scmp.eq.s32.totalorder %s28, 0
    %p97 = por %p95, %p96
    %s99 = sadd.s32 %s98, 1
    %p102 = scmp.eq.s32.totalorder %s22, 1
    %p103 = scmp.ne.s32.totalorder %s98, %s100
    %p104 = scmp.eq.s32.totalorder %s22, 0
    %p105 = por %p103, %p104
    %p106 = scmp.ne.s32.totalorder %s98, %s100
    %p107 = scmp.eq.s32.totalorder %s27, 1
    %p108 = por %p106, %p107
    %p109 = scmp.ne.s32.totalorder %s100, %s101
    %p110 = scmp.eq.s32.totalorder %s27, 0
    %p111 = por %p109, %p110
    %p112 = scmp.ne.s32.totalorder %s100, %s101
    %p113 = scmp.eq.s32.totalorder %s28, 1
    %p114 = por %p112, %p113
    %p116 = scmp.ne.s32.totalorder %s101, %s115
    %p117 = scmp.eq.s32.totalorder %s28, 0
    %p118 = por %p116, %p117
    %s120 = sadd.s32 %s119, 1
    %p123 = scmp.eq.s32.totalorder %s22, 1
    %p124 = scmp.ne.s32.totalorder %s119, %s121
    %p125 = scmp.eq.s32.totalorder %s22, 0
    %p126 = por %p124, %p125
    %p127 = scmp.ne.s32.totalorder %s119, %s121
    %p128 = scmp.eq.s32.totalorder %s27, 1
    %p129 = por %p127, %p128
    %p130 = scmp.ne.s32.totalorder %s121, %s122
    %p131 = scmp.eq.s32.totalorder %s27, 0
    %p132 = por %p130, %p131
    %p133 = scmp.ne.s32.totalorder %s121, %s122
    %p134 = scmp.eq.s32.totalorder %s28, 1
    %p135 = por %p133, %p134
    %p137 = scmp.ne.s32.totalorder %s122, %s136
    %p138 = scmp.eq.s32.totalorder %s28, 0
    %p139 = por %p137, %p138
    %s141 = sadd.s32 %s140, 1
    %p144 = scmp.eq.s32.totalorder %s22, 1
    %p145 = scmp.ne.s32.totalorder %s140, %s142
    %p146 = scmp.eq.s32.totalorder %s22, 0
    %p147 = por %p145, %p146
    %p148 = scmp.ne.s32.totalorder %s140, %s142
    %p149 = scmp.eq.s32.totalorder %s27, 1
    %p150 = por %p148, %p149
    %p151 = scmp.ne.s32.totalorder %s142, %s143
    %p152 = scmp.eq.s32.totalorder %s27, 0
    %p153 = por %p151, %p152
    %p154 = scmp.ne.s32.totalorder %s142, %s143
    %p155 = scmp.eq.s32.totalorder %s28, 1
    %p156 = por %p154, %p155
    %p158 = scmp.ne.s32.totalorder %s143, %s157
    %p159 = scmp.eq.s32.totalorder %s28, 0
    %p160 = por %p158, %p159
    %s162 = sadd.s32 %s161, 1
    %p165 = scmp.eq.s32.totalorder %s22, 1
    %p166 = scmp.ne.s32.totalorder %s161, %s163
    %p167 = scmp.eq.s32.totalorder %s22, 0
    %p168 = por %p166, %p167
    %p169 = scmp.ne.s32.totalorder %s161, %s163
    %p170 = scmp.eq.s32.totalorder %s27, 1
    %p171 = por %p169, %p170
    %p172 = scmp.ne.s32.totalorder %s163, %s164
    %p173 = scmp.eq.s32.totalorder %s27, 0
    %p174 = por %p172, %p173
    %p175 = scmp.ne.s32.totalorder %s163, %s164
    %p176 = scmp.eq.s32.totalorder %s28, 1
    %p177 = por %p175, %p176
    %p179 = scmp.ne.s32.totalorder %s164, %s178
    %p180 = scmp.eq.s32.totalorder %s28, 0
    %p181 = por %p179, %p180
    %s183 = sadd.s32 %s182, 1
    %p186 = scmp.eq.s32.totalorder %s22, 1
    %p187 = scmp.ne.s32.totalorder %s182, %s184
    %p188 = scmp.eq.s32.totalorder %s22, 0
    %p189 = por %p187, %p188
    %p190 = scmp.ne.s32.totalorder %s182, %s184
    %p191 = scmp.eq.s32.totalorder %s27, 1
    %p192 = por %p190, %p191
    %p193 = scmp.ne.s32.totalorder %s184, %s185
    %p194 = scmp.eq.s32.totalorder %s27, 0
    %p195 = por %p193, %p194
    %p196 = scmp.ne.s32.totalorder %s184, %s185
    %p197 = scmp.eq.s32.totalorder %s28, 1
    %p198 = por %p196, %p197
    %p200 = scmp.ne.s32.totalorder %s185, %s199
    %p201 = scmp.eq.s32.totalorder %s28, 0
    %p202 = por %p200, %p201
    %s204 = sadd.s32 %s203, 1
    %p207 = scmp.eq.s32.totalorder %s22, 1
    %p208 = scmp.ne.s32.totalorder %s203, %s205
    %p209 = scmp.eq.s32.totalorder %s22, 0
    %p210 = por %p208, %p209
    %p211 = scmp.ne.s32.totalorder %s203, %s205
    %p212 = scmp.eq.s32.totalorder %s27, 1
    %p213 = por %p211, %p212
    %p214 = scmp.ne.s32.totalorder %s205, %s206
    %p215 = scmp.eq.s32.totalorder %s27, 0
    %p216 = por %p214, %p215
    %p217 = scmp.ne.s32.totalorder %s205, %s206
    %p218 = scmp.eq.s32.totalorder %s28, 1
    %p219 = por %p217, %p218
    %p221 = scmp.ne.s32.totalorder %s206, %s220
    %p222 = scmp.eq.s32.totalorder %s28, 0
    %p223 = por %p221, %p222
    %s225 = sadd.s32 %s224, 1
    %p228 = scmp.eq.s32.totalorder %s22, 1
    %p229 = scmp.ne.s32.totalorder %s224, %s226
    %p230 = scmp.eq.s32.totalorder %s22, 0
    %p231 = por %p229, %p230
    %p232 = scmp.ne.s32.totalorder %s224, %s226
    %p233 = scmp.eq.s32.totalorder %s27, 1
    %p234 = por %p232, %p233
    %p235 = scmp.ne.s32.totalorder %s226, %s227
    %p236 = scmp.eq.s32.totalorder %s27, 0
    %p237 = por %p235, %p236
    %p238 = scmp.ne.s32.totalorder %s226, %s227
    %p239 = scmp.eq.s32.totalorder %s28, 1
    %p240 = por %p238, %p239
    %p242 = scmp.ne.s32.totalorder %s227, %s241
    %p243 = scmp.eq.s32.totalorder %s28, 0
    %p244 = por %p242, %p243
    %s246 = sadd.s32 %s245, 1
    %p249 = scmp.eq.s32.totalorder %s22, 1
    %p250 = scmp.ne.s32.totalorder %s245, %s247
    %p251 = scmp.eq.s32.totalorder %s22, 0
    %p252 = por %p250, %p251
    %p253 = scmp.ne.s32.totalorder %s245, %s247
    %p254 = scmp.eq.s32.totalorder %s27, 1
    %p255 = por %p253, %p254
    %p256 = scmp.ne.s32.totalorder %s247, %s248
    %p257 = scmp.eq.s32.totalorder %s27, 0
    %p258 = por %p256, %p257
    %p259 = scmp.ne.s32.totalorder %s247, %s248
    %p260 = scmp.eq.s32.totalorder %s28, 1
    %p261 = por %p259, %p260
    %p263 = scmp.ne.s32.totalorder %s248, %s262
    %p264 = scmp.eq.s32.totalorder %s28, 0
    %p265 = por %p263, %p264
    %s267 = sadd.s32 %s266, 1
    %p270 = scmp.eq.s32.totalorder %s22, 1
    %p271 = scmp.ne.s32.totalorder %s266, %s268
    %p272 = scmp.eq.s32.totalorder %s22, 0
    %p273 = por %p271, %p272
    %p274 = scmp.ne.s32.totalorder %s266, %s268
    %p275 = scmp.eq.s32.totalorder %s27, 1
    %p276 = por %p274, %p275
    %p277 = scmp.ne.s32.totalorder %s268, %s269
    %p278 = scmp.eq.s32.totalorder %s27, 0
    %p279 = por %p277, %p278
    %p280 = scmp.ne.s32.totalorder %s268, %s269
    %p281 = scmp.eq.s32.totalorder %s28, 1
    %p282 = por %p280, %p281
    %p284 = scmp.ne.s32.totalorder %s269, %s283
    %p285 = scmp.eq.s32.totalorder %s28, 0
    %p286 = por %p284, %p285
    %s288 = sadd.s32 %s287, 1
    %p291 = scmp.eq.s32.totalorder %s22, 1
    %p292 = scmp.ne.s32.totalorder %s287, %s289
    %p293 = scmp.eq.s32.totalorder %s22, 0
    %p294 = por %p292, %p293
    %p295 = scmp.ne.s32.totalorder %s287, %s289
    %p296 = scmp.eq.s32.totalorder %s27, 1
    %p297 = por %p295, %p296
    %p298 = scmp.ne.s32.totalorder %s289, %s290
    %p299 = scmp.eq.s32.totalorder %s27, 0
    %p300 = por %p298, %p299
    %p301 = scmp.ne.s32.totalorder %s289, %s290
    %p302 = scmp.eq.s32.totalorder %s28, 1
    %p303 = por %p301, %p302
    %p305 = scmp.ne.s32.totalorder %s290, %s304
    %p306 = scmp.eq.s32.totalorder %s28, 0
    %p307 = por %p305, %p306
    %s308 = ssub.s32 %s22, %s29
    %p309 = scmp.eq.s32.totalorder %s308, 0
    %s311 = sadd.s32 %s310, 1
    %s312 = scalar_select %p309, %s310, %s311
    %p315 = pneg %p309
    %p316 = scmp.eq.s32.totalorder %s22, 1
    %p317 = por %p315, %p316
    %p318 = scmp.ne.s32.totalorder %s310, %s313
    %p319 = scmp.eq.s32.totalorder %s22, 0
    %p320 = por %p318, %p319
    %p321 = scmp.ne.s32.totalorder %s310, %s313
    %p322 = scmp.eq.s32.totalorder %s27, 1
    %p323 = por %p321, %p322
    %p324 = scmp.ne.s32.totalorder %s313, %s314
    %p325 = scmp.eq.s32.totalorder %s27, 0
    %p326 = por %p324, %p325
    %p327 = scmp.ne.s32.totalorder %s313, %s314
    %p328 = scmp.eq.s32.totalorder %s28, 1
    %p329 = por %p327, %p328
    %p331 = scmp.ne.s32.totalorder %s314, %s330
    %p332 = scmp.eq.s32.totalorder %s28, 0
    %p333 = por %p331, %p332
    %s334 = ssub.s32 %s22, %s29
    %p335 = scmp.eq.s32.totalorder %s334, 0
    %s337 = sadd.s32 %s336, 1
    %s338 = scalar_select %p335, %s336, %s337
    %p341 = pneg %p335
    %p342 = scmp.eq.s32.totalorder %s22, 1
    %p343 = por %p341, %p342
    %p344 = scmp.ne.s32.totalorder %s336, %s339
    %p345 = scmp.eq.s32.totalorder %s22, 0
    %p346 = por %p344, %p345
    %p347 = scmp.ne.s32.totalorder %s336, %s339
    %p348 = scmp.eq.s32.totalorder %s27, 1
    %p349 = por %p347, %p348
    %p350 = scmp.ne.s32.totalorder %s339, %s340
    %p351 = scmp.eq.s32.totalorder %s27, 0
    %p352 = por %p350, %p351
    %p353 = scmp.ne.s32.totalorder %s339, %s340
    %p354 = scmp.eq.s32.totalorder %s28, 1
    %p355 = por %p353, %p354
    %p357 = scmp.ne.s32.totalorder %s340, %s356
    %p358 = scmp.eq.s32.totalorder %s28, 0
    %p359 = por %p357, %p358
    %s360 = ssub.s32 %s22, %s29
    %p361 = scmp.eq.s32.totalorder %s360, 0
    %s363 = sadd.s32 %s362, 1
    %s364 = scalar_select %p361, %s362, %s363
    %p367 = pneg %p361
    %p368 = scmp.eq.s32.totalorder %s22, 1
    %p369 = por %p367, %p368
    %p370 = scmp.ne.s32.totalorder %s362, %s365
    %p371 = scmp.eq.s32.totalorder %s22, 0
    %p372 = por %p370, %p371
    %p373 = scmp.ne.s32.totalorder %s362, %s365
    %p374 = scmp.eq.s32.totalorder %s27, 1
    %p375 = por %p373, %p374
    %p376 = scmp.ne.s32.totalorder %s365, %s366
    %p377 = scmp.eq.s32.totalorder %s27, 0
    %p378 = por %p376, %p377
    %p379 = scmp.ne.s32.totalorder %s365, %s366
    %p380 = scmp.eq.s32.totalorder %s28, 1
    %p381 = por %p379, %p380
    %p383 = scmp.ne.s32.totalorder %s366, %s382
    %p384 = scmp.eq.s32.totalorder %s28, 0
    %p385 = por %p383, %p384
    %p386 = scmp.le.s32.totalorder 1, %s22
    %p387 = scmp.lt.s32.totalorder %s22, 3
    %p388 = pnand %p386, %p387
    %p389 = pneg %p388
    // Predicated region
    $region9: #{encoder_forward.1} parent=5 // pred_check
      _
    $region10: #{encoder_forward.1} parent=5 // pred_check_branch
      %391 = sbr.rel (%p388) target = $region12
    $region11: #{encoder_forward.1} parent=5 // pred_region
      %s392 = ssub.s32 %s22, 1
      // Predicated region
      $region13: #{encoder_forward.1} parent=11 // pred_check
        %p393 = pneg %p69
      $region14: #{encoder_forward.1} parent=11 // pred_check_branch
        %395 = sbr.rel (%p393) target = $region16
      $region15: #{encoder_forward.1} parent=11 // pred_region
        _
      $region16: #{encoder_forward.1} parent=11 // pred_fallthru
        _
      // Predicated region
      $region17: #{encoder_forward.1} parent=11 // pred_check
        %p396 = pneg %p90
      $region18: #{encoder_forward.1} parent=11 // pred_check_branch
        %398 = sbr.rel (%p396) target = $region20
      $region19: #{encoder_forward.1} parent=11 // pred_region
        _
      $region20: #{encoder_forward.1} parent=11 // pred_fallthru
        _
      // Predicated region
      $region21: #{encoder_forward.1} parent=11 // pred_check
        %p399 = pneg %p111
      $region22: #{encoder_forward.1} parent=11 // pred_check_branch
        %401 = sbr.rel (%p399) target = $region24
      $region23: #{encoder_forward.1} parent=11 // pred_region
        _
      $region24: #{encoder_forward.1} parent=11 // pred_fallthru
        _
      // Predicated region
      $region25: #{encoder_forward.1} parent=11 // pred_check
        %p402 = pneg %p132
      $region26: #{encoder_forward.1} parent=11 // pred_check_branch
        %404 = sbr.rel (%p402) target = $region28
      $region27: #{encoder_forward.1} parent=11 // pred_region
        _
      $region28: #{encoder_forward.1} parent=11 // pred_fallthru
        _
      // Predicated region
      $region29: #{encoder_forward.1} parent=11 // pred_check
        %p405 = pneg %p153
      $region30: #{encoder_forward.1} parent=11 // pred_check_branch
        %407 = sbr.rel (%p405) target = $region32
      $region31: #{encoder_forward.1} parent=11 // pred_region
        _
      $region32: #{encoder_forward.1} parent=11 // pred_fallthru
        _
      // Predicated region
      $region33: #{encoder_forward.1} parent=11 // pred_check
        %p408 = pneg %p174
      $region34: #{encoder_forward.1} parent=11 // pred_check_branch
        %410 = sbr.rel (%p408) target = $region36
      $region35: #{encoder_forward.1} parent=11 // pred_region
        _
      $region36: #{encoder_forward.1} parent=11 // pred_fallthru
        _
      // Predicated region
      $region37: #{encoder_forward.1} parent=11 // pred_check
        %p411 = pneg %p195
      $region38: #{encoder_forward.1} parent=11 // pred_check_branch
        %413 = sbr.rel (%p411) target = $region40
      $region39: #{encoder_forward.1} parent=11 // pred_region
        _
      $region40: #{encoder_forward.1} parent=11 // pred_fallthru
        _
      // Predicated region
      $region41: #{encoder_forward.1} parent=11 // pred_check
        %p414 = pneg %p216
      $region42: #{encoder_forward.1} parent=11 // pred_check_branch
        %416 = sbr.rel (%p414) target = $region44
      $region43: #{encoder_forward.1} parent=11 // pred_region
        _
      $region44: #{encoder_forward.1} parent=11 // pred_fallthru
        _
      // Predicated region
      $region45: #{encoder_forward.1} parent=11 // pred_check
        %p417 = pneg %p237
      $region46: #{encoder_forward.1} parent=11 // pred_check_branch
        %419 = sbr.rel (%p417) target = $region48
      $region47: #{encoder_forward.1} parent=11 // pred_region
        _
      $region48: #{encoder_forward.1} parent=11 // pred_fallthru
        _
      // Predicated region
      $region49: #{encoder_forward.1} parent=11 // pred_check
        %p420 = pneg %p258
      $region50: #{encoder_forward.1} parent=11 // pred_check_branch
        %422 = sbr.rel (%p420) target = $region52
      $region51: #{encoder_forward.1} parent=11 // pred_region
        _
      $region52: #{encoder_forward.1} parent=11 // pred_fallthru
        _
      // Predicated region
      $region53: #{encoder_forward.1} parent=11 // pred_check
        %p423 = pneg %p279
      $region54: #{encoder_forward.1} parent=11 // pred_check_branch
        %425 = sbr.rel (%p423) target = $region56
      $region55: #{encoder_forward.1} parent=11 // pred_region
        _
      $region56: #{encoder_forward.1} parent=11 // pred_fallthru
        _
      // Predicated region
      $region57: #{encoder_forward.1} parent=11 // pred_check
        %p426 = pneg %p300
      $region58: #{encoder_forward.1} parent=11 // pred_check_branch
        %428 = sbr.rel (%p426) target = $region60
      $region59: #{encoder_forward.1} parent=11 // pred_region
        _
      $region60: #{encoder_forward.1} parent=11 // pred_fallthru
        _
    $region12: #{encoder_forward.1} parent=5 // pred_fallthru
      _
    %p429 = scmp.lt.s32.totalorder %s22, 2
    // Predicated region
    $region61: #{encoder_forward.1} parent=5 // pred_check
      %p430 = pneg %p429
    $region62: #{encoder_forward.1} parent=5 // pred_check_branch
      %432 = sbr.rel (%p430) target = $region64
    $region63: #{encoder_forward.1} parent=5 // pred_region
      // Predicated region
      $region65: #{encoder_forward.1} parent=63 // pred_check
        %p433 = pneg %p42
      $region66: #{encoder_forward.1} parent=63 // pred_check_branch
        %435 = sbr.rel (%p433) target = $region68
      $region67: #{encoder_forward.1} parent=63 // pred_region
        %p436 = scmp.lt.s32.totalorder %s22, 1
        %s437 = scalar_select %p436, %s22, 1
        %s438 = smul.addr %s437, 41
        %s439 = smul.addr %s438, 8
        %s440 = scalar_lea.vmem %s0, %s439
      $region68: #{encoder_forward.1} parent=63 // pred_fallthru
        _
    $region64: #{encoder_forward.1} parent=5 // pred_fallthru
      _
    %p441 = scmp.le.s32.totalorder 1, %s22
    %p442 = scmp.lt.s32.totalorder %s22, 3
    %p443 = pnand %p441, %p442
    %p444 = pneg %p443
    // Predicated region
    $region69: #{encoder_forward.1} parent=5 // pred_check
      _
    $region70: #{encoder_forward.1} parent=5 // pred_check_branch
      %446 = sbr.rel (%p443) target = $region72
    $region71: #{encoder_forward.1} parent=5 // pred_region
      %s447 = ssub.s32 %s22, 1
      %p448 = scmp.lt.s32.totalorder %s27, 1
      %s449 = scalar_select %p448, %s27, 1
      %s450 = smul.addr %s449, 41
      %s451 = smul.addr %s450, 8
      %s452 = scalar_lea.vmem %s0, %s451
      %p453 = pneg %p48
      %p454 = pneg %p45
      %p455 = pneg %p69
      %p456 = pneg %p66
      %p457 = pneg %p90
      %p458 = pneg %p87
      %p459 = pneg %p111
      %p460 = pneg %p108
      %p461 = pneg %p132
      %p462 = pneg %p129
      %p463 = pneg %p153
      %p464 = pneg %p150
      %p465 = pneg %p174
      %p466 = pneg %p171
      %p467 = pneg %p195
      %p468 = pneg %p192
      %p469 = pneg %p216
      %p470 = pneg %p213
      %p471 = pneg %p237
      %p472 = pneg %p234
      %p473 = pneg %p258
      %p474 = pneg %p255
      %p475 = pneg %p279
      %p476 = pneg %p276
      %p477 = pneg %p300
      %p478 = pneg %p297
      %p479 = pneg %p326
      %p480 = pneg %p323
      %p481 = scmp.lt.s32.totalorder %s27, 1
      %s482 = scalar_select %p481, %s27, 1
      %s483 = smul.addr %s482, 5
      %s484 = smul.addr %s483, 8
      %s485 = scalar_lea.vmem %s13, %s484
      %p486 = pneg %p352
      %p487 = pneg %p349
      %p488 = scmp.lt.s32.totalorder %s27, 1
      %s489 = scalar_select %p488, %s27, 1
      %s490 = smul.addr %s489, 36
      %s491 = smul.addr %s490, 8
      %s492 = scalar_lea.vmem %s14, %s491
      %p493 = pneg %p378
      %p494 = pneg %p375
      %p495 = scmp.lt.s32.totalorder %s27, 1
      %s496 = scalar_select %p495, %s27, 1
      %s497 = smul.addr %s496, 15
      %s498 = smul.addr %s497, 8
      %s499 = scalar_lea.vmem %s15, %s498
      %p500 = scmp.lt.s32.totalorder %s27, 1
      %s501 = scalar_select %p500, %s27, 1
      %s502 = smul.addr %s501, 41
      %s503 = smul.addr %s502, 8
      %s504 = scalar_lea.vmem %s0, %s503
      %p505 = scmp.lt.s32.totalorder %s27, 1
      %s506 = scalar_select %p505, %s27, 1
      %s507 = smul.addr %s506, 5
      %s508 = smul.addr %s507, 8
      %s509 = scalar_lea.vmem %s13, %s508
      %p510 = scmp.lt.s32.totalorder %s27, 1
      %s511 = scalar_select %p510, %s27, 1
      %s512 = smul.addr %s511, 36
      %s513 = smul.addr %s512, 8
      %s514 = scalar_lea.vmem %s14, %s513
      %p515 = scmp.lt.s32.totalorder %s27, 1
      %s516 = scalar_select %p515, %s27, 1
      %s517 = smul.addr %s516, 15
      %s518 = smul.addr %s517, 8
      %s519 = scalar_lea.vmem %s15, %s518
      %v520 = vld [vmem:[%s504] sm:$0xff]
      %v521 = vld [vmem:[%s504 + $0x8] sm:$0xff]
      %v522 = vld [vmem:[%s504 + $0x10] sm:$0xff]
      %v523 = vld [vmem:[%s504 + $0x18] sm:$0xff]
      %v524 = vld [vmem:[%s504 + $0x20] sm:$0xff]
      %v525 = vld [vmem:[%s504 + $0x28] sm:$0xff]
      %v526 = vld [vmem:[%s504 + $0x30] sm:$0xff]
      %v527 = vld [vmem:[%s504 + $0x38] sm:$0xff]
      %v528 = vld [vmem:[%s504 + $0x40] sm:$0xff]
      %v529 = vld [vmem:[%s504 + $0x48] sm:$0xff]
      %v530 = vld [vmem:[%s504 + $0x50] sm:$0xff]
      %v531 = vld [vmem:[%s504 + $0x58] sm:$0xff]
      %v532 = vld [vmem:[%s504 + $0x60] sm:$0xff]
      %v533 = vld [vmem:[%s504 + $0x68] sm:$0xff]
      %v534 = vld [vmem:[%s504 + $0x70] sm:$0xff]
      %v535 = vld [vmem:[%s504 + $0x78] sm:$0xff]
      %v536 = vld [vmem:[%s504 + $0x80] sm:$0xff]
      %v537 = vld [vmem:[%s504 + $0x88] sm:$0xff]
      %v538 = vld [vmem:[%s504 + $0x90] sm:$0xff]
      %v539 = vld [vmem:[%s504 + $0x98] sm:$0xff]
      %v540 = vld [vmem:[%s504 + $0xa0] sm:$0xff]
      %v541 = vld [vmem:[%s504 + $0xa8] sm:$0xff]
      %v542 = vld [vmem:[%s504 + $0xb0] sm:$0xff]
      %v543 = vld [vmem:[%s504 + $0xb8] sm:$0xff]
      %v544 = vld [vmem:[%s504 + $0xc0] sm:$0xff]
      %v545 = vld [vmem:[%s504 + $0xc8] sm:$0xff]
      %v546 = vld [vmem:[%s504 + $0xd0] sm:$0xff]
      %v547 = vld [vmem:[%s504 + $0xd8] sm:$0xff]
      %v548 = vld [vmem:[%s504 + $0xe0] sm:$0xff]
      %v549 = vld [vmem:[%s504 + $0xe8] sm:$0xff]
      %v550 = vld [vmem:[%s504 + $0xf0] sm:$0xff]
      %v551 = vld [vmem:[%s504 + $0xf8] sm:$0xff]
      %v552 = vld [vmem:[%s504 + $0x100] sm:$0xff]
      %v553 = vld [vmem:[%s504 + $0x108] sm:$0xff]
      %v554 = vld [vmem:[%s504 + $0x110] sm:$0xff]
      %v555 = vld [vmem:[%s504 + $0x118] sm:$0x3f]
      %vm556 = vcmask 31744
      %557 = vst.msk [vmem:[#allocation3] sm:$0xff] %vm556, %v520
      %558 = vst.msk [vmem:[#allocation3 + $0x10] sm:$0xff] %vm556, %v521
      %559 = vst.msk [vmem:[#allocation3 + $0x20] sm:$0xff] %vm556, %v522
      %560 = vst.msk [vmem:[#allocation3 + $0x30] sm:$0xff] %vm556, %v523
      %561 = vst.msk [vmem:[#allocation3 + $0x40] sm:$0xff] %vm556, %v524
      %562 = vst.msk [vmem:[#allocation3 + $0x50] sm:$0xff] %vm556, %v525
      %563 = vst.msk [vmem:[#allocation3 + $0x60] sm:$0xff] %vm556, %v526
      %564 = vst.msk [vmem:[#allocation3 + $0x70] sm:$0xff] %vm556, %v527
      %565 = vst.msk [vmem:[#allocation3 + $0x80] sm:$0xff] %vm556, %v528
      %566 = vst.msk [vmem:[#allocation3 + $0x90] sm:$0xff] %vm556, %v529
      %567 = vst.msk [vmem:[#allocation3 + $0xa0] sm:$0xff] %vm556, %v530
      %568 = vst.msk [vmem:[#allocation3 + $0xb0] sm:$0xff] %vm556, %v531
      %569 = vst.msk [vmem:[#allocation3 + $0xc0] sm:$0xff] %vm556, %v532
      %570 = vst.msk [vmem:[#allocation3 + $0xd0] sm:$0xff] %vm556, %v533
      %571 = vst.msk [vmem:[#allocation3 + $0xe0] sm:$0xff] %vm556, %v534
      %572 = vst.msk [vmem:[#allocation3 + $0xf0] sm:$0xff] %vm556, %v535
      %573 = vst.msk [vmem:[#allocation3 + $0x100] sm:$0xff] %vm556, %v536
      %574 = vst.msk [vmem:[#allocation3 + $0x110] sm:$0xff] %vm556, %v537
      %575 = vst.msk [vmem:[#allocation3 + $0x120] sm:$0xff] %vm556, %v538
      %576 = vst.msk [vmem:[#allocation3 + $0x130] sm:$0xff] %vm556, %v539
      %577 = vst.msk [vmem:[#allocation3 + $0x140] sm:$0xff] %vm556, %v540
      %578 = vst.msk [vmem:[#allocation3 + $0x150] sm:$0xff] %vm556, %v541
      %579 = vst.msk [vmem:[#allocation3 + $0x160] sm:$0xff] %vm556, %v542
      %580 = vst.msk [vmem:[#allocation3 + $0x170] sm:$0xff] %vm556, %v543
      %581 = vst.msk [vmem:[#allocation3 + $0x180] sm:$0xff] %vm556, %v544
      %582 = vst.msk [vmem:[#allocation3 + $0x190] sm:$0xff] %vm556, %v545
      %583 = vst.msk [vmem:[#allocation3 + $0x1a0] sm:$0xff] %vm556, %v546
      %584 = vst.msk [vmem:[#allocation3 + $0x1b0] sm:$0xff] %vm556, %v547
      %585 = vst.msk [vmem:[#allocation3 + $0x1c0] sm:$0xff] %vm556, %v548
      %586 = vst.msk [vmem:[#allocation3 + $0x1d0] sm:$0xff] %vm556, %v549
      %587 = vst.msk [vmem:[#allocation3 + $0x1e0] sm:$0xff] %vm556, %v550
      %588 = vst.msk [vmem:[#allocation3 + $0x1f0] sm:$0xff] %vm556, %v551
      %589 = vst.msk [vmem:[#allocation3 + $0x200] sm:$0xff] %vm556, %v552
      %590 = vst.msk [vmem:[#allocation3 + $0x210] sm:$0xff] %vm556, %v553
      %591 = vst.msk [vmem:[#allocation3 + $0x220] sm:$0xff] %vm556, %v554
      %vm592 = vcmask 29696
      %593 = vst.msk [vmem:[#allocation3 + $0x230] sm:$0x3f] %vm592, %v555
      %v594 = vld [vmem:[%s504 + $0x1] sm:$0xff]
      %v595 = vld [vmem:[%s504 + $0x9] sm:$0xff]
      %v596 = vld [vmem:[%s504 + $0x11] sm:$0xff]
      %v597 = vld [vmem:[%s504 + $0x19] sm:$0xff]
      %v598 = vld [vmem:[%s504 + $0x21] sm:$0xff]
      %v599 = vld [vmem:[%s504 + $0x29] sm:$0xff]
      %v600 = vld [vmem:[%s504 + $0x31] sm:$0xff]
      %v601 = vld [vmem:[%s504 + $0x39] sm:$0xff]
      %v602 = vld [vmem:[%s504 + $0x41] sm:$0xff]
      %v603 = vld [vmem:[%s504 + $0x49] sm:$0xff]
      %v604 = vld [vmem:[%s504 + $0x51] sm:$0xff]
      %v605 = vld [vmem:[%s504 + $0x59] sm:$0xff]
      %v606 = vld [vmem:[%s504 + $0x61] sm:$0xff]
      %v607 = vld [vmem:[%s504 + $0x69] sm:$0xff]
      %v608 = vld [vmem:[%s504 + $0x71] sm:$0xff]
      %v609 = vld [vmem:[%s504 + $0x79] sm:$0xff]
      %v610 = vld [vmem:[%s504 + $0x81] sm:$0xff]
      %v611 = vld [vmem:[%s504 + $0x89] sm:$0xff]
      %v612 = vld [vmem:[%s504 + $0x91] sm:$0xff]
      %v613 = vld [vmem:[%s504 + $0x99] sm:$0xff]
      %v614 = vld [vmem:[%s504 + $0xa1] sm:$0xff]
      %v615 = vld [vmem:[%s504 + $0xa9] sm:$0xff]
      %v616 = vld [vmem:[%s504 + $0xb1] sm:$0xff]
      %v617 = vld [vmem:[%s504 + $0xb9] sm:$0xff]
      %v618 = vld [vmem:[%s504 + $0xc1] sm:$0xff]
      %v619 = vld [vmem:[%s504 + $0xc9] sm:$0xff]
      %v620 = vld [vmem:[%s504 + $0xd1] sm:$0xff]
      %v621 = vld [vmem:[%s504 + $0xd9] sm:$0xff]
      %v622 = vld [vmem:[%s504 + $0xe1] sm:$0xff]
      %v623 = vld [vmem:[%s504 + $0xe9] sm:$0xff]
      %v624 = vld [vmem:[%s504 + $0xf1] sm:$0xff]
      %v625 = vld [vmem:[%s504 + $0xf9] sm:$0xff]
      %v626 = vld [vmem:[%s504 + $0x101] sm:$0xff]
      %v627 = vld [vmem:[%s504 + $0x109] sm:$0xff]
      %v628 = vld [vmem:[%s504 + $0x111] sm:$0xff]
      %v629 = vld [vmem:[%s504 + $0x119] sm:$0x3f]
      %666 = vrot.lane.b32.xlu0 %v594, 4
      %v667 = vpop.permute.xlu0 %666
      %668 = vrot.lane.b32.xlu0 %v595, 4
      %v669 = vpop.permute.xlu0 %668
      %670 = vrot.lane.b32.xlu0 %v596, 4
      %v671 = vpop.permute.xlu0 %670
      %672 = vrot.lane.b32.xlu0 %v597, 4
      %v673 = vpop.permute.xlu0 %672
      %674 = vrot.lane.b32.xlu0 %v598, 4
      %v675 = vpop.permute.xlu0 %674
      %676 = vrot.lane.b32.xlu0 %v599, 4
      %v677 = vpop.permute.xlu0 %676
      %678 = vrot.lane.b32.xlu0 %v600, 4
      %v679 = vpop.permute.xlu0 %678
      %680 = vrot.lane.b32.xlu0 %v601, 4
      %v681 = vpop.permute.xlu0 %680
      %682 = vrot.lane.b32.xlu0 %v602, 4
      %v683 = vpop.permute.xlu0 %682
      %684 = vrot.lane.b32.xlu0 %v603, 4
      %v685 = vpop.permute.xlu0 %684
      %686 = vrot.lane.b32.xlu0 %v604, 4
      %v687 = vpop.permute.xlu0 %686
      %688 = vrot.lane.b32.xlu0 %v605, 4
      %v689 = vpop.permute.xlu0 %688
      %690 = vrot.lane.b32.xlu0 %v606, 4
      %v691 = vpop.permute.xlu0 %690
      %692 = vrot.lane.b32.xlu0 %v607, 4
      %v693 = vpop.permute.xlu0 %692
      %694 = vrot.lane.b32.xlu0 %v608, 4
      %v695 = vpop.permute.xlu0 %694
      %696 = vrot.lane.b32.xlu0 %v609, 4
      %v697 = vpop.permute.xlu0 %696
      %698 = vrot.lane.b32.xlu0 %v610, 4
      %v699 = vpop.permute.xlu0 %698
      %700 = vrot.lane.b32.xlu0 %v611, 4
      %v701 = vpop.permute.xlu0 %700
      %702 = vrot.lane.b32.xlu0 %v612, 4
      %v703 = vpop.permute.xlu0 %702
      %704 = vrot.lane.b32.xlu0 %v613, 4
      %v705 = vpop.permute.xlu0 %704
      %706 = vrot.lane.b32.xlu0 %v614, 4
      %v707 = vpop.permute.xlu0 %706
      %708 = vrot.lane.b32.xlu0 %v615, 4
      %v709 = vpop.permute.xlu0 %708
      %710 = vrot.lane.b32.xlu0 %v616, 4
      %v711 = vpop.permute.xlu0 %710
      %712 = vrot.lane.b32.xlu0 %v617, 4
      %v713 = vpop.permute.xlu0 %712
      %714 = vrot.lane.b32.xlu0 %v618, 4
      %v715 = vpop.permute.xlu0 %714
      %716 = vrot.lane.b32.xlu0 %v619, 4
      %v717 = vpop.permute.xlu0 %716
      %718 = vrot.lane.b32.xlu0 %v620, 4
      %v719 = vpop.permute.xlu0 %718
      %720 = vrot.lane.b32.xlu0 %v621, 4
      %v721 = vpop.permute.xlu0 %720
      %722 = vrot.lane.b32.xlu0 %v622, 4
      %v723 = vpop.permute.xlu0 %722
      %724 = vrot.lane.b32.xlu0 %v623, 4
      %v725 = vpop.permute.xlu0 %724
      %726 = vrot.lane.b32.xlu0 %v624, 4
      %v727 = vpop.permute.xlu0 %726
      %728 = vrot.lane.b32.xlu0 %v625, 4
      %v729 = vpop.permute.xlu0 %728
      %730 = vrot.lane.b32.xlu0 %v626, 4
      %v731 = vpop.permute.xlu0 %730
      %732 = vrot.lane.b32.xlu0 %v627, 4
      %v733 = vpop.permute.xlu0 %732
      %734 = vrot.lane.b32.xlu0 %v628, 4
      %v735 = vpop.permute.xlu0 %734
      %736 = vrot.lane.b32.xlu0 %v629, 4
      %v737 = vpop.permute.xlu0 %736
      %vm774 = vcmask 64544
      %775 = vst.msk [vmem:[#allocation3] sm:$0xff] %vm774, %v667
      %776 = vst.msk [vmem:[#allocation3 + $0x10] sm:$0xff] %vm774, %v669
      %777 = vst.msk [vmem:[#allocation3 + $0x20] sm:$0xff] %vm774, %v671
      %778 = vst.msk [vmem:[#allocation3 + $0x30] sm:$0xff] %vm774, %v673
      %779 = vst.msk [vmem:[#allocation3 + $0x40] sm:$0xff] %vm774, %v675
      %780 = vst.msk [vmem:[#allocation3 + $0x50] sm:$0xff] %vm774, %v677
      %781 = vst.msk [vmem:[#allocation3 + $0x60] sm:$0xff] %vm774, %v679
      %782 = vst.msk [vmem:[#allocation3 + $0x70] sm:$0xff] %vm774, %v681
      %783 = vst.msk [vmem:[#allocation3 + $0x80] sm:$0xff] %vm774, %v683
      %784 = vst.msk [vmem:[#allocation3 + $0x90] sm:$0xff] %vm774, %v685
      %785 = vst.msk [vmem:[#allocation3 + $0xa0] sm:$0xff] %vm774, %v687
      %786 = vst.msk [vmem:[#allocation3 + $0xb0] sm:$0xff] %vm774, %v689
      %787 = vst.msk [vmem:[#allocation3 + $0xc0] sm:$0xff] %vm774, %v691
      %788 = vst.msk [vmem:[#allocation3 + $0xd0] sm:$0xff] %vm774, %v693
      %789 = vst.msk [vmem:[#allocation3 + $0xe0] sm:$0xff] %vm774, %v695
      %790 = vst.msk [vmem:[#allocation3 + $0xf0] sm:$0xff] %vm774, %v697
      %791 = vst.msk [vmem:[#allocation3 + $0x100] sm:$0xff] %vm774, %v699
      %792 = vst.msk [vmem:[#allocation3 + $0x110] sm:$0xff] %vm774, %v701
      %793 = vst.msk [vmem:[#allocation3 + $0x120] sm:$0xff] %vm774, %v703
      %794 = vst.msk [vmem:[#allocation3 + $0x130] sm:$0xff] %vm774, %v705
      %795 = vst.msk [vmem:[#allocation3 + $0x140] sm:$0xff] %vm774, %v707
      %796 = vst.msk [vmem:[#allocation3 + $0x150] sm:$0xff] %vm774, %v709
      %797 = vst.msk [vmem:[#allocation3 + $0x160] sm:$0xff] %vm774, %v711
      %798 = vst.msk [vmem:[#allocation3 + $0x170] sm:$0xff] %vm774, %v713
      %799 = vst.msk [vmem:[#allocation3 + $0x180] sm:$0xff] %vm774, %v715
      %800 = vst.msk [vmem:[#allocation3 + $0x190] sm:$0xff] %vm774, %v717
      %801 = vst.msk [vmem:[#allocation3 + $0x1a0] sm:$0xff] %vm774, %v719
      %802 = vst.msk [vmem:[#allocation3 + $0x1b0] sm:$0xff] %vm774, %v721
      %803 = vst.msk [vmem:[#allocation3 + $0x1c0] sm:$0xff] %vm774, %v723
      %804 = vst.msk [vmem:[#allocation3 + $0x1d0] sm:$0xff] %vm774, %v725
      %805 = vst.msk [vmem:[#allocation3 + $0x1e0] sm:$0xff] %vm774, %v727
      %806 = vst.msk [vmem:[#allocation3 + $0x1f0] sm:$0xff] %vm774, %v729
      %807 = vst.msk [vmem:[#allocation3 + $0x200] sm:$0xff] %vm774, %v731
      %808 = vst.msk [vmem:[#allocation3 + $0x210] sm:$0xff] %vm774, %v733
      %809 = vst.msk [vmem:[#allocation3 + $0x220] sm:$0xff] %vm774, %v735
      %vm810 = vcmask 62496
      %811 = vst.msk [vmem:[#allocation3 + $0x230] sm:$0x3f] %vm810, %v737
      %v812 = vld [vmem:[%s504 + $0x2] sm:$0xff]
      %v813 = vld [vmem:[%s504 + $0xa] sm:$0xff]
      %v814 = vld [vmem:[%s504 + $0x12] sm:$0xff]
      %v815 = vld [vmem:[%s504 + $0x1a] sm:$0xff]
      %v816 = vld [vmem:[%s504 + $0x22] sm:$0xff]
      %v817 = vld [vmem:[%s504 + $0x2a] sm:$0xff]
      %v818 = vld [vmem:[%s504 + $0x32] sm:$0xff]
      %v819 = vld [vmem:[%s504 + $0x3a] sm:$0xff]
      %v820 = vld [vmem:[%s504 + $0x42] sm:$0xff]
      %v821 = vld [vmem:[%s504 + $0x4a] sm:$0xff]
      %v822 = vld [vmem:[%s504 + $0x52] sm:$0xff]
      %v823 = vld [vmem:[%s504 + $0x5a] sm:$0xff]
      %v824 = vld [vmem:[%s504 + $0x62] sm:$0xff]
      %v825 = vld [vmem:[%s504 + $0x6a] sm:$0xff]
      %v826 = vld [vmem:[%s504 + $0x72] sm:$0xff]
      %v827 = vld [vmem:[%s504 + $0x7a] sm:$0xff]
      %v828 = vld [vmem:[%s504 + $0x82] sm:$0xff]
      %v829 = vld [vmem:[%s504 + $0x8a] sm:$0xff]
      %v830 = vld [vmem:[%s504 + $0x92] sm:$0xff]
      %v831 = vld [vmem:[%s504 + $0x9a] sm:$0xff]
      %v832 = vld [vmem:[%s504 + $0xa2] sm:$0xff]
      %v833 = vld [vmem:[%s504 + $0xaa] sm:$0xff]
      %v834 = vld [vmem:[%s504 + $0xb2] sm:$0xff]
      %v835 = vld [vmem:[%s504 + $0xba] sm:$0xff]
      %v836 = vld [vmem:[%s504 + $0xc2] sm:$0xff]
      %v837 = vld [vmem:[%s504 + $0xca] sm:$0xff]
      %v838 = vld [vmem:[%s504 + $0xd2] sm:$0xff]
      %v839 = vld [vmem:[%s504 + $0xda] sm:$0xff]
      %v840 = vld [vmem:[%s504 + $0xe2] sm:$0xff]
      %v841 = vld [vmem:[%s504 + $0xea] sm:$0xff]
      %v842 = vld [vmem:[%s504 + $0xf2] sm:$0xff]
      %v843 = vld [vmem:[%s504 + $0xfa] sm:$0xff]
      %v844 = vld [vmem:[%s504 + $0x102] sm:$0xff]
      %v845 = vld [vmem:[%s504 + $0x10a] sm:$0xff]
      %v846 = vld [vmem:[%s504 + $0x112] sm:$0xff]
      %v847 = vld [vmem:[%s504 + $0x11a] sm:$0x3f]
      %884 = vrot.lane.b32.xlu0 %v812, 8
      %v885 = vpop.permute.xlu0 %884
      %886 = vrot.lane.b32.xlu0 %v813, 8
      %v887 = vpop.permute.xlu0 %886
      %888 = vrot.lane.b32.xlu0 %v814, 8
      %v889 = vpop.permute.xlu0 %888
      %890 = vrot.lane.b32.xlu0 %v815, 8
      %v891 = vpop.permute.xlu0 %890
      %892 = vrot.lane.b32.xlu0 %v816, 8
      %v893 = vpop.permute.xlu0 %892
      %894 = vrot.lane.b32.xlu0 %v817, 8
      %v895 = vpop.permute.xlu0 %894
      %896 = vrot.lane.b32.xlu0 %v818, 8
      %v897 = vpop.permute.xlu0 %896
      %898 = vrot.lane.b32.xlu0 %v819, 8
      %v899 = vpop.permute.xlu0 %898
      %900 = vrot.lane.b32.xlu0 %v820, 8
      %v901 = vpop.permute.xlu0 %900
      %902 = vrot.lane.b32.xlu0 %v821, 8
      %v903 = vpop.permute.xlu0 %902
      %904 = vrot.lane.b32.xlu0 %v822, 8
      %v905 = vpop.permute.xlu0 %904
      %906 = vrot.lane.b32.xlu0 %v823, 8
      %v907 = vpop.permute.xlu0 %906
      %908 = vrot.lane.b32.xlu0 %v824, 8
      %v909 = vpop.permute.xlu0 %908
      %910 = vrot.lane.b32.xlu0 %v825, 8
      %v911 = vpop.permute.xlu0 %910
      %912 = vrot.lane.b32.xlu0 %v826, 8
      %v913 = vpop.permute.xlu0 %912
      %914 = vrot.lane.b32.xlu0 %v827, 8
      %v915 = vpop.permute.xlu0 %914
      %916 = vrot.lane.b32.xlu0 %v828, 8
      %v917 = vpop.permute.xlu0 %916
      %918 = vrot.lane.b32.xlu0 %v829, 8
      %v919 = vpop.permute.xlu0 %918
      %920 = vrot.lane.b32.xlu0 %v830, 8
      %v921 = vpop.permute.xlu0 %920
      %922 = vrot.lane.b32.xlu0 %v831, 8
      %v923 = vpop.permute.xlu0 %922
      %924 = vrot.lane.b32.xlu0 %v832, 8
      %v925 = vpop.permute.xlu0 %924
      %926 = vrot.lane.b32.xlu0 %v833, 8
      %v927 = vpop.permute.xlu0 %926
      %928 = vrot.lane.b32.xlu0 %v834, 8
      %v929 = vpop.permute.xlu0 %928
      %930 = vrot.lane.b32.xlu0 %v835, 8
      %v931 = vpop.permute.xlu0 %930
      %932 = vrot.lane.b32.xlu0 %v836, 8
      %v933 = vpop.permute.xlu0 %932
      %934 = vrot.lane.b32.xlu0 %v837, 8
      %v935 = vpop.permute.xlu0 %934
      %936 = vrot.lane.b32.xlu0 %v838, 8
      %v937 = vpop.permute.xlu0 %936
      %938 = vrot.lane.b32.xlu0 %v839, 8
      %v939 = vpop.permute.xlu0 %938
      %940 = vrot.lane.b32.xlu0 %v840, 8
      %v941 = vpop.permute.xlu0 %940
      %942 = vrot.lane.b32.xlu0 %v841, 8
      %v943 = vpop.permute.xlu0 %942
      %944 = vrot.lane.b32.xlu0 %v842, 8
      %v945 = vpop.permute.xlu0 %944
      %946 = vrot.lane.b32.xlu0 %v843, 8
      %v947 = vpop.permute.xlu0 %946
      %948 = vrot.lane.b32.xlu0 %v844, 8
      %v949 = vpop.permute.xlu0 %948
      %950 = vrot.lane.b32.xlu0 %v845, 8
      %v951 = vpop.permute.xlu0 %950
      %952 = vrot.lane.b32.xlu0 %v846, 8
      %v953 = vpop.permute.xlu0 %952
      %954 = vrot.lane.b32.xlu0 %v847, 8
      %v955 = vpop.permute.xlu0 %954
      %vm992 = vcmask 97344
      %993 = vst.msk [vmem:[#allocation3] sm:$0xff] %vm992, %v885
      %994 = vst.msk [vmem:[#allocation3 + $0x10] sm:$0xff] %vm992, %v887
      %995 = vst.msk [vmem:[#allocation3 + $0x20] sm:$0xff] %vm992, %v889
      %996 = vst.msk [vmem:[#allocation3 + $0x30] sm:$0xff] %vm992, %v891
      %997 = vst.msk [vmem:[#allocation3 + $0x40] sm:$0xff] %vm992, %v893
      %998 = vst.msk [vmem:[#allocation3 + $0x50] sm:$0xff] %vm992, %v895
      %999 = vst.msk [vmem:[#allocation3 + $0x60] sm:$0xff] %vm992, %v897
      %1000 = vst.msk [vmem:[#allocation3 + $0x70] sm:$0xff] %vm992, %v899
      %1001 = vst.msk [vmem:[#allocation3 + $0x80] sm:$0xff] %vm992, %v901
      %1002 = vst.msk [vmem:[#allocation3 + $0x90] sm:$0xff] %vm992, %v903
      %1003 = vst.msk [vmem:[#allocation3 + $0xa0] sm:$0xff] %vm992, %v905
      %1004 = vst.msk [vmem:[#allocation3 + $0xb0] sm:$0xff] %vm992, %v907
      %1005 = vst.msk [vmem:[#allocation3 + $0xc0] sm:$0xff] %vm992, %v909
      %1006 = vst.msk [vmem:[#allocation3 + $0xd0] sm:$0xff] %vm992, %v911
      %1007 = vst.msk [vmem:[#allocation3 + $0xe0] sm:$0xff] %vm992, %v913
      %1008 = vst.msk [vmem:[#allocation3 + $0xf0] sm:$0xff] %vm992, %v915
      %1009 = vst.msk [vmem:[#allocation3 + $0x100] sm:$0xff] %vm992, %v917
      %1010 = vst.msk [vmem:[#allocation3 + $0x110] sm:$0xff] %vm992, %v919
      %1011 = vst.msk [vmem:[#allocation3 + $0x120] sm:$0xff] %vm992, %v921
      %1012 = vst.msk [vmem:[#allocation3 + $0x130] sm:$0xff] %vm992, %v923
      %1013 = vst.msk [vmem:[#allocation3 + $0x140] sm:$0xff] %vm992, %v925
      %1014 = vst.msk [vmem:[#allocation3 + $0x150] sm:$0xff] %vm992, %v927
      %1015 = vst.msk [vmem:[#allocation3 + $0x160] sm:$0xff] %vm992, %v929
      %1016 = vst.msk [vmem:[#allocation3 + $0x170] sm:$0xff] %vm992, %v931
      %1017 = vst.msk [vmem:[#allocation3 + $0x180] sm:$0xff] %vm992, %v933
      %1018 = vst.msk [vmem:[#allocation3 + $0x190] sm:$0xff] %vm992, %v935
      %1019 = vst.msk [vmem:[#allocation3 + $0x1a0] sm:$0xff] %vm992, %v937
      %1020 = vst.msk [vmem:[#allocation3 + $0x1b0] sm:$0xff] %vm992, %v939
      %1021 = vst.msk [vmem:[#allocation3 + $0x1c0] sm:$0xff] %vm992, %v941
      %1022 = vst.msk [vmem:[#allocation3 + $0x1d0] sm:$0xff] %vm992, %v943
      %1023 = vst.msk [vmem:[#allocation3 + $0x1e0] sm:$0xff] %vm992, %v945
      %1024 = vst.msk [vmem:[#allocation3 + $0x1f0] sm:$0xff] %vm992, %v947
      %1025 = vst.msk [vmem:[#allocation3 + $0x200] sm:$0xff] %vm992, %v949
      %1026 = vst.msk [vmem:[#allocation3 + $0x210] sm:$0xff] %vm992, %v951
      %1027 = vst.msk [vmem:[#allocation3 + $0x220] sm:$0xff] %vm992, %v953
      %vm1028 = vcmask 95296
      %1029 = vst.msk [vmem:[#allocation3 + $0x230] sm:$0x3f] %vm1028, %v955
      %v1030 = vld [vmem:[%s504 + $0x12] sm:$0xff]
      %v1031 = vld [vmem:[%s504 + $0x1a] sm:$0xff]
      %v1032 = vld [vmem:[%s504 + $0x22] sm:$0xff]
      %v1033 = vld [vmem:[%s504 + $0x2a] sm:$0xff]
      %v1034 = vld [vmem:[%s504 + $0x32] sm:$0xff]
      %v1035 = vld [vmem:[%s504 + $0x3a] sm:$0xff]
      %v1036 = vld [vmem:[%s504 + $0x42] sm:$0xff]
      %v1037 = vld [vmem:[%s504 + $0x4a] sm:$0xff]
      %v1038 = vld [vmem:[%s504 + $0x52] sm:$0xff]
      %v1039 = vld [vmem:[%s504 + $0x5a] sm:$0xff]
      %v1040 = vld [vmem:[%s504 + $0x62] sm:$0xff]
      %v1041 = vld [vmem:[%s504 + $0x6a] sm:$0xff]
      %v1042 = vld [vmem:[%s504 + $0x72] sm:$0xff]
      %v1043 = vld [vmem:[%s504 + $0x7a] sm:$0xff]
      %v1044 = vld [vmem:[%s504 + $0x82] sm:$0xff]
      %v1045 = vld [vmem:[%s504 + $0x8a] sm:$0xff]
      %v1046 = vld [vmem:[%s504 + $0x92] sm:$0xff]
      %v1047 = vld [vmem:[%s504 + $0x9a] sm:$0xff]
      %v1048 = vld [vmem:[%s504 + $0xa2] sm:$0xff]
      %v1049 = vld [vmem:[%s504 + $0xaa] sm:$0xff]
      %v1050 = vld [vmem:[%s504 + $0xb2] sm:$0xff]
      %v1051 = vld [vmem:[%s504 + $0xba] sm:$0xff]
      %v1052 = vld [vmem:[%s504 + $0xc2] sm:$0xff]
      %v1053 = vld [vmem:[%s504 + $0xca] sm:$0xff]
      %v1054 = vld [vmem:[%s504 + $0xd2] sm:$0xff]
      %v1055 = vld [vmem:[%s504 + $0xda] sm:$0xff]
      %v1056 = vld [vmem:[%s504 + $0xe2] sm:$0xff]
      %v1057 = vld [vmem:[%s504 + $0xea] sm:$0xff]
      %v1058 = vld [vmem:[%s504 + $0xf2] sm:$0xff]
      %v1059 = vld [vmem:[%s504 + $0xfa] sm:$0xff]
      %v1060 = vld [vmem:[%s504 + $0x102] sm:$0xff]
      %v1061 = vld [vmem:[%s504 + $0x10a] sm:$0xff]
      %v1062 = vld [vmem:[%s504 + $0x112] sm:$0xff]
      %v1063 = vld [vmem:[%s504 + $0x11a] sm:$0xff]
      %v1064 = vld [vmem:[%s504 + $0x122] sm:$0xff]
      %v1065 = vld [vmem:[%s504 + $0x12a] sm:$0x3f]
      %1102 = vrot.lane.b32.xlu0 %v1030, 12
      %v1103 = vpop.permute.xlu0 %1102
      %1104 = vrot.lane.b32.xlu0 %v1031, 12
      %v1105 = vpop.permute.xlu0 %1104
      %1106 = vrot.lane.b32.xlu0 %v1032, 12
      %v1107 = vpop.permute.xlu0 %1106
      %1108 = vrot.lane.b32.xlu0 %v1033, 12
      %v1109 = vpop.permute.xlu0 %1108
      %1110 = vrot.lane.b32.xlu0 %v1034, 12
      %v1111 = vpop.permute.xlu0 %1110
      %1112 = vrot.lane.b32.xlu0 %v1035, 12
      %v1113 = vpop.permute.xlu0 %1112
      %1114 = vrot.lane.b32.xlu0 %v1036, 12
      %v1115 = vpop.permute.xlu0 %1114
      %1116 = vrot.lane.b32.xlu0 %v1037, 12
      %v1117 = vpop.permute.xlu0 %1116
      %1118 = vrot.lane.b32.xlu0 %v1038, 12
      %v1119 = vpop.permute.xlu0 %1118
      %1120 = vrot.lane.b32.xlu0 %v1039, 12
      %v1121 = vpop.permute.xlu0 %1120
      %1122 = vrot.lane.b32.xlu0 %v1040, 12
      %v1123 = vpop.permute.xlu0 %1122
      %1124 = vrot.lane.b32.xlu0 %v1041, 12
      %v1125 = vpop.permute.xlu0 %1124
      %1126 = vrot.lane.b32.xlu0 %v1042, 12
      %v1127 = vpop.permute.xlu0 %1126
      %1128 = vrot.lane.b32.xlu0 %v1043, 12
      %v1129 = vpop.permute.xlu0 %1128
      %1130 = vrot.lane.b32.xlu0 %v1044, 12
      %v1131 = vpop.permute.xlu0 %1130
      %1132 = vrot.lane.b32.xlu0 %v1045, 12
      %v1133 = vpop.permute.xlu0 %1132
      %1134 = vrot.lane.b32.xlu0 %v1046, 12
      %v1135 = vpop.permute.xlu0 %1134
      %1136 = vrot.lane.b32.xlu0 %v1047, 12
      %v1137 = vpop.permute.xlu0 %1136
      %1138 = vrot.lane.b32.xlu0 %v1048, 12
      %v1139 = vpop.permute.xlu0 %1138
      %1140 = vrot.lane.b32.xlu0 %v1049, 12
      %v1141 = vpop.permute.xlu0 %1140
      %1142 = vrot.lane.b32.xlu0 %v1050, 12
      %v1143 = vpop.permute.xlu0 %1142
      %1144 = vrot.lane.b32.xlu0 %v1051, 12
      %v1145 = vpop.permute.xlu0 %1144
      %1146 = vrot.lane.b32.xlu0 %v1052, 12
      %v1147 = vpop.permute.xlu0 %1146
      %1148 = vrot.lane.b32.xlu0 %v1053, 12
      %v1149 = vpop.permute.xlu0 %1148
      %1150 = vrot.lane.b32.xlu0 %v1054, 12
      %v1151 = vpop.permute.xlu0 %1150
      %1152 = vrot.lane.b32.xlu0 %v1055, 12
      %v1153 = vpop.permute.xlu0 %1152
      %1154 = vrot.lane.b32.xlu0 %v1056, 12
      %v1155 = vpop.permute.xlu0 %1154
      %1156 = vrot.lane.b32.xlu0 %v1057, 12
      %v1157 = vpop.permute.xlu0 %1156
      %1158 = vrot.lane.b32.xlu0 %v1058, 12
      %v1159 = vpop.permute.xlu0 %1158
      %1160 = vrot.lane.b32.xlu0 %v1059, 12
      %v1161 = vpop.permute.xlu0 %1160
      %1162 = vrot.lane.b32.xlu0 %v1060, 12
      %v1163 = vpop.permute.xlu0 %1162
      %1164 = vrot.lane.b32.xlu0 %v1061, 12
      %v1165 = vpop.permute.xlu0 %1164
      %1166 = vrot.lane.b32.xlu0 %v1062, 12
      %v1167 = vpop.permute.xlu0 %1166
      %1168 = vrot.lane.b32.xlu0 %v1063, 12
      %v1169 = vpop.permute.xlu0 %1168
      %1170 = vrot.lane.b32.xlu0 %v1064, 12
      %v1171 = vpop.permute.xlu0 %1170
      %1172 = vrot.lane.b32.xlu0 %v1065, 12
      %v1173 = vpop.permute.xlu0 %1172
      %vm1210 = vcmask 130144
      %1211 = vst.msk [vmem:[#allocation3] sm:$0xff] %vm1210, %v1103
      %1212 = vst.msk [vmem:[#allocation3 + $0x10] sm:$0xff] %vm1210, %v1105
      %1213 = vst.msk [vmem:[#allocation3 + $0x20] sm:$0xff] %vm1210, %v1107
      %1214 = vst.msk [vmem:[#allocation3 + $0x30] sm:$0xff] %vm1210, %v1109
      %1215 = vst.msk [vmem:[#allocation3 + $0x40] sm:$0xff] %vm1210, %v1111
      %1216 = vst.msk [vmem:[#allocation3 + $0x50] sm:$0xff] %vm1210, %v1113
      %1217 = vst.msk [vmem:[#allocation3 + $0x60] sm:$0xff] %vm1210, %v1115
      %1218 = vst.msk [vmem:[#allocation3 + $0x70] sm:$0xff] %vm1210, %v1117
      %1219 = vst.msk [vmem:[#allocation3 + $0x80] sm:$0xff] %vm1210, %v1119
      %1220 = vst.msk [vmem:[#allocation3 + $0x90] sm:$0xff] %vm1210, %v1121
      %1221 = vst.msk [vmem:[#allocation3 + $0xa0] sm:$0xff] %vm1210, %v1123
      %1222 = vst.msk [vmem:[#allocation3 + $0xb0] sm:$0xff] %vm1210, %v1125
      %1223 = vst.msk [vmem:[#allocation3 + $0xc0] sm:$0xff] %vm1210, %v1127
      %1224 = vst.msk [vmem:[#allocation3 + $0xd0] sm:$0xff] %vm1210, %v1129
      %1225 = vst.msk [vmem:[#allocation3 + $0xe0] sm:$0xff] %vm1210, %v1131
      %1226 = vst.msk [vmem:[#allocation3 + $0xf0] sm:$0xff] %vm1210, %v1133
      %1227 = vst.msk [vmem:[#allocation3 + $0x100] sm:$0xff] %vm1210, %v1135
      %1228 = vst.msk [vmem:[#allocation3 + $0x110] sm:$0xff] %vm1210, %v1137
      %1229 = vst.msk [vmem:[#allocation3 + $0x120] sm:$0xff] %vm1210, %v1139
      %1230 = vst.msk [vmem:[#allocation3 + $0x130] sm:$0xff] %vm1210, %v1141
      %1231 = vst.msk [vmem:[#allocation3 + $0x140] sm:$0xff] %vm1210, %v1143
      %1232 = vst.msk [vmem:[#allocation3 + $0x150] sm:$0xff] %vm1210, %v1145
      %1233 = vst.msk [vmem:[#allocation3 + $0x160] sm:$0xff] %vm1210, %v1147
      %1234 = vst.msk [vmem:[#allocation3 + $0x170] sm:$0xff] %vm1210, %v1149
      %1235 = vst.msk [vmem:[#allocation3 + $0x180] sm:$0xff] %vm1210, %v1151
      %1236 = vst.msk [vmem:[#allocation3 + $0x190] sm:$0xff] %vm1210, %v1153
      %1237 = vst.msk [vmem:[#allocation3 + $0x1a0] sm:$0xff] %vm1210, %v1155
      %1238 = vst.msk [vmem:[#allocation3 + $0x1b0] sm:$0xff] %vm1210, %v1157
      %1239 = vst.msk [vmem:[#allocation3 + $0x1c0] sm:$0xff] %vm1210, %v1159
      %1240 = vst.msk [vmem:[#allocation3 + $0x1d0] sm:$0xff] %vm1210, %v1161
      %1241 = vst.msk [vmem:[#allocation3 + $0x1e0] sm:$0xff] %vm1210, %v1163
      %1242 = vst.msk [vmem:[#allocation3 + $0x1f0] sm:$0xff] %vm1210, %v1165
      %1243 = vst.msk [vmem:[#allocation3 + $0x200] sm:$0xff] %vm1210, %v1167
      %1244 = vst.msk [vmem:[#allocation3 + $0x210] sm:$0xff] %vm1210, %v1169
      %1245 = vst.msk [vmem:[#allocation3 + $0x220] sm:$0xff] %vm1210, %v1171
      %vm1246 = vcmask 128096
      %1247 = vst.msk [vmem:[#allocation3 + $0x230] sm:$0x3f] %vm1246, %v1173
      %v1248 = vld [vmem:[%s504 + $0x13] sm:$0xff]
      %v1249 = vld [vmem:[%s504 + $0x1b] sm:$0xff]
      %v1250 = vld [vmem:[%s504 + $0x23] sm:$0xff]
      %v1251 = vld [vmem:[%s504 + $0x2b] sm:$0xff]
      %v1252 = vld [vmem:[%s504 + $0x33] sm:$0xff]
      %v1253 = vld [vmem:[%s504 + $0x3b] sm:$0xff]
      %v1254 = vld [vmem:[%s504 + $0x43] sm:$0xff]
      %v1255 = vld [vmem:[%s504 + $0x4b] sm:$0xff]
      %v1256 = vld [vmem:[%s504 + $0x53] sm:$0xff]
      %v1257 = vld [vmem:[%s504 + $0x5b] sm:$0xff]
      %v1258 = vld [vmem:[%s504 + $0x63] sm:$0xff]
      %v1259 = vld [vmem:[%s504 + $0x6b] sm:$0xff]
      %v1260 = vld [vmem:[%s504 + $0x73] sm:$0xff]
      %v1261 = vld [vmem:[%s504 + $0x7b] sm:$0xff]
      %v1262 = vld [vmem:[%s504 + $0x83] sm:$0xff]
      %v1263 = vld [vmem:[%s504 + $0x8b] sm:$0xff]
      %v1264 = vld [vmem:[%s504 + $0x93] sm:$0xff]
      %v1265 = vld [vmem:[%s504 + $0x9b] sm:$0xff]
      %v1266 = vld [vmem:[%s504 + $0xa3] sm:$0xff]
      %v1267 = vld [vmem:[%s504 + $0xab] sm:$0xff]
      %v1268 = vld [vmem:[%s504 + $0xb3] sm:$0xff]
      %v1269 = vld [vmem:[%s504 + $0xbb] sm:$0xff]
      %v1270 = vld [vmem:[%s504 + $0xc3] sm:$0xff]
      %v1271 = vld [vmem:[%s504 + $0xcb] sm:$0xff]
      %v1272 = vld [vmem:[%s504 + $0xd3] sm:$0xff]
      %v1273 = vld [vmem:[%s504 + $0xdb] sm:$0xff]
      %v1274 = vld [vmem:[%s504 + $0xe3] sm:$0xff]
      %v1275 = vld [vmem:[%s504 + $0xeb] sm:$0xff]
      %v1276 = vld [vmem:[%s504 + $0xf3] sm:$0xff]
      %v1277 = vld [vmem:[%s504 + $0xfb] sm:$0xff]
      %v1278 = vld [vmem:[%s504 + $0x103] sm:$0xff]
      %v1279 = vld [vmem:[%s504 + $0x10b] sm:$0xff]
      %v1280 = vld [vmem:[%s504 + $0x113] sm:$0xff]
      %v1281 = vld [vmem:[%s504 + $0x11b] sm:$0xff]
      %v1282 = vld [vmem:[%s504 + $0x123] sm:$0xff]
      %v1283 = vld [vmem:[%s504 + $0x12b] sm:$0x3f]
      %1320 = vrot.lane.b32.xlu0 %v1248, 16
      %v1321 = vpop.permute.xlu0 %1320
      %1322 = vrot.lane.b32.xlu0 %v1249, 16
      %v1323 = vpop.permute.xlu0 %1322
      %1324 = vrot.lane.b32.xlu0 %v1250, 16
      %v1325 = vpop.permute.xlu0 %1324
      %1326 = vrot.lane.b32.xlu0 %v1251, 16
      %v1327 = vpop.permute.xlu0 %1326
      %1328 = vrot.lane.b32.xlu0 %v1252, 16
      %v1329 = vpop.permute.xlu0 %1328
      %1330 = vrot.lane.b32.xlu0 %v1253, 16
      %v1331 = vpop.permute.xlu0 %1330
      %1332 = vrot.lane.b32.xlu0 %v1254, 16
      %v1333 = vpop.permute.xlu0 %1332
      %1334 = vrot.lane.b32.xlu0 %v1255, 16
      %v1335 = vpop.permute.xlu0 %1334
      %1336 = vrot.lane.b32.xlu0 %v1256, 16
      %v1337 = vpop.permute.xlu0 %1336
      %1338 = vrot.lane.b32.xlu0 %v1257, 16
      %v1339 = vpop.permute.xlu0 %1338
      %1340 = vrot.lane.b32.xlu0 %v1258, 16
      %v1341 = vpop.permute.xlu0 %1340
      %1342 = vrot.lane.b32.xlu0 %v1259, 16
      %v1343 = vpop.permute.xlu0 %1342
      %1344 = vrot.lane.b32.xlu0 %v1260, 16
      %v1345 = vpop.permute.xlu0 %1344
      %1346 = vrot.lane.b32.xlu0 %v1261, 16
      %v1347 = vpop.permute.xlu0 %1346
      %1348 = vrot.lane.b32.xlu0 %v1262, 16
      %v1349 = vpop.permute.xlu0 %1348
      %1350 = vrot.lane.b32.xlu0 %v1263, 16
      %v1351 = vpop.permute.xlu0 %1350
      %1352 = vrot.lane.b32.xlu0 %v1264, 16
      %v1353 = vpop.permute.xlu0 %1352
      %1354 = vrot.lane.b32.xlu0 %v1265, 16
      %v1355 = vpop.permute.xlu0 %1354
      %1356 = vrot.lane.b32.xlu0 %v1266, 16
      %v1357 = vpop.permute.xlu0 %1356
      %1358 = vrot.lane.b32.xlu0 %v1267, 16
      %v1359 = vpop.permute.xlu0 %1358
      %1360 = vrot.lane.b32.xlu0 %v1268, 16
      %v1361 = vpop.permute.xlu0 %1360
      %1362 = vrot.lane.b32.xlu0 %v1269, 16
      %v1363 = vpop.permute.xlu0 %1362
      %1364 = vrot.lane.b32.xlu0 %v1270, 16
      %v1365 = vpop.permute.xlu0 %1364
      %1366 = vrot.lane.b32.xlu0 %v1271, 16
      %v1367 = vpop.permute.xlu0 %1366
      %1368 = vrot.lane.b32.xlu0 %v1272, 16
      %v1369 = vpop.permute.xlu0 %1368
      %1370 = vrot.lane.b32.xlu0 %v1273, 16
      %v1371 = vpop.permute.xlu0 %1370
      %1372 = vrot.lane.b32.xlu0 %v1274, 16
      %v1373 = vpop.permute.xlu0 %1372
      %1374 = vrot.lane.b32.xlu0 %v1275, 16
      %v1375 = vpop.permute.xlu0 %1374
      %1376 = vrot.lane.b32.xlu0 %v1276, 16
      %v1377 = vpop.permute.xlu0 %1376
      %1378 = vrot.lane.b32.xlu0 %v1277, 16
      %v1379 = vpop.permute.xlu0 %1378
      %1380 = vrot.lane.b32.xlu0 %v1278, 16
      %v1381 = vpop.permute.xlu0 %1380
      %1382 = vrot.lane.b32.xlu0 %v1279, 16
      %v1383 = vpop.permute.xlu0 %1382
      %1384 = vrot.lane.b32.xlu0 %v1280, 16
      %v1385 = vpop.permute.xlu0 %1384
      %1386 = vrot.lane.b32.xlu0 %v1281, 16
      %v1387 = vpop.permute.xlu0 %1386
      %1388 = vrot.lane.b32.xlu0 %v1282, 16
      %v1389 = vpop.permute.xlu0 %1388
      %1390 = vrot.lane.b32.xlu0 %v1283, 16
      %v1391 = vpop.permute.xlu0 %1390
      %vm1428 = vcmask 162944
      %1429 = vst.msk [vmem:[#allocation3] sm:$0xff] %vm1428, %v1321
      %1430 = vst.msk [vmem:[#allocation3 + $0x10] sm:$0xff] %vm1428, %v1323
      %1431 = vst.msk [vmem:[#allocation3 + $0x20] sm:$0xff] %vm1428, %v1325
      %1432 = vst.msk [vmem:[#allocation3 + $0x30] sm:$0xff] %vm1428, %v1327
      %1433 = vst.msk [vmem:[#allocation3 + $0x40] sm:$0xff] %vm1428, %v1329
      %1434 = vst.msk [vmem:[#allocation3 + $0x50] sm:$0xff] %vm1428, %v1331
      %1435 = vst.msk [vmem:[#allocation3 + $0x60] sm:$0xff] %vm1428, %v1333
      %1436 = vst.msk [vmem:[#allocation3 + $0x70] sm:$0xff] %vm1428, %v1335
      %1437 = vst.msk [vmem:[#allocation3 + $0x80] sm:$0xff] %vm1428, %v1337
      %1438 = vst.msk [vmem:[#allocation3 + $0x90] sm:$0xff] %vm1428, %v1339
      %1439 = vst.msk [vmem:[#allocation3 + $0xa0] sm:$0xff] %vm1428, %v1341
      %1440 = vst.msk [vmem:[#allocation3 + $0xb0] sm:$0xff] %vm1428, %v1343
      %1441 = vst.msk [vmem:[#allocation3 + $0xc0] sm:$0xff] %vm1428, %v1345
      %1442 = vst.msk [vmem:[#allocation3 + $0xd0] sm:$0xff] %vm1428, %v1347
      %1443 = vst.msk [vmem:[#allocation3 + $0xe0] sm:$0xff] %vm1428, %v1349
      %1444 = vst.msk [vmem:[#allocation3 + $0xf0] sm:$0xff] %vm1428, %v1351
      %1445 = vst.msk [vmem:[#allocation3 + $0x100] sm:$0xff] %vm1428, %v1353
      %1446 = vst.msk [vmem:[#allocation3 + $0x110] sm:$0xff] %vm1428, %v1355
      %1447 = vst.msk [vmem:[#allocation3 + $0x120] sm:$0xff] %vm1428, %v1357
      %1448 = vst.msk [vmem:[#allocation3 + $0x130] sm:$0xff] %vm1428, %v1359
      %1449 = vst.msk [vmem:[#allocation3 + $0x140] sm:$0xff] %vm1428, %v1361
      %1450 = vst.msk [vmem:[#allocation3 + $0x150] sm:$0xff] %vm1428, %v1363
      %1451 = vst.msk [vmem:[#allocation3 + $0x160] sm:$0xff] %vm1428, %v1365
      %1452 = vst.msk [vmem:[#allocation3 + $0x170] sm:$0xff] %vm1428, %v1367
      %1453 = vst.msk [vmem:[#allocation3 + $0x180] sm:$0xff] %vm1428, %v1369
      %1454 = vst.msk [vmem:[#allocation3 + $0x190] sm:$0xff] %vm1428, %v1371
      %1455 = vst.msk [vmem:[#allocation3 + $0x1a0] sm:$0xff] %vm1428, %v1373
      %1456 = vst.msk [vmem:[#allocation3 + $0x1b0] sm:$0xff] %vm1428, %v1375
      %1457 = vst.msk [vmem:[#allocation3 + $0x1c0] sm:$0xff] %vm1428, %v1377
      %1458 = vst.msk [vmem:[#allocation3 + $0x1d0] sm:$0xff] %vm1428, %v1379
      %1459 = vst.msk [vmem:[#allocation3 + $0x1e0] sm:$0xff] %vm1428, %v1381
      %1460 = vst.msk [vmem:[#allocation3 + $0x1f0] sm:$0xff] %vm1428, %v1383
      %1461 = vst.msk [vmem:[#allocation3 + $0x200] sm:$0xff] %vm1428, %v1385
      %1462 = vst.msk [vmem:[#allocation3 + $0x210] sm:$0xff] %vm1428, %v1387
      %1463 = vst.msk [vmem:[#allocation3 + $0x220] sm:$0xff] %vm1428, %v1389
      %vm1464 = vcmask 160896
      %1465 = vst.msk [vmem:[#allocation3 + $0x230] sm:$0x3f] %vm1464, %v1391
      %v1466 = vld [vmem:[%s504 + $0x14] sm:$0xff]
      %v1467 = vld [vmem:[%s504 + $0x1c] sm:$0xff]
      %v1468 = vld [vmem:[%s504 + $0x24] sm:$0xff]
      %v1469 = vld [vmem:[%s504 + $0x2c] sm:$0xff]
      %v1470 = vld [vmem:[%s504 + $0x34] sm:$0xff]
      %v1471 = vld [vmem:[%s504 + $0x3c] sm:$0xff]
      %v1472 = vld [vmem:[%s504 + $0x44] sm:$0xff]
      %v1473 = vld [vmem:[%s504 + $0x4c] sm:$0xff]
      %v1474 = vld [vmem:[%s504 + $0x54] sm:$0xff]
      %v1475 = vld [vmem:[%s504 + $0x5c] sm:$0xff]
      %v1476 = vld [vmem:[%s504 + $0x64] sm:$0xff]
      %v1477 = vld [vmem:[%s504 + $0x6c] sm:$0xff]
      %v1478 = vld [vmem:[%s504 + $0x74] sm:$0xff]
      %v1479 = vld [vmem:[%s504 + $0x7c] sm:$0xff]
      %v1480 = vld [vmem:[%s504 + $0x84] sm:$0xff]
      %v1481 = vld [vmem:[%s504 + $0x8c] sm:$0xff]
      %v1482 = vld [vmem:[%s504 + $0x94] sm:$0xff]
      %v1483 = vld [vmem:[%s504 + $0x9c] sm:$0xff]
      %v1484 = vld [vmem:[%s504 + $0xa4] sm:$0xff]
      %v1485 = vld [vmem:[%s504 + $0xac] sm:$0xff]
      %v1486 = vld [vmem:[%s504 + $0xb4] sm:$0xff]
      %v1487 = vld [vmem:[%s504 + $0xbc] sm:$0xff]
      %v1488 = vld [vmem:[%s504 + $0xc4] sm:$0xff]
      %v1489 = vld [vmem:[%s504 + $0xcc] sm:$0xff]
      %v1490 = vld [vmem:[%s504 + $0xd4] sm:$0xff]
      %v1491 = vld [vmem:[%s504 + $0xdc] sm:$0xff]
      %v1492 = vld [vmem:[%s504 + $0xe4] sm:$0xff]
      %v1493 = vld [vmem:[%s504 + $0xec] sm:$0xff]
      %v1494 = vld [vmem:[%s504 + $0xf4] sm:$0xff]
      %v1495 = vld [vmem:[%s504 + $0xfc] sm:$0xff]
      %v1496 = vld [vmem:[%s504 + $0x104] sm:$0xff]
      %v1497 = vld [vmem:[%s504 + $0x10c] sm:$0xff]
      %v1498 = vld [vmem:[%s504 + $0x114] sm:$0xff]
      %v1499 = vld [vmem:[%s504 + $0x11c] sm:$0xff]
      %v1500 = vld [vmem:[%s504 + $0x124] sm:$0xff]
      %v1501 = vld [vmem:[%s504 + $0x12c] sm:$0x3f]
      %1538 = vrot.lane.b32.xlu0 %v1466, 20
      %v1539 = vpop.permute.xlu0 %1538
      %1540 = vrot.lane.b32.xlu0 %v1467, 20
      %v1541 = vpop.permute.xlu0 %1540
      %1542 = vrot.lane.b32.xlu0 %v1468, 20
      %v1543 = vpop.permute.xlu0 %1542
      %1544 = vrot.lane.b32.xlu0 %v1469, 20
      %v1545 = vpop.permute.xlu0 %1544
      %1546 = vrot.lane.b32.xlu0 %v1470, 20
      %v1547 = vpop.permute.xlu0 %1546
      %1548 = vrot.lane.b32.xlu0 %v1471, 20
      %v1549 = vpop.permute.xlu0 %1548
      %1550 = vrot.lane.b32.xlu0 %v1472, 20
      %v1551 = vpop.permute.xlu0 %1550
      %1552 = vrot.lane.b32.xlu0 %v1473, 20
      %v1553 = vpop.permute.xlu0 %1552
      %1554 = vrot.lane.b32.xlu0 %v1474, 20
      %v1555 = vpop.permute.xlu0 %1554
      %1556 = vrot.lane.b32.xlu0 %v1475, 20
      %v1557 = vpop.permute.xlu0 %1556
      %1558 = vrot.lane.b32.xlu0 %v1476, 20
      %v1559 = vpop.permute.xlu0 %1558
      %1560 = vrot.lane.b32.xlu0 %v1477, 20
      %v1561 = vpop.permute.xlu0 %1560
      %1562 = vrot.lane.b32.xlu0 %v1478, 20
      %v1563 = vpop.permute.xlu0 %1562
      %1564 = vrot.lane.b32.xlu0 %v1479, 20
      %v1565 = vpop.permute.xlu0 %1564
      %1566 = vrot.lane.b32.xlu0 %v1480, 20
      %v1567 = vpop.permute.xlu0 %1566
      %1568 = vrot.lane.b32.xlu0 %v1481, 20
      %v1569 = vpop.permute.xlu0 %1568
      %1570 = vrot.lane.b32.xlu0 %v1482, 20
      %v1571 = vpop.permute.xlu0 %1570
      %1572 = vrot.lane.b32.xlu0 %v1483, 20
      %v1573 = vpop.permute.xlu0 %1572
      %1574 = vrot.lane.b32.xlu0 %v1484, 20
      %v1575 = vpop.permute.xlu0 %1574
      %1576 = vrot.lane.b32.xlu0 %v1485, 20
      %v1577 = vpop.permute.xlu0 %1576
      %1578 = vrot.lane.b32.xlu0 %v1486, 20
      %v1579 = vpop.permute.xlu0 %1578
      %1580 = vrot.lane.b32.xlu0 %v1487, 20
      %v1581 = vpop.permute.xlu0 %1580
      %1582 = vrot.lane.b32.xlu0 %v1488, 20
      %v1583 = vpop.permute.xlu0 %1582
      %1584 = vrot.lane.b32.xlu0 %v1489, 20
      %v1585 = vpop.permute.xlu0 %1584
      %1586 = vrot.lane.b32.xlu0 %v1490, 20
      %v1587 = vpop.permute.xlu0 %1586
      %1588 = vrot.lane.b32.xlu0 %v1491, 20
      %v1589 = vpop.permute.xlu0 %1588
      %1590 = vrot.lane.b32.xlu0 %v1492, 20
      %v1591 = vpop.permute.xlu0 %1590
      %1592 = vrot.lane.b32.xlu0 %v1493, 20
      %v1593 = vpop.permute.xlu0 %1592
      %1594 = vrot.lane.b32.xlu0 %v1494, 20
      %v1595 = vpop.permute.xlu0 %1594
      %1596 = vrot.lane.b32.xlu0 %v1495, 20
      %v1597 = vpop.permute.xlu0 %1596
      %1598 = vrot.lane.b32.xlu0 %v1496, 20
      %v1599 = vpop.permute.xlu0 %1598
      %1600 = vrot.lane.b32.xlu0 %v1497, 20
      %v1601 = vpop.permute.xlu0 %1600
      %1602 = vrot.lane.b32.xlu0 %v1498, 20
      %v1603 = vpop.permute.xlu0 %1602
      %1604 = vrot.lane.b32.xlu0 %v1499, 20
      %v1605 = vpop.permute.xlu0 %1604
      %1606 = vrot.lane.b32.xlu0 %v1500, 20
      %v1607 = vpop.permute.xlu0 %1606
      %1608 = vrot.lane.b32.xlu0 %v1501, 20
      %v1609 = vpop.permute.xlu0 %1608
      %vm1646 = vcmask 195744
      %1647 = vst.msk [vmem:[#allocation3] sm:$0xff] %vm1646, %v1539
      %1648 = vst.msk [vmem:[#allocation3 + $0x10] sm:$0xff] %vm1646, %v1541
      %1649 = vst.msk [vmem:[#allocation3 + $0x20] sm:$0xff] %vm1646, %v1543
      %1650 = vst.msk [vmem:[#allocation3 + $0x30] sm:$0xff] %vm1646, %v1545
      %1651 = vst.msk [vmem:[#allocation3 + $0x40] sm:$0xff] %vm1646, %v1547
      %1652 = vst.msk [vmem:[#allocation3 + $0x50] sm:$0xff] %vm1646, %v1549
      %1653 = vst.msk [vmem:[#allocation3 + $0x60] sm:$0xff] %vm1646, %v1551
      %1654 = vst.msk [vmem:[#allocation3 + $0x70] sm:$0xff] %vm1646, %v1553
      %1655 = vst.msk [vmem:[#allocation3 + $0x80] sm:$0xff] %vm1646, %v1555
      %1656 = vst.msk [vmem:[#allocation3 + $0x90] sm:$0xff] %vm1646, %v1557
      %1657 = vst.msk [vmem:[#allocation3 + $0xa0] sm:$0xff] %vm1646, %v1559
      %1658 = vst.msk [vmem:[#allocation3 + $0xb0] sm:$0xff] %vm1646, %v1561
      %1659 = vst.msk [vmem:[#allocation3 + $0xc0] sm:$0xff] %vm1646, %v1563
      %1660 = vst.msk [vmem:[#allocation3 + $0xd0] sm:$0xff] %vm1646, %v1565
      %1661 = vst.msk [vmem:[#allocation3 + $0xe0] sm:$0xff] %vm1646, %v1567
      %1662 = vst.msk [vmem:[#allocation3 + $0xf0] sm:$0xff] %vm1646, %v1569
      %1663 = vst.msk [vmem:[#allocation3 + $0x100] sm:$0xff] %vm1646, %v1571
      %1664 = vst.msk [vmem:[#allocation3 + $0x110] sm:$0xff] %vm1646, %v1573
      %1665 = vst.msk [vmem:[#allocation3 + $0x120] sm:$0xff] %vm1646, %v1575
      %1666 = vst.msk [vmem:[#allocation3 + $0x130] sm:$0xff] %vm1646, %v1577
      %1667 = vst.msk [vmem:[#allocation3 + $0x140] sm:$0xff] %vm1646, %v1579
      %1668 = vst.msk [vmem:[#allocation3 + $0x150] sm:$0xff] %vm1646, %v1581
      %1669 = vst.msk [vmem:[#allocation3 + $0x160] sm:$0xff] %vm1646, %v1583
      %1670 = vst.msk [vmem:[#allocation3 + $0x170] sm:$0xff] %vm1646, %v1585
      %1671 = vst.msk [vmem:[#allocation3 + $0x180] sm:$0xff] %vm1646, %v1587
      %1672 = vst.msk [vmem:[#allocation3 + $0x190] sm:$0xff] %vm1646, %v1589
      %1673 = vst.msk [vmem:[#allocation3 + $0x1a0] sm:$0xff] %vm1646, %v1591
      %1674 = vst.msk [vmem:[#allocation3 + $0x1b0] sm:$0xff] %vm1646, %v1593
      %1675 = vst.msk [vmem:[#allocation3 + $0x1c0] sm:$0xff] %vm1646, %v1595
      %1676 = vst.msk [vmem:[#allocation3 + $0x1d0] sm:$0xff] %vm1646, %v1597
      %1677 = vst.msk [vmem:[#allocation3 + $0x1e0] sm:$0xff] %vm1646, %v1599
      %1678 = vst.msk [vmem:[#allocation3 + $0x1f0] sm:$0xff] %vm1646, %v1601
      %1679 = vst.msk [vmem:[#allocation3 + $0x200] sm:$0xff] %vm1646, %v1603
      %1680 = vst.msk [vmem:[#allocation3 + $0x210] sm:$0xff] %vm1646, %v1605
      %1681 = vst.msk [vmem:[#allocation3 + $0x220] sm:$0xff] %vm1646, %v1607
      %vm1682 = vcmask 193696
      %1683 = vst.msk [vmem:[#allocation3 + $0x230] sm:$0x3f] %vm1682, %v1609
      %v1684 = vld [vmem:[%s504 + $0x24] sm:$0xff]
      %v1685 = vld [vmem:[%s504 + $0x2c] sm:$0xff]
      %v1686 = vld [vmem:[%s504 + $0x34] sm:$0xff]
      %v1687 = vld [vmem:[%s504 + $0x3c] sm:$0xff]
      %v1688 = vld [vmem:[%s504 + $0x44] sm:$0xff]
      %v1689 = vld [vmem:[%s504 + $0x4c] sm:$0xff]
      %v1690 = vld [vmem:[%s504 + $0x54] sm:$0xff]
      %v1691 = vld [vmem:[%s504 + $0x5c] sm:$0xff]
      %v1692 = vld [vmem:[%s504 + $0x64] sm:$0xff]
      %v1693 = vld [vmem:[%s504 + $0x6c] sm:$0xff]
      %v1694 = vld [vmem:[%s504 + $0x74] sm:$0xff]
      %v1695 = vld [vmem:[%s504 + $0x7c] sm:$0xff]
      %v1696 = vld [vmem:[%s504 + $0x84] sm:$0xff]
      %v1697 = vld [vmem:[%s504 + $0x8c] sm:$0xff]
      %v1698 = vld [vmem:[%s504 + $0x94] sm:$0xff]
      %v1699 = vld [vmem:[%s504 + $0x9c] sm:$0xff]
      %v1700 = vld [vmem:[%s504 + $0xa4] sm:$0xff]
      %v1701 = vld [vmem:[%s504 + $0xac] sm:$0xff]
      %v1702 = vld [vmem:[%s504 + $0xb4] sm:$0xff]
      %v1703 = vld [vmem:[%s504 + $0xbc] sm:$0xff]
      %v1704 = vld [vmem:[%s504 + $0xc4] sm:$0xff]
      %v1705 = vld [vmem:[%s504 + $0xcc] sm:$0xff]
      %v1706 = vld [vmem:[%s504 + $0xd4] sm:$0xff]
      %v1707 = vld [vmem:[%s504 + $0xdc] sm:$0xff]
      %v1708 = vld [vmem:[%s504 + $0xe4] sm:$0xff]
      %v1709 = vld [vmem:[%s504 + $0xec] sm:$0xff]
      %v1710 = vld [vmem:[%s504 + $0xf4] sm:$0xff]
      %v1711 = vld [vmem:[%s504 + $0xfc] sm:$0xff]
      %v1712 = vld [vmem:[%s504 + $0x104] sm:$0xff]
      %v1713 = vld [vmem:[%s504 + $0x10c] sm:$0xff]
      %v1714 = vld [vmem:[%s504 + $0x114] sm:$0xff]
      %v1715 = vld [vmem:[%s504 + $0x11c] sm:$0xff]
      %v1716 = vld [vmem:[%s504 + $0x124] sm:$0xff]
      %v1717 = vld [vmem:[%s504 + $0x12c] sm:$0xff]
      %v1718 = vld [vmem:[%s504 + $0x134] sm:$0xff]
      %v1719 = vld [vmem:[%s504 + $0x13c] sm:$0x3f]
      %1756 = vrot.lane.b32.xlu0 %v1684, 24
      %v1757 = vpop.permute.xlu0 %1756
      %1758 = vrot.lane.b32.xlu0 %v1685, 24
      %v1759 = vpop.permute.xlu0 %1758
      %1760 = vrot.lane.b32.xlu0 %v1686, 24
      %v1761 = vpop.permute.xlu0 %1760
      %1762 = vrot.lane.b32.xlu0 %v1687, 24
      %v1763 = vpop.permute.xlu0 %1762
      %1764 = vrot.lane.b32.xlu0 %v1688, 24
      %v1765 = vpop.permute.xlu0 %1764
      %1766 = vrot.lane.b32.xlu0 %v1689, 24
      %v1767 = vpop.permute.xlu0 %1766
      %1768 = vrot.lane.b32.xlu0 %v1690, 24
      %v1769 = vpop.permute.xlu0 %1768
      %1770 = vrot.lane.b32.xlu0 %v1691, 24
      %v1771 = vpop.permute.xlu0 %1770
      %1772 = vrot.lane.b32.xlu0 %v1692, 24
      %v1773 = vpop.permute.xlu0 %1772
      %1774 = vrot.lane.b32.xlu0 %v1693, 24
      %v1775 = vpop.permute.xlu0 %1774
      %1776 = vrot.lane.b32.xlu0 %v1694, 24
      %v1777 = vpop.permute.xlu0 %1776
      %1778 = vrot.lane.b32.xlu0 %v1695, 24
      %v1779 = vpop.permute.xlu0 %1778
      %1780 = vrot.lane.b32.xlu0 %v1696, 24
      %v1781 = vpop.permute.xlu0 %1780
      %1782 = vrot.lane.b32.xlu0 %v1697, 24
      %v1783 = vpop.permute.xlu0 %1782
      %1784 = vrot.lane.b32.xlu0 %v1698, 24
      %v1785 = vpop.permute.xlu0 %1784
      %1786 = vrot.lane.b32.xlu0 %v1699, 24
      %v1787 = vpop.permute.xlu0 %1786
      %1788 = vrot.lane.b32.xlu0 %v1700, 24
      %v1789 = vpop.permute.xlu0 %1788
      %1790 = vrot.lane.b32.xlu0 %v1701, 24
      %v1791 = vpop.permute.xlu0 %1790
      %1792 = vrot.lane.b32.xlu0 %v1702, 24
      %v1793 = vpop.permute.xlu0 %1792
      %1794 = vrot.lane.b32.xlu0 %v1703, 24
      %v1795 = vpop.permute.xlu0 %1794
      %1796 = vrot.lane.b32.xlu0 %v1704, 24
      %v1797 = vpop.permute.xlu0 %1796
      %1798 = vrot.lane.b32.xlu0 %v1705, 24
      %v1799 = vpop.permute.xlu0 %1798
      %1800 = vrot.lane.b32.xlu0 %v1706, 24
      %v1801 = vpop.permute.xlu0 %1800
      %1802 = vrot.lane.b32.xlu0 %v1707, 24
      %v1803 = vpop.permute.xlu0 %1802
      %1804 = vrot.lane.b32.xlu0 %v1708, 24
      %v1805 = vpop.permute.xlu0 %1804
      %1806 = vrot.lane.b32.xlu0 %v1709, 24
      %v1807 = vpop.permute.xlu0 %1806
      %1808 = vrot.lane.b32.xlu0 %v1710, 24
      %v1809 = vpop.permute.xlu0 %1808
      %1810 = vrot.lane.b32.xlu0 %v1711, 24
      %v1811 = vpop.permute.xlu0 %1810
      %1812 = vrot.lane.b32.xlu0 %v1712, 24
      %v1813 = vpop.permute.xlu0 %1812
      %1814 = vrot.lane.b32.xlu0 %v1713, 24
      %v1815 = vpop.permute.xlu0 %1814
      %1816 = vrot.lane.b32.xlu0 %v1714, 24
      %v1817 = vpop.permute.xlu0 %1816
      %1818 = vrot.lane.b32.xlu0 %v1715, 24
      %v1819 = vpop.permute.xlu0 %1818
      %1820 = vrot.lane.b32.xlu0 %v1716, 24
      %v1821 = vpop.permute.xlu0 %1820
      %1822 = vrot.lane.b32.xlu0 %v1717, 24
      %v1823 = vpop.permute.xlu0 %1822
      %1824 = vrot.lane.b32.xlu0 %v1718, 24
      %v1825 = vpop.permute.xlu0 %1824
      %1826 = vrot.lane.b32.xlu0 %v1719, 24
      %v1827 = vpop.permute.xlu0 %1826
      %vm1864 = vcmask 228544
      %1865 = vst.msk [vmem:[#allocation3] sm:$0xff] %vm1864, %v1757
      %1866 = vst.msk [vmem:[#allocation3 + $0x10] sm:$0xff] %vm1864, %v1759
      %1867 = vst.msk [vmem:[#allocation3 + $0x20] sm:$0xff] %vm1864, %v1761
      %1868 = vst.msk [vmem:[#allocation3 + $0x30] sm:$0xff] %vm1864, %v1763
      %1869 = vst.msk [vmem:[#allocation3 + $0x40] sm:$0xff] %vm1864, %v1765
      %1870 = vst.msk [vmem:[#allocation3 + $0x50] sm:$0xff] %vm1864, %v1767
      %1871 = vst.msk [vmem:[#allocation3 + $0x60] sm:$0xff] %vm1864, %v1769
      %1872 = vst.msk [vmem:[#allocation3 + $0x70] sm:$0xff] %vm1864, %v1771
      %1873 = vst.msk [vmem:[#allocation3 + $0x80] sm:$0xff] %vm1864, %v1773
      %1874 = vst.msk [vmem:[#allocation3 + $0x90] sm:$0xff] %vm1864, %v1775
      %1875 = vst.msk [vmem:[#allocation3 + $0xa0] sm:$0xff] %vm1864, %v1777
      %1876 = vst.msk [vmem:[#allocation3 + $0xb0] sm:$0xff] %vm1864, %v1779
      %1877 = vst.msk [vmem:[#allocation3 + $0xc0] sm:$0xff] %vm1864, %v1781
      %1878 = vst.msk [vmem:[#allocation3 + $0xd0] sm:$0xff] %vm1864, %v1783
      %1879 = vst.msk [vmem:[#allocation3 + $0xe0] sm:$0xff] %vm1864, %v1785
      %1880 = vst.msk [vmem:[#allocation3 + $0xf0] sm:$0xff] %vm1864, %v1787
      %1881 = vst.msk [vmem:[#allocation3 + $0x100] sm:$0xff] %vm1864, %v1789
      %1882 = vst.msk [vmem:[#allocation3 + $0x110] sm:$0xff] %vm1864, %v1791
      %1883 = vst.msk [vmem:[#allocation3 + $0x120] sm:$0xff] %vm1864, %v1793
      %1884 = vst.msk [vmem:[#allocation3 + $0x130] sm:$0xff] %vm1864, %v1795
      %1885 = vst.msk [vmem:[#allocation3 + $0x140] sm:$0xff] %vm1864, %v1797
      %1886 = vst.msk [vmem:[#allocation3 + $0x150] sm:$0xff] %vm1864, %v1799
      %1887 = vst.msk [vmem:[#allocation3 + $0x160] sm:$0xff] %vm1864, %v1801
      %1888 = vst.msk [vmem:[#allocation3 + $0x170] sm:$0xff] %vm1864, %v1803
      %1889 = vst.msk [vmem:[#allocation3 + $0x180] sm:$0xff] %vm1864, %v1805
      %1890 = vst.msk [vmem:[#allocation3 + $0x190] sm:$0xff] %vm1864, %v1807
      %1891 = vst.msk [vmem:[#allocation3 + $0x1a0] sm:$0xff] %vm1864, %v1809
      %1892 = vst.msk [vmem:[#allocation3 + $0x1b0] sm:$0xff] %vm1864, %v1811
      %1893 = vst.msk [vmem:[#allocation3 + $0x1c0] sm:$0xff] %vm1864, %v1813
      %1894 = vst.msk [vmem:[#allocation3 + $0x1d0] sm:$0xff] %vm1864, %v1815
      %1895 = vst.msk [vmem:[#allocation3 + $0x1e0] sm:$0xff] %vm1864, %v1817
      %1896 = vst.msk [vmem:[#allocation3 + $0x1f0] sm:$0xff] %vm1864, %v1819
      %1897 = vst.msk [vmem:[#allocation3 + $0x200] sm:$0xff] %vm1864, %v1821
      %1898 = vst.msk [vmem:[#allocation3 + $0x210] sm:$0xff] %vm1864, %v1823
      %1899 = vst.msk [vmem:[#allocation3 + $0x220] sm:$0xff] %vm1864, %v1825
      %vm1900 = vcmask 226496
      %1901 = vst.msk [vmem:[#allocation3 + $0x230] sm:$0x3f] %vm1900, %v1827
      %v1902 = vld [vmem:[%s504 + $0x25] sm:$0xff]
      %v1903 = vld [vmem:[%s504 + $0x2d] sm:$0xff]
      %v1904 = vld [vmem:[%s504 + $0x35] sm:$0xff]
      %v1905 = vld [vmem:[%s504 + $0x3d] sm:$0xff]
      %v1906 = vld [vmem:[%s504 + $0x45] sm:$0xff]
      %v1907 = vld [vmem:[%s504 + $0x4d] sm:$0xff]
      %v1908 = vld [vmem:[%s504 + $0x55] sm:$0xff]
      %v1909 = vld [vmem:[%s504 + $0x5d] sm:$0xff]
      %v1910 = vld [vmem:[%s504 + $0x65] sm:$0xff]
      %v1911 = vld [vmem:[%s504 + $0x6d] sm:$0xff]
      %v1912 = vld [vmem:[%s504 + $0x75] sm:$0xff]
      %v1913 = vld [vmem:[%s504 + $0x7d] sm:$0xff]
      %v1914 = vld [vmem:[%s504 + $0x85] sm:$0xff]
      %v1915 = vld [vmem:[%s504 + $0x8d] sm:$0xff]
      %v1916 = vld [vmem:[%s504 + $0x95] sm:$0xff]
      %v1917 = vld [vmem:[%s504 + $0x9d] sm:$0xff]
      %v1918 = vld [vmem:[%s504 + $0xa5] sm:$0xff]
      %v1919 = vld [vmem:[%s504 + $0xad] sm:$0xff]
      %v1920 = vld [vmem:[%s504 + $0xb5] sm:$0xff]
      %v1921 = vld [vmem:[%s504 + $0xbd] sm:$0xff]
      %v1922 = vld [vmem:[%s504 + $0xc5] sm:$0xff]
      %v1923 = vld [vmem:[%s504 + $0xcd] sm:$0xff]
      %v1924 = vld [vmem:[%s504 + $0xd5] sm:$0xff]
      %v1925 = vld [vmem:[%s504 + $0xdd] sm:$0xff]
      %v1926 = vld [vmem:[%s504 + $0xe5] sm:$0xff]
      %v1927 = vld [vmem:[%s504 + $0xed] sm:$0xff]
      %v1928 = vld [vmem:[%s504 + $0xf5] sm:$0xff]
      %v1929 = vld [vmem:[%s504 + $0xfd] sm:$0xff]
      %v1930 = vld [vmem:[%s504 + $0x105] sm:$0xff]
      %v1931 = vld [vmem:[%s504 + $0x10d] sm:$0xff]
      %v1932 = vld [vmem:[%s504 + $0x115] sm:$0xff]
      %v1933 = vld [vmem:[%s504 + $0x11d] sm:$0xff]
      %v1934 = vld [vmem:[%s504 + $0x125] sm:$0xff]
      %v1935 = vld [vmem:[%s504 + $0x12d] sm:$0xff]
      %v1936 = vld [vmem:[%s504 + $0x135] sm:$0xff]
      %v1937 = vld [vmem:[%s504 + $0x13d] sm:$0x3f]
      %1974 = vrot.lane.b32.xlu0 %v1902, 28
      %v1975 = vpop.permute.xlu0 %1974
      %1976 = vrot.lane.b32.xlu0 %v1903, 28
      %v1977 = vpop.permute.xlu0 %1976
      %1978 = vrot.lane.b32.xlu0 %v1904, 28
      %v1979 = vpop.permute.xlu0 %1978
      %1980 = vrot.lane.b32.xlu0 %v1905, 28
      %v1981 = vpop.permute.xlu0 %1980
      %1982 = vrot.lane.b32.xlu0 %v1906, 28
      %v1983 = vpop.permute.xlu0 %1982
      %1984 = vrot.lane.b32.xlu0 %v1907, 28
      %v1985 = vpop.permute.xlu0 %1984
      %1986 = vrot.lane.b32.xlu0 %v1908, 28
      %v1987 = vpop.permute.xlu0 %1986
      %1988 = vrot.lane.b32.xlu0 %v1909, 28
      %v1989 = vpop.permute.xlu0 %1988
      %1990 = vrot.lane.b32.xlu0 %v1910, 28
      %v1991 = vpop.permute.xlu0 %1990
      %1992 = vrot.lane.b32.xlu0 %v1911, 28
      %v1993 = vpop.permute.xlu0 %1992
      %1994 = vrot.lane.b32.xlu0 %v1912, 28
      %v1995 = vpop.permute.xlu0 %1994
      %1996 = vrot.lane.b32.xlu0 %v1913, 28
      %v1997 = vpop.permute.xlu0 %1996
      %1998 = vrot.lane.b32.xlu0 %v1914, 28
      %v1999 = vpop.permute.xlu0 %1998
      %2000 = vrot.lane.b32.xlu0 %v1915, 28
      %v2001 = vpop.permute.xlu0 %2000
      %2002 = vrot.lane.b32.xlu0 %v1916, 28
      %v2003 = vpop.permute.xlu0 %2002
      %2004 = vrot.lane.b32.xlu0 %v1917, 28
      %v2005 = vpop.permute.xlu0 %2004
      %2006 = vrot.lane.b32.xlu0 %v1918, 28
      %v2007 = vpop.permute.xlu0 %2006
      %2008 = vrot.lane.b32.xlu0 %v1919, 28
      %v2009 = vpop.permute.xlu0 %2008
      %2010 = vrot.lane.b32.xlu0 %v1920, 28
      %v2011 = vpop.permute.xlu0 %2010
      %2012 = vrot.lane.b32.xlu0 %v1921, 28
      %v2013 = vpop.permute.xlu0 %2012
      %2014 = vrot.lane.b32.xlu0 %v1922, 28
      %v2015 = vpop.permute.xlu0 %2014
      %2016 = vrot.lane.b32.xlu0 %v1923, 28
      %v2017 = vpop.permute.xlu0 %2016
      %2018 = vrot.lane.b32.xlu0 %v1924, 28
      %v2019 = vpop.permute.xlu0 %2018
      %2020 = vrot.lane.b32.xlu0 %v1925, 28
      %v2021 = vpop.permute.xlu0 %2020
      %2022 = vrot.lane.b32.xlu0 %v1926, 28
      %v2023 = vpop.permute.xlu0 %2022
      %2024 = vrot.lane.b32.xlu0 %v1927, 28
      %v2025 = vpop.permute.xlu0 %2024
      %2026 = vrot.lane.b32.xlu0 %v1928, 28
      %v2027 = vpop.permute.xlu0 %2026
      %2028 = vrot.lane.b32.xlu0 %v1929, 28
      %v2029 = vpop.permute.xlu0 %2028
      %2030 = vrot.lane.b32.xlu0 %v1930, 28
      %v2031 = vpop.permute.xlu0 %2030
      %2032 = vrot.lane.b32.xlu0 %v1931, 28
      %v2033 = vpop.permute.xlu0 %2032
      %2034 = vrot.lane.b32.xlu0 %v1932, 28
      %v2035 = vpop.permute.xlu0 %2034
      %2036 = vrot.lane.b32.xlu0 %v1933, 28
      %v2037 = vpop.permute.xlu0 %2036
      %2038 = vrot.lane.b32.xlu0 %v1934, 28
      %v2039 = vpop.permute.xlu0 %2038
      %2040 = vrot.lane.b32.xlu0 %v1935, 28
      %v2041 = vpop.permute.xlu0 %2040
      %2042 = vrot.lane.b32.xlu0 %v1936, 28
      %v2043 = vpop.permute.xlu0 %2042
      %2044 = vrot.lane.b32.xlu0 %v1937, 28
      %v2045 = vpop.permute.xlu0 %2044
      %vm2082 = vcmask 261344
      %2083 = vst.msk [vmem:[#allocation3] sm:$0xff] %vm2082, %v1975
      %2084 = vst.msk [vmem:[#allocation3 + $0x10] sm:$0xff] %vm2082, %v1977
      %2085 = vst.msk [vmem:[#allocation3 + $0x20] sm:$0xff] %vm2082, %v1979
      %2086 = vst.msk [vmem:[#allocation3 + $0x30] sm:$0xff] %vm2082, %v1981
      %2087 = vst.msk [vmem:[#allocation3 + $0x40] sm:$0xff] %vm2082, %v1983
      %2088 = vst.msk [vmem:[#allocation3 + $0x50] sm:$0xff] %vm2082, %v1985
      %2089 = vst.msk [vmem:[#allocation3 + $0x60] sm:$0xff] %vm2082, %v1987
      %2090 = vst.msk [vmem:[#allocation3 + $0x70] sm:$0xff] %vm2082, %v1989
      %2091 = vst.msk [vmem:[#allocation3 + $0x80] sm:$0xff] %vm2082, %v1991
      %2092 = vst.msk [vmem:[#allocation3 + $0x90] sm:$0xff] %vm2082, %v1993
      %2093 = vst.msk [vmem:[#allocation3 + $0xa0] sm:$0xff] %vm2082, %v1995
      %2094 = vst.msk [vmem:[#allocation3 + $0xb0] sm:$0xff] %vm2082, %v1997
      %2095 = vst.msk [vmem:[#allocation3 + $0xc0] sm:$0xff] %vm2082, %v1999
      %2096 = vst.msk [vmem:[#allocation3 + $0xd0] sm:$0xff] %vm2082, %v2001
      %2097 = vst.msk [vmem:[#allocation3 + $0xe0] sm:$0xff] %vm2082, %v2003
      %2098 = vst.msk [vmem:[#allocation3 + $0xf0] sm:$0xff] %vm2082, %v2005
      %2099 = vst.msk [vmem:[#allocation3 + $0x100] sm:$0xff] %vm2082, %v2007
      %2100 = vst.msk [vmem:[#allocation3 + $0x110] sm:$0xff] %vm2082, %v2009
      %2101 = vst.msk [vmem:[#allocation3 + $0x120] sm:$0xff] %vm2082, %v2011
      %2102 = vst.msk [vmem:[#allocation3 + $0x130] sm:$0xff] %vm2082, %v2013
      %2103 = vst.msk [vmem:[#allocation3 + $0x140] sm:$0xff] %vm2082, %v2015
      %2104 = vst.msk [vmem:[#allocation3 + $0x150] sm:$0xff] %vm2082, %v2017
      %2105 = vst.msk [vmem:[#allocation3 + $0x160] sm:$0xff] %vm2082, %v2019
      %2106 = vst.msk [vmem:[#allocation3 + $0x170] sm:$0xff] %vm2082, %v2021
      %2107 = vst.msk [vmem:[#allocation3 + $0x180] sm:$0xff] %vm2082, %v2023
      %2108 = vst.msk [vmem:[#allocation3 + $0x190] sm:$0xff] %vm2082, %v2025
      %2109 = vst.msk [vmem:[#allocation3 + $0x1a0] sm:$0xff] %vm2082, %v2027
      %2110 = vst.msk [vmem:[#allocation3 + $0x1b0] sm:$0xff] %vm2082, %v2029
      %2111 = vst.msk [vmem:[#allocation3 + $0x1c0] sm:$0xff] %vm2082, %v2031
      %2112 = vst.msk [vmem:[#allocation3 + $0x1d0] sm:$0xff] %vm2082, %v2033
      %2113 = vst.msk [vmem:[#allocation3 + $0x1e0] sm:$0xff] %vm2082, %v2035
      %2114 = vst.msk [vmem:[#allocation3 + $0x1f0] sm:$0xff] %vm2082, %v2037
      %2115 = vst.msk [vmem:[#allocation3 + $0x200] sm:$0xff] %vm2082, %v2039
      %2116 = vst.msk [vmem:[#allocation3 + $0x210] sm:$0xff] %vm2082, %v2041
      %2117 = vst.msk [vmem:[#allocation3 + $0x220] sm:$0xff] %vm2082, %v2043
      %vm2118 = vcmask 259296
      %2119 = vst.msk [vmem:[#allocation3 + $0x230] sm:$0x3f] %vm2118, %v2045
      %v2120 = vld [vmem:[%s504 + $0x26] sm:$0xff]
      %v2121 = vld [vmem:[%s504 + $0x2e] sm:$0xff]
      %v2122 = vld [vmem:[%s504 + $0x36] sm:$0xff]
      %v2123 = vld [vmem:[%s504 + $0x3e] sm:$0xff]
      %v2124 = vld [vmem:[%s504 + $0x46] sm:$0xff]
      %v2125 = vld [vmem:[%s504 + $0x4e] sm:$0xff]
      %v2126 = vld [vmem:[%s504 + $0x56] sm:$0xff]
      %v2127 = vld [vmem:[%s504 + $0x5e] sm:$0xff]
      %v2128 = vld [vmem:[%s504 + $0x66] sm:$0xff]
      %v2129 = vld [vmem:[%s504 + $0x6e] sm:$0xff]
      %v2130 = vld [vmem:[%s504 + $0x76] sm:$0xff]
      %v2131 = vld [vmem:[%s504 + $0x7e] sm:$0xff]
      %v2132 = vld [vmem:[%s504 + $0x86] sm:$0xff]
      %v2133 = vld [vmem:[%s504 + $0x8e] sm:$0xff]
      %v2134 = vld [vmem:[%s504 + $0x96] sm:$0xff]
      %v2135 = vld [vmem:[%s504 + $0x9e] sm:$0xff]
      %v2136 = vld [vmem:[%s504 + $0xa6] sm:$0xff]
      %v2137 = vld [vmem:[%s504 + $0xae] sm:$0xff]
      %v2138 = vld [vmem:[%s504 + $0xb6] sm:$0xff]
      %v2139 = vld [vmem:[%s504 + $0xbe] sm:$0xff]
      %v2140 = vld [vmem:[%s504 + $0xc6] sm:$0xff]
      %v2141 = vld [vmem:[%s504 + $0xce] sm:$0xff]
      %v2142 = vld [vmem:[%s504 + $0xd6] sm:$0xff]
      %v2143 = vld [vmem:[%s504 + $0xde] sm:$0xff]
      %v2144 = vld [vmem:[%s504 + $0xe6] sm:$0xff]
      %v2145 = vld [vmem:[%s504 + $0xee] sm:$0xff]
      %v2146 = vld [vmem:[%s504 + $0xf6] sm:$0xff]
      %v2147 = vld [vmem:[%s504 + $0xfe] sm:$0xff]
      %v2148 = vld [vmem:[%s504 + $0x106] sm:$0xff]
      %v2149 = vld [vmem:[%s504 + $0x10e] sm:$0xff]
      %v2150 = vld [vmem:[%s504 + $0x116] sm:$0xff]
      %v2151 = vld [vmem:[%s504 + $0x11e] sm:$0xff]
      %v2152 = vld [vmem:[%s504 + $0x126] sm:$0xff]
      %v2153 = vld [vmem:[%s504 + $0x12e] sm:$0xff]
      %v2154 = vld [vmem:[%s504 + $0x136] sm:$0xff]
      %v2155 = vld [vmem:[%s504 + $0x13e] sm:$0x3f]
      %2192 = vrot.lane.b32.xlu0 %v2120, 32
      %v2193 = vpop.permute.xlu0 %2192
      %2194 = vrot.lane.b32.xlu0 %v2121, 32
      %v2195 = vpop.permute.xlu0 %2194
      %2196 = vrot.lane.b32.xlu0 %v2122, 32
      %v2197 = vpop.permute.xlu0 %2196
      %2198 = vrot.lane.b32.xlu0 %v2123, 32
      %v2199 = vpop.permute.xlu0 %2198
      %2200 = vrot.lane.b32.xlu0 %v2124, 32
      %v2201 = vpop.permute.xlu0 %2200
      %2202 = vrot.lane.b32.xlu0 %v2125, 32
      %v2203 = vpop.permute.xlu0 %2202
      %2204 = vrot.lane.b32.xlu0 %v2126, 32
      %v2205 = vpop.permute.xlu0 %2204
      %2206 = vrot.lane.b32.xlu0 %v2127, 32
      %v2207 = vpop.permute.xlu0 %2206
      %2208 = vrot.lane.b32.xlu0 %v2128, 32
      %v2209 = vpop.permute.xlu0 %2208
      %2210 = vrot.lane.b32.xlu0 %v2129, 32
      %v2211 = vpop.permute.xlu0 %2210
      %2212 = vrot.lane.b32.xlu0 %v2130, 32
      %v2213 = vpop.permute.xlu0 %2212
      %2214 = vrot.lane.b32.xlu0 %v2131, 32
      %v2215 = vpop.permute.xlu0 %2214
      %2216 = vrot.lane.b32.xlu0 %v2132, 32
      %v2217 = vpop.permute.xlu0 %2216
      %2218 = vrot.lane.b32.xlu0 %v2133, 32
      %v2219 = vpop.permute.xlu0 %2218
      %2220 = vrot.lane.b32.xlu0 %v2134, 32
      %v2221 = vpop.permute.xlu0 %2220
      %2222 = vrot.lane.b32.xlu0 %v2135, 32
      %v2223 = vpop.permute.xlu0 %2222
      %2224 = vrot.lane.b32.xlu0 %v2136, 32
      %v2225 = vpop.permute.xlu0 %2224
      %2226 = vrot.lane.b32.xlu0 %v2137, 32
      %v2227 = vpop.permute.xlu0 %2226
      %2228 = vrot.lane.b32.xlu0 %v2138, 32
      %v2229 = vpop.permute.xlu0 %2228
      %2230 = vrot.lane.b32.xlu0 %v2139, 32
      %v2231 = vpop.permute.xlu0 %2230
      %2232 = vrot.lane.b32.xlu0 %v2140, 32
      %v2233 = vpop.permute.xlu0 %2232
      %2234 = vrot.lane.b32.xlu0 %v2141, 32
      %v2235 = vpop.permute.xlu0 %2234
      %2236 = vrot.lane.b32.xlu0 %v2142, 32
      %v2237 = vpop.permute.xlu0 %2236
      %2238 = vrot.lane.b32.xlu0 %v2143, 32
      %v2239 = vpop.permute.xlu0 %2238
      %2240 = vrot.lane.b32.xlu0 %v2144, 32
      %v2241 = vpop.permute.xlu0 %2240
      %2242 = vrot.lane.b32.xlu0 %v2145, 32
      %v2243 = vpop.permute.xlu0 %2242
      %2244 = vrot.lane.b32.xlu0 %v2146, 32
      %v2245 = vpop.permute.xlu0 %2244
      %2246 = vrot.lane.b32.xlu0 %v2147, 32
      %v2247 = vpop.permute.xlu0 %2246
      %2248 = vrot.lane.b32.xlu0 %v2148, 32
      %v2249 = vpop.permute.xlu0 %2248
      %2250 = vrot.lane.b32.xlu0 %v2149, 32
      %v2251 = vpop.permute.xlu0 %2250
      %2252 = vrot.lane.b32.xlu0 %v2150, 32
      %v2253 = vpop.permute.xlu0 %2252
      %2254 = vrot.lane.b32.xlu0 %v2151, 32
      %v2255 = vpop.permute.xlu0 %2254
      %2256 = vrot.lane.b32.xlu0 %v2152, 32
      %v2257 = vpop.permute.xlu0 %2256
      %2258 = vrot.lane.b32.xlu0 %v2153, 32
      %v2259 = vpop.permute.xlu0 %2258
      %2260 = vrot.lane.b32.xlu0 %v2154, 32
      %v2261 = vpop.permute.xlu0 %2260
      %2262 = vrot.lane.b32.xlu0 %v2155, 32
      %v2263 = vpop.permute.xlu0 %2262
      %vm2300 = vcmask 294144
      %2301 = vst.msk [vmem:[#allocation3] sm:$0xff] %vm2300, %v2193
      %2302 = vst.msk [vmem:[#allocation3 + $0x10] sm:$0xff] %vm2300, %v2195
      %2303 = vst.msk [vmem:[#allocation3 + $0x20] sm:$0xff] %vm2300, %v2197
      %2304 = vst.msk [vmem:[#allocation3 + $0x30] sm:$0xff] %vm2300, %v2199
      %2305 = vst.msk [vmem:[#allocation3 + $0x40] sm:$0xff] %vm2300, %v2201
      %2306 = vst.msk [vmem:[#allocation3 + $0x50] sm:$0xff] %vm2300, %v2203
      %2307 = vst.msk [vmem:[#allocation3 + $0x60] sm:$0xff] %vm2300, %v2205
      %2308 = vst.msk [vmem:[#allocation3 + $0x70] sm:$0xff] %vm2300, %v2207
      %2309 = vst.msk [vmem:[#allocation3 + $0x80] sm:$0xff] %vm2300, %v2209
      %2310 = vst.msk [vmem:[#allocation3 + $0x90] sm:$0xff] %vm2300, %v2211
      %2311 = vst.msk [vmem:[#allocation3 + $0xa0] sm:$0xff] %vm2300, %v2213
      %2312 = vst.msk [vmem:[#allocation3 + $0xb0] sm:$0xff] %vm2300, %v2215
      %2313 = vst.msk [vmem:[#allocation3 + $0xc0] sm:$0xff] %vm2300, %v2217
      %2314 = vst.msk [vmem:[#allocation3 + $0xd0] sm:$0xff] %vm2300, %v2219
      %2315 = vst.msk [vmem:[#allocation3 + $0xe0] sm:$0xff] %vm2300, %v2221
      %2316 = vst.msk [vmem:[#allocation3 + $0xf0] sm:$0xff] %vm2300, %v2223
      %2317 = vst.msk [vmem:[#allocation3 + $0x100] sm:$0xff] %vm2300, %v2225
      %2318 = vst.msk [vmem:[#allocation3 + $0x110] sm:$0xff] %vm2300, %v2227
      %2319 = vst.msk [vmem:[#allocation3 + $0x120] sm:$0xff] %vm2300, %v2229
      %2320 = vst.msk [vmem:[#allocation3 + $0x130] sm:$0xff] %vm2300, %v2231
      %2321 = vst.msk [vmem:[#allocation3 + $0x140] sm:$0xff] %vm2300, %v2233
      %2322 = vst.msk [vmem:[#allocation3 + $0x150] sm:$0xff] %vm2300, %v2235
      %2323 = vst.msk [vmem:[#allocation3 + $0x160] sm:$0xff] %vm2300, %v2237
      %2324 = vst.msk [vmem:[#allocation3 + $0x170] sm:$0xff] %vm2300, %v2239
      %2325 = vst.msk [vmem:[#allocation3 + $0x180] sm:$0xff] %vm2300, %v2241
      %2326 = vst.msk [vmem:[#allocation3 + $0x190] sm:$0xff] %vm2300, %v2243
      %2327 = vst.msk [vmem:[#allocation3 + $0x1a0] sm:$0xff] %vm2300, %v2245
      %2328 = vst.msk [vmem:[#allocation3 + $0x1b0] sm:$0xff] %vm2300, %v2247
      %2329 = vst.msk [vmem:[#allocation3 + $0x1c0] sm:$0xff] %vm2300, %v2249
      %2330 = vst.msk [vmem:[#allocation3 + $0x1d0] sm:$0xff] %vm2300, %v2251
      %2331 = vst.msk [vmem:[#allocation3 + $0x1e0] sm:$0xff] %vm2300, %v2253
      %2332 = vst.msk [vmem:[#allocation3 + $0x1f0] sm:$0xff] %vm2300, %v2255
      %2333 = vst.msk [vmem:[#allocation3 + $0x200] sm:$0xff] %vm2300, %v2257
      %2334 = vst.msk [vmem:[#allocation3 + $0x210] sm:$0xff] %vm2300, %v2259
      %2335 = vst.msk [vmem:[#allocation3 + $0x220] sm:$0xff] %vm2300, %v2261
      %vm2336 = vcmask 292096
      %2337 = vst.msk [vmem:[#allocation3 + $0x230] sm:$0x3f] %vm2336, %v2263
      %v2338 = vld [vmem:[#allocation3] sm:$0xff]
      %v2339 = vld [vmem:[#allocation3 + $0x10] sm:$0xff]
      %v2340 = vld [vmem:[#allocation3 + $0x20] sm:$0xff]
      %v2341 = vld [vmem:[#allocation3 + $0x30] sm:$0xff]
      %v2342 = vld [vmem:[#allocation3 + $0x40] sm:$0xff]
      %v2343 = vld [vmem:[#allocation3 + $0x50] sm:$0xff]
      %v2344 = vld [vmem:[#allocation3 + $0x60] sm:$0xff]
      %v2345 = vld [vmem:[#allocation3 + $0x70] sm:$0xff]
      %v2346 = vld [vmem:[#allocation3 + $0x80] sm:$0xff]
      %v2347 = vld [vmem:[#allocation3 + $0x90] sm:$0xff]
      %v2348 = vld [vmem:[#allocation3 + $0xa0] sm:$0xff]
      %v2349 = vld [vmem:[#allocation3 + $0xb0] sm:$0xff]
      %v2350 = vld [vmem:[#allocation3 + $0xc0] sm:$0xff]
      %v2351 = vld [vmem:[#allocation3 + $0xd0] sm:$0xff]
      %v2352 = vld [vmem:[#allocation3 + $0xe0] sm:$0xff]
      %v2353 = vld [vmem:[#allocation3 + $0xf0] sm:$0xff]
      %v2354 = vld [vmem:[#allocation3 + $0x100] sm:$0xff]
      %v2355 = vld [vmem:[#allocation3 + $0x110] sm:$0xff]
      %v2356 = vld [vmem:[#allocation3 + $0x120] sm:$0xff]
      %v2357 = vld [vmem:[#allocation3 + $0x130] sm:$0xff]
      %v2358 = vld [vmem:[#allocation3 + $0x140] sm:$0xff]
      %v2359 = vld [vmem:[#allocation3 + $0x150] sm:$0xff]
      %v2360 = vld [vmem:[#allocation3 + $0x160] sm:$0xff]
      %v2361 = vld [vmem:[#allocation3 + $0x170] sm:$0xff]
      %v2362 = vld [vmem:[#allocation3 + $0x180] sm:$0xff]
      %v2363 = vld [vmem:[#allocation3 + $0x190] sm:$0xff]
      %v2364 = vld [vmem:[#allocation3 + $0x1a0] sm:$0xff]
      %v2365 = vld [vmem:[#allocation3 + $0x1b0] sm:$0xff]
      %v2366 = vld [vmem:[#allocation3 + $0x1c0] sm:$0xff]
      %v2367 = vld [vmem:[#allocation3 + $0x1d0] sm:$0xff]
      %v2368 = vld [vmem:[#allocation3 + $0x1e0] sm:$0xff]
      %v2369 = vld [vmem:[#allocation3 + $0x1f0] sm:$0xff]
      %v2370 = vld [vmem:[#allocation3 + $0x200] sm:$0xff]
      %v2371 = vld [vmem:[#allocation3 + $0x210] sm:$0xff]
      %v2372 = vld [vmem:[#allocation3 + $0x220] sm:$0xff]
      %v2373 = vld [vmem:[#allocation3 + $0x230] sm:$0x3f]
      %v2374 = vld [vmem:[%s1] sm:$0xff]
      %v2375 = vld [vmem:[%s1 + $0x8] sm:$0xff]
      %v2376 = vld [vmem:[%s1 + $0x10] sm:$0xff]
      %v2377 = vld [vmem:[%s1 + $0x18] sm:$0xff]
      %v2378 = vld [vmem:[%s1 + $0x20] sm:$0xf]
      %v2379 = vld [vmem:[%s2] sm:$0x1]
      %v2381 = vlaneseq
      %v2382 = vshrl.u32 %v2381, 7
      %v2383 = vsub.s32 0, %v2382
      %v2384 = vrot.slane %v2379, %v2383
      %vm2386 = vcmask 293888
      %v2388 = vsel %vm2386, %v2338, 0
      %v2391 = vsel %vm2386, %v2339, 0
      %v2394 = vsel %vm2386, %v2340, 0
      %v2397 = vsel %vm2386, %v2341, 0
      %v2400 = vsel %vm2386, %v2342, 0
      %v2403 = vsel %vm2386, %v2343, 0
      %v2406 = vsel %vm2386, %v2344, 0
      %v2409 = vsel %vm2386, %v2345, 0
      %v2412 = vsel %vm2386, %v2346, 0
      %v2415 = vsel %vm2386, %v2347, 0
      %v2418 = vsel %vm2386, %v2348, 0
      %v2421 = vsel %vm2386, %v2349, 0
      %v2424 = vsel %vm2386, %v2350, 0
      %v2427 = vsel %vm2386, %v2351, 0
      %v2430 = vsel %vm2386, %v2352, 0
      %v2433 = vsel %vm2386, %v2353, 0
      %v2436 = vsel %vm2386, %v2354, 0
      %v2439 = vsel %vm2386, %v2355, 0
      %v2442 = vsel %vm2386, %v2356, 0
      %v2445 = vsel %vm2386, %v2357, 0
      %v2448 = vsel %vm2386, %v2358, 0
      %v2451 = vsel %vm2386, %v2359, 0
      %v2454 = vsel %vm2386, %v2360, 0
      %v2457 = vsel %vm2386, %v2361, 0
      %v2460 = vsel %vm2386, %v2362, 0
      %v2463 = vsel %vm2386, %v2363, 0
      %v2466 = vsel %vm2386, %v2364, 0
      %v2469 = vsel %vm2386, %v2365, 0
      %v2472 = vsel %vm2386, %v2366, 0
      %v2475 = vsel %vm2386, %v2367, 0
      %v2478 = vsel %vm2386, %v2368, 0
      %v2481 = vsel %vm2386, %v2369, 0
      %v2484 = vsel %vm2386, %v2370, 0
      %v2487 = vsel %vm2386, %v2371, 0
      %v2490 = vsel %vm2386, %v2372, 0
      %v2493 = vsel %vm2386, %v2373, 0
      %vm2495 = vcmask 1043456
      %v2497 = vsel %vm2495, %v2378, 0
      %2499 = vmatprep.subr.mxu0 0.0
      %2500 = vmatpush1.msra.mxu0 %v2374
      %2501 = vmatprep.subr.mxu0 0.0
      %2502 = vmatpush1.msra.mxu0 %v2375
      %2503 = vmatprep.subr.mxu0 0.0
      %2504 = vmatpush1.msra.mxu0 %v2376
      %2505 = vmatprep.subr.mxu0 0.0
      %2506 = vmatpush1.msra.mxu0 %v2377
      %2507 = vmatprep.subr.mxu0 0.0
      %2508 = vmatpush1.msra.mxu0 %v2497
      %2509 = vmatprep.subr.mxu0 0.0
      %2510 = vmatpush1.msra.mxu0 0.0
      %2511 = vmatprep.subr.mxu0 0.0
      %2512 = vmatpush1.msra.mxu0 0.0
      %2513 = vmatprep.subr.mxu0 0.0
      %2514 = vmatpush1.msra.mxu0 0.0
      %2515 = vmatprep.subr.mxu0 0.0
      %2516 = vmatpush1.msra.mxu0 0.0
      %2517 = vmatprep.subr.mxu0 0.0
      %2518 = vmatpush1.msra.mxu0 0.0
      %2519 = vmatprep.subr.mxu0 0.0
      %2520 = vmatpush1.msra.mxu0 0.0
      %2521 = vmatprep.subr.mxu0 0.0
      %2522 = vmatpush1.msra.mxu0 0.0
      %2523 = vmatprep.subr.mxu0 0.0
      %2524 = vmatpush1.msra.mxu0 0.0
      %2525 = vmatprep.subr.mxu0 0.0
      %2526 = vmatpush1.msra.mxu0 0.0
      %2527 = vmatprep.subr.mxu0 0.0
      %2528 = vmatpush1.msra.mxu0 0.0
      %2529 = vmatprep.subr.mxu0 0.0
      %2530 = vmatpush1.msra.mxu0 0.0
      %2531 = vmatprep.subr.mxu0 0.0
      %2532 = vmatpush1.msra.mxu0 0.0
      %2533 = vmatprep.subr.mxu0 0.0
      %2534 = vmatpush1.msra.mxu0 0.0
      %2535 = vmatprep.subr.mxu0 0.0
      %2536 = vmatpush1.msra.mxu0 0.0
      %2537 = vmatprep.subr.mxu0 0.0
      %2538 = vmatpush1.msra.mxu0 0.0
      %2539 = vmatprep.subr.mxu0 0.0
      %2540 = vmatpush1.msra.mxu0 0.0
      %2541 = vmatprep.subr.mxu0 0.0
      %2542 = vmatpush1.msra.mxu0 0.0
      %2543 = vmatprep.subr.mxu0 0.0
      %2544 = vmatpush1.msra.mxu0 0.0
      %2545 = vmatprep.subr.mxu0 0.0
      %2546 = vmatpush1.msra.mxu0 0.0
      %2547 = vmatprep.subr.mxu0 0.0
      %2548 = vmatpush1.msra.mxu0 0.0
      %2549 = vmatprep.subr.mxu0 0.0
      %2550 = vmatpush1.msra.mxu0 0.0
      %2551 = vmatprep.subr.mxu0 0.0
      %2552 = vmatpush1.msra.mxu0 0.0
      %2553 = vmatprep.subr.mxu0 0.0
      %2554 = vmatpush1.msra.mxu0 0.0
      %2555 = vmatprep.subr.mxu0 0.0
      %2556 = vmatpush1.msra.mxu0 0.0
      %2557 = vmatprep.subr.mxu0 0.0
      %2558 = vmatpush1.msra.mxu0 0.0
      %2559 = vmatprep.subr.mxu0 0.0
      %2560 = vmatpush1.msra.mxu0 0.0
      %2561 = vmatprep.subr.mxu0 0.0
      %2562 = vmatpush1.msra.mxu0 0.0
      %2563 = vmatprep.mubr.f32.mxu0 0.0
      %2564 = vmatmul.mubr.f32.gmra.mrb[0].mxu0 %v2388
      %v2565 = vpop.f32.mrb[0].mxu0
      %v2566 = vadd.f32 %v2384, %v2565
      %v2567 = vpop.f32.mrb[0].mxu0
      %2568 = vmatprep.mubr.f32.mxu0 0.0
      %2569 = vmatmul.mubr.f32.gmra.mrb[0].mxu0 %v2391
      %v2570 = vpop.f32.mrb[0].mxu0
      %v2571 = vadd.f32 %v2384, %v2570
      %v2572 = vpop.f32.mrb[0].mxu0
      %2573 = vmatprep.mubr.f32.mxu0 0.0
      %2574 = vmatmul.mubr.f32.gmra.mrb[0].mxu0 %v2394
      %v2575 = vpop.f32.mrb[0].mxu0
      %v2576 = vadd.f32 %v2384, %v2575
      %v2577 = vpop.f32.mrb[0].mxu0
      %2578 = vmatprep.mubr.f32.mxu0 0.0
      %2579 = vmatmul.mubr.f32.gmra.mrb[0].mxu0 %v2397
      %v2580 = vpop.f32.mrb[0].mxu0
      %v2581 = vadd.f32 %v2384, %v2580
      %v2582 = vpop.f32.mrb[0].mxu0
      %2583 = vmatprep.mubr.f32.mxu0 0.0
      %2584 = vmatmul.mubr.f32.gmra.mrb[0].mxu0 %v2400
      %v2585 = vpop.f32.mrb[0].mxu0
      %v2586 = vadd.f32 %v2384, %v2585
      %v2587 = vpop.f32.mrb[0].mxu0
      %2588 = vmatprep.mubr.f32.mxu0 0.0
      %2589 = vmatmul.mubr.f32.gmra.mrb[0].mxu0 %v2403
      %v2590 = vpop.f32.mrb[0].mxu0
      %v2591 = vadd.f32 %v2384, %v2590
      %v2592 = vpop.f32.mrb[0].mxu0
      %2593 = vmatprep.mubr.f32.mxu0 0.0
      %2594 = vmatmul.mubr.f32.gmra.mrb[0].mxu0 %v2406
      %v2595 = vpop.f32.mrb[0].mxu0
      %v2596 = vadd.f32 %v2384, %v2595
      %v2597 = vpop.f32.mrb[0].mxu0
      %2598 = vmatprep.mubr.f32.mxu0 0.0
      %2599 = vmatmul.mubr.f32.gmra.mrb[0].mxu0 %v2409
      %v2600 = vpop.f32.mrb[0].mxu0
      %v2601 = vadd.f32 %v2384, %v2600
      %v2602 = vpop.f32.mrb[0].mxu0
      %2603 = vmatprep.mubr.f32.mxu0 0.0
      %2604 = vmatmul.mubr.f32.gmra.mrb[0].mxu0 %v2412
      %v2605 = vpop.f32.mrb[0].mxu0
      %v2606 = vadd.f32 %v2384, %v2605
      %v2607 = vpop.f32.mrb[0].mxu0
      %2608 = vmatprep.mubr.f32.mxu0 0.0
      %2609 = vmatmul.mubr.f32.gmra.mrb[0].mxu0 %v2415
      %v2610 = vpop.f32.mrb[0].mxu0
      %v2611 = vadd.f32 %v2384, %v2610
      %v2612 = vpop.f32.mrb[0].mxu0
      %2613 = vmatprep.mubr.f32.mxu0 0.0
      %2614 = vmatmul.mubr.f32.gmra.mrb[0].mxu0 %v2418
      %v2615 = vpop.f32.mrb[0].mxu0
      %v2616 = vadd.f32 %v2384, %v2615
      %v2617 = vpop.f32.mrb[0].mxu0
      %2618 = vmatprep.mubr.f32.mxu0 0.0
      %2619 = vmatmul.mubr.f32.gmra.mrb[0].mxu0 %v2421
      %v2620 = vpop.f32.mrb[0].mxu0
      %v2621 = vadd.f32 %v2384, %v2620
      %v2622 = vpop.f32.mrb[0].mxu0
      %2623 = vmatprep.mubr.f32.mxu0 0.0
      %2624 = vmatmul.mubr.f32.gmra.mrb[0].mxu0 %v2424
      %v2625 = vpop.f32.mrb[0].mxu0
      %v2626 = vadd.f32 %v2384, %v2625
      %v2627 = vpop.f32.mrb[0].mxu0
      %2628 = vmatprep.mubr.f32.mxu0 0.0
      %2629 = vmatmul.mubr.f32.gmra.mrb[0].mxu0 %v2427
      %v2630 = vpop.f32.mrb[0].mxu0
      %v2631 = vadd.f32 %v2384, %v2630
      %v2632 = vpop.f32.mrb[0].mxu0
      %2633 = vmatprep.mubr.f32.mxu0 0.0
      %2634 = vmatmul.mubr.f32.gmra.mrb[0].mxu0 %v2430
      %v2635 = vpop.f32.mrb[0].mxu0
      %v2636 = vadd.f32 %v2384, %v2635
      %v2637 = vpop.f32.mrb[0].mxu0
      %2638 = vmatprep.mubr.f32.mxu0 0.0
      %2639 = vmatmul.mubr.f32.gmra.mrb[0].mxu0 %v2433
      %v2640 = vpop.f32.mrb[0].mxu0
      %v2641 = vadd.f32 %v2384, %v2640
      %v2642 = vpop.f32.mrb[0].mxu0
      %2643 = vmatprep.mubr.f32.mxu0 0.0
      %2644 = vmatmul.mubr.f32.gmra.mrb[0].mxu0 %v2436
      %v2645 = vpop.f32.mrb[0].mxu0
      %v2646 = vadd.f32 %v2384, %v2645
      %v2647 = vpop.f32.mrb[0].mxu0
      %2648 = vmatprep.mubr.f32.mxu0 0.0
      %2649 = vmatmul.mubr.f32.gmra.mrb[0].mxu0 %v2439
      %v2650 = vpop.f32.mrb[0].mxu0
      %v2651 = vadd.f32 %v2384, %v2650
      %v2652 = vpop.f32.mrb[0].mxu0
      %2653 = vmatprep.mubr.f32.mxu0 0.0
      %2654 = vmatmul.mubr.f32.gmra.mrb[0].mxu0 %v2442
      %v2655 = vpop.f32.mrb[0].mxu0
      %v2656 = vadd.f32 %v2384, %v2655
      %v2657 = vpop.f32.mrb[0].mxu0
      %2658 = vmatprep.mubr.f32.mxu0 0.0
      %2659 = vmatmul.mubr.f32.gmra.mrb[0].mxu0 %v2445
      %v2660 = vpop.f32.mrb[0].mxu0
      %v2661 = vadd.f32 %v2384, %v2660
      %v2662 = vpop.f32.mrb[0].mxu0
      %2663 = vmatprep.mubr.f32.mxu0 0.0
      %2664 = vmatmul.mubr.f32.gmra.mrb[0].mxu0 %v2448
      %v2665 = vpop.f32.mrb[0].mxu0
      %v2666 = vadd.f32 %v2384, %v2665
      %v2667 = vpop.f32.mrb[0].mxu0
      %2668 = vmatprep.mubr.f32.mxu0 0.0
      %2669 = vmatmul.mubr.f32.gmra.mrb[0].mxu0 %v2451
      %v2670 = vpop.f32.mrb[0].mxu0
      %v2671 = vadd.f32 %v2384, %v2670
      %v2672 = vpop.f32.mrb[0].mxu0
      %2673 = vmatprep.mubr.f32.mxu0 0.0
      %2674 = vmatmul.mubr.f32.gmra.mrb[0].mxu0 %v2454
      %v2675 = vpop.f32.mrb[0].mxu0
      %v2676 = vadd.f32 %v2384, %v2675
      %v2677 = vpop.f32.mrb[0].mxu0
      %2678 = vmatprep.mubr.f32.mxu0 0.0
      %2679 = vmatmul.mubr.f32.gmra.mrb[0].mxu0 %v2457
      %v2680 = vpop.f32.mrb[0].mxu0
      %v2681 = vadd.f32 %v2384, %v2680
      %v2682 = vpop.f32.mrb[0].mxu0
      %2683 = vmatprep.mubr.f32.mxu0 0.0
      %2684 = vmatmul.mubr.f32.gmra.mrb[0].mxu0 %v2460
      %v2685 = vpop.f32.mrb[0].mxu0
      %v2686 = vadd.f32 %v2384, %v2685
      %v2687 = vpop.f32.mrb[0].mxu0
      %2688 = vmatprep.mubr.f32.mxu0 0.0
      %2689 = vmatmul.mubr.f32.gmra.mrb[0].mxu0 %v2463
      %v2690 = vpop.f32.mrb[0].mxu0
      %v2691 = vadd.f32 %v2384, %v2690
      %v2692 = vpop.f32.mrb[0].mxu0
      %2693 = vmatprep.mubr.f32.mxu0 0.0
      %2694 = vmatmul.mubr.f32.gmra.mrb[0].mxu0 %v2466
      %v2695 = vpop.f32.mrb[0].mxu0
      %v2696 = vadd.f32 %v2384, %v2695
      %v2697 = vpop.f32.mrb[0].mxu0
      %2698 = vmatprep.mubr.f32.mxu0 0.0
      %2699 = vmatmul.mubr.f32.gmra.mrb[0].mxu0 %v2469
      %v2700 = vpop.f32.mrb[0].mxu0
      %v2701 = vadd.f32 %v2384, %v2700
      %v2702 = vpop.f32.mrb[0].mxu0
      %2703 = vmatprep.mubr.f32.mxu0 0.0
      %2704 = vmatmul.mubr.f32.gmra.mrb[0].mxu0 %v2472
      %v2705 = vpop.f32.mrb[0].mxu0
      %v2706 = vadd.f32 %v2384, %v2705
      %v2707 = vpop.f32.mrb[0].mxu0
      %2708 = vmatprep.mubr.f32.mxu0 0.0
      %2709 = vmatmul.mubr.f32.gmra.mrb[0].mxu0 %v2475
      %v2710 = vpop.f32.mrb[0].mxu0
      %v2711 = vadd.f32 %v2384, %v2710
      %v2712 = vpop.f32.mrb[0].mxu0
      %2713 = vmatprep.mubr.f32.mxu0 0.0
      %2714 = vmatmul.mubr.f32.gmra.mrb[0].mxu0 %v2478
      %v2715 = vpop.f32.mrb[0].mxu0
      %v2716 = vadd.f32 %v2384, %v2715
      %v2717 = vpop.f32.mrb[0].mxu0
      %2718 = vmatprep.mubr.f32.mxu0 0.0
      %2719 = vmatmul.mubr.f32.gmra.mrb[0].mxu0 %v2481
      %v2720 = vpop.f32.mrb[0].mxu0
      %v2721 = vadd.f32 %v2384, %v2720
      %v2722 = vpop.f32.mrb[0].mxu0
      %2723 = vmatprep.mubr.f32.mxu0 0.0
      %2724 = vmatmul.mubr.f32.gmra.mrb[0].mxu0 %v2484
      %v2725 = vpop.f32.mrb[0].mxu0
      %v2726 = vadd.f32 %v2384, %v2725
      %v2727 = vpop.f32.mrb[0].mxu0
      %2728 = vmatprep.mubr.f32.mxu0 0.0
      %2729 = vmatmul.mubr.f32.gmra.mrb[0].mxu0 %v2487
      %v2730 = vpop.f32.mrb[0].mxu0
      %v2731 = vadd.f32 %v2384, %v2730
      %v2732 = vpop.f32.mrb[0].mxu0
      %2733 = vmatprep.mubr.f32.mxu0 0.0
      %2734 = vmatmul.mubr.f32.gmra.mrb[0].mxu0 %v2490
      %v2735 = vpop.f32.mrb[0].mxu0
      %v2736 = vadd.f32 %v2384, %v2735
      %v2737 = vpop.f32.mrb[0].mxu0
      %2738 = vmatprep.mubr.f32.mxu0 0.0
      %2739 = vmatmul.mubr.f32.gmra.mrb[0].mxu0 %v2493
      %v2740 = vpop.f32.mrb[0].mxu0
      %v2741 = vadd.f32 %v2384, %v2740
      %v2742 = vpop.f32.mrb[0].mxu0
      %2743 = vdwg.mxu0
      %vm2744 = vcmp.ge.f32.partialorder %v2566, 0.0
      %vm2745 = vcmp.ge.f32.partialorder %v2571, 0.0
      %vm2746 = vcmp.ge.f32.partialorder %v2576, 0.0
      %vm2747 = vcmp.ge.f32.partialorder %v2581, 0.0
      %vm2748 = vcmp.ge.f32.partialorder %v2586, 0.0
      %vm2749 = vcmp.ge.f32.partialorder %v2591, 0.0
      %vm2750 = vcmp.ge.f32.partialorder %v2596, 0.0
      %vm2751 = vcmp.ge.f32.partialorder %v2601, 0.0
      %vm2752 = vcmp.ge.f32.partialorder %v2606, 0.0
      %vm2753 = vcmp.ge.f32.partialorder %v2611, 0.0
      %vm2754 = vcmp.ge.f32.partialorder %v2616, 0.0
      %vm2755 = vcmp.ge.f32.partialorder %v2621, 0.0
      %vm2756 = vcmp.ge.f32.partialorder %v2626, 0.0
      %vm2757 = vcmp.ge.f32.partialorder %v2631, 0.0
      %vm2758 = vcmp.ge.f32.partialorder %v2636, 0.0
      %vm2759 = vcmp.ge.f32.partialorder %v2641, 0.0
      %vm2760 = vcmp.ge.f32.partialorder %v2646, 0.0
      %vm2761 = vcmp.ge.f32.partialorder %v2651, 0.0
      %vm2762 = vcmp.ge.f32.partialorder %v2656, 0.0
      %vm2763 = vcmp.ge.f32.partialorder %v2661, 0.0
      %vm2764 = vcmp.ge.f32.partialorder %v2666, 0.0
      %vm2765 = vcmp.ge.f32.partialorder %v2671, 0.0
      %vm2766 = vcmp.ge.f32.partialorder %v2676, 0.0
      %vm2767 = vcmp.ge.f32.partialorder %v2681, 0.0
      %vm2768 = vcmp.ge.f32.partialorder %v2686, 0.0
      %vm2769 = vcmp.ge.f32.partialorder %v2691, 0.0
      %vm2770 = vcmp.ge.f32.partialorder %v2696, 0.0
      %vm2771 = vcmp.ge.f32.partialorder %v2701, 0.0
      %vm2772 = vcmp.ge.f32.partialorder %v2706, 0.0
      %vm2773 = vcmp.ge.f32.partialorder %v2711, 0.0
      %vm2774 = vcmp.ge.f32.partialorder %v2716, 0.0
      %vm2775 = vcmp.ge.f32.partialorder %v2721, 0.0
      %vm2776 = vcmp.ge.f32.partialorder %v2726, 0.0
      %vm2777 = vcmp.ge.f32.partialorder %v2731, 0.0
      %vm2778 = vcmp.ge.f32.partialorder %v2736, 0.0
      %vm2779 = vcmp.ge.f32.partialorder %v2741, 0.0
      %v2780 = vmul.f32 %v2566, 0.01
      %v2781 = vmul.f32 %v2571, 0.01
      %v2782 = vmul.f32 %v2576, 0.01
      %v2783 = vmul.f32 %v2581, 0.01
      %v2784 = vmul.f32 %v2586, 0.01
      %v2785 = vmul.f32 %v2591, 0.01
      %v2786 = vmul.f32 %v2596, 0.01
      %v2787 = vmul.f32 %v2601, 0.01
      %v2788 = vmul.f32 %v2606, 0.01
      %v2789 = vmul.f32 %v2611, 0.01
      %v2790 = vmul.f32 %v2616, 0.01
      %v2791 = vmul.f32 %v2621, 0.01
      %v2792 = vmul.f32 %v2626, 0.01
      %v2793 = vmul.f32 %v2631, 0.01
      %v2794 = vmul.f32 %v2636, 0.01
      %v2795 = vmul.f32 %v2641, 0.01
      %v2796 = vmul.f32 %v2646, 0.01
      %v2797 = vmul.f32 %v2651, 0.01
      %v2798 = vmul.f32 %v2656, 0.01
      %v2799 = vmul.f32 %v2661, 0.01
      %v2800 = vmul.f32 %v2666, 0.01
      %v2801 = vmul.f32 %v2671, 0.01
      %v2802 = vmul.f32 %v2676, 0.01
      %v2803 = vmul.f32 %v2681, 0.01
      %v2804 = vmul.f32 %v2686, 0.01
      %v2805 = vmul.f32 %v2691, 0.01
      %v2806 = vmul.f32 %v2696, 0.01
      %v2807 = vmul.f32 %v2701, 0.01
      %v2808 = vmul.f32 %v2706, 0.01
      %v2809 = vmul.f32 %v2711, 0.01
      %v2810 = vmul.f32 %v2716, 0.01
      %v2811 = vmul.f32 %v2721, 0.01
      %v2812 = vmul.f32 %v2726, 0.01
      %v2813 = vmul.f32 %v2731, 0.01
      %v2814 = vmul.f32 %v2736, 0.01
      %v2815 = vmul.f32 %v2741, 0.01
      %v2816 = vsel %vm2744, %v2566, %v2780
      %v2817 = vsel %vm2745, %v2571, %v2781
      %v2818 = vsel %vm2746, %v2576, %v2782
      %v2819 = vsel %vm2747, %v2581, %v2783
      %v2820 = vsel %vm2748, %v2586, %v2784
      %v2821 = vsel %vm2749, %v2591, %v2785
      %v2822 = vsel %vm2750, %v2596, %v2786
      %v2823 = vsel %vm2751, %v2601, %v2787
      %v2824 = vsel %vm2752, %v2606, %v2788
      %v2825 = vsel %vm2753, %v2611, %v2789
      %v2826 = vsel %vm2754, %v2616, %v2790
      %v2827 = vsel %vm2755, %v2621, %v2791
      %v2828 = vsel %vm2756, %v2626, %v2792
      %v2829 = vsel %vm2757, %v2631, %v2793
      %v2830 = vsel %vm2758, %v2636, %v2794
      %v2831 = vsel %vm2759, %v2641, %v2795
      %v2832 = vsel %vm2760, %v2646, %v2796
      %v2833 = vsel %vm2761, %v2651, %v2797
      %v2834 = vsel %vm2762, %v2656, %v2798
      %v2835 = vsel %vm2763, %v2661, %v2799
      %v2836 = vsel %vm2764, %v2666, %v2800
      %v2837 = vsel %vm2765, %v2671, %v2801
      %v2838 = vsel %vm2766, %v2676, %v2802
      %v2839 = vsel %vm2767, %v2681, %v2803
      %v2840 = vsel %vm2768, %v2686, %v2804
      %v2841 = vsel %vm2769, %v2691, %v2805
      %v2842 = vsel %vm2770, %v2696, %v2806
      %v2843 = vsel %vm2771, %v2701, %v2807
      %v2844 = vsel %vm2772, %v2706, %v2808
      %v2845 = vsel %vm2773, %v2711, %v2809
      %v2846 = vsel %vm2774, %v2716, %v2810
      %v2847 = vsel %vm2775, %v2721, %v2811
      %v2848 = vsel %vm2776, %v2726, %v2812
      %v2849 = vsel %vm2777, %v2731, %v2813
      %v2850 = vsel %vm2778, %v2736, %v2814
      %v2851 = vsel %vm2779, %v2741, %v2815
      %v2852 = vld [vmem:[%s3] sm:$0xff]
      %v2853 = vld [vmem:[%s3 + $0x8] sm:$0xff]
      %v2854 = vld [vmem:[%s3 + $0x10] sm:$0xff]
      %v2855 = vld [vmem:[%s3 + $0x18] sm:$0xff]
      %v2856 = vld [vmem:[%s3 + $0x20] sm:$0xff]
      %v2857 = vld [vmem:[%s3 + $0x28] sm:$0xff]
      %v2858 = vld [vmem:[%s3 + $0x30] sm:$0xff]
      %v2859 = vld [vmem:[%s3 + $0x38] sm:$0xff]
      %v2860 = vld [vmem:[%s3 + $0x40] sm:$0xff]
      %v2861 = vld [vmem:[%s3 + $0x48] sm:$0xff]
      %v2862 = vld [vmem:[%s3 + $0x50] sm:$0xff]
      %v2863 = vld [vmem:[%s3 + $0x58] sm:$0xff]
      %v2864 = vld [vmem:[%s3 + $0x60] sm:$0xff]
      %v2865 = vld [vmem:[%s3 + $0x68] sm:$0xff]
      %v2866 = vld [vmem:[%s3 + $0x70] sm:$0xff]
      %v2867 = vld [vmem:[%s3 + $0x78] sm:$0xff]
      %v2868 = vld [vmem:[%s3 + $0x80] sm:$0xff]
      %v2869 = vld [vmem:[%s3 + $0x88] sm:$0xff]
      %v2870 = vld [vmem:[%s3 + $0x90] sm:$0xff]
      %v2871 = vld [vmem:[%s3 + $0x98] sm:$0xff]
      %v2872 = vld [vmem:[%s3 + $0xa0] sm:$0xff]
      %v2873 = vld [vmem:[%s3 + $0xa8] sm:$0xff]
      %v2874 = vld [vmem:[%s3 + $0xb0] sm:$0xff]
      %v2875 = vld [vmem:[%s3 + $0xb8] sm:$0xff]
      %v2876 = vld [vmem:[%s3 + $0xc0] sm:$0xff]
      %v2877 = vld [vmem:[%s3 + $0xc8] sm:$0xff]
      %v2878 = vld [vmem:[%s3 + $0xd0] sm:$0xff]
      %v2879 = vld [vmem:[%s3 + $0xd8] sm:$0xff]
      %v2880 = vld [vmem:[%s3 + $0xe0] sm:$0xff]
      %v2881 = vld [vmem:[%s3 + $0xe8] sm:$0xff]
      %v2882 = vld [vmem:[%s3 + $0xf0] sm:$0xff]
      %v2883 = vld [vmem:[%s3 + $0xf8] sm:$0xff]
      %v2884 = vld [vmem:[%s3 + $0x100] sm:$0xff]
      %v2885 = vld [vmem:[%s3 + $0x108] sm:$0xff]
      %v2886 = vld [vmem:[%s3 + $0x110] sm:$0xff]
      %v2887 = vld [vmem:[%s3 + $0x118] sm:$0x3f]
      %2889 = vset.pattern.permute.xlu0 0
      %2890 = vperm.xlu0 %2889, %v2852
      %v2891 = vpop.permute.xlu0 %2890
      %2894 = vset.pattern.permute.xlu0 0
      %2895 = vperm.xlu0 %2894, %v2853
      %v2896 = vpop.permute.xlu0 %2895
      %2899 = vset.pattern.permute.xlu0 0
      %2900 = vperm.xlu0 %2899, %v2854
      %v2901 = vpop.permute.xlu0 %2900
      %2904 = vset.pattern.permute.xlu0 0
      %2905 = vperm.xlu0 %2904, %v2855
      %v2906 = vpop.permute.xlu0 %2905
      %2909 = vset.pattern.permute.xlu0 0
      %2910 = vperm.xlu0 %2909, %v2856
      %v2911 = vpop.permute.xlu0 %2910
      %2914 = vset.pattern.permute.xlu0 0
      %2915 = vperm.xlu0 %2914, %v2857
      %v2916 = vpop.permute.xlu0 %2915
      %2919 = vset.pattern.permute.xlu0 0
      %2920 = vperm.xlu0 %2919, %v2858
      %v2921 = vpop.permute.xlu0 %2920
      %2924 = vset.pattern.permute.xlu0 0
      %2925 = vperm.xlu0 %2924, %v2859
      %v2926 = vpop.permute.xlu0 %2925
      %2929 = vset.pattern.permute.xlu0 0
      %2930 = vperm.xlu0 %2929, %v2860
      %v2931 = vpop.permute.xlu0 %2930
      %2934 = vset.pattern.permute.xlu0 0
      %2935 = vperm.xlu0 %2934, %v2861
      %v2936 = vpop.permute.xlu0 %2935
      %2939 = vset.pattern.permute.xlu0 0
      %2940 = vperm.xlu0 %2939, %v2862
      %v2941 = vpop.permute.xlu0 %2940
      %2944 = vset.pattern.permute.xlu0 0
      %2945 = vperm.xlu0 %2944, %v2863
      %v2946 = vpop.permute.xlu0 %2945
      %2949 = vset.pattern.permute.xlu0 0
      %2950 = vperm.xlu0 %2949, %v2864
      %v2951 = vpop.permute.xlu0 %2950
      %2954 = vset.pattern.permute.xlu0 0
      %2955 = vperm.xlu0 %2954, %v2865
      %v2956 = vpop.permute.xlu0 %2955
      %2959 = vset.pattern.permute.xlu0 0
      %2960 = vperm.xlu0 %2959, %v2866
      %v2961 = vpop.permute.xlu0 %2960
      %2964 = vset.pattern.permute.xlu0 0
      %2965 = vperm.xlu0 %2964, %v2867
      %v2966 = vpop.permute.xlu0 %2965
      %2969 = vset.pattern.permute.xlu0 0
      %2970 = vperm.xlu0 %2969, %v2868
      %v2971 = vpop.permute.xlu0 %2970
      %2974 = vset.pattern.permute.xlu0 0
      %2975 = vperm.xlu0 %2974, %v2869
      %v2976 = vpop.permute.xlu0 %2975
      %2979 = vset.pattern.permute.xlu0 0
      %2980 = vperm.xlu0 %2979, %v2870
      %v2981 = vpop.permute.xlu0 %2980
      %2984 = vset.pattern.permute.xlu0 0
      %2985 = vperm.xlu0 %2984, %v2871
      %v2986 = vpop.permute.xlu0 %2985
      %2989 = vset.pattern.permute.xlu0 0
      %2990 = vperm.xlu0 %2989, %v2872
      %v2991 = vpop.permute.xlu0 %2990
      %2994 = vset.pattern.permute.xlu0 0
      %2995 = vperm.xlu0 %2994, %v2873
      %v2996 = vpop.permute.xlu0 %2995
      %2999 = vset.pattern.permute.xlu0 0
      %3000 = vperm.xlu0 %2999, %v2874
      %v3001 = vpop.permute.xlu0 %3000
      %3004 = vset.pattern.permute.xlu0 0
      %3005 = vperm.xlu0 %3004, %v2875
      %v3006 = vpop.permute.xlu0 %3005
      %3009 = vset.pattern.permute.xlu0 0
      %3010 = vperm.xlu0 %3009, %v2876
      %v3011 = vpop.permute.xlu0 %3010
      %3014 = vset.pattern.permute.xlu0 0
      %3015 = vperm.xlu0 %3014, %v2877
      %v3016 = vpop.permute.xlu0 %3015
      %3019 = vset.pattern.permute.xlu0 0
      %3020 = vperm.xlu0 %3019, %v2878
      %v3021 = vpop.permute.xlu0 %3020
      %3024 = vset.pattern.permute.xlu0 0
      %3025 = vperm.xlu0 %3024, %v2879
      %v3026 = vpop.permute.xlu0 %3025
      %3029 = vset.pattern.permute.xlu0 0
      %3030 = vperm.xlu0 %3029, %v2880
      %v3031 = vpop.permute.xlu0 %3030
      %3034 = vset.pattern.permute.xlu0 0
      %3035 = vperm.xlu0 %3034, %v2881
      %v3036 = vpop.permute.xlu0 %3035
      %3039 = vset.pattern.permute.xlu0 0
      %3040 = vperm.xlu0 %3039, %v2882
      %v3041 = vpop.permute.xlu0 %3040
      %3044 = vset.pattern.permute.xlu0 0
      %3045 = vperm.xlu0 %3044, %v2883
      %v3046 = vpop.permute.xlu0 %3045
      %3049 = vset.pattern.permute.xlu0 0
      %3050 = vperm.xlu0 %3049, %v2884
      %v3051 = vpop.permute.xlu0 %3050
      %3054 = vset.pattern.permute.xlu0 0
      %3055 = vperm.xlu0 %3054, %v2885
      %v3056 = vpop.permute.xlu0 %3055
      %3059 = vset.pattern.permute.xlu0 0
      %3060 = vperm.xlu0 %3059, %v2886
      %v3061 = vpop.permute.xlu0 %3060
      %3064 = vset.pattern.permute.xlu0 0
      %3065 = vperm.xlu0 %3064, %v2887
      %v3066 = vpop.permute.xlu0 %3065
      %v3068 = vmul.f32 %v2816, %v2891
      %v3069 = vmul.f32 %v2817, %v2896
      %v3070 = vmul.f32 %v2818, %v2901
      %v3071 = vmul.f32 %v2819, %v2906
      %v3072 = vmul.f32 %v2820, %v2911
      %v3073 = vmul.f32 %v2821, %v2916
      %v3074 = vmul.f32 %v2822, %v2921
      %v3075 = vmul.f32 %v2823, %v2926
      %v3076 = vmul.f32 %v2824, %v2931
      %v3077 = vmul.f32 %v2825, %v2936
      %v3078 = vmul.f32 %v2826, %v2941
      %v3079 = vmul.f32 %v2827, %v2946
      %v3080 = vmul.f32 %v2828, %v2951
      %v3081 = vmul.f32 %v2829, %v2956
      %v3082 = vmul.f32 %v2830, %v2961
      %v3083 = vmul.f32 %v2831, %v2966
      %v3084 = vmul.f32 %v2832, %v2971
      %v3085 = vmul.f32 %v2833, %v2976
      %v3086 = vmul.f32 %v2834, %v2981
      %v3087 = vmul.f32 %v2835, %v2986
      %v3088 = vmul.f32 %v2836, %v2991
      %v3089 = vmul.f32 %v2837, %v2996
      %v3090 = vmul.f32 %v2838, %v3001
      %v3091 = vmul.f32 %v2839, %v3006
      %v3092 = vmul.f32 %v2840, %v3011
      %v3093 = vmul.f32 %v2841, %v3016
      %v3094 = vmul.f32 %v2842, %v3021
      %v3095 = vmul.f32 %v2843, %v3026
      %v3096 = vmul.f32 %v2844, %v3031
      %v3097 = vmul.f32 %v2845, %v3036
      %v3098 = vmul.f32 %v2846, %v3041
      %v3099 = vmul.f32 %v2847, %v3046
      %v3100 = vmul.f32 %v2848, %v3051
      %v3101 = vmul.f32 %v2849, %v3056
      %v3102 = vmul.f32 %v2850, %v3061
      %v3103 = vmul.f32 %v2851, %v3066
      %3104 = vst.msk [vmem:[%s514] sm:$0xff] %vm556, %v3068
      %3105 = vst.msk [vmem:[%s514 + $0x8] sm:$0xff] %vm556, %v3069
      %3106 = vst.msk [vmem:[%s514 + $0x10] sm:$0xff] %vm556, %v3070
      %3107 = vst.msk [vmem:[%s514 + $0x18] sm:$0xff] %vm556, %v3071
      %3108 = vst.msk [vmem:[%s514 + $0x20] sm:$0xff] %vm556, %v3072
      %3109 = vst.msk [vmem:[%s514 + $0x28] sm:$0xff] %vm556, %v3073
      %3110 = vst.msk [vmem:[%s514 + $0x30] sm:$0xff] %vm556, %v3074
      %3111 = vst.msk [vmem:[%s514 + $0x38] sm:$0xff] %vm556, %v3075
      %3112 = vst.msk [vmem:[%s514 + $0x40] sm:$0xff] %vm556, %v3076
      %3113 = vst.msk [vmem:[%s514 + $0x48] sm:$0xff] %vm556, %v3077
      %3114 = vst.msk [vmem:[%s514 + $0x50] sm:$0xff] %vm556, %v3078
      %3115 = vst.msk [vmem:[%s514 + $0x58] sm:$0xff] %vm556, %v3079
      %3116 = vst.msk [vmem:[%s514 + $0x60] sm:$0xff] %vm556, %v3080
      %3117 = vst.msk [vmem:[%s514 + $0x68] sm:$0xff] %vm556, %v3081
      %3118 = vst.msk [vmem:[%s514 + $0x70] sm:$0xff] %vm556, %v3082
      %3119 = vst.msk [vmem:[%s514 + $0x78] sm:$0xff] %vm556, %v3083
      %3120 = vst.msk [vmem:[%s514 + $0x80] sm:$0xff] %vm556, %v3084
      %3121 = vst.msk [vmem:[%s514 + $0x88] sm:$0xff] %vm556, %v3085
      %3122 = vst.msk [vmem:[%s514 + $0x90] sm:$0xff] %vm556, %v3086
      %3123 = vst.msk [vmem:[%s514 + $0x98] sm:$0xff] %vm556, %v3087
      %3124 = vst.msk [vmem:[%s514 + $0xa0] sm:$0xff] %vm556, %v3088
      %3125 = vst.msk [vmem:[%s514 + $0xa8] sm:$0xff] %vm556, %v3089
      %3126 = vst.msk [vmem:[%s514 + $0xb0] sm:$0xff] %vm556, %v3090
      %3127 = vst.msk [vmem:[%s514 + $0xb8] sm:$0xff] %vm556, %v3091
      %3128 = vst.msk [vmem:[%s514 + $0xc0] sm:$0xff] %vm556, %v3092
      %3129 = vst.msk [vmem:[%s514 + $0xc8] sm:$0xff] %vm556, %v3093
      %3130 = vst.msk [vmem:[%s514 + $0xd0] sm:$0xff] %vm556, %v3094
      %3131 = vst.msk [vmem:[%s514 + $0xd8] sm:$0xff] %vm556, %v3095
      %3132 = vst.msk [vmem:[%s514 + $0xe0] sm:$0xff] %vm556, %v3096
      %3133 = vst.msk [vmem:[%s514 + $0xe8] sm:$0xff] %vm556, %v3097
      %3134 = vst.msk [vmem:[%s514 + $0xf0] sm:$0xff] %vm556, %v3098
      %3135 = vst.msk [vmem:[%s514 + $0xf8] sm:$0xff] %vm556, %v3099
      %3136 = vst.msk [vmem:[%s514 + $0x100] sm:$0xff] %vm556, %v3100
      %3137 = vst.msk [vmem:[%s514 + $0x108] sm:$0xff] %vm556, %v3101
      %3138 = vst.msk [vmem:[%s514 + $0x110] sm:$0xff] %vm556, %v3102
      %3139 = vst.msk [vmem:[%s514 + $0x118] sm:$0x3f] %vm592, %v3103
      %3140 = vst.msk [vmem:[#allocation2] sm:$0xff] %vm556, 0.0
      %3141 = vst.msk [vmem:[#allocation2 + $0x8] sm:$0xff] %vm556, 0.0
      %vm3142 = vcmask 26624
      %3143 = vst.msk [vmem:[#allocation2 + $0x10] sm:$0x7] %vm3142, 0.0
      %3144 = vst.msk [vmem:[#allocation2 + $0x13] sm:$0xff] %vm556, %v3068
      %3145 = vst.msk [vmem:[#allocation2 + $0x1b] sm:$0xff] %vm556, %v3069
      %3146 = vst.msk [vmem:[#allocation2 + $0x23] sm:$0xff] %vm556, %v3070
      %3147 = vst.msk [vmem:[#allocation2 + $0x2b] sm:$0xff] %vm556, %v3071
      %3148 = vst.msk [vmem:[#allocation2 + $0x33] sm:$0xff] %vm556, %v3072
      %3149 = vst.msk [vmem:[#allocation2 + $0x3b] sm:$0xff] %vm556, %v3073
      %3150 = vst.msk [vmem:[#allocation2 + $0x43] sm:$0xff] %vm556, %v3074
      %3151 = vst.msk [vmem:[#allocation2 + $0x4b] sm:$0xff] %vm556, %v3075
      %3152 = vst.msk [vmem:[#allocation2 + $0x53] sm:$0xff] %vm556, %v3076
      %3153 = vst.msk [vmem:[#allocation2 + $0x5b] sm:$0xff] %vm556, %v3077
      %3154 = vst.msk [vmem:[#allocation2 + $0x63] sm:$0xff] %vm556, %v3078
      %3155 = vst.msk [vmem:[#allocation2 + $0x6b] sm:$0xff] %vm556, %v3079
      %3156 = vst.msk [vmem:[#allocation2 + $0x73] sm:$0xff] %vm556, %v3080
      %3157 = vst.msk [vmem:[#allocation2 + $0x7b] sm:$0xff] %vm556, %v3081
      %3158 = vst.msk [vmem:[#allocation2 + $0x83] sm:$0xff] %vm556, %v3082
      %3159 = vst.msk [vmem:[#allocation2 + $0x8b] sm:$0xff] %vm556, %v3083
      %3160 = vst.msk [vmem:[#allocation2 + $0x93] sm:$0xff] %vm556, %v3084
      %3161 = vst.msk [vmem:[#allocation2 + $0x9b] sm:$0xff] %vm556, %v3085
      %3162 = vst.msk [vmem:[#allocation2 + $0xa3] sm:$0xff] %vm556, %v3086
      %3163 = vst.msk [vmem:[#allocation2 + $0xab] sm:$0xff] %vm556, %v3087
      %3164 = vst.msk [vmem:[#allocation2 + $0xb3] sm:$0xff] %vm556, %v3088
      %3165 = vst.msk [vmem:[#allocation2 + $0xbb] sm:$0xff] %vm556, %v3089
      %3166 = vst.msk [vmem:[#allocation2 + $0xc3] sm:$0xff] %vm556, %v3090
      %3167 = vst.msk [vmem:[#allocation2 + $0xcb] sm:$0xff] %vm556, %v3091
      %3168 = vst.msk [vmem:[#allocation2 + $0xd3] sm:$0xff] %vm556, %v3092
      %3169 = vst.msk [vmem:[#allocation2 + $0xdb] sm:$0xff] %vm556, %v3093
      %3170 = vst.msk [vmem:[#allocation2 + $0xe3] sm:$0xff] %vm556, %v3094
      %3171 = vst.msk [vmem:[#allocation2 + $0xeb] sm:$0xff] %vm556, %v3095
      %3172 = vst.msk [vmem:[#allocation2 + $0xf3] sm:$0xff] %vm556, %v3096
      %3173 = vst.msk [vmem:[#allocation2 + $0xfb] sm:$0xff] %vm556, %v3097
      %3174 = vst.msk [vmem:[#allocation2 + $0x103] sm:$0xff] %vm556, %v3098
      %3175 = vst.msk [vmem:[#allocation2 + $0x10b] sm:$0xff] %vm556, %v3099
      %3176 = vst.msk [vmem:[#allocation2 + $0x113] sm:$0xff] %vm556, %v3100
      %3177 = vst.msk [vmem:[#allocation2 + $0x11b] sm:$0xff] %vm556, %v3101
      %3178 = vst.msk [vmem:[#allocation2 + $0x123] sm:$0xff] %vm556, %v3102
      %3179 = vst.msk [vmem:[#allocation2 + $0x12b] sm:$0x3f] %vm592, %v3103
      %3180 = vst.msk [vmem:[#allocation2 + $0x131] sm:$0xff] %vm556, 0.0
      %3181 = vst.msk [vmem:[#allocation2 + $0x139] sm:$0xff] %vm556, 0.0
      %3182 = vst.msk [vmem:[#allocation2 + $0x141] sm:$0x7] %vm3142, 0.0
      %v3183 = vld [vmem:[#allocation2] sm:$0xff]
      %v3184 = vld [vmem:[#allocation2 + $0x8] sm:$0xff]
      %v3185 = vld [vmem:[#allocation2 + $0x10] sm:$0xff]
      %v3186 = vld [vmem:[#allocation2 + $0x18] sm:$0xff]
      %v3187 = vld [vmem:[#allocation2 + $0x20] sm:$0xff]
      %v3188 = vld [vmem:[#allocation2 + $0x28] sm:$0xff]
      %v3189 = vld [vmem:[#allocation2 + $0x30] sm:$0xff]
      %v3190 = vld [vmem:[#allocation2 + $0x38] sm:$0xff]
      %v3191 = vld [vmem:[#allocation2 + $0x40] sm:$0xff]
      %v3192 = vld [vmem:[#allocation2 + $0x48] sm:$0xff]
      %v3193 = vld [vmem:[#allocation2 + $0x50] sm:$0xff]
      %v3194 = vld [vmem:[#allocation2 + $0x58] sm:$0xff]
      %v3195 = vld [vmem:[#allocation2 + $0x60] sm:$0xff]
      %v3196 = vld [vmem:[#allocation2 + $0x68] sm:$0xff]
      %v3197 = vld [vmem:[#allocation2 + $0x70] sm:$0xff]
      %v3198 = vld [vmem:[#allocation2 + $0x78] sm:$0xff]
      %v3199 = vld [vmem:[#allocation2 + $0x80] sm:$0xff]
      %v3200 = vld [vmem:[#allocation2 + $0x88] sm:$0xff]
      %v3201 = vld [vmem:[#allocation2 + $0x90] sm:$0xff]
      %v3202 = vld [vmem:[#allocation2 + $0x98] sm:$0xff]
      %v3203 = vld [vmem:[#allocation2 + $0xa0] sm:$0xff]
      %v3204 = vld [vmem:[#allocation2 + $0xa8] sm:$0xff]
      %v3205 = vld [vmem:[#allocation2 + $0xb0] sm:$0xff]
      %v3206 = vld [vmem:[#allocation2 + $0xb8] sm:$0xff]
      %v3207 = vld [vmem:[#allocation2 + $0xc0] sm:$0xff]
      %v3208 = vld [vmem:[#allocation2 + $0xc8] sm:$0xff]
      %v3209 = vld [vmem:[#allocation2 + $0xd0] sm:$0xff]
      %v3210 = vld [vmem:[#allocation2 + $0xd8] sm:$0xff]
      %v3211 = vld [vmem:[#allocation2 + $0xe0] sm:$0xff]
      %v3212 = vld [vmem:[#allocation2 + $0xe8] sm:$0xff]
      %v3213 = vld [vmem:[#allocation2 + $0xf0] sm:$0xff]
      %v3214 = vld [vmem:[#allocation2 + $0xf8] sm:$0xff]
      %v3215 = vld [vmem:[#allocation2 + $0x100] sm:$0xff]
      %v3216 = vld [vmem:[#allocation2 + $0x108] sm:$0xff]
      %v3217 = vld [vmem:[#allocation2 + $0x110] sm:$0xff]
      %v3218 = vld [vmem:[#allocation2 + $0x118] sm:$0x3f]
      %3219 = vst.msk [vmem:[#allocation3] sm:$0xff] %vm556, %v3183
      %3220 = vst.msk [vmem:[#allocation3 + $0x10] sm:$0xff] %vm556, %v3184
      %3221 = vst.msk [vmem:[#allocation3 + $0x20] sm:$0xff] %vm556, %v3185
      %3222 = vst.msk [vmem:[#allocation3 + $0x30] sm:$0xff] %vm556, %v3186
      %3223 = vst.msk [vmem:[#allocation3 + $0x40] sm:$0xff] %vm556, %v3187
      %3224 = vst.msk [vmem:[#allocation3 + $0x50] sm:$0xff] %vm556, %v3188
      %3225 = vst.msk [vmem:[#allocation3 + $0x60] sm:$0xff] %vm556, %v3189
      %3226 = vst.msk [vmem:[#allocation3 + $0x70] sm:$0xff] %vm556, %v3190
      %3227 = vst.msk [vmem:[#allocation3 + $0x80] sm:$0xff] %vm556, %v3191
      %3228 = vst.msk [vmem:[#allocation3 + $0x90] sm:$0xff] %vm556, %v3192
      %3229 = vst.msk [vmem:[#allocation3 + $0xa0] sm:$0xff] %vm556, %v3193
      %3230 = vst.msk [vmem:[#allocation3 + $0xb0] sm:$0xff] %vm556, %v3194
      %3231 = vst.msk [vmem:[#allocation3 + $0xc0] sm:$0xff] %vm556, %v3195
      %3232 = vst.msk [vmem:[#allocation3 + $0xd0] sm:$0xff] %vm556, %v3196
      %3233 = vst.msk [vmem:[#allocation3 + $0xe0] sm:$0xff] %vm556, %v3197
      %3234 = vst.msk [vmem:[#allocation3 + $0xf0] sm:$0xff] %vm556, %v3198
      %3235 = vst.msk [vmem:[#allocation3 + $0x100] sm:$0xff] %vm556, %v3199
      %3236 = vst.msk [vmem:[#allocation3 + $0x110] sm:$0xff] %vm556, %v3200
      %3237 = vst.msk [vmem:[#allocation3 + $0x120] sm:$0xff] %vm556, %v3201
      %3238 = vst.msk [vmem:[#allocation3 + $0x130] sm:$0xff] %vm556, %v3202
      %3239 = vst.msk [vmem:[#allocation3 + $0x140] sm:$0xff] %vm556, %v3203
      %3240 = vst.msk [vmem:[#allocation3 + $0x150] sm:$0xff] %vm556, %v3204
      %3241 = vst.msk [vmem:[#allocation3 + $0x160] sm:$0xff] %vm556, %v3205
      %3242 = vst.msk [vmem:[#allocation3 + $0x170] sm:$0xff] %vm556, %v3206
      %3243 = vst.msk [vmem:[#allocation3 + $0x180] sm:$0xff] %vm556, %v3207
      %3244 = vst.msk [vmem:[#allocation3 + $0x190] sm:$0xff] %vm556, %v3208
      %3245 = vst.msk [vmem:[#allocation3 + $0x1a0] sm:$0xff] %vm556, %v3209
      %3246 = vst.msk [vmem:[#allocation3 + $0x1b0] sm:$0xff] %vm556, %v3210
      %3247 = vst.msk [vmem:[#allocation3 + $0x1c0] sm:$0xff] %vm556, %v3211
      %3248 = vst.msk [vmem:[#allocation3 + $0x1d0] sm:$0xff] %vm556, %v3212
      %3249 = vst.msk [vmem:[#allocation3 + $0x1e0] sm:$0xff] %vm556, %v3213
      %3250 = vst.msk [vmem:[#allocation3 + $0x1f0] sm:$0xff] %vm556, %v3214
      %3251 = vst.msk [vmem:[#allocation3 + $0x200] sm:$0xff] %vm556, %v3215
      %3252 = vst.msk [vmem:[#allocation3 + $0x210] sm:$0xff] %vm556, %v3216
      %3253 = vst.msk [vmem:[#allocation3 + $0x220] sm:$0xff] %vm556, %v3217
      %3254 = vst.msk [vmem:[#allocation3 + $0x230] sm:$0x3f] %vm592, %v3218
      %v3255 = vld [vmem:[#allocation2 + $0x1] sm:$0xff]
      %v3256 = vld [vmem:[#allocation2 + $0x9] sm:$0xff]
      %v3257 = vld [vmem:[#allocation2 + $0x11] sm:$0xff]
      %v3258 = vld [vmem:[#allocation2 + $0x19] sm:$0xff]
      %v3259 = vld [vmem:[#allocation2 + $0x21] sm:$0xff]
      %v3260 = vld [vmem:[#allocation2 + $0x29] sm:$0xff]
      %v3261 = vld [vmem:[#allocation2 + $0x31] sm:$0xff]
      %v3262 = vld [vmem:[#allocation2 + $0x39] sm:$0xff]
      %v3263 = vld [vmem:[#allocation2 + $0x41] sm:$0xff]
      %v3264 = vld [vmem:[#allocation2 + $0x49] sm:$0xff]
      %v3265 = vld [vmem:[#allocation2 + $0x51] sm:$0xff]
      %v3266 = vld [vmem:[#allocation2 + $0x59] sm:$0xff]
      %v3267 = vld [vmem:[#allocation2 + $0x61] sm:$0xff]
      %v3268 = vld [vmem:[#allocation2 + $0x69] sm:$0xff]
      %v3269 = vld [vmem:[#allocation2 + $0x71] sm:$0xff]
      %v3270 = vld [vmem:[#allocation2 + $0x79] sm:$0xff]
      %v3271 = vld [vmem:[#allocation2 + $0x81] sm:$0xff]
      %v3272 = vld [vmem:[#allocation2 + $0x89] sm:$0xff]
      %v3273 = vld [vmem:[#allocation2 + $0x91] sm:$0xff]
      %v3274 = vld [vmem:[#allocation2 + $0x99] sm:$0xff]
      %v3275 = vld [vmem:[#allocation2 + $0xa1] sm:$0xff]
      %v3276 = vld [vmem:[#allocation2 + $0xa9] sm:$0xff]
      %v3277 = vld [vmem:[#allocation2 + $0xb1] sm:$0xff]
      %v3278 = vld [vmem:[#allocation2 + $0xb9] sm:$0xff]
      %v3279 = vld [vmem:[#allocation2 + $0xc1] sm:$0xff]
      %v3280 = vld [vmem:[#allocation2 + $0xc9] sm:$0xff]
      %v3281 = vld [vmem:[#allocation2 + $0xd1] sm:$0xff]
      %v3282 = vld [vmem:[#allocation2 + $0xd9] sm:$0xff]
      %v3283 = vld [vmem:[#allocation2 + $0xe1] sm:$0xff]
      %v3284 = vld [vmem:[#allocation2 + $0xe9] sm:$0xff]
      %v3285 = vld [vmem:[#allocation2 + $0xf1] sm:$0xff]
      %v3286 = vld [vmem:[#allocation2 + $0xf9] sm:$0xff]
      %v3287 = vld [vmem:[#allocation2 + $0x101] sm:$0xff]
      %v3288 = vld [vmem:[#allocation2 + $0x109] sm:$0xff]
      %v3289 = vld [vmem:[#allocation2 + $0x111] sm:$0xff]
      %v3290 = vld [vmem:[#allocation2 + $0x119] sm:$0x3f]
      %3327 = vrot.lane.b32.xlu0 %v3255, 4
      %v3328 = vpop.permute.xlu0 %3327
      %3329 = vrot.lane.b32.xlu0 %v3256, 4
      %v3330 = vpop.permute.xlu0 %3329
      %3331 = vrot.lane.b32.xlu0 %v3257, 4
      %v3332 = vpop.permute.xlu0 %3331
      %3333 = vrot.lane.b32.xlu0 %v3258, 4
      %v3334 = vpop.permute.xlu0 %3333
      %3335 = vrot.lane.b32.xlu0 %v3259, 4
      %v3336 = vpop.permute.xlu0 %3335
      %3337 = vrot.lane.b32.xlu0 %v3260, 4
      %v3338 = vpop.permute.xlu0 %3337
      %3339 = vrot.lane.b32.xlu0 %v3261, 4
      %v3340 = vpop.permute.xlu0 %3339
      %3341 = vrot.lane.b32.xlu0 %v3262, 4
      %v3342 = vpop.permute.xlu0 %3341
      %3343 = vrot.lane.b32.xlu0 %v3263, 4
      %v3344 = vpop.permute.xlu0 %3343
      %3345 = vrot.lane.b32.xlu0 %v3264, 4
      %v3346 = vpop.permute.xlu0 %3345
      %3347 = vrot.lane.b32.xlu0 %v3265, 4
      %v3348 = vpop.permute.xlu0 %3347
      %3349 = vrot.lane.b32.xlu0 %v3266, 4
      %v3350 = vpop.permute.xlu0 %3349
      %3351 = vrot.lane.b32.xlu0 %v3267, 4
      %v3352 = vpop.permute.xlu0 %3351
      %3353 = vrot.lane.b32.xlu0 %v3268, 4
      %v3354 = vpop.permute.xlu0 %3353
      %3355 = vrot.lane.b32.xlu0 %v3269, 4
      %v3356 = vpop.permute.xlu0 %3355
      %3357 = vrot.lane.b32.xlu0 %v3270, 4
      %v3358 = vpop.permute.xlu0 %3357
      %3359 = vrot.lane.b32.xlu0 %v3271, 4
      %v3360 = vpop.permute.xlu0 %3359
      %3361 = vrot.lane.b32.xlu0 %v3272, 4
      %v3362 = vpop.permute.xlu0 %3361
      %3363 = vrot.lane.b32.xlu0 %v3273, 4
      %v3364 = vpop.permute.xlu0 %3363
      %3365 = vrot.lane.b32.xlu0 %v3274, 4
      %v3366 = vpop.permute.xlu0 %3365
      %3367 = vrot.lane.b32.xlu0 %v3275, 4
      %v3368 = vpop.permute.xlu0 %3367
      %3369 = vrot.lane.b32.xlu0 %v3276, 4
      %v3370 = vpop.permute.xlu0 %3369
      %3371 = vrot.lane.b32.xlu0 %v3277, 4
      %v3372 = vpop.permute.xlu0 %3371
      %3373 = vrot.lane.b32.xlu0 %v3278, 4
      %v3374 = vpop.permute.xlu0 %3373
      %3375 = vrot.lane.b32.xlu0 %v3279, 4
      %v3376 = vpop.permute.xlu0 %3375
      %3377 = vrot.lane.b32.xlu0 %v3280, 4
      %v3378 = vpop.permute.xlu0 %3377
      %3379 = vrot.lane.b32.xlu0 %v3281, 4
      %v3380 = vpop.permute.xlu0 %3379
      %3381 = vrot.lane.b32.xlu0 %v3282, 4
      %v3382 = vpop.permute.xlu0 %3381
      %3383 = vrot.lane.b32.xlu0 %v3283, 4
      %v3384 = vpop.permute.xlu0 %3383
      %3385 = vrot.lane.b32.xlu0 %v3284, 4
      %v3386 = vpop.permute.xlu0 %3385
      %3387 = vrot.lane.b32.xlu0 %v3285, 4
      %v3388 = vpop.permute.xlu0 %3387
      %3389 = vrot.lane.b32.xlu0 %v3286, 4
      %v3390 = vpop.permute.xlu0 %3389
      %3391 = vrot.lane.b32.xlu0 %v3287, 4
      %v3392 = vpop.permute.xlu0 %3391
      %3393 = vrot.lane.b32.xlu0 %v3288, 4
      %v3394 = vpop.permute.xlu0 %3393
      %3395 = vrot.lane.b32.xlu0 %v3289, 4
      %v3396 = vpop.permute.xlu0 %3395
      %3397 = vrot.lane.b32.xlu0 %v3290, 4
      %v3398 = vpop.permute.xlu0 %3397
      %3435 = vst.msk [vmem:[#allocation3] sm:$0xff] %vm774, %v3328
      %3436 = vst.msk [vmem:[#allocation3 + $0x10] sm:$0xff] %vm774, %v3330
      %3437 = vst.msk [vmem:[#allocation3 + $0x20] sm:$0xff] %vm774, %v3332
      %3438 = vst.msk [vmem:[#allocation3 + $0x30] sm:$0xff] %vm774, %v3334
      %3439 = vst.msk [vmem:[#allocation3 + $0x40] sm:$0xff] %vm774, %v3336
      %3440 = vst.msk [vmem:[#allocation3 + $0x50] sm:$0xff] %vm774, %v3338
      %3441 = vst.msk [vmem:[#allocation3 + $0x60] sm:$0xff] %vm774, %v3340
      %3442 = vst.msk [vmem:[#allocation3 + $0x70] sm:$0xff] %vm774, %v3342
      %3443 = vst.msk [vmem:[#allocation3 + $0x80] sm:$0xff] %vm774, %v3344
      %3444 = vst.msk [vmem:[#allocation3 + $0x90] sm:$0xff] %vm774, %v3346
      %3445 = vst.msk [vmem:[#allocation3 + $0xa0] sm:$0xff] %vm774, %v3348
      %3446 = vst.msk [vmem:[#allocation3 + $0xb0] sm:$0xff] %vm774, %v3350
      %3447 = vst.msk [vmem:[#allocation3 + $0xc0] sm:$0xff] %vm774, %v3352
      %3448 = vst.msk [vmem:[#allocation3 + $0xd0] sm:$0xff] %vm774, %v3354
      %3449 = vst.msk [vmem:[#allocation3 + $0xe0] sm:$0xff] %vm774, %v3356
      %3450 = vst.msk [vmem:[#allocation3 + $0xf0] sm:$0xff] %vm774, %v3358
      %3451 = vst.msk [vmem:[#allocation3 + $0x100] sm:$0xff] %vm774, %v3360
      %3452 = vst.msk [vmem:[#allocation3 + $0x110] sm:$0xff] %vm774, %v3362
      %3453 = vst.msk [vmem:[#allocation3 + $0x120] sm:$0xff] %vm774, %v3364
      %3454 = vst.msk [vmem:[#allocation3 + $0x130] sm:$0xff] %vm774, %v3366
      %3455 = vst.msk [vmem:[#allocation3 + $0x140] sm:$0xff] %vm774, %v3368
      %3456 = vst.msk [vmem:[#allocation3 + $0x150] sm:$0xff] %vm774, %v3370
      %3457 = vst.msk [vmem:[#allocation3 + $0x160] sm:$0xff] %vm774, %v3372
      %3458 = vst.msk [vmem:[#allocation3 + $0x170] sm:$0xff] %vm774, %v3374
      %3459 = vst.msk [vmem:[#allocation3 + $0x180] sm:$0xff] %vm774, %v3376
      %3460 = vst.msk [vmem:[#allocation3 + $0x190] sm:$0xff] %vm774, %v3378
      %3461 = vst.msk [vmem:[#allocation3 + $0x1a0] sm:$0xff] %vm774, %v3380
      %3462 = vst.msk [vmem:[#allocation3 + $0x1b0] sm:$0xff] %vm774, %v3382
      %3463 = vst.msk [vmem:[#allocation3 + $0x1c0] sm:$0xff] %vm774, %v3384
      %3464 = vst.msk [vmem:[#allocation3 + $0x1d0] sm:$0xff] %vm774, %v3386
      %3465 = vst.msk [vmem:[#allocation3 + $0x1e0] sm:$0xff] %vm774, %v3388
      %3466 = vst.msk [vmem:[#allocation3 + $0x1f0] sm:$0xff] %vm774, %v3390
      %3467 = vst.msk [vmem:[#allocation3 + $0x200] sm:$0xff] %vm774, %v3392
      %3468 = vst.msk [vmem:[#allocation3 + $0x210] sm:$0xff] %vm774, %v3394
      %3469 = vst.msk [vmem:[#allocation3 + $0x220] sm:$0xff] %vm774, %v3396
      %3470 = vst.msk [vmem:[#allocation3 + $0x230] sm:$0x3f] %vm810, %v3398
      %v3471 = vld [vmem:[#allocation2 + $0x2] sm:$0xff]
      %v3472 = vld [vmem:[#allocation2 + $0xa] sm:$0xff]
      %v3473 = vld [vmem:[#allocation2 + $0x12] sm:$0xff]
      %v3474 = vld [vmem:[#allocation2 + $0x1a] sm:$0xff]
      %v3475 = vld [vmem:[#allocation2 + $0x22] sm:$0xff]
      %v3476 = vld [vmem:[#allocation2 + $0x2a] sm:$0xff]
      %v3477 = vld [vmem:[#allocation2 + $0x32] sm:$0xff]
      %v3478 = vld [vmem:[#allocation2 + $0x3a] sm:$0xff]
      %v3479 = vld [vmem:[#allocation2 + $0x42] sm:$0xff]
      %v3480 = vld [vmem:[#allocation2 + $0x4a] sm:$0xff]
      %v3481 = vld [vmem:[#allocation2 + $0x52] sm:$0xff]
      %v3482 = vld [vmem:[#allocation2 + $0x5a] sm:$0xff]
      %v3483 = vld [vmem:[#allocation2 + $0x62] sm:$0xff]
      %v3484 = vld [vmem:[#allocation2 + $0x6a] sm:$0xff]
      %v3485 = vld [vmem:[#allocation2 + $0x72] sm:$0xff]
      %v3486 = vld [vmem:[#allocation2 + $0x7a] sm:$0xff]
      %v3487 = vld [vmem:[#allocation2 + $0x82] sm:$0xff]
      %v3488 = vld [vmem:[#allocation2 + $0x8a] sm:$0xff]
      %v3489 = vld [vmem:[#allocation2 + $0x92] sm:$0xff]
      %v3490 = vld [vmem:[#allocation2 + $0x9a] sm:$0xff]
      %v3491 = vld [vmem:[#allocation2 + $0xa2] sm:$0xff]
      %v3492 = vld [vmem:[#allocation2 + $0xaa] sm:$0xff]
      %v3493 = vld [vmem:[#allocation2 + $0xb2] sm:$0xff]
      %v3494 = vld [vmem:[#allocation2 + $0xba] sm:$0xff]
      %v3495 = vld [vmem:[#allocation2 + $0xc2] sm:$0xff]
      %v3496 = vld [vmem:[#allocation2 + $0xca] sm:$0xff]
      %v3497 = vld [vmem:[#allocation2 + $0xd2] sm:$0xff]
      %v3498 = vld [vmem:[#allocation2 + $0xda] sm:$0xff]
      %v3499 = vld [vmem:[#allocation2 + $0xe2] sm:$0xff]
      %v3500 = vld [vmem:[#allocation2 + $0xea] sm:$0xff]
      %v3501 = vld [vmem:[#allocation2 + $0xf2] sm:$0xff]
      %v3502 = vld [vmem:[#allocation2 + $0xfa] sm:$0xff]
      %v3503 = vld [vmem:[#allocation2 + $0x102] sm:$0xff]
      %v3504 = vld [vmem:[#allocation2 + $0x10a] sm:$0xff]
      %v3505 = vld [vmem:[#allocation2 + $0x112] sm:$0xff]
      %v3506 = vld [vmem:[#allocation2 + $0x11a] sm:$0x3f]
      %3543 = vrot.lane.b32.xlu0 %v3471, 8
      %v3544 = vpop.permute.xlu0 %3543
      %3545 = vrot.lane.b32.xlu0 %v3472, 8
      %v3546 = vpop.permute.xlu0 %3545
      %3547 = vrot.lane.b32.xlu0 %v3473, 8
      %v3548 = vpop.permute.xlu0 %3547
      %3549 = vrot.lane.b32.xlu0 %v3474, 8
      %v3550 = vpop.permute.xlu0 %3549
      %3551 = vrot.lane.b32.xlu0 %v3475, 8
      %v3552 = vpop.permute.xlu0 %3551
      %3553 = vrot.lane.b32.xlu0 %v3476, 8
      %v3554 = vpop.permute.xlu0 %3553
      %3555 = vrot.lane.b32.xlu0 %v3477, 8
      %v3556 = vpop.permute.xlu0 %3555
      %3557 = vrot.lane.b32.xlu0 %v3478, 8
      %v3558 = vpop.permute.xlu0 %3557
      %3559 = vrot.lane.b32.xlu0 %v3479, 8
      %v3560 = vpop.permute.xlu0 %3559
      %3561 = vrot.lane.b32.xlu0 %v3480, 8
      %v3562 = vpop.permute.xlu0 %3561
      %3563 = vrot.lane.b32.xlu0 %v3481, 8
      %v3564 = vpop.permute.xlu0 %3563
      %3565 = vrot.lane.b32.xlu0 %v3482, 8
      %v3566 = vpop.permute.xlu0 %3565
      %3567 = vrot.lane.b32.xlu0 %v3483, 8
      %v3568 = vpop.permute.xlu0 %3567
      %3569 = vrot.lane.b32.xlu0 %v3484, 8
      %v3570 = vpop.permute.xlu0 %3569
      %3571 = vrot.lane.b32.xlu0 %v3485, 8
      %v3572 = vpop.permute.xlu0 %3571
      %3573 = vrot.lane.b32.xlu0 %v3486, 8
      %v3574 = vpop.permute.xlu0 %3573
      %3575 = vrot.lane.b32.xlu0 %v3487, 8
      %v3576 = vpop.permute.xlu0 %3575
      %3577 = vrot.lane.b32.xlu0 %v3488, 8
      %v3578 = vpop.permute.xlu0 %3577
      %3579 = vrot.lane.b32.xlu0 %v3489, 8
      %v3580 = vpop.permute.xlu0 %3579
      %3581 = vrot.lane.b32.xlu0 %v3490, 8
      %v3582 = vpop.permute.xlu0 %3581
      %3583 = vrot.lane.b32.xlu0 %v3491, 8
      %v3584 = vpop.permute.xlu0 %3583
      %3585 = vrot.lane.b32.xlu0 %v3492, 8
      %v3586 = vpop.permute.xlu0 %3585
      %3587 = vrot.lane.b32.xlu0 %v3493, 8
      %v3588 = vpop.permute.xlu0 %3587
      %3589 = vrot.lane.b32.xlu0 %v3494, 8
      %v3590 = vpop.permute.xlu0 %3589
      %3591 = vrot.lane.b32.xlu0 %v3495, 8
      %v3592 = vpop.permute.xlu0 %3591
      %3593 = vrot.lane.b32.xlu0 %v3496, 8
      %v3594 = vpop.permute.xlu0 %3593
      %3595 = vrot.lane.b32.xlu0 %v3497, 8
      %v3596 = vpop.permute.xlu0 %3595
      %3597 = vrot.lane.b32.xlu0 %v3498, 8
      %v3598 = vpop.permute.xlu0 %3597
      %3599 = vrot.lane.b32.xlu0 %v3499, 8
      %v3600 = vpop.permute.xlu0 %3599
      %3601 = vrot.lane.b32.xlu0 %v3500, 8
      %v3602 = vpop.permute.xlu0 %3601
      %3603 = vrot.lane.b32.xlu0 %v3501, 8
      %v3604 = vpop.permute.xlu0 %3603
      %3605 = vrot.lane.b32.xlu0 %v3502, 8
      %v3606 = vpop.permute.xlu0 %3605
      %3607 = vrot.lane.b32.xlu0 %v3503, 8
      %v3608 = vpop.permute.xlu0 %3607
      %3609 = vrot.lane.b32.xlu0 %v3504, 8
      %v3610 = vpop.permute.xlu0 %3609
      %3611 = vrot.lane.b32.xlu0 %v3505, 8
      %v3612 = vpop.permute.xlu0 %3611
      %3613 = vrot.lane.b32.xlu0 %v3506, 8
      %v3614 = vpop.permute.xlu0 %3613
      %3651 = vst.msk [vmem:[#allocation3] sm:$0xff] %vm992, %v3544
      %3652 = vst.msk [vmem:[#allocation3 + $0x10] sm:$0xff] %vm992, %v3546
      %3653 = vst.msk [vmem:[#allocation3 + $0x20] sm:$0xff] %vm992, %v3548
      %3654 = vst.msk [vmem:[#allocation3 + $0x30] sm:$0xff] %vm992, %v3550
      %3655 = vst.msk [vmem:[#allocation3 + $0x40] sm:$0xff] %vm992, %v3552
      %3656 = vst.msk [vmem:[#allocation3 + $0x50] sm:$0xff] %vm992, %v3554
      %3657 = vst.msk [vmem:[#allocation3 + $0x60] sm:$0xff] %vm992, %v3556
      %3658 = vst.msk [vmem:[#allocation3 + $0x70] sm:$0xff] %vm992, %v3558
      %3659 = vst.msk [vmem:[#allocation3 + $0x80] sm:$0xff] %vm992, %v3560
      %3660 = vst.msk [vmem:[#allocation3 + $0x90] sm:$0xff] %vm992, %v3562
      %3661 = vst.msk [vmem:[#allocation3 + $0xa0] sm:$0xff] %vm992, %v3564
      %3662 = vst.msk [vmem:[#allocation3 + $0xb0] sm:$0xff] %vm992, %v3566
      %3663 = vst.msk [vmem:[#allocation3 + $0xc0] sm:$0xff] %vm992, %v3568
      %3664 = vst.msk [vmem:[#allocation3 + $0xd0] sm:$0xff] %vm992, %v3570
      %3665 = vst.msk [vmem:[#allocation3 + $0xe0] sm:$0xff] %vm992, %v3572
      %3666 = vst.msk [vmem:[#allocation3 + $0xf0] sm:$0xff] %vm992, %v3574
      %3667 = vst.msk [vmem:[#allocation3 + $0x100] sm:$0xff] %vm992, %v3576
      %3668 = vst.msk [vmem:[#allocation3 + $0x110] sm:$0xff] %vm992, %v3578
      %3669 = vst.msk [vmem:[#allocation3 + $0x120] sm:$0xff] %vm992, %v3580
      %3670 = vst.msk [vmem:[#allocation3 + $0x130] sm:$0xff] %vm992, %v3582
      %3671 = vst.msk [vmem:[#allocation3 + $0x140] sm:$0xff] %vm992, %v3584
      %3672 = vst.msk [vmem:[#allocation3 + $0x150] sm:$0xff] %vm992, %v3586
      %3673 = vst.msk [vmem:[#allocation3 + $0x160] sm:$0xff] %vm992, %v3588
      %3674 = vst.msk [vmem:[#allocation3 + $0x170] sm:$0xff] %vm992, %v3590
      %3675 = vst.msk [vmem:[#allocation3 + $0x180] sm:$0xff] %vm992, %v3592
      %3676 = vst.msk [vmem:[#allocation3 + $0x190] sm:$0xff] %vm992, %v3594
      %3677 = vst.msk [vmem:[#allocation3 + $0x1a0] sm:$0xff] %vm992, %v3596
      %3678 = vst.msk [vmem:[#allocation3 + $0x1b0] sm:$0xff] %vm992, %v3598
      %3679 = vst.msk [vmem:[#allocation3 + $0x1c0] sm:$0xff] %vm992, %v3600
      %3680 = vst.msk [vmem:[#allocation3 + $0x1d0] sm:$0xff] %vm992, %v3602
      %3681 = vst.msk [vmem:[#allocation3 + $0x1e0] sm:$0xff] %vm992, %v3604
      %3682 = vst.msk [vmem:[#allocation3 + $0x1f0] sm:$0xff] %vm992, %v3606
      %3683 = vst.msk [vmem:[#allocation3 + $0x200] sm:$0xff] %vm992, %v3608
      %3684 = vst.msk [vmem:[#allocation3 + $0x210] sm:$0xff] %vm992, %v3610
      %3685 = vst.msk [vmem:[#allocation3 + $0x220] sm:$0xff] %vm992, %v3612
      %3686 = vst.msk [vmem:[#allocation3 + $0x230] sm:$0x3f] %vm1028, %v3614
      %v3687 = vld [vmem:[#allocation2 + $0x12] sm:$0xff]
      %v3688 = vld [vmem:[#allocation2 + $0x1a] sm:$0xff]
      %v3689 = vld [vmem:[#allocation2 + $0x22] sm:$0xff]
      %v3690 = vld [vmem:[#allocation2 + $0x2a] sm:$0xff]
      %v3691 = vld [vmem:[#allocation2 + $0x32] sm:$0xff]
      %v3692 = vld [vmem:[#allocation2 + $0x3a] sm:$0xff]
      %v3693 = vld [vmem:[#allocation2 + $0x42] sm:$0xff]
      %v3694 = vld [vmem:[#allocation2 + $0x4a] sm:$0xff]
      %v3695 = vld [vmem:[#allocation2 + $0x52] sm:$0xff]
      %v3696 = vld [vmem:[#allocation2 + $0x5a] sm:$0xff]
      %v3697 = vld [vmem:[#allocation2 + $0x62] sm:$0xff]
      %v3698 = vld [vmem:[#allocation2 + $0x6a] sm:$0xff]
      %v3699 = vld [vmem:[#allocation2 + $0x72] sm:$0xff]
      %v3700 = vld [vmem:[#allocation2 + $0x7a] sm:$0xff]
      %v3701 = vld [vmem:[#allocation2 + $0x82] sm:$0xff]
      %v3702 = vld [vmem:[#allocation2 + $0x8a] sm:$0xff]
      %v3703 = vld [vmem:[#allocation2 + $0x92] sm:$0xff]
      %v3704 = vld [vmem:[#allocation2 + $0x9a] sm:$0xff]
      %v3705 = vld [vmem:[#allocation2 + $0xa2] sm:$0xff]
      %v3706 = vld [vmem:[#allocation2 + $0xaa] sm:$0xff]
      %v3707 = vld [vmem:[#allocation2 + $0xb2] sm:$0xff]
      %v3708 = vld [vmem:[#allocation2 + $0xba] sm:$0xff]
      %v3709 = vld [vmem:[#allocation2 + $0xc2] sm:$0xff]
      %v3710 = vld [vmem:[#allocation2 + $0xca] sm:$0xff]
      %v3711 = vld [vmem:[#allocation2 + $0xd2] sm:$0xff]
      %v3712 = vld [vmem:[#allocation2 + $0xda] sm:$0xff]
      %v3713 = vld [vmem:[#allocation2 + $0xe2] sm:$0xff]
      %v3714 = vld [vmem:[#allocation2 + $0xea] sm:$0xff]
      %v3715 = vld [vmem:[#allocation2 + $0xf2] sm:$0xff]
      %v3716 = vld [vmem:[#allocation2 + $0xfa] sm:$0xff]
      %v3717 = vld [vmem:[#allocation2 + $0x102] sm:$0xff]
      %v3718 = vld [vmem:[#allocation2 + $0x10a] sm:$0xff]
      %v3719 = vld [vmem:[#allocation2 + $0x112] sm:$0xff]
      %v3720 = vld [vmem:[#allocation2 + $0x11a] sm:$0xff]
      %v3721 = vld [vmem:[#allocation2 + $0x122] sm:$0xff]
      %v3722 = vld [vmem:[#allocation2 + $0x12a] sm:$0x3f]
      %3759 = vrot.lane.b32.xlu0 %v3687, 12
      %v3760 = vpop.permute.xlu0 %3759
      %3761 = vrot.lane.b32.xlu0 %v3688, 12
      %v3762 = vpop.permute.xlu0 %3761
      %3763 = vrot.lane.b32.xlu0 %v3689, 12
      %v3764 = vpop.permute.xlu0 %3763
      %3765 = vrot.lane.b32.xlu0 %v3690, 12
      %v3766 = vpop.permute.xlu0 %3765
      %3767 = vrot.lane.b32.xlu0 %v3691, 12
      %v3768 = vpop.permute.xlu0 %3767
      %3769 = vrot.lane.b32.xlu0 %v3692, 12
      %v3770 = vpop.permute.xlu0 %3769
      %3771 = vrot.lane.b32.xlu0 %v3693, 12
      %v3772 = vpop.permute.xlu0 %3771
      %3773 = vrot.lane.b32.xlu0 %v3694, 12
      %v3774 = vpop.permute.xlu0 %3773
      %3775 = vrot.lane.b32.xlu0 %v3695, 12
      %v3776 = vpop.permute.xlu0 %3775
      %3777 = vrot.lane.b32.xlu0 %v3696, 12
      %v3778 = vpop.permute.xlu0 %3777
      %3779 = vrot.lane.b32.xlu0 %v3697, 12
      %v3780 = vpop.permute.xlu0 %3779
      %3781 = vrot.lane.b32.xlu0 %v3698, 12
      %v3782 = vpop.permute.xlu0 %3781
      %3783 = vrot.lane.b32.xlu0 %v3699, 12
      %v3784 = vpop.permute.xlu0 %3783
      %3785 = vrot.lane.b32.xlu0 %v3700, 12
      %v3786 = vpop.permute.xlu0 %3785
      %3787 = vrot.lane.b32.xlu0 %v3701, 12
      %v3788 = vpop.permute.xlu0 %3787
      %3789 = vrot.lane.b32.xlu0 %v3702, 12
      %v3790 = vpop.permute.xlu0 %3789
      %3791 = vrot.lane.b32.xlu0 %v3703, 12
      %v3792 = vpop.permute.xlu0 %3791
      %3793 = vrot.lane.b32.xlu0 %v3704, 12
      %v3794 = vpop.permute.xlu0 %3793
      %3795 = vrot.lane.b32.xlu0 %v3705, 12
      %v3796 = vpop.permute.xlu0 %3795
      %3797 = vrot.lane.b32.xlu0 %v3706, 12
      %v3798 = vpop.permute.xlu0 %3797
      %3799 = vrot.lane.b32.xlu0 %v3707, 12
      %v3800 = vpop.permute.xlu0 %3799
      %3801 = vrot.lane.b32.xlu0 %v3708, 12
      %v3802 = vpop.permute.xlu0 %3801
      %3803 = vrot.lane.b32.xlu0 %v3709, 12
      %v3804 = vpop.permute.xlu0 %3803
      %3805 = vrot.lane.b32.xlu0 %v3710, 12
      %v3806 = vpop.permute.xlu0 %3805
      %3807 = vrot.lane.b32.xlu0 %v3711, 12
      %v3808 = vpop.permute.xlu0 %3807
      %3809 = vrot.lane.b32.xlu0 %v3712, 12
      %v3810 = vpop.permute.xlu0 %3809
      %3811 = vrot.lane.b32.xlu0 %v3713, 12
      %v3812 = vpop.permute.xlu0 %3811
      %3813 = vrot.lane.b32.xlu0 %v3714, 12
      %v3814 = vpop.permute.xlu0 %3813
      %3815 = vrot.lane.b32.xlu0 %v3715, 12
      %v3816 = vpop.permute.xlu0 %3815
      %3817 = vrot.lane.b32.xlu0 %v3716, 12
      %v3818 = vpop.permute.xlu0 %3817
      %3819 = vrot.lane.b32.xlu0 %v3717, 12
      %v3820 = vpop.permute.xlu0 %3819
      %3821 = vrot.lane.b32.xlu0 %v3718, 12
      %v3822 = vpop.permute.xlu0 %3821
      %3823 = vrot.lane.b32.xlu0 %v3719, 12
      %v3824 = vpop.permute.xlu0 %3823
      %3825 = vrot.lane.b32.xlu0 %v3720, 12
      %v3826 = vpop.permute.xlu0 %3825
      %3827 = vrot.lane.b32.xlu0 %v3721, 12
      %v3828 = vpop.permute.xlu0 %3827
      %3829 = vrot.lane.b32.xlu0 %v3722, 12
      %v3830 = vpop.permute.xlu0 %3829
      %3867 = vst.msk [vmem:[#allocation3] sm:$0xff] %vm1210, %v3760
      %3868 = vst.msk [vmem:[#allocation3 + $0x10] sm:$0xff] %vm1210, %v3762
      %3869 = vst.msk [vmem:[#allocation3 + $0x20] sm:$0xff] %vm1210, %v3764
      %3870 = vst.msk [vmem:[#allocation3 + $0x30] sm:$0xff] %vm1210, %v3766
      %3871 = vst.msk [vmem:[#allocation3 + $0x40] sm:$0xff] %vm1210, %v3768
      %3872 = vst.msk [vmem:[#allocation3 + $0x50] sm:$0xff] %vm1210, %v3770
      %3873 = vst.msk [vmem:[#allocation3 + $0x60] sm:$0xff] %vm1210, %v3772
      %3874 = vst.msk [vmem:[#allocation3 + $0x70] sm:$0xff] %vm1210, %v3774
      %3875 = vst.msk [vmem:[#allocation3 + $0x80] sm:$0xff] %vm1210, %v3776
      %3876 = vst.msk [vmem:[#allocation3 + $0x90] sm:$0xff] %vm1210, %v3778
      %3877 = vst.msk [vmem:[#allocation3 + $0xa0] sm:$0xff] %vm1210, %v3780
      %3878 = vst.msk [vmem:[#allocation3 + $0xb0] sm:$0xff] %vm1210, %v3782
      %3879 = vst.msk [vmem:[#allocation3 + $0xc0] sm:$0xff] %vm1210, %v3784
      %3880 = vst.msk [vmem:[#allocation3 + $0xd0] sm:$0xff] %vm1210, %v3786
      %3881 = vst.msk [vmem:[#allocation3 + $0xe0] sm:$0xff] %vm1210, %v3788
      %3882 = vst.msk [vmem:[#allocation3 + $0xf0] sm:$0xff] %vm1210, %v3790
      %3883 = vst.msk [vmem:[#allocation3 + $0x100] sm:$0xff] %vm1210, %v3792
      %3884 = vst.msk [vmem:[#allocation3 + $0x110] sm:$0xff] %vm1210, %v3794
      %3885 = vst.msk [vmem:[#allocation3 + $0x120] sm:$0xff] %vm1210, %v3796
      %3886 = vst.msk [vmem:[#allocation3 + $0x130] sm:$0xff] %vm1210, %v3798
      %3887 = vst.msk [vmem:[#allocation3 + $0x140] sm:$0xff] %vm1210, %v3800
      %3888 = vst.msk [vmem:[#allocation3 + $0x150] sm:$0xff] %vm1210, %v3802
      %3889 = vst.msk [vmem:[#allocation3 + $0x160] sm:$0xff] %vm1210, %v3804
      %3890 = vst.msk [vmem:[#allocation3 + $0x170] sm:$0xff] %vm1210, %v3806
      %3891 = vst.msk [vmem:[#allocation3 + $0x180] sm:$0xff] %vm1210, %v3808
      %3892 = vst.msk [vmem:[#allocation3 + $0x190] sm:$0xff] %vm1210, %v3810
      %3893 = vst.msk [vmem:[#allocation3 + $0x1a0] sm:$0xff] %vm1210, %v3812
      %3894 = vst.msk [vmem:[#allocation3 + $0x1b0] sm:$0xff] %vm1210, %v3814
      %3895 = vst.msk [vmem:[#allocation3 + $0x1c0] sm:$0xff] %vm1210, %v3816
      %3896 = vst.msk [vmem:[#allocation3 + $0x1d0] sm:$0xff] %vm1210, %v3818
      %3897 = vst.msk [vmem:[#allocation3 + $0x1e0] sm:$0xff] %vm1210, %v3820
      %3898 = vst.msk [vmem:[#allocation3 + $0x1f0] sm:$0xff] %vm1210, %v3822
      %3899 = vst.msk [vmem:[#allocation3 + $0x200] sm:$0xff] %vm1210, %v3824
      %3900 = vst.msk [vmem:[#allocation3 + $0x210] sm:$0xff] %vm1210, %v3826
      %3901 = vst.msk [vmem:[#allocation3 + $0x220] sm:$0xff] %vm1210, %v3828
      %3902 = vst.msk [vmem:[#allocation3 + $0x230] sm:$0x3f] %vm1246, %v3830
      %v3903 = vld [vmem:[#allocation2 + $0x13] sm:$0xff]
      %v3904 = vld [vmem:[#allocation2 + $0x1b] sm:$0xff]
      %v3905 = vld [vmem:[#allocation2 + $0x23] sm:$0xff]
      %v3906 = vld [vmem:[#allocation2 + $0x2b] sm:$0xff]
      %v3907 = vld [vmem:[#allocation2 + $0x33] sm:$0xff]
      %v3908 = vld [vmem:[#allocation2 + $0x3b] sm:$0xff]
      %v3909 = vld [vmem:[#allocation2 + $0x43] sm:$0xff]
      %v3910 = vld [vmem:[#allocation2 + $0x4b] sm:$0xff]
      %v3911 = vld [vmem:[#allocation2 + $0x53] sm:$0xff]
      %v3912 = vld [vmem:[#allocation2 + $0x5b] sm:$0xff]
      %v3913 = vld [vmem:[#allocation2 + $0x63] sm:$0xff]
      %v3914 = vld [vmem:[#allocation2 + $0x6b] sm:$0xff]
      %v3915 = vld [vmem:[#allocation2 + $0x73] sm:$0xff]
      %v3916 = vld [vmem:[#allocation2 + $0x7b] sm:$0xff]
      %v3917 = vld [vmem:[#allocation2 + $0x83] sm:$0xff]
      %v3918 = vld [vmem:[#allocation2 + $0x8b] sm:$0xff]
      %v3919 = vld [vmem:[#allocation2 + $0x93] sm:$0xff]
      %v3920 = vld [vmem:[#allocation2 + $0x9b] sm:$0xff]
      %v3921 = vld [vmem:[#allocation2 + $0xa3] sm:$0xff]
      %v3922 = vld [vmem:[#allocation2 + $0xab] sm:$0xff]
      %v3923 = vld [vmem:[#allocation2 + $0xb3] sm:$0xff]
      %v3924 = vld [vmem:[#allocation2 + $0xbb] sm:$0xff]
      %v3925 = vld [vmem:[#allocation2 + $0xc3] sm:$0xff]
      %v3926 = vld [vmem:[#allocation2 + $0xcb] sm:$0xff]
      %v3927 = vld [vmem:[#allocation2 + $0xd3] sm:$0xff]
      %v3928 = vld [vmem:[#allocation2 + $0xdb] sm:$0xff]
      %v3929 = vld [vmem:[#allocation2 + $0xe3] sm:$0xff]
      %v3930 = vld [vmem:[#allocation2 + $0xeb] sm:$0xff]
      %v3931 = vld [vmem:[#allocation2 + $0xf3] sm:$0xff]
      %v3932 = vld [vmem:[#allocation2 + $0xfb] sm:$0xff]
      %v3933 = vld [vmem:[#allocation2 + $0x103] sm:$0xff]
      %v3934 = vld [vmem:[#allocation2 + $0x10b] sm:$0xff]
      %v3935 = vld [vmem:[#allocation2 + $0x113] sm:$0xff]
      %v3936 = vld [vmem:[#allocation2 + $0x11b] sm:$0xff]
      %v3937 = vld [vmem:[#allocation2 + $0x123] sm:$0xff]
      %v3938 = vld [vmem:[#allocation2 + $0x12b] sm:$0x3f]
      %3975 = vrot.lane.b32.xlu0 %v3903, 16
      %v3976 = vpop.permute.xlu0 %3975
      %3977 = vrot.lane.b32.xlu0 %v3904, 16
      %v3978 = vpop.permute.xlu0 %3977
      %3979 = vrot.lane.b32.xlu0 %v3905, 16
      %v3980 = vpop.permute.xlu0 %3979
      %3981 = vrot.lane.b32.xlu0 %v3906, 16
      %v3982 = vpop.permute.xlu0 %3981
      %3983 = vrot.lane.b32.xlu0 %v3907, 16
      %v3984 = vpop.permute.xlu0 %3983
      %3985 = vrot.lane.b32.xlu0 %v3908, 16
      %v3986 = vpop.permute.xlu0 %3985
      %3987 = vrot.lane.b32.xlu0 %v3909, 16
      %v3988 = vpop.permute.xlu0 %3987
      %3989 = vrot.lane.b32.xlu0 %v3910, 16
      %v3990 = vpop.permute.xlu0 %3989
      %3991 = vrot.lane.b32.xlu0 %v3911, 16
      %v3992 = vpop.permute.xlu0 %3991
      %3993 = vrot.lane.b32.xlu0 %v3912, 16
      %v3994 = vpop.permute.xlu0 %3993
      %3995 = vrot.lane.b32.xlu0 %v3913, 16
      %v3996 = vpop.permute.xlu0 %3995
      %3997 = vrot.lane.b32.xlu0 %v3914, 16
      %v3998 = vpop.permute.xlu0 %3997
      %3999 = vrot.lane.b32.xlu0 %v3915, 16
      %v4000 = vpop.permute.xlu0 %3999
      %4001 = vrot.lane.b32.xlu0 %v3916, 16
      %v4002 = vpop.permute.xlu0 %4001
      %4003 = vrot.lane.b32.xlu0 %v3917, 16
      %v4004 = vpop.permute.xlu0 %4003
      %4005 = vrot.lane.b32.xlu0 %v3918, 16
      %v4006 = vpop.permute.xlu0 %4005
      %4007 = vrot.lane.b32.xlu0 %v3919, 16
      %v4008 = vpop.permute.xlu0 %4007
      %4009 = vrot.lane.b32.xlu0 %v3920, 16
      %v4010 = vpop.permute.xlu0 %4009
      %4011 = vrot.lane.b32.xlu0 %v3921, 16
      %v4012 = vpop.permute.xlu0 %4011
      %4013 = vrot.lane.b32.xlu0 %v3922, 16
      %v4014 = vpop.permute.xlu0 %4013
      %4015 = vrot.lane.b32.xlu0 %v3923, 16
      %v4016 = vpop.permute.xlu0 %4015
      %4017 = vrot.lane.b32.xlu0 %v3924, 16
      %v4018 = vpop.permute.xlu0 %4017
      %4019 = vrot.lane.b32.xlu0 %v3925, 16
      %v4020 = vpop.permute.xlu0 %4019
      %4021 = vrot.lane.b32.xlu0 %v3926, 16
      %v4022 = vpop.permute.xlu0 %4021
      %4023 = vrot.lane.b32.xlu0 %v3927, 16
      %v4024 = vpop.permute.xlu0 %4023
      %4025 = vrot.lane.b32.xlu0 %v3928, 16
      %v4026 = vpop.permute.xlu0 %4025
      %4027 = vrot.lane.b32.xlu0 %v3929, 16
      %v4028 = vpop.permute.xlu0 %4027
      %4029 = vrot.lane.b32.xlu0 %v3930, 16
      %v4030 = vpop.permute.xlu0 %4029
      %4031 = vrot.lane.b32.xlu0 %v3931, 16
      %v4032 = vpop.permute.xlu0 %4031
      %4033 = vrot.lane.b32.xlu0 %v3932, 16
      %v4034 = vpop.permute.xlu0 %4033
      %4035 = vrot.lane.b32.xlu0 %v3933, 16
      %v4036 = vpop.permute.xlu0 %4035
      %4037 = vrot.lane.b32.xlu0 %v3934, 16
      %v4038 = vpop.permute.xlu0 %4037
      %4039 = vrot.lane.b32.xlu0 %v3935, 16
      %v4040 = vpop.permute.xlu0 %4039
      %4041 = vrot.lane.b32.xlu0 %v3936, 16
      %v4042 = vpop.permute.xlu0 %4041
      %4043 = vrot.lane.b32.xlu0 %v3937, 16
      %v4044 = vpop.permute.xlu0 %4043
      %4045 = vrot.lane.b32.xlu0 %v3938, 16
      %v4046 = vpop.permute.xlu0 %4045
      %4083 = vst.msk [vmem:[#allocation3] sm:$0xff] %vm1428, %v3976
      %4084 = vst.msk [vmem:[#allocation3 + $0x10] sm:$0xff] %vm1428, %v3978
      %4085 = vst.msk [vmem:[#allocation3 + $0x20] sm:$0xff] %vm1428, %v3980
      %4086 = vst.msk [vmem:[#allocation3 + $0x30] sm:$0xff] %vm1428, %v3982
      %4087 = vst.msk [vmem:[#allocation3 + $0x40] sm:$0xff] %vm1428, %v3984
      %4088 = vst.msk [vmem:[#allocation3 + $0x50] sm:$0xff] %vm1428, %v3986
      %4089 = vst.msk [vmem:[#allocation3 + $0x60] sm:$0xff] %vm1428, %v3988
      %4090 = vst.msk [vmem:[#allocation3 + $0x70] sm:$0xff] %vm1428, %v3990
      %4091 = vst.msk [vmem:[#allocation3 + $0x80] sm:$0xff] %vm1428, %v3992
      %4092 = vst.msk [vmem:[#allocation3 + $0x90] sm:$0xff] %vm1428, %v3994
      %4093 = vst.msk [vmem:[#allocation3 + $0xa0] sm:$0xff] %vm1428, %v3996
      %4094 = vst.msk [vmem:[#allocation3 + $0xb0] sm:$0xff] %vm1428, %v3998
      %4095 = vst.msk [vmem:[#allocation3 + $0xc0] sm:$0xff] %vm1428, %v4000
      %4096 = vst.msk [vmem:[#allocation3 + $0xd0] sm:$0xff] %vm1428, %v4002
      %4097 = vst.msk [vmem:[#allocation3 + $0xe0] sm:$0xff] %vm1428, %v4004
      %4098 = vst.msk [vmem:[#allocation3 + $0xf0] sm:$0xff] %vm1428, %v4006
      %4099 = vst.msk [vmem:[#allocation3 + $0x100] sm:$0xff] %vm1428, %v4008
      %4100 = vst.msk [vmem:[#allocation3 + $0x110] sm:$0xff] %vm1428, %v4010
      %4101 = vst.msk [vmem:[#allocation3 + $0x120] sm:$0xff] %vm1428, %v4012
      %4102 = vst.msk [vmem:[#allocation3 + $0x130] sm:$0xff] %vm1428, %v4014
      %4103 = vst.msk [vmem:[#allocation3 + $0x140] sm:$0xff] %vm1428, %v4016
      %4104 = vst.msk [vmem:[#allocation3 + $0x150] sm:$0xff] %vm1428, %v4018
      %4105 = vst.msk [vmem:[#allocation3 + $0x160] sm:$0xff] %vm1428, %v4020
      %4106 = vst.msk [vmem:[#allocation3 + $0x170] sm:$0xff] %vm1428, %v4022
      %4107 = vst.msk [vmem:[#allocation3 + $0x180] sm:$0xff] %vm1428, %v4024
      %4108 = vst.msk [vmem:[#allocation3 + $0x190] sm:$0xff] %vm1428, %v4026
      %4109 = vst.msk [vmem:[#allocation3 + $0x1a0] sm:$0xff] %vm1428, %v4028
      %4110 = vst.msk [vmem:[#allocation3 + $0x1b0] sm:$0xff] %vm1428, %v4030
      %4111 = vst.msk [vmem:[#allocation3 + $0x1c0] sm:$0xff] %vm1428, %v4032
      %4112 = vst.msk [vmem:[#allocation3 + $0x1d0] sm:$0xff] %vm1428, %v4034
      %4113 = vst.msk [vmem:[#allocation3 + $0x1e0] sm:$0xff] %vm1428, %v4036
      %4114 = vst.msk [vmem:[#allocation3 + $0x1f0] sm:$0xff] %vm1428, %v4038
      %4115 = vst.msk [vmem:[#allocation3 + $0x200] sm:$0xff] %vm1428, %v4040
      %4116 = vst.msk [vmem:[#allocation3 + $0x210] sm:$0xff] %vm1428, %v4042
      %4117 = vst.msk [vmem:[#allocation3 + $0x220] sm:$0xff] %vm1428, %v4044
      %4118 = vst.msk [vmem:[#allocation3 + $0x230] sm:$0x3f] %vm1464, %v4046
      %v4119 = vld [vmem:[#allocation2 + $0x14] sm:$0xff]
      %v4120 = vld [vmem:[#allocation2 + $0x1c] sm:$0xff]
      %v4121 = vld [vmem:[#allocation2 + $0x24] sm:$0xff]
      %v4122 = vld [vmem:[#allocation2 + $0x2c] sm:$0xff]
      %v4123 = vld [vmem:[#allocation2 + $0x34] sm:$0xff]
      %v4124 = vld [vmem:[#allocation2 + $0x3c] sm:$0xff]
      %v4125 = vld [vmem:[#allocation2 + $0x44] sm:$0xff]
      %v4126 = vld [vmem:[#allocation2 + $0x4c] sm:$0xff]
      %v4127 = vld [vmem:[#allocation2 + $0x54] sm:$0xff]
      %v4128 = vld [vmem:[#allocation2 + $0x5c] sm:$0xff]
      %v4129 = vld [vmem:[#allocation2 + $0x64] sm:$0xff]
      %v4130 = vld [vmem:[#allocation2 + $0x6c] sm:$0xff]
      %v4131 = vld [vmem:[#allocation2 + $0x74] sm:$0xff]
      %v4132 = vld [vmem:[#allocation2 + $0x7c] sm:$0xff]
      %v4133 = vld [vmem:[#allocation2 + $0x84] sm:$0xff]
      %v4134 = vld [vmem:[#allocation2 + $0x8c] sm:$0xff]
      %v4135 = vld [vmem:[#allocation2 + $0x94] sm:$0xff]
      %v4136 = vld [vmem:[#allocation2 + $0x9c] sm:$0xff]
      %v4137 = vld [vmem:[#allocation2 + $0xa4] sm:$0xff]
      %v4138 = vld [vmem:[#allocation2 + $0xac] sm:$0xff]
      %v4139 = vld [vmem:[#allocation2 + $0xb4] sm:$0xff]
      %v4140 = vld [vmem:[#allocation2 + $0xbc] sm:$0xff]
      %v4141 = vld [vmem:[#allocation2 + $0xc4] sm:$0xff]
      %v4142 = vld [vmem:[#allocation2 + $0xcc] sm:$0xff]
      %v4143 = vld [vmem:[#allocation2 + $0xd4] sm:$0xff]
      %v4144 = vld [vmem:[#allocation2 + $0xdc] sm:$0xff]
      %v4145 = vld [vmem:[#allocation2 + $0xe4] sm:$0xff]
      %v4146 = vld [vmem:[#allocation2 + $0xec] sm:$0xff]
      %v4147 = vld [vmem:[#allocation2 + $0xf4] sm:$0xff]
      %v4148 = vld [vmem:[#allocation2 + $0xfc] sm:$0xff]
      %v4149 = vld [vmem:[#allocation2 + $0x104] sm:$0xff]
      %v4150 = vld [vmem:[#allocation2 + $0x10c] sm:$0xff]
      %v4151 = vld [vmem:[#allocation2 + $0x114] sm:$0xff]
      %v4152 = vld [vmem:[#allocation2 + $0x11c] sm:$0xff]
      %v4153 = vld [vmem:[#allocation2 + $0x124] sm:$0xff]
      %v4154 = vld [vmem:[#allocation2 + $0x12c] sm:$0x3f]
      %4191 = vrot.lane.b32.xlu0 %v4119, 20
      %v4192 = vpop.permute.xlu0 %4191
      %4193 = vrot.lane.b32.xlu0 %v4120, 20
      %v4194 = vpop.permute.xlu0 %4193
      %4195 = vrot.lane.b32.xlu0 %v4121, 20
      %v4196 = vpop.permute.xlu0 %4195
      %4197 = vrot.lane.b32.xlu0 %v4122, 20
      %v4198 = vpop.permute.xlu0 %4197
      %4199 = vrot.lane.b32.xlu0 %v4123, 20
      %v4200 = vpop.permute.xlu0 %4199
      %4201 = vrot.lane.b32.xlu0 %v4124, 20
      %v4202 = vpop.permute.xlu0 %4201
      %4203 = vrot.lane.b32.xlu0 %v4125, 20
      %v4204 = vpop.permute.xlu0 %4203
      %4205 = vrot.lane.b32.xlu0 %v4126, 20
      %v4206 = vpop.permute.xlu0 %4205
      %4207 = vrot.lane.b32.xlu0 %v4127, 20
      %v4208 = vpop.permute.xlu0 %4207
      %4209 = vrot.lane.b32.xlu0 %v4128, 20
      %v4210 = vpop.permute.xlu0 %4209
      %4211 = vrot.lane.b32.xlu0 %v4129, 20
      %v4212 = vpop.permute.xlu0 %4211
      %4213 = vrot.lane.b32.xlu0 %v4130, 20
      %v4214 = vpop.permute.xlu0 %4213
      %4215 = vrot.lane.b32.xlu0 %v4131, 20
      %v4216 = vpop.permute.xlu0 %4215
      %4217 = vrot.lane.b32.xlu0 %v4132, 20
      %v4218 = vpop.permute.xlu0 %4217
      %4219 = vrot.lane.b32.xlu0 %v4133, 20
      %v4220 = vpop.permute.xlu0 %4219
      %4221 = vrot.lane.b32.xlu0 %v4134, 20
      %v4222 = vpop.permute.xlu0 %4221
      %4223 = vrot.lane.b32.xlu0 %v4135, 20
      %v4224 = vpop.permute.xlu0 %4223
      %4225 = vrot.lane.b32.xlu0 %v4136, 20
      %v4226 = vpop.permute.xlu0 %4225
      %4227 = vrot.lane.b32.xlu0 %v4137, 20
      %v4228 = vpop.permute.xlu0 %4227
      %4229 = vrot.lane.b32.xlu0 %v4138, 20
      %v4230 = vpop.permute.xlu0 %4229
      %4231 = vrot.lane.b32.xlu0 %v4139, 20
      %v4232 = vpop.permute.xlu0 %4231
      %4233 = vrot.lane.b32.xlu0 %v4140, 20
      %v4234 = vpop.permute.xlu0 %4233
      %4235 = vrot.lane.b32.xlu0 %v4141, 20
      %v4236 = vpop.permute.xlu0 %4235
      %4237 = vrot.lane.b32.xlu0 %v4142, 20
      %v4238 = vpop.permute.xlu0 %4237
      %4239 = vrot.lane.b32.xlu0 %v4143, 20
      %v4240 = vpop.permute.xlu0 %4239
      %4241 = vrot.lane.b32.xlu0 %v4144, 20
      %v4242 = vpop.permute.xlu0 %4241
      %4243 = vrot.lane.b32.xlu0 %v4145, 20
      %v4244 = vpop.permute.xlu0 %4243
      %4245 = vrot.lane.b32.xlu0 %v4146, 20
      %v4246 = vpop.permute.xlu0 %4245
      %4247 = vrot.lane.b32.xlu0 %v4147, 20
      %v4248 = vpop.permute.xlu0 %4247
      %4249 = vrot.lane.b32.xlu0 %v4148, 20
      %v4250 = vpop.permute.xlu0 %4249
      %4251 = vrot.lane.b32.xlu0 %v4149, 20
      %v4252 = vpop.permute.xlu0 %4251
      %4253 = vrot.lane.b32.xlu0 %v4150, 20
      %v4254 = vpop.permute.xlu0 %4253
      %4255 = vrot.lane.b32.xlu0 %v4151, 20
      %v4256 = vpop.permute.xlu0 %4255
      %4257 = vrot.lane.b32.xlu0 %v4152, 20
      %v4258 = vpop.permute.xlu0 %4257
      %4259 = vrot.lane.b32.xlu0 %v4153, 20
      %v4260 = vpop.permute.xlu0 %4259
      %4261 = vrot.lane.b32.xlu0 %v4154, 20
      %v4262 = vpop.permute.xlu0 %4261
      %4299 = vst.msk [vmem:[#allocation3] sm:$0xff] %vm1646, %v4192
      %4300 = vst.msk [vmem:[#allocation3 + $0x10] sm:$0xff] %vm1646, %v4194
      %4301 = vst.msk [vmem:[#allocation3 + $0x20] sm:$0xff] %vm1646, %v4196
      %4302 = vst.msk [vmem:[#allocation3 + $0x30] sm:$0xff] %vm1646, %v4198
      %4303 = vst.msk [vmem:[#allocation3 + $0x40] sm:$0xff] %vm1646, %v4200
      %4304 = vst.msk [vmem:[#allocation3 + $0x50] sm:$0xff] %vm1646, %v4202
      %4305 = vst.msk [vmem:[#allocation3 + $0x60] sm:$0xff] %vm1646, %v4204
      %4306 = vst.msk [vmem:[#allocation3 + $0x70] sm:$0xff] %vm1646, %v4206
      %4307 = vst.msk [vmem:[#allocation3 + $0x80] sm:$0xff] %vm1646, %v4208
      %4308 = vst.msk [vmem:[#allocation3 + $0x90] sm:$0xff] %vm1646, %v4210
      %4309 = vst.msk [vmem:[#allocation3 + $0xa0] sm:$0xff] %vm1646, %v4212
      %4310 = vst.msk [vmem:[#allocation3 + $0xb0] sm:$0xff] %vm1646, %v4214
      %4311 = vst.msk [vmem:[#allocation3 + $0xc0] sm:$0xff] %vm1646, %v4216
      %4312 = vst.msk [vmem:[#allocation3 + $0xd0] sm:$0xff] %vm1646, %v4218
      %4313 = vst.msk [vmem:[#allocation3 + $0xe0] sm:$0xff] %vm1646, %v4220
      %4314 = vst.msk [vmem:[#allocation3 + $0xf0] sm:$0xff] %vm1646, %v4222
      %4315 = vst.msk [vmem:[#allocation3 + $0x100] sm:$0xff] %vm1646, %v4224
      %4316 = vst.msk [vmem:[#allocation3 + $0x110] sm:$0xff] %vm1646, %v4226
      %4317 = vst.msk [vmem:[#allocation3 + $0x120] sm:$0xff] %vm1646, %v4228
      %4318 = vst.msk [vmem:[#allocation3 + $0x130] sm:$0xff] %vm1646, %v4230
      %4319 = vst.msk [vmem:[#allocation3 + $0x140] sm:$0xff] %vm1646, %v4232
      %4320 = vst.msk [vmem:[#allocation3 + $0x150] sm:$0xff] %vm1646, %v4234
      %4321 = vst.msk [vmem:[#allocation3 + $0x160] sm:$0xff] %vm1646, %v4236
      %4322 = vst.msk [vmem:[#allocation3 + $0x170] sm:$0xff] %vm1646, %v4238
      %4323 = vst.msk [vmem:[#allocation3 + $0x180] sm:$0xff] %vm1646, %v4240
      %4324 = vst.msk [vmem:[#allocation3 + $0x190] sm:$0xff] %vm1646, %v4242
      %4325 = vst.msk [vmem:[#allocation3 + $0x1a0] sm:$0xff] %vm1646, %v4244
      %4326 = vst.msk [vmem:[#allocation3 + $0x1b0] sm:$0xff] %vm1646, %v4246
      %4327 = vst.msk [vmem:[#allocation3 + $0x1c0] sm:$0xff] %vm1646, %v4248
      %4328 = vst.msk [vmem:[#allocation3 + $0x1d0] sm:$0xff] %vm1646, %v4250
      %4329 = vst.msk [vmem:[#allocation3 + $0x1e0] sm:$0xff] %vm1646, %v4252
      %4330 = vst.msk [vmem:[#allocation3 + $0x1f0] sm:$0xff] %vm1646, %v4254
      %4331 = vst.msk [vmem:[#allocation3 + $0x200] sm:$0xff] %vm1646, %v4256
      %4332 = vst.msk [vmem:[#allocation3 + $0x210] sm:$0xff] %vm1646, %v4258
      %4333 = vst.msk [vmem:[#allocation3 + $0x220] sm:$0xff] %vm1646, %v4260
      %4334 = vst.msk [vmem:[#allocation3 + $0x230] sm:$0x3f] %vm1682, %v4262
      %v4335 = vld [vmem:[#allocation2 + $0x24] sm:$0xff]
      %v4336 = vld [vmem:[#allocation2 + $0x2c] sm:$0xff]
      %v4337 = vld [vmem:[#allocation2 + $0x34] sm:$0xff]
      %v4338 = vld [vmem:[#allocation2 + $0x3c] sm:$0xff]
      %v4339 = vld [vmem:[#allocation2 + $0x44] sm:$0xff]
      %v4340 = vld [vmem:[#allocation2 + $0x4c] sm:$0xff]
      %v4341 = vld [vmem:[#allocation2 + $0x54] sm:$0xff]
      %v4342 = vld [vmem:[#allocation2 + $0x5c] sm:$0xff]
      %v4343 = vld [vmem:[#allocation2 + $0x64] sm:$0xff]
      %v4344 = vld [vmem:[#allocation2 + $0x6c] sm:$0xff]
      %v4345 = vld [vmem:[#allocation2 + $0x74] sm:$0xff]
      %v4346 = vld [vmem:[#allocation2 + $0x7c] sm:$0xff]
      %v4347 = vld [vmem:[#allocation2 + $0x84] sm:$0xff]
      %v4348 = vld [vmem:[#allocation2 + $0x8c] sm:$0xff]
      %v4349 = vld [vmem:[#allocation2 + $0x94] sm:$0xff]
      %v4350 = vld [vmem:[#allocation2 + $0x9c] sm:$0xff]
      %v4351 = vld [vmem:[#allocation2 + $0xa4] sm:$0xff]
      %v4352 = vld [vmem:[#allocation2 + $0xac] sm:$0xff]
      %v4353 = vld [vmem:[#allocation2 + $0xb4] sm:$0xff]
      %v4354 = vld [vmem:[#allocation2 + $0xbc] sm:$0xff]
      %v4355 = vld [vmem:[#allocation2 + $0xc4] sm:$0xff]
      %v4356 = vld [vmem:[#allocation2 + $0xcc] sm:$0xff]
      %v4357 = vld [vmem:[#allocation2 + $0xd4] sm:$0xff]
      %v4358 = vld [vmem:[#allocation2 + $0xdc] sm:$0xff]
      %v4359 = vld [vmem:[#allocation2 + $0xe4] sm:$0xff]
      %v4360 = vld [vmem:[#allocation2 + $0xec] sm:$0xff]
      %v4361 = vld [vmem:[#allocation2 + $0xf4] sm:$0xff]
      %v4362 = vld [vmem:[#allocation2 + $0xfc] sm:$0xff]
      %v4363 = vld [vmem:[#allocation2 + $0x104] sm:$0xff]
      %v4364 = vld [vmem:[#allocation2 + $0x10c] sm:$0xff]
      %v4365 = vld [vmem:[#allocation2 + $0x114] sm:$0xff]
      %v4366 = vld [vmem:[#allocation2 + $0x11c] sm:$0xff]
      %v4367 = vld [vmem:[#allocation2 + $0x124] sm:$0xff]
      %v4368 = vld [vmem:[#allocation2 + $0x12c] sm:$0xff]
      %v4369 = vld [vmem:[#allocation2 + $0x134] sm:$0xff]
      %v4370 = vld [vmem:[#allocation2 + $0x13c] sm:$0x3f]
      %4407 = vrot.lane.b32.xlu0 %v4335, 24
      %v4408 = vpop.permute.xlu0 %4407
      %4409 = vrot.lane.b32.xlu0 %v4336, 24
      %v4410 = vpop.permute.xlu0 %4409
      %4411 = vrot.lane.b32.xlu0 %v4337, 24
      %v4412 = vpop.permute.xlu0 %4411
      %4413 = vrot.lane.b32.xlu0 %v4338, 24
      %v4414 = vpop.permute.xlu0 %4413
      %4415 = vrot.lane.b32.xlu0 %v4339, 24
      %v4416 = vpop.permute.xlu0 %4415
      %4417 = vrot.lane.b32.xlu0 %v4340, 24
      %v4418 = vpop.permute.xlu0 %4417
      %4419 = vrot.lane.b32.xlu0 %v4341, 24
      %v4420 = vpop.permute.xlu0 %4419
      %4421 = vrot.lane.b32.xlu0 %v4342, 24
      %v4422 = vpop.permute.xlu0 %4421
      %4423 = vrot.lane.b32.xlu0 %v4343, 24
      %v4424 = vpop.permute.xlu0 %4423
      %4425 = vrot.lane.b32.xlu0 %v4344, 24
      %v4426 = vpop.permute.xlu0 %4425
      %4427 = vrot.lane.b32.xlu0 %v4345, 24
      %v4428 = vpop.permute.xlu0 %4427
      %4429 = vrot.lane.b32.xlu0 %v4346, 24
      %v4430 = vpop.permute.xlu0 %4429
      %4431 = vrot.lane.b32.xlu0 %v4347, 24
      %v4432 = vpop.permute.xlu0 %4431
      %4433 = vrot.lane.b32.xlu0 %v4348, 24
      %v4434 = vpop.permute.xlu0 %4433
      %4435 = vrot.lane.b32.xlu0 %v4349, 24
      %v4436 = vpop.permute.xlu0 %4435
      %4437 = vrot.lane.b32.xlu0 %v4350, 24
      %v4438 = vpop.permute.xlu0 %4437
      %4439 = vrot.lane.b32.xlu0 %v4351, 24
      %v4440 = vpop.permute.xlu0 %4439
      %4441 = vrot.lane.b32.xlu0 %v4352, 24
      %v4442 = vpop.permute.xlu0 %4441
      %4443 = vrot.lane.b32.xlu0 %v4353, 24
      %v4444 = vpop.permute.xlu0 %4443
      %4445 = vrot.lane.b32.xlu0 %v4354, 24
      %v4446 = vpop.permute.xlu0 %4445
      %4447 = vrot.lane.b32.xlu0 %v4355, 24
      %v4448 = vpop.permute.xlu0 %4447
      %4449 = vrot.lane.b32.xlu0 %v4356, 24
      %v4450 = vpop.permute.xlu0 %4449
      %4451 = vrot.lane.b32.xlu0 %v4357, 24
      %v4452 = vpop.permute.xlu0 %4451
      %4453 = vrot.lane.b32.xlu0 %v4358, 24
      %v4454 = vpop.permute.xlu0 %4453
      %4455 = vrot.lane.b32.xlu0 %v4359, 24
      %v4456 = vpop.permute.xlu0 %4455
      %4457 = vrot.lane.b32.xlu0 %v4360, 24
      %v4458 = vpop.permute.xlu0 %4457
      %4459 = vrot.lane.b32.xlu0 %v4361, 24
      %v4460 = vpop.permute.xlu0 %4459
      %4461 = vrot.lane.b32.xlu0 %v4362, 24
      %v4462 = vpop.permute.xlu0 %4461
      %4463 = vrot.lane.b32.xlu0 %v4363, 24
      %v4464 = vpop.permute.xlu0 %4463
      %4465 = vrot.lane.b32.xlu0 %v4364, 24
      %v4466 = vpop.permute.xlu0 %4465
      %4467 = vrot.lane.b32.xlu0 %v4365, 24
      %v4468 = vpop.permute.xlu0 %4467
      %4469 = vrot.lane.b32.xlu0 %v4366, 24
      %v4470 = vpop.permute.xlu0 %4469
      %4471 = vrot.lane.b32.xlu0 %v4367, 24
      %v4472 = vpop.permute.xlu0 %4471
      %4473 = vrot.lane.b32.xlu0 %v4368, 24
      %v4474 = vpop.permute.xlu0 %4473
      %4475 = vrot.lane.b32.xlu0 %v4369, 24
      %v4476 = vpop.permute.xlu0 %4475
      %4477 = vrot.lane.b32.xlu0 %v4370, 24
      %v4478 = vpop.permute.xlu0 %4477
      %4515 = vst.msk [vmem:[#allocation3] sm:$0xff] %vm1864, %v4408
      %4516 = vst.msk [vmem:[#allocation3 + $0x10] sm:$0xff] %vm1864, %v4410
      %4517 = vst.msk [vmem:[#allocation3 + $0x20] sm:$0xff] %vm1864, %v4412
      %4518 = vst.msk [vmem:[#allocation3 + $0x30] sm:$0xff] %vm1864, %v4414
      %4519 = vst.msk [vmem:[#allocation3 + $0x40] sm:$0xff] %vm1864, %v4416
      %4520 = vst.msk [vmem:[#allocation3 + $0x50] sm:$0xff] %vm1864, %v4418
      %4521 = vst.msk [vmem:[#allocation3 + $0x60] sm:$0xff] %vm1864, %v4420
      %4522 = vst.msk [vmem:[#allocation3 + $0x70] sm:$0xff] %vm1864, %v4422
      %4523 = vst.msk [vmem:[#allocation3 + $0x80] sm:$0xff] %vm1864, %v4424
      %4524 = vst.msk [vmem:[#allocation3 + $0x90] sm:$0xff] %vm1864, %v4426
      %4525 = vst.msk [vmem:[#allocation3 + $0xa0] sm:$0xff] %vm1864, %v4428
      %4526 = vst.msk [vmem:[#allocation3 + $0xb0] sm:$0xff] %vm1864, %v4430
      %4527 = vst.msk [vmem:[#allocation3 + $0xc0] sm:$0xff] %vm1864, %v4432
      %4528 = vst.msk [vmem:[#allocation3 + $0xd0] sm:$0xff] %vm1864, %v4434
      %4529 = vst.msk [vmem:[#allocation3 + $0xe0] sm:$0xff] %vm1864, %v4436
      %4530 = vst.msk [vmem:[#allocation3 + $0xf0] sm:$0xff] %vm1864, %v4438
      %4531 = vst.msk [vmem:[#allocation3 + $0x100] sm:$0xff] %vm1864, %v4440
      %4532 = vst.msk [vmem:[#allocation3 + $0x110] sm:$0xff] %vm1864, %v4442
      %4533 = vst.msk [vmem:[#allocation3 + $0x120] sm:$0xff] %vm1864, %v4444
      %4534 = vst.msk [vmem:[#allocation3 + $0x130] sm:$0xff] %vm1864, %v4446
      %4535 = vst.msk [vmem:[#allocation3 + $0x140] sm:$0xff] %vm1864, %v4448
      %4536 = vst.msk [vmem:[#allocation3 + $0x150] sm:$0xff] %vm1864, %v4450
      %4537 = vst.msk [vmem:[#allocation3 + $0x160] sm:$0xff] %vm1864, %v4452
      %4538 = vst.msk [vmem:[#allocation3 + $0x170] sm:$0xff] %vm1864, %v4454
      %4539 = vst.msk [vmem:[#allocation3 + $0x180] sm:$0xff] %vm1864, %v4456
      %4540 = vst.msk [vmem:[#allocation3 + $0x190] sm:$0xff] %vm1864, %v4458
      %4541 = vst.msk [vmem:[#allocation3 + $0x1a0] sm:$0xff] %vm1864, %v4460
      %4542 = vst.msk [vmem:[#allocation3 + $0x1b0] sm:$0xff] %vm1864, %v4462
      %4543 = vst.msk [vmem:[#allocation3 + $0x1c0] sm:$0xff] %vm1864, %v4464
      %4544 = vst.msk [vmem:[#allocation3 + $0x1d0] sm:$0xff] %vm1864, %v4466
      %4545 = vst.msk [vmem:[#allocation3 + $0x1e0] sm:$0xff] %vm1864, %v4468
      %4546 = vst.msk [vmem:[#allocation3 + $0x1f0] sm:$0xff] %vm1864, %v4470
      %4547 = vst.msk [vmem:[#allocation3 + $0x200] sm:$0xff] %vm1864, %v4472
      %4548 = vst.msk [vmem:[#allocation3 + $0x210] sm:$0xff] %vm1864, %v4474
      %4549 = vst.msk [vmem:[#allocation3 + $0x220] sm:$0xff] %vm1864, %v4476
      %4550 = vst.msk [vmem:[#allocation3 + $0x230] sm:$0x3f] %vm1900, %v4478
      %v4551 = vld [vmem:[#allocation2 + $0x25] sm:$0xff]
      %v4552 = vld [vmem:[#allocation2 + $0x2d] sm:$0xff]
      %v4553 = vld [vmem:[#allocation2 + $0x35] sm:$0xff]
      %v4554 = vld [vmem:[#allocation2 + $0x3d] sm:$0xff]
      %v4555 = vld [vmem:[#allocation2 + $0x45] sm:$0xff]
      %v4556 = vld [vmem:[#allocation2 + $0x4d] sm:$0xff]
      %v4557 = vld [vmem:[#allocation2 + $0x55] sm:$0xff]
      %v4558 = vld [vmem:[#allocation2 + $0x5d] sm:$0xff]
      %v4559 = vld [vmem:[#allocation2 + $0x65] sm:$0xff]
      %v4560 = vld [vmem:[#allocation2 + $0x6d] sm:$0xff]
      %v4561 = vld [vmem:[#allocation2 + $0x75] sm:$0xff]
      %v4562 = vld [vmem:[#allocation2 + $0x7d] sm:$0xff]
      %v4563 = vld [vmem:[#allocation2 + $0x85] sm:$0xff]
      %v4564 = vld [vmem:[#allocation2 + $0x8d] sm:$0xff]
      %v4565 = vld [vmem:[#allocation2 + $0x95] sm:$0xff]
      %v4566 = vld [vmem:[#allocation2 + $0x9d] sm:$0xff]
      %v4567 = vld [vmem:[#allocation2 + $0xa5] sm:$0xff]
      %v4568 = vld [vmem:[#allocation2 + $0xad] sm:$0xff]
      %v4569 = vld [vmem:[#allocation2 + $0xb5] sm:$0xff]
      %v4570 = vld [vmem:[#allocation2 + $0xbd] sm:$0xff]
      %v4571 = vld [vmem:[#allocation2 + $0xc5] sm:$0xff]
      %v4572 = vld [vmem:[#allocation2 + $0xcd] sm:$0xff]
      %v4573 = vld [vmem:[#allocation2 + $0xd5] sm:$0xff]
      %v4574 = vld [vmem:[#allocation2 + $0xdd] sm:$0xff]
      %v4575 = vld [vmem:[#allocation2 + $0xe5] sm:$0xff]
      %v4576 = vld [vmem:[#allocation2 + $0xed] sm:$0xff]
      %v4577 = vld [vmem:[#allocation2 + $0xf5] sm:$0xff]
      %v4578 = vld [vmem:[#allocation2 + $0xfd] sm:$0xff]
      %v4579 = vld [vmem:[#allocation2 + $0x105] sm:$0xff]
      %v4580 = vld [vmem:[#allocation2 + $0x10d] sm:$0xff]
      %v4581 = vld [vmem:[#allocation2 + $0x115] sm:$0xff]
      %v4582 = vld [vmem:[#allocation2 + $0x11d] sm:$0xff]
      %v4583 = vld [vmem:[#allocation2 + $0x125] sm:$0xff]
      %v4584 = vld [vmem:[#allocation2 + $0x12d] sm:$0xff]
      %v4585 = vld [vmem:[#allocation2 + $0x135] sm:$0xff]
      %v4586 = vld [vmem:[#allocation2 + $0x13d] sm:$0x3f]
      %4623 = vrot.lane.b32.xlu0 %v4551, 28
      %v4624 = vpop.permute.xlu0 %4623
      %4625 = vrot.lane.b32.xlu0 %v4552, 28
      %v4626 = vpop.permute.xlu0 %4625
      %4627 = vrot.lane.b32.xlu0 %v4553, 28
      %v4628 = vpop.permute.xlu0 %4627
      %4629 = vrot.lane.b32.xlu0 %v4554, 28
      %v4630 = vpop.permute.xlu0 %4629
      %4631 = vrot.lane.b32.xlu0 %v4555, 28
      %v4632 = vpop.permute.xlu0 %4631
      %4633 = vrot.lane.b32.xlu0 %v4556, 28
      %v4634 = vpop.permute.xlu0 %4633
      %4635 = vrot.lane.b32.xlu0 %v4557, 28
      %v4636 = vpop.permute.xlu0 %4635
      %4637 = vrot.lane.b32.xlu0 %v4558, 28
      %v4638 = vpop.permute.xlu0 %4637
      %4639 = vrot.lane.b32.xlu0 %v4559, 28
      %v4640 = vpop.permute.xlu0 %4639
      %4641 = vrot.lane.b32.xlu0 %v4560, 28
      %v4642 = vpop.permute.xlu0 %4641
      %4643 = vrot.lane.b32.xlu0 %v4561, 28
      %v4644 = vpop.permute.xlu0 %4643
      %4645 = vrot.lane.b32.xlu0 %v4562, 28
      %v4646 = vpop.permute.xlu0 %4645
      %4647 = vrot.lane.b32.xlu0 %v4563, 28
      %v4648 = vpop.permute.xlu0 %4647
      %4649 = vrot.lane.b32.xlu0 %v4564, 28
      %v4650 = vpop.permute.xlu0 %4649
      %4651 = vrot.lane.b32.xlu0 %v4565, 28
      %v4652 = vpop.permute.xlu0 %4651
      %4653 = vrot.lane.b32.xlu0 %v4566, 28
      %v4654 = vpop.permute.xlu0 %4653
      %4655 = vrot.lane.b32.xlu0 %v4567, 28
      %v4656 = vpop.permute.xlu0 %4655
      %4657 = vrot.lane.b32.xlu0 %v4568, 28
      %v4658 = vpop.permute.xlu0 %4657
      %4659 = vrot.lane.b32.xlu0 %v4569, 28
      %v4660 = vpop.permute.xlu0 %4659
      %4661 = vrot.lane.b32.xlu0 %v4570, 28
      %v4662 = vpop.permute.xlu0 %4661
      %4663 = vrot.lane.b32.xlu0 %v4571, 28
      %v4664 = vpop.permute.xlu0 %4663
      %4665 = vrot.lane.b32.xlu0 %v4572, 28
      %v4666 = vpop.permute.xlu0 %4665
      %4667 = vrot.lane.b32.xlu0 %v4573, 28
      %v4668 = vpop.permute.xlu0 %4667
      %4669 = vrot.lane.b32.xlu0 %v4574, 28
      %v4670 = vpop.permute.xlu0 %4669
      %4671 = vrot.lane.b32.xlu0 %v4575, 28
      %v4672 = vpop.permute.xlu0 %4671
      %4673 = vrot.lane.b32.xlu0 %v4576, 28
      %v4674 = vpop.permute.xlu0 %4673
      %4675 = vrot.lane.b32.xlu0 %v4577, 28
      %v4676 = vpop.permute.xlu0 %4675
      %4677 = vrot.lane.b32.xlu0 %v4578, 28
      %v4678 = vpop.permute.xlu0 %4677
      %4679 = vrot.lane.b32.xlu0 %v4579, 28
      %v4680 = vpop.permute.xlu0 %4679
      %4681 = vrot.lane.b32.xlu0 %v4580, 28
      %v4682 = vpop.permute.xlu0 %4681
      %4683 = vrot.lane.b32.xlu0 %v4581, 28
      %v4684 = vpop.permute.xlu0 %4683
      %4685 = vrot.lane.b32.xlu0 %v4582, 28
      %v4686 = vpop.permute.xlu0 %4685
      %4687 = vrot.lane.b32.xlu0 %v4583, 28
      %v4688 = vpop.permute.xlu0 %4687
      %4689 = vrot.lane.b32.xlu0 %v4584, 28
      %v4690 = vpop.permute.xlu0 %4689
      %4691 = vrot.lane.b32.xlu0 %v4585, 28
      %v4692 = vpop.permute.xlu0 %4691
      %4693 = vrot.lane.b32.xlu0 %v4586, 28
      %v4694 = vpop.permute.xlu0 %4693
      %4731 = vst.msk [vmem:[#allocation3] sm:$0xff] %vm2082, %v4624
      %4732 = vst.msk [vmem:[#allocation3 + $0x10] sm:$0xff] %vm2082, %v4626
      %4733 = vst.msk [vmem:[#allocation3 + $0x20] sm:$0xff] %vm2082, %v4628
      %4734 = vst.msk [vmem:[#allocation3 + $0x30] sm:$0xff] %vm2082, %v4630
      %4735 = vst.msk [vmem:[#allocation3 + $0x40] sm:$0xff] %vm2082, %v4632
      %4736 = vst.msk [vmem:[#allocation3 + $0x50] sm:$0xff] %vm2082, %v4634
      %4737 = vst.msk [vmem:[#allocation3 + $0x60] sm:$0xff] %vm2082, %v4636
      %4738 = vst.msk [vmem:[#allocation3 + $0x70] sm:$0xff] %vm2082, %v4638
      %4739 = vst.msk [vmem:[#allocation3 + $0x80] sm:$0xff] %vm2082, %v4640
      %4740 = vst.msk [vmem:[#allocation3 + $0x90] sm:$0xff] %vm2082, %v4642
      %4741 = vst.msk [vmem:[#allocation3 + $0xa0] sm:$0xff] %vm2082, %v4644
      %4742 = vst.msk [vmem:[#allocation3 + $0xb0] sm:$0xff] %vm2082, %v4646
      %4743 = vst.msk [vmem:[#allocation3 + $0xc0] sm:$0xff] %vm2082, %v4648
      %4744 = vst.msk [vmem:[#allocation3 + $0xd0] sm:$0xff] %vm2082, %v4650
      %4745 = vst.msk [vmem:[#allocation3 + $0xe0] sm:$0xff] %vm2082, %v4652
      %4746 = vst.msk [vmem:[#allocation3 + $0xf0] sm:$0xff] %vm2082, %v4654
      %4747 = vst.msk [vmem:[#allocation3 + $0x100] sm:$0xff] %vm2082, %v4656
      %4748 = vst.msk [vmem:[#allocation3 + $0x110] sm:$0xff] %vm2082, %v4658
      %4749 = vst.msk [vmem:[#allocation3 + $0x120] sm:$0xff] %vm2082, %v4660
      %4750 = vst.msk [vmem:[#allocation3 + $0x130] sm:$0xff] %vm2082, %v4662
      %4751 = vst.msk [vmem:[#allocation3 + $0x140] sm:$0xff] %vm2082, %v4664
      %4752 = vst.msk [vmem:[#allocation3 + $0x150] sm:$0xff] %vm2082, %v4666
      %4753 = vst.msk [vmem:[#allocation3 + $0x160] sm:$0xff] %vm2082, %v4668
      %4754 = vst.msk [vmem:[#allocation3 + $0x170] sm:$0xff] %vm2082, %v4670
      %4755 = vst.msk [vmem:[#allocation3 + $0x180] sm:$0xff] %vm2082, %v4672
      %4756 = vst.msk [vmem:[#allocation3 + $0x190] sm:$0xff] %vm2082, %v4674
      %4757 = vst.msk [vmem:[#allocation3 + $0x1a0] sm:$0xff] %vm2082, %v4676
      %4758 = vst.msk [vmem:[#allocation3 + $0x1b0] sm:$0xff] %vm2082, %v4678
      %4759 = vst.msk [vmem:[#allocation3 + $0x1c0] sm:$0xff] %vm2082, %v4680
      %4760 = vst.msk [vmem:[#allocation3 + $0x1d0] sm:$0xff] %vm2082, %v4682
      %4761 = vst.msk [vmem:[#allocation3 + $0x1e0] sm:$0xff] %vm2082, %v4684
      %4762 = vst.msk [vmem:[#allocation3 + $0x1f0] sm:$0xff] %vm2082, %v4686
      %4763 = vst.msk [vmem:[#allocation3 + $0x200] sm:$0xff] %vm2082, %v4688
      %4764 = vst.msk [vmem:[#allocation3 + $0x210] sm:$0xff] %vm2082, %v4690
      %4765 = vst.msk [vmem:[#allocation3 + $0x220] sm:$0xff] %vm2082, %v4692
      %4766 = vst.msk [vmem:[#allocation3 + $0x230] sm:$0x3f] %vm2118, %v4694
      %v4767 = vld [vmem:[#allocation2 + $0x26] sm:$0xff]
      %v4768 = vld [vmem:[#allocation2 + $0x2e] sm:$0xff]
      %v4769 = vld [vmem:[#allocation2 + $0x36] sm:$0xff]
      %v4770 = vld [vmem:[#allocation2 + $0x3e] sm:$0xff]
      %v4771 = vld [vmem:[#allocation2 + $0x46] sm:$0xff]
      %v4772 = vld [vmem:[#allocation2 + $0x4e] sm:$0xff]
      %v4773 = vld [vmem:[#allocation2 + $0x56] sm:$0xff]
      %v4774 = vld [vmem:[#allocation2 + $0x5e] sm:$0xff]
      %v4775 = vld [vmem:[#allocation2 + $0x66] sm:$0xff]
      %v4776 = vld [vmem:[#allocation2 + $0x6e] sm:$0xff]
      %v4777 = vld [vmem:[#allocation2 + $0x76] sm:$0xff]
      %v4778 = vld [vmem:[#allocation2 + $0x7e] sm:$0xff]
      %v4779 = vld [vmem:[#allocation2 + $0x86] sm:$0xff]
      %v4780 = vld [vmem:[#allocation2 + $0x8e] sm:$0xff]
      %v4781 = vld [vmem:[#allocation2 + $0x96] sm:$0xff]
      %v4782 = vld [vmem:[#allocation2 + $0x9e] sm:$0xff]
      %v4783 = vld [vmem:[#allocation2 + $0xa6] sm:$0xff]
      %v4784 = vld [vmem:[#allocation2 + $0xae] sm:$0xff]
      %v4785 = vld [vmem:[#allocation2 + $0xb6] sm:$0xff]
      %v4786 = vld [vmem:[#allocation2 + $0xbe] sm:$0xff]
      %v4787 = vld [vmem:[#allocation2 + $0xc6] sm:$0xff]
      %v4788 = vld [vmem:[#allocation2 + $0xce] sm:$0xff]
      %v4789 = vld [vmem:[#allocation2 + $0xd6] sm:$0xff]
      %v4790 = vld [vmem:[#allocation2 + $0xde] sm:$0xff]
      %v4791 = vld [vmem:[#allocation2 + $0xe6] sm:$0xff]
      %v4792 = vld [vmem:[#allocation2 + $0xee] sm:$0xff]
      %v4793 = vld [vmem:[#allocation2 + $0xf6] sm:$0xff]
      %v4794 = vld [vmem:[#allocation2 + $0xfe] sm:$0xff]
      %v4795 = vld [vmem:[#allocation2 + $0x106] sm:$0xff]
      %v4796 = vld [vmem:[#allocation2 + $0x10e] sm:$0xff]
      %v4797 = vld [vmem:[#allocation2 + $0x116] sm:$0xff]
      %v4798 = vld [vmem:[#allocation2 + $0x11e] sm:$0xff]
      %v4799 = vld [vmem:[#allocation2 + $0x126] sm:$0xff]
      %v4800 = vld [vmem:[#allocation2 + $0x12e] sm:$0xff]
      %v4801 = vld [vmem:[#allocation2 + $0x136] sm:$0xff]
      %v4802 = vld [vmem:[#allocation2 + $0x13e] sm:$0x3f]
      %4839 = vrot.lane.b32.xlu0 %v4767, 32
      %v4840 = vpop.permute.xlu0 %4839
      %4841 = vrot.lane.b32.xlu0 %v4768, 32
      %v4842 = vpop.permute.xlu0 %4841
      %4843 = vrot.lane.b32.xlu0 %v4769, 32
      %v4844 = vpop.permute.xlu0 %4843
      %4845 = vrot.lane.b32.xlu0 %v4770, 32
      %v4846 = vpop.permute.xlu0 %4845
      %4847 = vrot.lane.b32.xlu0 %v4771, 32
      %v4848 = vpop.permute.xlu0 %4847
      %4849 = vrot.lane.b32.xlu0 %v4772, 32
      %v4850 = vpop.permute.xlu0 %4849
      %4851 = vrot.lane.b32.xlu0 %v4773, 32
      %v4852 = vpop.permute.xlu0 %4851
      %4853 = vrot.lane.b32.xlu0 %v4774, 32
      %v4854 = vpop.permute.xlu0 %4853
      %4855 = vrot.lane.b32.xlu0 %v4775, 32
      %v4856 = vpop.permute.xlu0 %4855
      %4857 = vrot.lane.b32.xlu0 %v4776, 32
      %v4858 = vpop.permute.xlu0 %4857
      %4859 = vrot.lane.b32.xlu0 %v4777, 32
      %v4860 = vpop.permute.xlu0 %4859
      %4861 = vrot.lane.b32.xlu0 %v4778, 32
      %v4862 = vpop.permute.xlu0 %4861
      %4863 = vrot.lane.b32.xlu0 %v4779, 32
      %v4864 = vpop.permute.xlu0 %4863
      %4865 = vrot.lane.b32.xlu0 %v4780, 32
      %v4866 = vpop.permute.xlu0 %4865
      %4867 = vrot.lane.b32.xlu0 %v4781, 32
      %v4868 = vpop.permute.xlu0 %4867
      %4869 = vrot.lane.b32.xlu0 %v4782, 32
      %v4870 = vpop.permute.xlu0 %4869
      %4871 = vrot.lane.b32.xlu0 %v4783, 32
      %v4872 = vpop.permute.xlu0 %4871
      %4873 = vrot.lane.b32.xlu0 %v4784, 32
      %v4874 = vpop.permute.xlu0 %4873
      %4875 = vrot.lane.b32.xlu0 %v4785, 32
      %v4876 = vpop.permute.xlu0 %4875
      %4877 = vrot.lane.b32.xlu0 %v4786, 32
      %v4878 = vpop.permute.xlu0 %4877
      %4879 = vrot.lane.b32.xlu0 %v4787, 32
      %v4880 = vpop.permute.xlu0 %4879
      %4881 = vrot.lane.b32.xlu0 %v4788, 32
      %v4882 = vpop.permute.xlu0 %4881
      %4883 = vrot.lane.b32.xlu0 %v4789, 32
      %v4884 = vpop.permute.xlu0 %4883
      %4885 = vrot.lane.b32.xlu0 %v4790, 32
      %v4886 = vpop.permute.xlu0 %4885
      %4887 = vrot.lane.b32.xlu0 %v4791, 32
      %v4888 = vpop.permute.xlu0 %4887
      %4889 = vrot.lane.b32.xlu0 %v4792, 32
      %v4890 = vpop.permute.xlu0 %4889
      %4891 = vrot.lane.b32.xlu0 %v4793, 32
      %v4892 = vpop.permute.xlu0 %4891
      %4893 = vrot.lane.b32.xlu0 %v4794, 32
      %v4894 = vpop.permute.xlu0 %4893
      %4895 = vrot.lane.b32.xlu0 %v4795, 32
      %v4896 = vpop.permute.xlu0 %4895
      %4897 = vrot.lane.b32.xlu0 %v4796, 32
      %v4898 = vpop.permute.xlu0 %4897
      %4899 = vrot.lane.b32.xlu0 %v4797, 32
      %v4900 = vpop.permute.xlu0 %4899
      %4901 = vrot.lane.b32.xlu0 %v4798, 32
      %v4902 = vpop.permute.xlu0 %4901
      %4903 = vrot.lane.b32.xlu0 %v4799, 32
      %v4904 = vpop.permute.xlu0 %4903
      %4905 = vrot.lane.b32.xlu0 %v4800, 32
      %v4906 = vpop.permute.xlu0 %4905
      %4907 = vrot.lane.b32.xlu0 %v4801, 32
      %v4908 = vpop.permute.xlu0 %4907
      %4909 = vrot.lane.b32.xlu0 %v4802, 32
      %v4910 = vpop.permute.xlu0 %4909
      %4947 = vst.msk [vmem:[#allocation3] sm:$0xff] %vm2300, %v4840
      %4948 = vst.msk [vmem:[#allocation3 + $0x10] sm:$0xff] %vm2300, %v4842
      %4949 = vst.msk [vmem:[#allocation3 + $0x20] sm:$0xff] %vm2300, %v4844
      %4950 = vst.msk [vmem:[#allocation3 + $0x30] sm:$0xff] %vm2300, %v4846
      %4951 = vst.msk [vmem:[#allocation3 + $0x40] sm:$0xff] %vm2300, %v4848
      %4952 = vst.msk [vmem:[#allocation3 + $0x50] sm:$0xff] %vm2300, %v4850
      %4953 = vst.msk [vmem:[#allocation3 + $0x60] sm:$0xff] %vm2300, %v4852
      %4954 = vst.msk [vmem:[#allocation3 + $0x70] sm:$0xff] %vm2300, %v4854
      %4955 = vst.msk [vmem:[#allocation3 + $0x80] sm:$0xff] %vm2300, %v4856
      %4956 = vst.msk [vmem:[#allocation3 + $0x90] sm:$0xff] %vm2300, %v4858
      %4957 = vst.msk [vmem:[#allocation3 + $0xa0] sm:$0xff] %vm2300, %v4860
      %4958 = vst.msk [vmem:[#allocation3 + $0xb0] sm:$0xff] %vm2300, %v4862
      %4959 = vst.msk [vmem:[#allocation3 + $0xc0] sm:$0xff] %vm2300, %v4864
      %4960 = vst.msk [vmem:[#allocation3 + $0xd0] sm:$0xff] %vm2300, %v4866
      %4961 = vst.msk [vmem:[#allocation3 + $0xe0] sm:$0xff] %vm2300, %v4868
      %4962 = vst.msk [vmem:[#allocation3 + $0xf0] sm:$0xff] %vm2300, %v4870
      %4963 = vst.msk [vmem:[#allocation3 + $0x100] sm:$0xff] %vm2300, %v4872
      %4964 = vst.msk [vmem:[#allocation3 + $0x110] sm:$0xff] %vm2300, %v4874
      %4965 = vst.msk [vmem:[#allocation3 + $0x120] sm:$0xff] %vm2300, %v4876
      %4966 = vst.msk [vmem:[#allocation3 + $0x130] sm:$0xff] %vm2300, %v4878
      %4967 = vst.msk [vmem:[#allocation3 + $0x140] sm:$0xff] %vm2300, %v4880
      %4968 = vst.msk [vmem:[#allocation3 + $0x150] sm:$0xff] %vm2300, %v4882
      %4969 = vst.msk [vmem:[#allocation3 + $0x160] sm:$0xff] %vm2300, %v4884
      %4970 = vst.msk [vmem:[#allocation3 + $0x170] sm:$0xff] %vm2300, %v4886
      %4971 = vst.msk [vmem:[#allocation3 + $0x180] sm:$0xff] %vm2300, %v4888
      %4972 = vst.msk [vmem:[#allocation3 + $0x190] sm:$0xff] %vm2300, %v4890
      %4973 = vst.msk [vmem:[#allocation3 + $0x1a0] sm:$0xff] %vm2300, %v4892
      %4974 = vst.msk [vmem:[#allocation3 + $0x1b0] sm:$0xff] %vm2300, %v4894
      %4975 = vst.msk [vmem:[#allocation3 + $0x1c0] sm:$0xff] %vm2300, %v4896
      %4976 = vst.msk [vmem:[#allocation3 + $0x1d0] sm:$0xff] %vm2300, %v4898
      %4977 = vst.msk [vmem:[#allocation3 + $0x1e0] sm:$0xff] %vm2300, %v4900
      %4978 = vst.msk [vmem:[#allocation3 + $0x1f0] sm:$0xff] %vm2300, %v4902
      %4979 = vst.msk [vmem:[#allocation3 + $0x200] sm:$0xff] %vm2300, %v4904
      %4980 = vst.msk [vmem:[#allocation3 + $0x210] sm:$0xff] %vm2300, %v4906
      %4981 = vst.msk [vmem:[#allocation3 + $0x220] sm:$0xff] %vm2300, %v4908
      %4982 = vst.msk [vmem:[#allocation3 + $0x230] sm:$0x3f] %vm2336, %v4910
      %v4983 = vld [vmem:[#allocation3] sm:$0xff]
      %v4984 = vld [vmem:[#allocation3 + $0x10] sm:$0xff]
      %v4985 = vld [vmem:[#allocation3 + $0x20] sm:$0xff]
      %v4986 = vld [vmem:[#allocation3 + $0x30] sm:$0xff]
      %v4987 = vld [vmem:[#allocation3 + $0x40] sm:$0xff]
      %v4988 = vld [vmem:[#allocation3 + $0x50] sm:$0xff]
      %v4989 = vld [vmem:[#allocation3 + $0x60] sm:$0xff]
      %v4990 = vld [vmem:[#allocation3 + $0x70] sm:$0xff]
      %v4991 = vld [vmem:[#allocation3 + $0x80] sm:$0xff]
      %v4992 = vld [vmem:[#allocation3 + $0x90] sm:$0xff]
      %v4993 = vld [vmem:[#allocation3 + $0xa0] sm:$0xff]
      %v4994 = vld [vmem:[#allocation3 + $0xb0] sm:$0xff]
      %v4995 = vld [vmem:[#allocation3 + $0xc0] sm:$0xff]
      %v4996 = vld [vmem:[#allocation3 + $0xd0] sm:$0xff]
      %v4997 = vld [vmem:[#allocation3 + $0xe0] sm:$0xff]
      %v4998 = vld [vmem:[#allocation3 + $0xf0] sm:$0xff]
      %v4999 = vld [vmem:[#allocation3 + $0x100] sm:$0xff]
      %v5000 = vld [vmem:[#allocation3 + $0x110] sm:$0xff]
      %v5001 = vld [vmem:[#allocation3 + $0x120] sm:$0xff]
      %v5002 = vld [vmem:[#allocation3 + $0x130] sm:$0xff]
      %v5003 = vld [vmem:[#allocation3 + $0x140] sm:$0xff]
      %v5004 = vld [vmem:[#allocation3 + $0x150] sm:$0xff]
      %v5005 = vld [vmem:[#allocation3 + $0x160] sm:$0xff]
      %v5006 = vld [vmem:[#allocation3 + $0x170] sm:$0xff]
      %v5007 = vld [vmem:[#allocation3 + $0x180] sm:$0xff]
      %v5008 = vld [vmem:[#allocation3 + $0x190] sm:$0xff]
      %v5009 = vld [vmem:[#allocation3 + $0x1a0] sm:$0xff]
      %v5010 = vld [vmem:[#allocation3 + $0x1b0] sm:$0xff]
      %v5011 = vld [vmem:[#allocation3 + $0x1c0] sm:$0xff]
      %v5012 = vld [vmem:[#allocation3 + $0x1d0] sm:$0xff]
      %v5013 = vld [vmem:[#allocation3 + $0x1e0] sm:$0xff]
      %v5014 = vld [vmem:[#allocation3 + $0x1f0] sm:$0xff]
      %v5015 = vld [vmem:[#allocation3 + $0x200] sm:$0xff]
      %v5016 = vld [vmem:[#allocation3 + $0x210] sm:$0xff]
      %v5017 = vld [vmem:[#allocation3 + $0x220] sm:$0xff]
      %v5018 = vld [vmem:[#allocation3 + $0x230] sm:$0x3f]
      %v5019 = vld [vmem:[%s4] sm:$0xff]
      %v5020 = vld [vmem:[%s4 + $0x8] sm:$0xff]
      %v5021 = vld [vmem:[%s4 + $0x10] sm:$0xff]
      %v5022 = vld [vmem:[%s4 + $0x18] sm:$0xff]
      %v5023 = vld [vmem:[%s4 + $0x20] sm:$0xf]
      %v5024 = vld [vmem:[%s5] sm:$0x1]
      %v5026 = vlaneseq
      %v5027 = vshrl.u32 %v5026, 7
      %v5028 = vsub.s32 0, %v5027
      %v5029 = vrot.slane %v5024, %v5028
      %v5032 = vsel %vm2386, %v4983, 0
      %v5035 = vsel %vm2386, %v4984, 0
      %v5038 = vsel %vm2386, %v4985, 0
      %v5041 = vsel %vm2386, %v4986, 0
      %v5044 = vsel %vm2386, %v4987, 0
      %v5047 = vsel %vm2386, %v4988, 0
      %v5050 = vsel %vm2386, %v4989, 0
      %v5053 = vsel %vm2386, %v4990, 0
      %v5056 = vsel %vm2386, %v4991, 0
      %v5059 = vsel %vm2386, %v4992, 0
      %v5062 = vsel %vm2386, %v4993, 0
      %v5065 = vsel %vm2386, %v4994, 0
      %v5068 = vsel %vm2386, %v4995, 0
      %v5071 = vsel %vm2386, %v4996, 0
      %v5074 = vsel %vm2386, %v4997, 0
      %v5077 = vsel %vm2386, %v4998, 0
      %v5080 = vsel %vm2386, %v4999, 0
      %v5083 = vsel %vm2386, %v5000, 0
      %v5086 = vsel %vm2386, %v5001, 0
      %v5089 = vsel %vm2386, %v5002, 0
      %v5092 = vsel %vm2386, %v5003, 0
      %v5095 = vsel %vm2386, %v5004, 0
      %v5098 = vsel %vm2386, %v5005, 0
      %v5101 = vsel %vm2386, %v5006, 0
      %v5104 = vsel %vm2386, %v5007, 0
      %v5107 = vsel %vm2386, %v5008, 0
      %v5110 = vsel %vm2386, %v5009, 0
      %v5113 = vsel %vm2386, %v5010, 0
      %v5116 = vsel %vm2386, %v5011, 0
      %v5119 = vsel %vm2386, %v5012, 0
      %v5122 = vsel %vm2386, %v5013, 0
      %v5125 = vsel %vm2386, %v5014, 0
      %v5128 = vsel %vm2386, %v5015, 0
      %v5131 = vsel %vm2386, %v5016, 0
      %v5134 = vsel %vm2386, %v5017, 0
      %v5137 = vsel %vm2386, %v5018, 0
      %v5140 = vsel %vm2495, %v5023, 0
      %5142 = vmatprep.subr.mxu0 0.0
      %5143 = vmatpush1.msra.mxu0 %v5019
      %5144 = vmatprep.subr.mxu0 0.0
      %5145 = vmatpush1.msra.mxu0 %v5020
      %5146 = vmatprep.subr.mxu0 0.0
      %5147 = vmatpush1.msra.mxu0 %v5021
      %5148 = vmatprep.subr.mxu0 0.0
      %5149 = vmatpush1.msra.mxu0 %v5022
      %5150 = vmatprep.subr.mxu0 0.0
      %5151 = vmatpush1.msra.mxu0 %v5140
      %5152 = vmatprep.subr.mxu0 0.0
      %5153 = vmatpush1.msra.mxu0 0.0
      %5154 = vmatprep.subr.mxu0 0.0
      %5155 = vmatpush1.msra.mxu0 0.0
      %5156 = vmatprep.subr.mxu0 0.0
      %5157 = vmatpush1.msra.mxu0 0.0
      %5158 = vmatprep.subr.mxu0 0.0
      %5159 = vmatpush1.msra.mxu0 0.0
      %5160 = vmatprep.subr.mxu0 0.0
      %5161 = vmatpush1.msra.mxu0 0.0
      %5162 = vmatprep.subr.mxu0 0.0
      %5163 = vmatpush1.msra.mxu0 0.0
      %5164 = vmatprep.subr.mxu0 0.0
      %5165 = vmatpush1.msra.mxu0 0.0
      %5166 = vmatprep.subr.mxu0 0.0
      %5167 = vmatpush1.msra.mxu0 0.0
      %5168 = vmatprep.subr.mxu0 0.0
      %5169 = vmatpush1.msra.mxu0 0.0
      %5170 = vmatprep.subr.mxu0 0.0
      %5171 = vmatpush1.msra.mxu0 0.0
      %5172 = vmatprep.subr.mxu0 0.0
      %5173 = vmatpush1.msra.mxu0 0.0
      %5174 = vmatprep.subr.mxu0 0.0
      %5175 = vmatpush1.msra.mxu0 0.0
      %5176 = vmatprep.subr.mxu0 0.0
      %5177 = vmatpush1.msra.mxu0 0.0
      %5178 = vmatprep.subr.mxu0 0.0
      %5179 = vmatpush1.msra.mxu0 0.0
      %5180 = vmatprep.subr.mxu0 0.0
      %5181 = vmatpush1.msra.mxu0 0.0
      %5182 = vmatprep.subr.mxu0 0.0
      %5183 = vmatpush1.msra.mxu0 0.0
      %5184 = vmatprep.subr.mxu0 0.0
      %5185 = vmatpush1.msra.mxu0 0.0
      %5186 = vmatprep.subr.mxu0 0.0
      %5187 = vmatpush1.msra.mxu0 0.0
      %5188 = vmatprep.subr.mxu0 0.0
      %5189 = vmatpush1.msra.mxu0 0.0
      %5190 = vmatprep.subr.mxu0 0.0
      %5191 = vmatpush1.msra.mxu0 0.0
      %5192 = vmatprep.subr.mxu0 0.0
      %5193 = vmatpush1.msra.mxu0 0.0
      %5194 = vmatprep.subr.mxu0 0.0
      %5195 = vmatpush1.msra.mxu0 0.0
      %5196 = vmatprep.subr.mxu0 0.0
      %5197 = vmatpush1.msra.mxu0 0.0
      %5198 = vmatprep.subr.mxu0 0.0
      %5199 = vmatpush1.msra.mxu0 0.0
      %5200 = vmatprep.subr.mxu0 0.0
      %5201 = vmatpush1.msra.mxu0 0.0
      %5202 = vmatprep.subr.mxu0 0.0
      %5203 = vmatpush1.msra.mxu0 0.0
      %5204 = vmatprep.subr.mxu0 0.0
      %5205 = vmatpush1.msra.mxu0 0.0
      %5206 = vmatprep.mubr.f32.mxu0 0.0
      %5207 = vmatmul.mubr.f32.gmra.mrb[0].mxu0 %v5032
      %v5208 = vpop.f32.mrb[0].mxu0
      %v5209 = vadd.f32 %v5029, %v5208
      %v5210 = vpop.f32.mrb[0].mxu0
      %5211 = vmatprep.mubr.f32.mxu0 0.0
      %5212 = vmatmul.mubr.f32.gmra.mrb[0].mxu0 %v5035
      %v5213 = vpop.f32.mrb[0].mxu0
      %v5214 = vadd.f32 %v5029, %v5213
      %v5215 = vpop.f32.mrb[0].mxu0
      %5216 = vmatprep.mubr.f32.mxu0 0.0
      %5217 = vmatmul.mubr.f32.gmra.mrb[0].mxu0 %v5038
      %v5218 = vpop.f32.mrb[0].mxu0
      %v5219 = vadd.f32 %v5029, %v5218
      %v5220 = vpop.f32.mrb[0].mxu0
      %5221 = vmatprep.mubr.f32.mxu0 0.0
      %5222 = vmatmul.mubr.f32.gmra.mrb[0].mxu0 %v5041
      %v5223 = vpop.f32.mrb[0].mxu0
      %v5224 = vadd.f32 %v5029, %v5223
      %v5225 = vpop.f32.mrb[0].mxu0
      %5226 = vmatprep.mubr.f32.mxu0 0.0
      %5227 = vmatmul.mubr.f32.gmra.mrb[0].mxu0 %v5044
      %v5228 = vpop.f32.mrb[0].mxu0
      %v5229 = vadd.f32 %v5029, %v5228
      %v5230 = vpop.f32.mrb[0].mxu0
      %5231 = vmatprep.mubr.f32.mxu0 0.0
      %5232 = vmatmul.mubr.f32.gmra.mrb[0].mxu0 %v5047
      %v5233 = vpop.f32.mrb[0].mxu0
      %v5234 = vadd.f32 %v5029, %v5233
      %v5235 = vpop.f32.mrb[0].mxu0
      %5236 = vmatprep.mubr.f32.mxu0 0.0
      %5237 = vmatmul.mubr.f32.gmra.mrb[0].mxu0 %v5050
      %v5238 = vpop.f32.mrb[0].mxu0
      %v5239 = vadd.f32 %v5029, %v5238
      %v5240 = vpop.f32.mrb[0].mxu0
      %5241 = vmatprep.mubr.f32.mxu0 0.0
      %5242 = vmatmul.mubr.f32.gmra.mrb[0].mxu0 %v5053
      %v5243 = vpop.f32.mrb[0].mxu0
      %v5244 = vadd.f32 %v5029, %v5243
      %v5245 = vpop.f32.mrb[0].mxu0
      %5246 = vmatprep.mubr.f32.mxu0 0.0
      %5247 = vmatmul.mubr.f32.gmra.mrb[0].mxu0 %v5056
      %v5248 = vpop.f32.mrb[0].mxu0
      %v5249 = vadd.f32 %v5029, %v5248
      %v5250 = vpop.f32.mrb[0].mxu0
      %5251 = vmatprep.mubr.f32.mxu0 0.0
      %5252 = vmatmul.mubr.f32.gmra.mrb[0].mxu0 %v5059
      %v5253 = vpop.f32.mrb[0].mxu0
      %v5254 = vadd.f32 %v5029, %v5253
      %v5255 = vpop.f32.mrb[0].mxu0
      %5256 = vmatprep.mubr.f32.mxu0 0.0
      %5257 = vmatmul.mubr.f32.gmra.mrb[0].mxu0 %v5062
      %v5258 = vpop.f32.mrb[0].mxu0
      %v5259 = vadd.f32 %v5029, %v5258
      %v5260 = vpop.f32.mrb[0].mxu0
      %5261 = vmatprep.mubr.f32.mxu0 0.0
      %5262 = vmatmul.mubr.f32.gmra.mrb[0].mxu0 %v5065
      %v5263 = vpop.f32.mrb[0].mxu0
      %v5264 = vadd.f32 %v5029, %v5263
      %v5265 = vpop.f32.mrb[0].mxu0
      %5266 = vmatprep.mubr.f32.mxu0 0.0
      %5267 = vmatmul.mubr.f32.gmra.mrb[0].mxu0 %v5068
      %v5268 = vpop.f32.mrb[0].mxu0
      %v5269 = vadd.f32 %v5029, %v5268
      %v5270 = vpop.f32.mrb[0].mxu0
      %5271 = vmatprep.mubr.f32.mxu0 0.0
      %5272 = vmatmul.mubr.f32.gmra.mrb[0].mxu0 %v5071
      %v5273 = vpop.f32.mrb[0].mxu0
      %v5274 = vadd.f32 %v5029, %v5273
      %v5275 = vpop.f32.mrb[0].mxu0
      %5276 = vmatprep.mubr.f32.mxu0 0.0
      %5277 = vmatmul.mubr.f32.gmra.mrb[0].mxu0 %v5074
      %v5278 = vpop.f32.mrb[0].mxu0
      %v5279 = vadd.f32 %v5029, %v5278
      %v5280 = vpop.f32.mrb[0].mxu0
      %5281 = vmatprep.mubr.f32.mxu0 0.0
      %5282 = vmatmul.mubr.f32.gmra.mrb[0].mxu0 %v5077
      %v5283 = vpop.f32.mrb[0].mxu0
      %v5284 = vadd.f32 %v5029, %v5283
      %v5285 = vpop.f32.mrb[0].mxu0
      %5286 = vmatprep.mubr.f32.mxu0 0.0
      %5287 = vmatmul.mubr.f32.gmra.mrb[0].mxu0 %v5080
      %v5288 = vpop.f32.mrb[0].mxu0
      %v5289 = vadd.f32 %v5029, %v5288
      %v5290 = vpop.f32.mrb[0].mxu0
      %5291 = vmatprep.mubr.f32.mxu0 0.0
      %5292 = vmatmul.mubr.f32.gmra.mrb[0].mxu0 %v5083
      %v5293 = vpop.f32.mrb[0].mxu0
      %v5294 = vadd.f32 %v5029, %v5293
      %v5295 = vpop.f32.mrb[0].mxu0
      %5296 = vmatprep.mubr.f32.mxu0 0.0
      %5297 = vmatmul.mubr.f32.gmra.mrb[0].mxu0 %v5086
      %v5298 = vpop.f32.mrb[0].mxu0
      %v5299 = vadd.f32 %v5029, %v5298
      %v5300 = vpop.f32.mrb[0].mxu0
      %5301 = vmatprep.mubr.f32.mxu0 0.0
      %5302 = vmatmul.mubr.f32.gmra.mrb[0].mxu0 %v5089
      %v5303 = vpop.f32.mrb[0].mxu0
      %v5304 = vadd.f32 %v5029, %v5303
      %v5305 = vpop.f32.mrb[0].mxu0
      %5306 = vmatprep.mubr.f32.mxu0 0.0
      %5307 = vmatmul.mubr.f32.gmra.mrb[0].mxu0 %v5092
      %v5308 = vpop.f32.mrb[0].mxu0
      %v5309 = vadd.f32 %v5029, %v5308
      %v5310 = vpop.f32.mrb[0].mxu0
      %5311 = vmatprep.mubr.f32.mxu0 0.0
      %5312 = vmatmul.mubr.f32.gmra.mrb[0].mxu0 %v5095
      %v5313 = vpop.f32.mrb[0].mxu0
      %v5314 = vadd.f32 %v5029, %v5313
      %v5315 = vpop.f32.mrb[0].mxu0
      %5316 = vmatprep.mubr.f32.mxu0 0.0
      %5317 = vmatmul.mubr.f32.gmra.mrb[0].mxu0 %v5098
      %v5318 = vpop.f32.mrb[0].mxu0
      %v5319 = vadd.f32 %v5029, %v5318
      %v5320 = vpop.f32.mrb[0].mxu0
      %5321 = vmatprep.mubr.f32.mxu0 0.0
      %5322 = vmatmul.mubr.f32.gmra.mrb[0].mxu0 %v5101
      %v5323 = vpop.f32.mrb[0].mxu0
      %v5324 = vadd.f32 %v5029, %v5323
      %v5325 = vpop.f32.mrb[0].mxu0
      %5326 = vmatprep.mubr.f32.mxu0 0.0
      %5327 = vmatmul.mubr.f32.gmra.mrb[0].mxu0 %v5104
      %v5328 = vpop.f32.mrb[0].mxu0
      %v5329 = vadd.f32 %v5029, %v5328
      %v5330 = vpop.f32.mrb[0].mxu0
      %5331 = vmatprep.mubr.f32.mxu0 0.0
      %5332 = vmatmul.mubr.f32.gmra.mrb[0].mxu0 %v5107
      %v5333 = vpop.f32.mrb[0].mxu0
      %v5334 = vadd.f32 %v5029, %v5333
      %v5335 = vpop.f32.mrb[0].mxu0
      %5336 = vmatprep.mubr.f32.mxu0 0.0
      %5337 = vmatmul.mubr.f32.gmra.mrb[0].mxu0 %v5110
      %v5338 = vpop.f32.mrb[0].mxu0
      %v5339 = vadd.f32 %v5029, %v5338
      %v5340 = vpop.f32.mrb[0].mxu0
      %5341 = vmatprep.mubr.f32.mxu0 0.0
      %5342 = vmatmul.mubr.f32.gmra.mrb[0].mxu0 %v5113
      %v5343 = vpop.f32.mrb[0].mxu0
      %v5344 = vadd.f32 %v5029, %v5343
      %v5345 = vpop.f32.mrb[0].mxu0
      %5346 = vmatprep.mubr.f32.mxu0 0.0
      %5347 = vmatmul.mubr.f32.gmra.mrb[0].mxu0 %v5116
      %v5348 = vpop.f32.mrb[0].mxu0
      %v5349 = vadd.f32 %v5029, %v5348
      %v5350 = vpop.f32.mrb[0].mxu0
      %5351 = vmatprep.mubr.f32.mxu0 0.0
      %5352 = vmatmul.mubr.f32.gmra.mrb[0].mxu0 %v5119
      %v5353 = vpop.f32.mrb[0].mxu0
      %v5354 = vadd.f32 %v5029, %v5353
      %v5355 = vpop.f32.mrb[0].mxu0
      %5356 = vmatprep.mubr.f32.mxu0 0.0
      %5357 = vmatmul.mubr.f32.gmra.mrb[0].mxu0 %v5122
      %v5358 = vpop.f32.mrb[0].mxu0
      %v5359 = vadd.f32 %v5029, %v5358
      %v5360 = vpop.f32.mrb[0].mxu0
      %5361 = vmatprep.mubr.f32.mxu0 0.0
      %5362 = vmatmul.mubr.f32.gmra.mrb[0].mxu0 %v5125
      %v5363 = vpop.f32.mrb[0].mxu0
      %v5364 = vadd.f32 %v5029, %v5363
      %v5365 = vpop.f32.mrb[0].mxu0
      %5366 = vmatprep.mubr.f32.mxu0 0.0
      %5367 = vmatmul.mubr.f32.gmra.mrb[0].mxu0 %v5128
      %v5368 = vpop.f32.mrb[0].mxu0
      %v5369 = vadd.f32 %v5029, %v5368
      %v5370 = vpop.f32.mrb[0].mxu0
      %5371 = vmatprep.mubr.f32.mxu0 0.0
      %5372 = vmatmul.mubr.f32.gmra.mrb[0].mxu0 %v5131
      %v5373 = vpop.f32.mrb[0].mxu0
      %v5374 = vadd.f32 %v5029, %v5373
      %v5375 = vpop.f32.mrb[0].mxu0
      %5376 = vmatprep.mubr.f32.mxu0 0.0
      %5377 = vmatmul.mubr.f32.gmra.mrb[0].mxu0 %v5134
      %v5378 = vpop.f32.mrb[0].mxu0
      %v5379 = vadd.f32 %v5029, %v5378
      %v5380 = vpop.f32.mrb[0].mxu0
      %5381 = vmatprep.mubr.f32.mxu0 0.0
      %5382 = vmatmul.mubr.f32.gmra.mrb[0].mxu0 %v5137
      %v5383 = vpop.f32.mrb[0].mxu0
      %v5384 = vadd.f32 %v5029, %v5383
      %v5385 = vpop.f32.mrb[0].mxu0
      %5386 = vdwg.mxu0
      %vm5387 = vcmp.ge.f32.partialorder %v5209, 0.0
      %vm5388 = vcmp.ge.f32.partialorder %v5214, 0.0
      %vm5389 = vcmp.ge.f32.partialorder %v5219, 0.0
      %vm5390 = vcmp.ge.f32.partialorder %v5224, 0.0
      %vm5391 = vcmp.ge.f32.partialorder %v5229, 0.0
      %vm5392 = vcmp.ge.f32.partialorder %v5234, 0.0
      %vm5393 = vcmp.ge.f32.partialorder %v5239, 0.0
      %vm5394 = vcmp.ge.f32.partialorder %v5244, 0.0
      %vm5395 = vcmp.ge.f32.partialorder %v5249, 0.0
      %vm5396 = vcmp.ge.f32.partialorder %v5254, 0.0
      %vm5397 = vcmp.ge.f32.partialorder %v5259, 0.0
      %vm5398 = vcmp.ge.f32.partialorder %v5264, 0.0
      %vm5399 = vcmp.ge.f32.partialorder %v5269, 0.0
      %vm5400 = vcmp.ge.f32.partialorder %v5274, 0.0
      %vm5401 = vcmp.ge.f32.partialorder %v5279, 0.0
      %vm5402 = vcmp.ge.f32.partialorder %v5284, 0.0
      %vm5403 = vcmp.ge.f32.partialorder %v5289, 0.0
      %vm5404 = vcmp.ge.f32.partialorder %v5294, 0.0
      %vm5405 = vcmp.ge.f32.partialorder %v5299, 0.0
      %vm5406 = vcmp.ge.f32.partialorder %v5304, 0.0
      %vm5407 = vcmp.ge.f32.partialorder %v5309, 0.0
      %vm5408 = vcmp.ge.f32.partialorder %v5314, 0.0
      %vm5409 = vcmp.ge.f32.partialorder %v5319, 0.0
      %vm5410 = vcmp.ge.f32.partialorder %v5324, 0.0
      %vm5411 = vcmp.ge.f32.partialorder %v5329, 0.0
      %vm5412 = vcmp.ge.f32.partialorder %v5334, 0.0
      %vm5413 = vcmp.ge.f32.partialorder %v5339, 0.0
      %vm5414 = vcmp.ge.f32.partialorder %v5344, 0.0
      %vm5415 = vcmp.ge.f32.partialorder %v5349, 0.0
      %vm5416 = vcmp.ge.f32.partialorder %v5354, 0.0
      %vm5417 = vcmp.ge.f32.partialorder %v5359, 0.0
      %vm5418 = vcmp.ge.f32.partialorder %v5364, 0.0
      %vm5419 = vcmp.ge.f32.partialorder %v5369, 0.0
      %vm5420 = vcmp.ge.f32.partialorder %v5374, 0.0
      %vm5421 = vcmp.ge.f32.partialorder %v5379, 0.0
      %vm5422 = vcmp.ge.f32.partialorder %v5384, 0.0
      %v5423 = vmul.f32 %v5209, 0.01
      %v5424 = vmul.f32 %v5214, 0.01
      %v5425 = vmul.f32 %v5219, 0.01
      %v5426 = vmul.f32 %v5224, 0.01
      %v5427 = vmul.f32 %v5229, 0.01
      %v5428 = vmul.f32 %v5234, 0.01
      %v5429 = vmul.f32 %v5239, 0.01
      %v5430 = vmul.f32 %v5244, 0.01
      %v5431 = vmul.f32 %v5249, 0.01
      %v5432 = vmul.f32 %v5254, 0.01
      %v5433 = vmul.f32 %v5259, 0.01
      %v5434 = vmul.f32 %v5264, 0.01
      %v5435 = vmul.f32 %v5269, 0.01
      %v5436 = vmul.f32 %v5274, 0.01
      %v5437 = vmul.f32 %v5279, 0.01
      %v5438 = vmul.f32 %v5284, 0.01
      %v5439 = vmul.f32 %v5289, 0.01
      %v5440 = vmul.f32 %v5294, 0.01
      %v5441 = vmul.f32 %v5299, 0.01
      %v5442 = vmul.f32 %v5304, 0.01
      %v5443 = vmul.f32 %v5309, 0.01
      %v5444 = vmul.f32 %v5314, 0.01
      %v5445 = vmul.f32 %v5319, 0.01
      %v5446 = vmul.f32 %v5324, 0.01
      %v5447 = vmul.f32 %v5329, 0.01
      %v5448 = vmul.f32 %v5334, 0.01
      %v5449 = vmul.f32 %v5339, 0.01
      %v5450 = vmul.f32 %v5344, 0.01
      %v5451 = vmul.f32 %v5349, 0.01
      %v5452 = vmul.f32 %v5354, 0.01
      %v5453 = vmul.f32 %v5359, 0.01
      %v5454 = vmul.f32 %v5364, 0.01
      %v5455 = vmul.f32 %v5369, 0.01
      %v5456 = vmul.f32 %v5374, 0.01
      %v5457 = vmul.f32 %v5379, 0.01
      %v5458 = vmul.f32 %v5384, 0.01
      %v5459 = vsel %vm5387, %v5209, %v5423
      %v5460 = vsel %vm5388, %v5214, %v5424
      %v5461 = vsel %vm5389, %v5219, %v5425
      %v5462 = vsel %vm5390, %v5224, %v5426
      %v5463 = vsel %vm5391, %v5229, %v5427
      %v5464 = vsel %vm5392, %v5234, %v5428
      %v5465 = vsel %vm5393, %v5239, %v5429
      %v5466 = vsel %vm5394, %v5244, %v5430
      %v5467 = vsel %vm5395, %v5249, %v5431
      %v5468 = vsel %vm5396, %v5254, %v5432
      %v5469 = vsel %vm5397, %v5259, %v5433
      %v5470 = vsel %vm5398, %v5264, %v5434
      %v5471 = vsel %vm5399, %v5269, %v5435
      %v5472 = vsel %vm5400, %v5274, %v5436
      %v5473 = vsel %vm5401, %v5279, %v5437
      %v5474 = vsel %vm5402, %v5284, %v5438
      %v5475 = vsel %vm5403, %v5289, %v5439
      %v5476 = vsel %vm5404, %v5294, %v5440
      %v5477 = vsel %vm5405, %v5299, %v5441
      %v5478 = vsel %vm5406, %v5304, %v5442
      %v5479 = vsel %vm5407, %v5309, %v5443
      %v5480 = vsel %vm5408, %v5314, %v5444
      %v5481 = vsel %vm5409, %v5319, %v5445
      %v5482 = vsel %vm5410, %v5324, %v5446
      %v5483 = vsel %vm5411, %v5329, %v5447
      %v5484 = vsel %vm5412, %v5334, %v5448
      %v5485 = vsel %vm5413, %v5339, %v5449
      %v5486 = vsel %vm5414, %v5344, %v5450
      %v5487 = vsel %vm5415, %v5349, %v5451
      %v5488 = vsel %vm5416, %v5354, %v5452
      %v5489 = vsel %vm5417, %v5359, %v5453
      %v5490 = vsel %vm5418, %v5364, %v5454
      %v5491 = vsel %vm5419, %v5369, %v5455
      %v5492 = vsel %vm5420, %v5374, %v5456
      %v5493 = vsel %vm5421, %v5379, %v5457
      %v5494 = vsel %vm5422, %v5384, %v5458
      %5495 = vst.msk [vmem:[#allocation4] sm:$0xff] %vm556, %v5459
      %5496 = vst.msk [vmem:[#allocation4 + $0x8] sm:$0xff] %vm556, %v5460
      %5497 = vst.msk [vmem:[#allocation4 + $0x10] sm:$0xff] %vm556, %v5461
      %5498 = vst.msk [vmem:[#allocation4 + $0x18] sm:$0xff] %vm556, %v5462
      %5499 = vst.msk [vmem:[#allocation4 + $0x20] sm:$0xff] %vm556, %v5463
      %5500 = vst.msk [vmem:[#allocation4 + $0x28] sm:$0xff] %vm556, %v5464
      %5501 = vst.msk [vmem:[#allocation4 + $0x30] sm:$0xff] %vm556, %v5465
      %5502 = vst.msk [vmem:[#allocation4 + $0x38] sm:$0xff] %vm556, %v5466
      %5503 = vst.msk [vmem:[#allocation4 + $0x40] sm:$0xff] %vm556, %v5467
      %5504 = vst.msk [vmem:[#allocation4 + $0x48] sm:$0xff] %vm556, %v5468
      %5505 = vst.msk [vmem:[#allocation4 + $0x50] sm:$0xff] %vm556, %v5469
      %5506 = vst.msk [vmem:[#allocation4 + $0x58] sm:$0xff] %vm556, %v5470
      %5507 = vst.msk [vmem:[#allocation4 + $0x60] sm:$0xff] %vm556, %v5471
      %5508 = vst.msk [vmem:[#allocation4 + $0x68] sm:$0xff] %vm556, %v5472
      %5509 = vst.msk [vmem:[#allocation4 + $0x70] sm:$0xff] %vm556, %v5473
      %5510 = vst.msk [vmem:[#allocation4 + $0x78] sm:$0xff] %vm556, %v5474
      %5511 = vst.msk [vmem:[#allocation4 + $0x80] sm:$0xff] %vm556, %v5475
      %5512 = vst.msk [vmem:[#allocation4 + $0x88] sm:$0xff] %vm556, %v5476
      %5513 = vst.msk [vmem:[#allocation4 + $0x90] sm:$0xff] %vm556, %v5477
      %5514 = vst.msk [vmem:[#allocation4 + $0x98] sm:$0xff] %vm556, %v5478
      %5515 = vst.msk [vmem:[#allocation4 + $0xa0] sm:$0xff] %vm556, %v5479
      %5516 = vst.msk [vmem:[#allocation4 + $0xa8] sm:$0xff] %vm556, %v5480
      %5517 = vst.msk [vmem:[#allocation4 + $0xb0] sm:$0xff] %vm556, %v5481
      %5518 = vst.msk [vmem:[#allocation4 + $0xb8] sm:$0xff] %vm556, %v5482
      %5519 = vst.msk [vmem:[#allocation4 + $0xc0] sm:$0xff] %vm556, %v5483
      %5520 = vst.msk [vmem:[#allocation4 + $0xc8] sm:$0xff] %vm556, %v5484
      %5521 = vst.msk [vmem:[#allocation4 + $0xd0] sm:$0xff] %vm556, %v5485
      %5522 = vst.msk [vmem:[#allocation4 + $0xd8] sm:$0xff] %vm556, %v5486
      %5523 = vst.msk [vmem:[#allocation4 + $0xe0] sm:$0xff] %vm556, %v5487
      %5524 = vst.msk [vmem:[#allocation4 + $0xe8] sm:$0xff] %vm556, %v5488
      %5525 = vst.msk [vmem:[#allocation4 + $0xf0] sm:$0xff] %vm556, %v5489
      %5526 = vst.msk [vmem:[#allocation4 + $0xf8] sm:$0xff] %vm556, %v5490
      %5527 = vst.msk [vmem:[#allocation4 + $0x100] sm:$0xff] %vm556, %v5491
      %5528 = vst.msk [vmem:[#allocation4 + $0x108] sm:$0xff] %vm556, %v5492
      %5529 = vst.msk [vmem:[#allocation4 + $0x110] sm:$0xff] %vm556, %v5493
      %5530 = vst.msk [vmem:[#allocation4 + $0x118] sm:$0x3f] %vm592, %v5494
      %v5531 = vld [vmem:[#allocation4] ss:$2 sm:$0xff]
      %s5532 = scalar_lea.vmem [#allocation4], 16
      %v5533 = vld [vmem:[%s5532] ss:$2 sm:$0xff]
      %s5534 = scalar_lea.vmem [#allocation4], 32
      %v5535 = vld [vmem:[%s5534] ss:$2 sm:$0xff]
      %s5536 = scalar_lea.vmem [#allocation4], 48
      %v5537 = vld [vmem:[%s5536] ss:$2 sm:$0xff]
      %s5538 = scalar_lea.vmem [#allocation4], 64
      %v5539 = vld [vmem:[%s5538] ss:$2 sm:$0xff]
      %s5540 = scalar_lea.vmem [#allocation4], 80
      %v5541 = vld [vmem:[%s5540] ss:$2 sm:$0xff]
      %s5542 = scalar_lea.vmem [#allocation4], 96
      %v5543 = vld [vmem:[%s5542] ss:$2 sm:$0xff]
      %s5544 = scalar_lea.vmem [#allocation4], 112
      %v5545 = vld [vmem:[%s5544] ss:$2 sm:$0xff]
      %s5546 = scalar_lea.vmem [#allocation4], 128
      %v5547 = vld [vmem:[%s5546] ss:$2 sm:$0xff]
      %s5548 = scalar_lea.vmem [#allocation4], 144
      %v5549 = vld [vmem:[%s5548] ss:$2 sm:$0xff]
      %s5550 = scalar_lea.vmem [#allocation4], 160
      %v5551 = vld [vmem:[%s5550] ss:$2 sm:$0xff]
      %s5552 = scalar_lea.vmem [#allocation4], 176
      %v5553 = vld [vmem:[%s5552] ss:$2 sm:$0xff]
      %s5554 = scalar_lea.vmem [#allocation4], 192
      %v5555 = vld [vmem:[%s5554] ss:$2 sm:$0xff]
      %s5556 = scalar_lea.vmem [#allocation4], 208
      %v5557 = vld [vmem:[%s5556] ss:$2 sm:$0xff]
      %s5558 = scalar_lea.vmem [#allocation4], 224
      %v5559 = vld [vmem:[%s5558] ss:$2 sm:$0x7]
      %5560 = vst.msk [vmem:[#allocation3] sm:$0xff] %vm556, %v5531
      %5561 = vst.msk [vmem:[#allocation3 + $0x10] sm:$0xff] %vm556, %v5533
      %5562 = vst.msk [vmem:[#allocation3 + $0x20] sm:$0xff] %vm556, %v5535
      %5563 = vst.msk [vmem:[#allocation3 + $0x30] sm:$0xff] %vm556, %v5537
      %5564 = vst.msk [vmem:[#allocation3 + $0x40] sm:$0xff] %vm556, %v5539
      %5565 = vst.msk [vmem:[#allocation3 + $0x50] sm:$0xff] %vm556, %v5541
      %5566 = vst.msk [vmem:[#allocation3 + $0x60] sm:$0xff] %vm556, %v5543
      %5567 = vst.msk [vmem:[#allocation3 + $0x70] sm:$0xff] %vm556, %v5545
      %5568 = vst.msk [vmem:[#allocation3 + $0x80] sm:$0xff] %vm556, %v5547
      %5569 = vst.msk [vmem:[#allocation3 + $0x90] sm:$0xff] %vm556, %v5549
      %5570 = vst.msk [vmem:[#allocation3 + $0xa0] sm:$0xff] %vm556, %v5551
      %5571 = vst.msk [vmem:[#allocation3 + $0xb0] sm:$0xff] %vm556, %v5553
      %5572 = vst.msk [vmem:[#allocation3 + $0xc0] sm:$0xff] %vm556, %v5555
      %5573 = vst.msk [vmem:[#allocation3 + $0xd0] sm:$0xff] %vm556, %v5557
      %5574 = vst.msk [vmem:[#allocation3 + $0xe0] sm:$0x7] %vm3142, %v5559
      %s5575 = scalar_lea.vmem [#allocation4], 1
      %v5576 = vld [vmem:[%s5575] ss:$2 sm:$0xff]
      %s5577 = scalar_lea.vmem [#allocation4], 17
      %v5578 = vld [vmem:[%s5577] ss:$2 sm:$0xff]
      %s5579 = scalar_lea.vmem [#allocation4], 33
      %v5580 = vld [vmem:[%s5579] ss:$2 sm:$0xff]
      %s5581 = scalar_lea.vmem [#allocation4], 49
      %v5582 = vld [vmem:[%s5581] ss:$2 sm:$0xff]
      %s5583 = scalar_lea.vmem [#allocation4], 65
      %v5584 = vld [vmem:[%s5583] ss:$2 sm:$0xff]
      %s5585 = scalar_lea.vmem [#allocation4], 81
      %v5586 = vld [vmem:[%s5585] ss:$2 sm:$0xff]
      %s5587 = scalar_lea.vmem [#allocation4], 97
      %v5588 = vld [vmem:[%s5587] ss:$2 sm:$0xff]
      %s5589 = scalar_lea.vmem [#allocation4], 113
      %v5590 = vld [vmem:[%s5589] ss:$2 sm:$0xff]
      %s5591 = scalar_lea.vmem [#allocation4], 129
      %v5592 = vld [vmem:[%s5591] ss:$2 sm:$0xff]
      %s5593 = scalar_lea.vmem [#allocation4], 145
      %v5594 = vld [vmem:[%s5593] ss:$2 sm:$0xff]
      %s5595 = scalar_lea.vmem [#allocation4], 161
      %v5596 = vld [vmem:[%s5595] ss:$2 sm:$0xff]
      %s5597 = scalar_lea.vmem [#allocation4], 177
      %v5598 = vld [vmem:[%s5597] ss:$2 sm:$0xff]
      %s5599 = scalar_lea.vmem [#allocation4], 193
      %v5600 = vld [vmem:[%s5599] ss:$2 sm:$0xff]
      %s5601 = scalar_lea.vmem [#allocation4], 209
      %v5602 = vld [vmem:[%s5601] ss:$2 sm:$0xff]
      %s5603 = scalar_lea.vmem [#allocation4], 225
      %v5604 = vld [vmem:[%s5603] ss:$2 sm:$0x7]
      %5620 = vrot.lane.b32.xlu0 %v5576, 4
      %v5621 = vpop.permute.xlu0 %5620
      %5622 = vrot.lane.b32.xlu0 %v5578, 4
      %v5623 = vpop.permute.xlu0 %5622
      %5624 = vrot.lane.b32.xlu0 %v5580, 4
      %v5625 = vpop.permute.xlu0 %5624
      %5626 = vrot.lane.b32.xlu0 %v5582, 4
      %v5627 = vpop.permute.xlu0 %5626
      %5628 = vrot.lane.b32.xlu0 %v5584, 4
      %v5629 = vpop.permute.xlu0 %5628
      %5630 = vrot.lane.b32.xlu0 %v5586, 4
      %v5631 = vpop.permute.xlu0 %5630
      %5632 = vrot.lane.b32.xlu0 %v5588, 4
      %v5633 = vpop.permute.xlu0 %5632
      %5634 = vrot.lane.b32.xlu0 %v5590, 4
      %v5635 = vpop.permute.xlu0 %5634
      %5636 = vrot.lane.b32.xlu0 %v5592, 4
      %v5637 = vpop.permute.xlu0 %5636
      %5638 = vrot.lane.b32.xlu0 %v5594, 4
      %v5639 = vpop.permute.xlu0 %5638
      %5640 = vrot.lane.b32.xlu0 %v5596, 4
      %v5641 = vpop.permute.xlu0 %5640
      %5642 = vrot.lane.b32.xlu0 %v5598, 4
      %v5643 = vpop.permute.xlu0 %5642
      %5644 = vrot.lane.b32.xlu0 %v5600, 4
      %v5645 = vpop.permute.xlu0 %5644
      %5646 = vrot.lane.b32.xlu0 %v5602, 4
      %v5647 = vpop.permute.xlu0 %5646
      %5648 = vrot.lane.b32.xlu0 %v5604, 4
      %v5649 = vpop.permute.xlu0 %5648
      %5665 = vst.msk [vmem:[#allocation3] sm:$0xff] %vm774, %v5621
      %5666 = vst.msk [vmem:[#allocation3 + $0x10] sm:$0xff] %vm774, %v5623
      %5667 = vst.msk [vmem:[#allocation3 + $0x20] sm:$0xff] %vm774, %v5625
      %5668 = vst.msk [vmem:[#allocation3 + $0x30] sm:$0xff] %vm774, %v5627
      %5669 = vst.msk [vmem:[#allocation3 + $0x40] sm:$0xff] %vm774, %v5629
      %5670 = vst.msk [vmem:[#allocation3 + $0x50] sm:$0xff] %vm774, %v5631
      %5671 = vst.msk [vmem:[#allocation3 + $0x60] sm:$0xff] %vm774, %v5633
      %5672 = vst.msk [vmem:[#allocation3 + $0x70] sm:$0xff] %vm774, %v5635
      %5673 = vst.msk [vmem:[#allocation3 + $0x80] sm:$0xff] %vm774, %v5637
      %5674 = vst.msk [vmem:[#allocation3 + $0x90] sm:$0xff] %vm774, %v5639
      %5675 = vst.msk [vmem:[#allocation3 + $0xa0] sm:$0xff] %vm774, %v5641
      %5676 = vst.msk [vmem:[#allocation3 + $0xb0] sm:$0xff] %vm774, %v5643
      %5677 = vst.msk [vmem:[#allocation3 + $0xc0] sm:$0xff] %vm774, %v5645
      %5678 = vst.msk [vmem:[#allocation3 + $0xd0] sm:$0xff] %vm774, %v5647
      %vm5679 = vcmask 59424
      %5680 = vst.msk [vmem:[#allocation3 + $0xe0] sm:$0x7] %vm5679, %v5649
      %s5681 = scalar_lea.vmem [#allocation4], 2
      %v5682 = vld [vmem:[%s5681] ss:$2 sm:$0xff]
      %s5683 = scalar_lea.vmem [#allocation4], 18
      %v5684 = vld [vmem:[%s5683] ss:$2 sm:$0xff]
      %s5685 = scalar_lea.vmem [#allocation4], 34
      %v5686 = vld [vmem:[%s5685] ss:$2 sm:$0xff]
      %s5687 = scalar_lea.vmem [#allocation4], 50
      %v5688 = vld [vmem:[%s5687] ss:$2 sm:$0xff]
      %s5689 = scalar_lea.vmem [#allocation4], 66
      %v5690 = vld [vmem:[%s5689] ss:$2 sm:$0xff]
      %s5691 = scalar_lea.vmem [#allocation4], 82
      %v5692 = vld [vmem:[%s5691] ss:$2 sm:$0xff]
      %s5693 = scalar_lea.vmem [#allocation4], 98
      %v5694 = vld [vmem:[%s5693] ss:$2 sm:$0xff]
      %s5695 = scalar_lea.vmem [#allocation4], 114
      %v5696 = vld [vmem:[%s5695] ss:$2 sm:$0xff]
      %s5697 = scalar_lea.vmem [#allocation4], 130
      %v5698 = vld [vmem:[%s5697] ss:$2 sm:$0xff]
      %s5699 = scalar_lea.vmem [#allocation4], 146
      %v5700 = vld [vmem:[%s5699] ss:$2 sm:$0xff]
      %s5701 = scalar_lea.vmem [#allocation4], 162
      %v5702 = vld [vmem:[%s5701] ss:$2 sm:$0xff]
      %s5703 = scalar_lea.vmem [#allocation4], 178
      %v5704 = vld [vmem:[%s5703] ss:$2 sm:$0xff]
      %s5705 = scalar_lea.vmem [#allocation4], 194
      %v5706 = vld [vmem:[%s5705] ss:$2 sm:$0xff]
      %s5707 = scalar_lea.vmem [#allocation4], 210
      %v5708 = vld [vmem:[%s5707] ss:$2 sm:$0xff]
      %s5709 = scalar_lea.vmem [#allocation4], 226
      %v5710 = vld [vmem:[%s5709] ss:$2 sm:$0x7]
      %5726 = vrot.lane.b32.xlu0 %v5682, 8
      %v5727 = vpop.permute.xlu0 %5726
      %5728 = vrot.lane.b32.xlu0 %v5684, 8
      %v5729 = vpop.permute.xlu0 %5728
      %5730 = vrot.lane.b32.xlu0 %v5686, 8
      %v5731 = vpop.permute.xlu0 %5730
      %5732 = vrot.lane.b32.xlu0 %v5688, 8
      %v5733 = vpop.permute.xlu0 %5732
      %5734 = vrot.lane.b32.xlu0 %v5690, 8
      %v5735 = vpop.permute.xlu0 %5734
      %5736 = vrot.lane.b32.xlu0 %v5692, 8
      %v5737 = vpop.permute.xlu0 %5736
      %5738 = vrot.lane.b32.xlu0 %v5694, 8
      %v5739 = vpop.permute.xlu0 %5738
      %5740 = vrot.lane.b32.xlu0 %v5696, 8
      %v5741 = vpop.permute.xlu0 %5740
      %5742 = vrot.lane.b32.xlu0 %v5698, 8
      %v5743 = vpop.permute.xlu0 %5742
      %5744 = vrot.lane.b32.xlu0 %v5700, 8
      %v5745 = vpop.permute.xlu0 %5744
      %5746 = vrot.lane.b32.xlu0 %v5702, 8
      %v5747 = vpop.permute.xlu0 %5746
      %5748 = vrot.lane.b32.xlu0 %v5704, 8
      %v5749 = vpop.permute.xlu0 %5748
      %5750 = vrot.lane.b32.xlu0 %v5706, 8
      %v5751 = vpop.permute.xlu0 %5750
      %5752 = vrot.lane.b32.xlu0 %v5708, 8
      %v5753 = vpop.permute.xlu0 %5752
      %5754 = vrot.lane.b32.xlu0 %v5710, 8
      %v5755 = vpop.permute.xlu0 %5754
      %5771 = vst.msk [vmem:[#allocation3] sm:$0xff] %vm992, %v5727
      %5772 = vst.msk [vmem:[#allocation3 + $0x10] sm:$0xff] %vm992, %v5729
      %5773 = vst.msk [vmem:[#allocation3 + $0x20] sm:$0xff] %vm992, %v5731
      %5774 = vst.msk [vmem:[#allocation3 + $0x30] sm:$0xff] %vm992, %v5733
      %5775 = vst.msk [vmem:[#allocation3 + $0x40] sm:$0xff] %vm992, %v5735
      %5776 = vst.msk [vmem:[#allocation3 + $0x50] sm:$0xff] %vm992, %v5737
      %5777 = vst.msk [vmem:[#allocation3 + $0x60] sm:$0xff] %vm992, %v5739
      %5778 = vst.msk [vmem:[#allocation3 + $0x70] sm:$0xff] %vm992, %v5741
      %5779 = vst.msk [vmem:[#allocation3 + $0x80] sm:$0xff] %vm992, %v5743
      %5780 = vst.msk [vmem:[#allocation3 + $0x90] sm:$0xff] %vm992, %v5745
      %5781 = vst.msk [vmem:[#allocation3 + $0xa0] sm:$0xff] %vm992, %v5747
      %5782 = vst.msk [vmem:[#allocation3 + $0xb0] sm:$0xff] %vm992, %v5749
      %5783 = vst.msk [vmem:[#allocation3 + $0xc0] sm:$0xff] %vm992, %v5751
      %5784 = vst.msk [vmem:[#allocation3 + $0xd0] sm:$0xff] %vm992, %v5753
      %vm5785 = vcmask 92224
      %5786 = vst.msk [vmem:[#allocation3 + $0xe0] sm:$0x7] %vm5785, %v5755
      %v5787 = vld [vmem:[%s5683] ss:$2 sm:$0xff]
      %v5788 = vld [vmem:[%s5685] ss:$2 sm:$0xff]
      %v5789 = vld [vmem:[%s5687] ss:$2 sm:$0xff]
      %v5790 = vld [vmem:[%s5689] ss:$2 sm:$0xff]
      %v5791 = vld [vmem:[%s5691] ss:$2 sm:$0xff]
      %v5792 = vld [vmem:[%s5693] ss:$2 sm:$0xff]
      %v5793 = vld [vmem:[%s5695] ss:$2 sm:$0xff]
      %v5794 = vld [vmem:[%s5697] ss:$2 sm:$0xff]
      %v5795 = vld [vmem:[%s5699] ss:$2 sm:$0xff]
      %v5796 = vld [vmem:[%s5701] ss:$2 sm:$0xff]
      %v5797 = vld [vmem:[%s5703] ss:$2 sm:$0xff]
      %v5798 = vld [vmem:[%s5705] ss:$2 sm:$0xff]
      %v5799 = vld [vmem:[%s5707] ss:$2 sm:$0xff]
      %v5800 = vld [vmem:[%s5709] ss:$2 sm:$0xff]
      %s5801 = scalar_lea.vmem [#allocation4], 242
      %v5802 = vld [vmem:[%s5801] ss:$2 sm:$0x7]
      %5818 = vrot.lane.b32.xlu0 %v5787, 12
      %v5819 = vpop.permute.xlu0 %5818
      %5820 = vrot.lane.b32.xlu0 %v5788, 12
      %v5821 = vpop.permute.xlu0 %5820
      %5822 = vrot.lane.b32.xlu0 %v5789, 12
      %v5823 = vpop.permute.xlu0 %5822
      %5824 = vrot.lane.b32.xlu0 %v5790, 12
      %v5825 = vpop.permute.xlu0 %5824
      %5826 = vrot.lane.b32.xlu0 %v5791, 12
      %v5827 = vpop.permute.xlu0 %5826
      %5828 = vrot.lane.b32.xlu0 %v5792, 12
      %v5829 = vpop.permute.xlu0 %5828
      %5830 = vrot.lane.b32.xlu0 %v5793, 12
      %v5831 = vpop.permute.xlu0 %5830
      %5832 = vrot.lane.b32.xlu0 %v5794, 12
      %v5833 = vpop.permute.xlu0 %5832
      %5834 = vrot.lane.b32.xlu0 %v5795, 12
      %v5835 = vpop.permute.xlu0 %5834
      %5836 = vrot.lane.b32.xlu0 %v5796, 12
      %v5837 = vpop.permute.xlu0 %5836
      %5838 = vrot.lane.b32.xlu0 %v5797, 12
      %v5839 = vpop.permute.xlu0 %5838
      %5840 = vrot.lane.b32.xlu0 %v5798, 12
      %v5841 = vpop.permute.xlu0 %5840
      %5842 = vrot.lane.b32.xlu0 %v5799, 12
      %v5843 = vpop.permute.xlu0 %5842
      %5844 = vrot.lane.b32.xlu0 %v5800, 12
      %v5845 = vpop.permute.xlu0 %5844
      %5846 = vrot.lane.b32.xlu0 %v5802, 12
      %v5847 = vpop.permute.xlu0 %5846
      %5863 = vst.msk [vmem:[#allocation3] sm:$0xff] %vm1210, %v5819
      %5864 = vst.msk [vmem:[#allocation3 + $0x10] sm:$0xff] %vm1210, %v5821
      %5865 = vst.msk [vmem:[#allocation3 + $0x20] sm:$0xff] %vm1210, %v5823
      %5866 = vst.msk [vmem:[#allocation3 + $0x30] sm:$0xff] %vm1210, %v5825
      %5867 = vst.msk [vmem:[#allocation3 + $0x40] sm:$0xff] %vm1210, %v5827
      %5868 = vst.msk [vmem:[#allocation3 + $0x50] sm:$0xff] %vm1210, %v5829
      %5869 = vst.msk [vmem:[#allocation3 + $0x60] sm:$0xff] %vm1210, %v5831
      %5870 = vst.msk [vmem:[#allocation3 + $0x70] sm:$0xff] %vm1210, %v5833
      %5871 = vst.msk [vmem:[#allocation3 + $0x80] sm:$0xff] %vm1210, %v5835
      %5872 = vst.msk [vmem:[#allocation3 + $0x90] sm:$0xff] %vm1210, %v5837
      %5873 = vst.msk [vmem:[#allocation3 + $0xa0] sm:$0xff] %vm1210, %v5839
      %5874 = vst.msk [vmem:[#allocation3 + $0xb0] sm:$0xff] %vm1210, %v5841
      %5875 = vst.msk [vmem:[#allocation3 + $0xc0] sm:$0xff] %vm1210, %v5843
      %5876 = vst.msk [vmem:[#allocation3 + $0xd0] sm:$0xff] %vm1210, %v5845
      %vm5877 = vcmask 125024
      %5878 = vst.msk [vmem:[#allocation3 + $0xe0] sm:$0x7] %vm5877, %v5847
      %s5879 = scalar_lea.vmem [#allocation4], 19
      %v5880 = vld [vmem:[%s5879] ss:$2 sm:$0xff]
      %s5881 = scalar_lea.vmem [#allocation4], 35
      %v5882 = vld [vmem:[%s5881] ss:$2 sm:$0xff]
      %s5883 = scalar_lea.vmem [#allocation4], 51
      %v5884 = vld [vmem:[%s5883] ss:$2 sm:$0xff]
      %s5885 = scalar_lea.vmem [#allocation4], 67
      %v5886 = vld [vmem:[%s5885] ss:$2 sm:$0xff]
      %s5887 = scalar_lea.vmem [#allocation4], 83
      %v5888 = vld [vmem:[%s5887] ss:$2 sm:$0xff]
      %s5889 = scalar_lea.vmem [#allocation4], 99
      %v5890 = vld [vmem:[%s5889] ss:$2 sm:$0xff]
      %s5891 = scalar_lea.vmem [#allocation4], 115
      %v5892 = vld [vmem:[%s5891] ss:$2 sm:$0xff]
      %s5893 = scalar_lea.vmem [#allocation4], 131
      %v5894 = vld [vmem:[%s5893] ss:$2 sm:$0xff]
      %s5895 = scalar_lea.vmem [#allocation4], 147
      %v5896 = vld [vmem:[%s5895] ss:$2 sm:$0xff]
      %s5897 = scalar_lea.vmem [#allocation4], 163
      %v5898 = vld [vmem:[%s5897] ss:$2 sm:$0xff]
      %s5899 = scalar_lea.vmem [#allocation4], 179
      %v5900 = vld [vmem:[%s5899] ss:$2 sm:$0xff]
      %s5901 = scalar_lea.vmem [#allocation4], 195
      %v5902 = vld [vmem:[%s5901] ss:$2 sm:$0xff]
      %s5903 = scalar_lea.vmem [#allocation4], 211
      %v5904 = vld [vmem:[%s5903] ss:$2 sm:$0xff]
      %s5905 = scalar_lea.vmem [#allocation4], 227
      %v5906 = vld [vmem:[%s5905] ss:$2 sm:$0xff]
      %s5907 = scalar_lea.vmem [#allocation4], 243
      %v5908 = vld [vmem:[%s5907] ss:$2 sm:$0x7]
      %5924 = vrot.lane.b32.xlu0 %v5880, 16
      %v5925 = vpop.permute.xlu0 %5924
      %5926 = vrot.lane.b32.xlu0 %v5882, 16
      %v5927 = vpop.permute.xlu0 %5926
      %5928 = vrot.lane.b32.xlu0 %v5884, 16
      %v5929 = vpop.permute.xlu0 %5928
      %5930 = vrot.lane.b32.xlu0 %v5886, 16
      %v5931 = vpop.permute.xlu0 %5930
      %5932 = vrot.lane.b32.xlu0 %v5888, 16
      %v5933 = vpop.permute.xlu0 %5932
      %5934 = vrot.lane.b32.xlu0 %v5890, 16
      %v5935 = vpop.permute.xlu0 %5934
      %5936 = vrot.lane.b32.xlu0 %v5892, 16
      %v5937 = vpop.permute.xlu0 %5936
      %5938 = vrot.lane.b32.xlu0 %v5894, 16
      %v5939 = vpop.permute.xlu0 %5938
      %5940 = vrot.lane.b32.xlu0 %v5896, 16
      %v5941 = vpop.permute.xlu0 %5940
      %5942 = vrot.lane.b32.xlu0 %v5898, 16
      %v5943 = vpop.permute.xlu0 %5942
      %5944 = vrot.lane.b32.xlu0 %v5900, 16
      %v5945 = vpop.permute.xlu0 %5944
      %5946 = vrot.lane.b32.xlu0 %v5902, 16
      %v5947 = vpop.permute.xlu0 %5946
      %5948 = vrot.lane.b32.xlu0 %v5904, 16
      %v5949 = vpop.permute.xlu0 %5948
      %5950 = vrot.lane.b32.xlu0 %v5906, 16
      %v5951 = vpop.permute.xlu0 %5950
      %5952 = vrot.lane.b32.xlu0 %v5908, 16
      %v5953 = vpop.permute.xlu0 %5952
      %5969 = vst.msk [vmem:[#allocation3] sm:$0xff] %vm1428, %v5925
      %5970 = vst.msk [vmem:[#allocation3 + $0x10] sm:$0xff] %vm1428, %v5927
      %5971 = vst.msk [vmem:[#allocation3 + $0x20] sm:$0xff] %vm1428, %v5929
      %5972 = vst.msk [vmem:[#allocation3 + $0x30] sm:$0xff] %vm1428, %v5931
      %5973 = vst.msk [vmem:[#allocation3 + $0x40] sm:$0xff] %vm1428, %v5933
      %5974 = vst.msk [vmem:[#allocation3 + $0x50] sm:$0xff] %vm1428, %v5935
      %5975 = vst.msk [vmem:[#allocation3 + $0x60] sm:$0xff] %vm1428, %v5937
      %5976 = vst.msk [vmem:[#allocation3 + $0x70] sm:$0xff] %vm1428, %v5939
      %5977 = vst.msk [vmem:[#allocation3 + $0x80] sm:$0xff] %vm1428, %v5941
      %5978 = vst.msk [vmem:[#allocation3 + $0x90] sm:$0xff] %vm1428, %v5943
      %5979 = vst.msk [vmem:[#allocation3 + $0xa0] sm:$0xff] %vm1428, %v5945
      %5980 = vst.msk [vmem:[#allocation3 + $0xb0] sm:$0xff] %vm1428, %v5947
      %5981 = vst.msk [vmem:[#allocation3 + $0xc0] sm:$0xff] %vm1428, %v5949
      %5982 = vst.msk [vmem:[#allocation3 + $0xd0] sm:$0xff] %vm1428, %v5951
      %vm5983 = vcmask 157824
      %5984 = vst.msk [vmem:[#allocation3 + $0xe0] sm:$0x7] %vm5983, %v5953
      %s5985 = scalar_lea.vmem [#allocation4], 20
      %v5986 = vld [vmem:[%s5985] ss:$2 sm:$0xff]
      %s5987 = scalar_lea.vmem [#allocation4], 36
      %v5988 = vld [vmem:[%s5987] ss:$2 sm:$0xff]
      %s5989 = scalar_lea.vmem [#allocation4], 52
      %v5990 = vld [vmem:[%s5989] ss:$2 sm:$0xff]
      %s5991 = scalar_lea.vmem [#allocation4], 68
      %v5992 = vld [vmem:[%s5991] ss:$2 sm:$0xff]
      %s5993 = scalar_lea.vmem [#allocation4], 84
      %v5994 = vld [vmem:[%s5993] ss:$2 sm:$0xff]
      %s5995 = scalar_lea.vmem [#allocation4], 100
      %v5996 = vld [vmem:[%s5995] ss:$2 sm:$0xff]
      %s5997 = scalar_lea.vmem [#allocation4], 116
      %v5998 = vld [vmem:[%s5997] ss:$2 sm:$0xff]
      %s5999 = scalar_lea.vmem [#allocation4], 132
      %v6000 = vld [vmem:[%s5999] ss:$2 sm:$0xff]
      %s6001 = scalar_lea.vmem [#allocation4], 148
      %v6002 = vld [vmem:[%s6001] ss:$2 sm:$0xff]
      %s6003 = scalar_lea.vmem [#allocation4], 164
      %v6004 = vld [vmem:[%s6003] ss:$2 sm:$0xff]
      %s6005 = scalar_lea.vmem [#allocation4], 180
      %v6006 = vld [vmem:[%s6005] ss:$2 sm:$0xff]
      %s6007 = scalar_lea.vmem [#allocation4], 196
      %v6008 = vld [vmem:[%s6007] ss:$2 sm:$0xff]
      %s6009 = scalar_lea.vmem [#allocation4], 212
      %v6010 = vld [vmem:[%s6009] ss:$2 sm:$0xff]
      %s6011 = scalar_lea.vmem [#allocation4], 228
      %v6012 = vld [vmem:[%s6011] ss:$2 sm:$0xff]
      %s6013 = scalar_lea.vmem [#allocation4], 244
      %v6014 = vld [vmem:[%s6013] ss:$2 sm:$0x7]
      %6030 = vrot.lane.b32.xlu0 %v5986, 20
      %v6031 = vpop.permute.xlu0 %6030
      %6032 = vrot.lane.b32.xlu0 %v5988, 20
      %v6033 = vpop.permute.xlu0 %6032
      %6034 = vrot.lane.b32.xlu0 %v5990, 20
      %v6035 = vpop.permute.xlu0 %6034
      %6036 = vrot.lane.b32.xlu0 %v5992, 20
      %v6037 = vpop.permute.xlu0 %6036
      %6038 = vrot.lane.b32.xlu0 %v5994, 20
      %v6039 = vpop.permute.xlu0 %6038
      %6040 = vrot.lane.b32.xlu0 %v5996, 20
      %v6041 = vpop.permute.xlu0 %6040
      %6042 = vrot.lane.b32.xlu0 %v5998, 20
      %v6043 = vpop.permute.xlu0 %6042
      %6044 = vrot.lane.b32.xlu0 %v6000, 20
      %v6045 = vpop.permute.xlu0 %6044
      %6046 = vrot.lane.b32.xlu0 %v6002, 20
      %v6047 = vpop.permute.xlu0 %6046
      %6048 = vrot.lane.b32.xlu0 %v6004, 20
      %v6049 = vpop.permute.xlu0 %6048
      %6050 = vrot.lane.b32.xlu0 %v6006, 20
      %v6051 = vpop.permute.xlu0 %6050
      %6052 = vrot.lane.b32.xlu0 %v6008, 20
      %v6053 = vpop.permute.xlu0 %6052
      %6054 = vrot.lane.b32.xlu0 %v6010, 20
      %v6055 = vpop.permute.xlu0 %6054
      %6056 = vrot.lane.b32.xlu0 %v6012, 20
      %v6057 = vpop.permute.xlu0 %6056
      %6058 = vrot.lane.b32.xlu0 %v6014, 20
      %v6059 = vpop.permute.xlu0 %6058
      %6075 = vst.msk [vmem:[#allocation3] sm:$0xff] %vm1646, %v6031
      %6076 = vst.msk [vmem:[#allocation3 + $0x10] sm:$0xff] %vm1646, %v6033
      %6077 = vst.msk [vmem:[#allocation3 + $0x20] sm:$0xff] %vm1646, %v6035
      %6078 = vst.msk [vmem:[#allocation3 + $0x30] sm:$0xff] %vm1646, %v6037
      %6079 = vst.msk [vmem:[#allocation3 + $0x40] sm:$0xff] %vm1646, %v6039
      %6080 = vst.msk [vmem:[#allocation3 + $0x50] sm:$0xff] %vm1646, %v6041
      %6081 = vst.msk [vmem:[#allocation3 + $0x60] sm:$0xff] %vm1646, %v6043
      %6082 = vst.msk [vmem:[#allocation3 + $0x70] sm:$0xff] %vm1646, %v6045
      %6083 = vst.msk [vmem:[#allocation3 + $0x80] sm:$0xff] %vm1646, %v6047
      %6084 = vst.msk [vmem:[#allocation3 + $0x90] sm:$0xff] %vm1646, %v6049
      %6085 = vst.msk [vmem:[#allocation3 + $0xa0] sm:$0xff] %vm1646, %v6051
      %6086 = vst.msk [vmem:[#allocation3 + $0xb0] sm:$0xff] %vm1646, %v6053
      %6087 = vst.msk [vmem:[#allocation3 + $0xc0] sm:$0xff] %vm1646, %v6055
      %6088 = vst.msk [vmem:[#allocation3 + $0xd0] sm:$0xff] %vm1646, %v6057
      %vm6089 = vcmask 190624
      %6090 = vst.msk [vmem:[#allocation3 + $0xe0] sm:$0x7] %vm6089, %v6059
      %v6091 = vld [vmem:[%s5987] ss:$2 sm:$0xff]
      %v6092 = vld [vmem:[%s5989] ss:$2 sm:$0xff]
      %v6093 = vld [vmem:[%s5991] ss:$2 sm:$0xff]
      %v6094 = vld [vmem:[%s5993] ss:$2 sm:$0xff]
      %v6095 = vld [vmem:[%s5995] ss:$2 sm:$0xff]
      %v6096 = vld [vmem:[%s5997] ss:$2 sm:$0xff]
      %v6097 = vld [vmem:[%s5999] ss:$2 sm:$0xff]
      %v6098 = vld [vmem:[%s6001] ss:$2 sm:$0xff]
      %v6099 = vld [vmem:[%s6003] ss:$2 sm:$0xff]
      %v6100 = vld [vmem:[%s6005] ss:$2 sm:$0xff]
      %v6101 = vld [vmem:[%s6007] ss:$2 sm:$0xff]
      %v6102 = vld [vmem:[%s6009] ss:$2 sm:$0xff]
      %v6103 = vld [vmem:[%s6011] ss:$2 sm:$0xff]
      %v6104 = vld [vmem:[%s6013] ss:$2 sm:$0xff]
      %s6105 = scalar_lea.vmem [#allocation4], 260
      %v6106 = vld [vmem:[%s6105] ss:$2 sm:$0x7]
      %6122 = vrot.lane.b32.xlu0 %v6091, 24
      %v6123 = vpop.permute.xlu0 %6122
      %6124 = vrot.lane.b32.xlu0 %v6092, 24
      %v6125 = vpop.permute.xlu0 %6124
      %6126 = vrot.lane.b32.xlu0 %v6093, 24
      %v6127 = vpop.permute.xlu0 %6126
      %6128 = vrot.lane.b32.xlu0 %v6094, 24
      %v6129 = vpop.permute.xlu0 %6128
      %6130 = vrot.lane.b32.xlu0 %v6095, 24
      %v6131 = vpop.permute.xlu0 %6130
      %6132 = vrot.lane.b32.xlu0 %v6096, 24
      %v6133 = vpop.permute.xlu0 %6132
      %6134 = vrot.lane.b32.xlu0 %v6097, 24
      %v6135 = vpop.permute.xlu0 %6134
      %6136 = vrot.lane.b32.xlu0 %v6098, 24
      %v6137 = vpop.permute.xlu0 %6136
      %6138 = vrot.lane.b32.xlu0 %v6099, 24
      %v6139 = vpop.permute.xlu0 %6138
      %6140 = vrot.lane.b32.xlu0 %v6100, 24
      %v6141 = vpop.permute.xlu0 %6140
      %6142 = vrot.lane.b32.xlu0 %v6101, 24
      %v6143 = vpop.permute.xlu0 %6142
      %6144 = vrot.lane.b32.xlu0 %v6102, 24
      %v6145 = vpop.permute.xlu0 %6144
      %6146 = vrot.lane.b32.xlu0 %v6103, 24
      %v6147 = vpop.permute.xlu0 %6146
      %6148 = vrot.lane.b32.xlu0 %v6104, 24
      %v6149 = vpop.permute.xlu0 %6148
      %6150 = vrot.lane.b32.xlu0 %v6106, 24
      %v6151 = vpop.permute.xlu0 %6150
      %6167 = vst.msk [vmem:[#allocation3] sm:$0xff] %vm1864, %v6123
      %6168 = vst.msk [vmem:[#allocation3 + $0x10] sm:$0xff] %vm1864, %v6125
      %6169 = vst.msk [vmem:[#allocation3 + $0x20] sm:$0xff] %vm1864, %v6127
      %6170 = vst.msk [vmem:[#allocation3 + $0x30] sm:$0xff] %vm1864, %v6129
      %6171 = vst.msk [vmem:[#allocation3 + $0x40] sm:$0xff] %vm1864, %v6131
      %6172 = vst.msk [vmem:[#allocation3 + $0x50] sm:$0xff] %vm1864, %v6133
      %6173 = vst.msk [vmem:[#allocation3 + $0x60] sm:$0xff] %vm1864, %v6135
      %6174 = vst.msk [vmem:[#allocation3 + $0x70] sm:$0xff] %vm1864, %v6137
      %6175 = vst.msk [vmem:[#allocation3 + $0x80] sm:$0xff] %vm1864, %v6139
      %6176 = vst.msk [vmem:[#allocation3 + $0x90] sm:$0xff] %vm1864, %v6141
      %6177 = vst.msk [vmem:[#allocation3 + $0xa0] sm:$0xff] %vm1864, %v6143
      %6178 = vst.msk [vmem:[#allocation3 + $0xb0] sm:$0xff] %vm1864, %v6145
      %6179 = vst.msk [vmem:[#allocation3 + $0xc0] sm:$0xff] %vm1864, %v6147
      %6180 = vst.msk [vmem:[#allocation3 + $0xd0] sm:$0xff] %vm1864, %v6149
      %vm6181 = vcmask 223424
      %6182 = vst.msk [vmem:[#allocation3 + $0xe0] sm:$0x7] %vm6181, %v6151
      %s6183 = scalar_lea.vmem [#allocation4], 37
      %v6184 = vld [vmem:[%s6183] ss:$2 sm:$0xff]
      %s6185 = scalar_lea.vmem [#allocation4], 53
      %v6186 = vld [vmem:[%s6185] ss:$2 sm:$0xff]
      %s6187 = scalar_lea.vmem [#allocation4], 69
      %v6188 = vld [vmem:[%s6187] ss:$2 sm:$0xff]
      %s6189 = scalar_lea.vmem [#allocation4], 85
      %v6190 = vld [vmem:[%s6189] ss:$2 sm:$0xff]
      %s6191 = scalar_lea.vmem [#allocation4], 101
      %v6192 = vld [vmem:[%s6191] ss:$2 sm:$0xff]
      %s6193 = scalar_lea.vmem [#allocation4], 117
      %v6194 = vld [vmem:[%s6193] ss:$2 sm:$0xff]
      %s6195 = scalar_lea.vmem [#allocation4], 133
      %v6196 = vld [vmem:[%s6195] ss:$2 sm:$0xff]
      %s6197 = scalar_lea.vmem [#allocation4], 149
      %v6198 = vld [vmem:[%s6197] ss:$2 sm:$0xff]
      %s6199 = scalar_lea.vmem [#allocation4], 165
      %v6200 = vld [vmem:[%s6199] ss:$2 sm:$0xff]
      %s6201 = scalar_lea.vmem [#allocation4], 181
      %v6202 = vld [vmem:[%s6201] ss:$2 sm:$0xff]
      %s6203 = scalar_lea.vmem [#allocation4], 197
      %v6204 = vld [vmem:[%s6203] ss:$2 sm:$0xff]
      %s6205 = scalar_lea.vmem [#allocation4], 213
      %v6206 = vld [vmem:[%s6205] ss:$2 sm:$0xff]
      %s6207 = scalar_lea.vmem [#allocation4], 229
      %v6208 = vld [vmem:[%s6207] ss:$2 sm:$0xff]
      %s6209 = scalar_lea.vmem [#allocation4], 245
      %v6210 = vld [vmem:[%s6209] ss:$2 sm:$0xff]
      %s6211 = scalar_lea.vmem [#allocation4], 261
      %v6212 = vld [vmem:[%s6211] ss:$2 sm:$0x7]
      %6228 = vrot.lane.b32.xlu0 %v6184, 28
      %v6229 = vpop.permute.xlu0 %6228
      %6230 = vrot.lane.b32.xlu0 %v6186, 28
      %v6231 = vpop.permute.xlu0 %6230
      %6232 = vrot.lane.b32.xlu0 %v6188, 28
      %v6233 = vpop.permute.xlu0 %6232
      %6234 = vrot.lane.b32.xlu0 %v6190, 28
      %v6235 = vpop.permute.xlu0 %6234
      %6236 = vrot.lane.b32.xlu0 %v6192, 28
      %v6237 = vpop.permute.xlu0 %6236
      %6238 = vrot.lane.b32.xlu0 %v6194, 28
      %v6239 = vpop.permute.xlu0 %6238
      %6240 = vrot.lane.b32.xlu0 %v6196, 28
      %v6241 = vpop.permute.xlu0 %6240
      %6242 = vrot.lane.b32.xlu0 %v6198, 28
      %v6243 = vpop.permute.xlu0 %6242
      %6244 = vrot.lane.b32.xlu0 %v6200, 28
      %v6245 = vpop.permute.xlu0 %6244
      %6246 = vrot.lane.b32.xlu0 %v6202, 28
      %v6247 = vpop.permute.xlu0 %6246
      %6248 = vrot.lane.b32.xlu0 %v6204, 28
      %v6249 = vpop.permute.xlu0 %6248
      %6250 = vrot.lane.b32.xlu0 %v6206, 28
      %v6251 = vpop.permute.xlu0 %6250
      %6252 = vrot.lane.b32.xlu0 %v6208, 28
      %v6253 = vpop.permute.xlu0 %6252
      %6254 = vrot.lane.b32.xlu0 %v6210, 28
      %v6255 = vpop.permute.xlu0 %6254
      %6256 = vrot.lane.b32.xlu0 %v6212, 28
      %v6257 = vpop.permute.xlu0 %6256
      %6273 = vst.msk [vmem:[#allocation3] sm:$0xff] %vm2082, %v6229
      %6274 = vst.msk [vmem:[#allocation3 + $0x10] sm:$0xff] %vm2082, %v6231
      %6275 = vst.msk [vmem:[#allocation3 + $0x20] sm:$0xff] %vm2082, %v6233
      %6276 = vst.msk [vmem:[#allocation3 + $0x30] sm:$0xff] %vm2082, %v6235
      %6277 = vst.msk [vmem:[#allocation3 + $0x40] sm:$0xff] %vm2082, %v6237
      %6278 = vst.msk [vmem:[#allocation3 + $0x50] sm:$0xff] %vm2082, %v6239
      %6279 = vst.msk [vmem:[#allocation3 + $0x60] sm:$0xff] %vm2082, %v6241
      %6280 = vst.msk [vmem:[#allocation3 + $0x70] sm:$0xff] %vm2082, %v6243
      %6281 = vst.msk [vmem:[#allocation3 + $0x80] sm:$0xff] %vm2082, %v6245
      %6282 = vst.msk [vmem:[#allocation3 + $0x90] sm:$0xff] %vm2082, %v6247
      %6283 = vst.msk [vmem:[#allocation3 + $0xa0] sm:$0xff] %vm2082, %v6249
      %6284 = vst.msk [vmem:[#allocation3 + $0xb0] sm:$0xff] %vm2082, %v6251
      %6285 = vst.msk [vmem:[#allocation3 + $0xc0] sm:$0xff] %vm2082, %v6253
      %6286 = vst.msk [vmem:[#allocation3 + $0xd0] sm:$0xff] %vm2082, %v6255
      %vm6287 = vcmask 256224
      %6288 = vst.msk [vmem:[#allocation3 + $0xe0] sm:$0x7] %vm6287, %v6257
      %s6289 = scalar_lea.vmem [#allocation4], 38
      %v6290 = vld [vmem:[%s6289] ss:$2 sm:$0xff]
      %s6291 = scalar_lea.vmem [#allocation4], 54
      %v6292 = vld [vmem:[%s6291] ss:$2 sm:$0xff]
      %s6293 = scalar_lea.vmem [#allocation4], 70
      %v6294 = vld [vmem:[%s6293] ss:$2 sm:$0xff]
      %s6295 = scalar_lea.vmem [#allocation4], 86
      %v6296 = vld [vmem:[%s6295] ss:$2 sm:$0xff]
      %s6297 = scalar_lea.vmem [#allocation4], 102
      %v6298 = vld [vmem:[%s6297] ss:$2 sm:$0xff]
      %s6299 = scalar_lea.vmem [#allocation4], 118
      %v6300 = vld [vmem:[%s6299] ss:$2 sm:$0xff]
      %s6301 = scalar_lea.vmem [#allocation4], 134
      %v6302 = vld [vmem:[%s6301] ss:$2 sm:$0xff]
      %s6303 = scalar_lea.vmem [#allocation4], 150
      %v6304 = vld [vmem:[%s6303] ss:$2 sm:$0xff]
      %s6305 = scalar_lea.vmem [#allocation4], 166
      %v6306 = vld [vmem:[%s6305] ss:$2 sm:$0xff]
      %s6307 = scalar_lea.vmem [#allocation4], 182
      %v6308 = vld [vmem:[%s6307] ss:$2 sm:$0xff]
      %s6309 = scalar_lea.vmem [#allocation4], 198
      %v6310 = vld [vmem:[%s6309] ss:$2 sm:$0xff]
      %s6311 = scalar_lea.vmem [#allocation4], 214
      %v6312 = vld [vmem:[%s6311] ss:$2 sm:$0xff]
      %s6313 = scalar_lea.vmem [#allocation4], 230
      %v6314 = vld [vmem:[%s6313] ss:$2 sm:$0xff]
      %s6315 = scalar_lea.vmem [#allocation4], 246
      %v6316 = vld [vmem:[%s6315] ss:$2 sm:$0xff]
      %s6317 = scalar_lea.vmem [#allocation4], 262
      %v6318 = vld [vmem:[%s6317] ss:$2 sm:$0x7]
      %6334 = vrot.lane.b32.xlu0 %v6290, 32
      %v6335 = vpop.permute.xlu0 %6334
      %6336 = vrot.lane.b32.xlu0 %v6292, 32
      %v6337 = vpop.permute.xlu0 %6336
      %6338 = vrot.lane.b32.xlu0 %v6294, 32
      %v6339 = vpop.permute.xlu0 %6338
      %6340 = vrot.lane.b32.xlu0 %v6296, 32
      %v6341 = vpop.permute.xlu0 %6340
      %6342 = vrot.lane.b32.xlu0 %v6298, 32
      %v6343 = vpop.permute.xlu0 %6342
      %6344 = vrot.lane.b32.xlu0 %v6300, 32
      %v6345 = vpop.permute.xlu0 %6344
      %6346 = vrot.lane.b32.xlu0 %v6302, 32
      %v6347 = vpop.permute.xlu0 %6346
      %6348 = vrot.lane.b32.xlu0 %v6304, 32
      %v6349 = vpop.permute.xlu0 %6348
      %6350 = vrot.lane.b32.xlu0 %v6306, 32
      %v6351 = vpop.permute.xlu0 %6350
      %6352 = vrot.lane.b32.xlu0 %v6308, 32
      %v6353 = vpop.permute.xlu0 %6352
      %6354 = vrot.lane.b32.xlu0 %v6310, 32
      %v6355 = vpop.permute.xlu0 %6354
      %6356 = vrot.lane.b32.xlu0 %v6312, 32
      %v6357 = vpop.permute.xlu0 %6356
      %6358 = vrot.lane.b32.xlu0 %v6314, 32
      %v6359 = vpop.permute.xlu0 %6358
      %6360 = vrot.lane.b32.xlu0 %v6316, 32
      %v6361 = vpop.permute.xlu0 %6360
      %6362 = vrot.lane.b32.xlu0 %v6318, 32
      %v6363 = vpop.permute.xlu0 %6362
      %6379 = vst.msk [vmem:[#allocation3] sm:$0xff] %vm2300, %v6335
      %6380 = vst.msk [vmem:[#allocation3 + $0x10] sm:$0xff] %vm2300, %v6337
      %6381 = vst.msk [vmem:[#allocation3 + $0x20] sm:$0xff] %vm2300, %v6339
      %6382 = vst.msk [vmem:[#allocation3 + $0x30] sm:$0xff] %vm2300, %v6341
      %6383 = vst.msk [vmem:[#allocation3 + $0x40] sm:$0xff] %vm2300, %v6343
      %6384 = vst.msk [vmem:[#allocation3 + $0x50] sm:$0xff] %vm2300, %v6345
      %6385 = vst.msk [vmem:[#allocation3 + $0x60] sm:$0xff] %vm2300, %v6347
      %6386 = vst.msk [vmem:[#allocation3 + $0x70] sm:$0xff] %vm2300, %v6349
      %6387 = vst.msk [vmem:[#allocation3 + $0x80] sm:$0xff] %vm2300, %v6351
      %6388 = vst.msk [vmem:[#allocation3 + $0x90] sm:$0xff] %vm2300, %v6353
      %6389 = vst.msk [vmem:[#allocation3 + $0xa0] sm:$0xff] %vm2300, %v6355
      %6390 = vst.msk [vmem:[#allocation3 + $0xb0] sm:$0xff] %vm2300, %v6357
      %6391 = vst.msk [vmem:[#allocation3 + $0xc0] sm:$0xff] %vm2300, %v6359
      %6392 = vst.msk [vmem:[#allocation3 + $0xd0] sm:$0xff] %vm2300, %v6361
      %vm6393 = vcmask 289024
      %6394 = vst.msk [vmem:[#allocation3 + $0xe0] sm:$0x7] %vm6393, %v6363
      %v6395 = vld [vmem:[#allocation3] sm:$0xff]
      %v6396 = vld [vmem:[#allocation3 + $0x10] sm:$0xff]
      %v6397 = vld [vmem:[#allocation3 + $0x20] sm:$0xff]
      %v6398 = vld [vmem:[#allocation3 + $0x30] sm:$0xff]
      %v6399 = vld [vmem:[#allocation3 + $0x40] sm:$0xff]
      %v6400 = vld [vmem:[#allocation3 + $0x50] sm:$0xff]
      %v6401 = vld [vmem:[#allocation3 + $0x60] sm:$0xff]
      %v6402 = vld [vmem:[#allocation3 + $0x70] sm:$0xff]
      %v6403 = vld [vmem:[#allocation3 + $0x80] sm:$0xff]
      %v6404 = vld [vmem:[#allocation3 + $0x90] sm:$0xff]
      %v6405 = vld [vmem:[#allocation3 + $0xa0] sm:$0xff]
      %v6406 = vld [vmem:[#allocation3 + $0xb0] sm:$0xff]
      %v6407 = vld [vmem:[#allocation3 + $0xc0] sm:$0xff]
      %v6408 = vld [vmem:[#allocation3 + $0xd0] sm:$0xff]
      %v6409 = vld [vmem:[#allocation3 + $0xe0] sm:$0x7]
      %v6410 = vld [vmem:[%s6] sm:$0xff]
      %v6411 = vld [vmem:[%s6 + $0x8] sm:$0xff]
      %v6412 = vld [vmem:[%s6 + $0x10] sm:$0xff]
      %v6413 = vld [vmem:[%s6 + $0x18] sm:$0xff]
      %v6414 = vld [vmem:[%s6 + $0x20] sm:$0xf]
      %v6415 = vld [vmem:[%s7] sm:$0x1]
      %v6417 = vlaneseq
      %v6418 = vshrl.u32 %v6417, 7
      %v6419 = vsub.s32 0, %v6418
      %v6420 = vrot.slane %v6415, %v6419
      %v6423 = vsel %vm2386, %v6395, 0
      %v6426 = vsel %vm2386, %v6396, 0
      %v6429 = vsel %vm2386, %v6397, 0
      %v6432 = vsel %vm2386, %v6398, 0
      %v6435 = vsel %vm2386, %v6399, 0
      %v6438 = vsel %vm2386, %v6400, 0
      %v6441 = vsel %vm2386, %v6401, 0
      %v6444 = vsel %vm2386, %v6402, 0
      %v6447 = vsel %vm2386, %v6403, 0
      %v6450 = vsel %vm2386, %v6404, 0
      %v6453 = vsel %vm2386, %v6405, 0
      %v6456 = vsel %vm2386, %v6406, 0
      %v6459 = vsel %vm2386, %v6407, 0
      %v6462 = vsel %vm2386, %v6408, 0
      %v6465 = vsel %vm2386, %v6409, 0
      %v6468 = vsel %vm2495, %v6414, 0
      %6470 = vmatprep.subr.mxu0 0.0
      %6471 = vmatpush1.msra.mxu0 %v6410
      %6472 = vmatprep.subr.mxu0 0.0
      %6473 = vmatpush1.msra.mxu0 %v6411
      %6474 = vmatprep.subr.mxu0 0.0
      %6475 = vmatpush1.msra.mxu0 %v6412
      %6476 = vmatprep.subr.mxu0 0.0
      %6477 = vmatpush1.msra.mxu0 %v6413
      %6478 = vmatprep.subr.mxu0 0.0
      %6479 = vmatpush1.msra.mxu0 %v6468
      %6480 = vmatprep.subr.mxu0 0.0
      %6481 = vmatpush1.msra.mxu0 0.0
      %6482 = vmatprep.subr.mxu0 0.0
      %6483 = vmatpush1.msra.mxu0 0.0
      %6484 = vmatprep.subr.mxu0 0.0
      %6485 = vmatpush1.msra.mxu0 0.0
      %6486 = vmatprep.subr.mxu0 0.0
      %6487 = vmatpush1.msra.mxu0 0.0
      %6488 = vmatprep.subr.mxu0 0.0
      %6489 = vmatpush1.msra.mxu0 0.0
      %6490 = vmatprep.subr.mxu0 0.0
      %6491 = vmatpush1.msra.mxu0 0.0
      %6492 = vmatprep.subr.mxu0 0.0
      %6493 = vmatpush1.msra.mxu0 0.0
      %6494 = vmatprep.subr.mxu0 0.0
      %6495 = vmatpush1.msra.mxu0 0.0
      %6496 = vmatprep.subr.mxu0 0.0
      %6497 = vmatpush1.msra.mxu0 0.0
      %6498 = vmatprep.subr.mxu0 0.0
      %6499 = vmatpush1.msra.mxu0 0.0
      %6500 = vmatprep.subr.mxu0 0.0
      %6501 = vmatpush1.msra.mxu0 0.0
      %6502 = vmatprep.subr.mxu0 0.0
      %6503 = vmatpush1.msra.mxu0 0.0
      %6504 = vmatprep.subr.mxu0 0.0
      %6505 = vmatpush1.msra.mxu0 0.0
      %6506 = vmatprep.subr.mxu0 0.0
      %6507 = vmatpush1.msra.mxu0 0.0
      %6508 = vmatprep.subr.mxu0 0.0
      %6509 = vmatpush1.msra.mxu0 0.0
      %6510 = vmatprep.subr.mxu0 0.0
      %6511 = vmatpush1.msra.mxu0 0.0
      %6512 = vmatprep.subr.mxu0 0.0
      %6513 = vmatpush1.msra.mxu0 0.0
      %6514 = vmatprep.subr.mxu0 0.0
      %6515 = vmatpush1.msra.mxu0 0.0
      %6516 = vmatprep.subr.mxu0 0.0
      %6517 = vmatpush1.msra.mxu0 0.0
      %6518 = vmatprep.subr.mxu0 0.0
      %6519 = vmatpush1.msra.mxu0 0.0
      %6520 = vmatprep.subr.mxu0 0.0
      %6521 = vmatpush1.msra.mxu0 0.0
      %6522 = vmatprep.subr.mxu0 0.0
      %6523 = vmatpush1.msra.mxu0 0.0
      %6524 = vmatprep.subr.mxu0 0.0
      %6525 = vmatpush1.msra.mxu0 0.0
      %6526 = vmatprep.subr.mxu0 0.0
      %6527 = vmatpush1.msra.mxu0 0.0
      %6528 = vmatprep.subr.mxu0 0.0
      %6529 = vmatpush1.msra.mxu0 0.0
      %6530 = vmatprep.subr.mxu0 0.0
      %6531 = vmatpush1.msra.mxu0 0.0
      %6532 = vmatprep.subr.mxu0 0.0
      %6533 = vmatpush1.msra.mxu0 0.0
      %6534 = vmatprep.mubr.f32.mxu0 0.0
      %6535 = vmatmul.mubr.f32.gmra.mrb[0].mxu0 %v6423
      %v6536 = vpop.f32.mrb[0].mxu0
      %v6537 = vadd.f32 %v6420, %v6536
      %v6538 = vpop.f32.mrb[0].mxu0
      %6539 = vmatprep.mubr.f32.mxu0 0.0
      %6540 = vmatmul.mubr.f32.gmra.mrb[0].mxu0 %v6426
      %v6541 = vpop.f32.mrb[0].mxu0
      %v6542 = vadd.f32 %v6420, %v6541
      %v6543 = vpop.f32.mrb[0].mxu0
      %6544 = vmatprep.mubr.f32.mxu0 0.0
      %6545 = vmatmul.mubr.f32.gmra.mrb[0].mxu0 %v6429
      %v6546 = vpop.f32.mrb[0].mxu0
      %v6547 = vadd.f32 %v6420, %v6546
      %v6548 = vpop.f32.mrb[0].mxu0
      %6549 = vmatprep.mubr.f32.mxu0 0.0
      %6550 = vmatmul.mubr.f32.gmra.mrb[0].mxu0 %v6432
      %v6551 = vpop.f32.mrb[0].mxu0
      %v6552 = vadd.f32 %v6420, %v6551
      %v6553 = vpop.f32.mrb[0].mxu0
      %6554 = vmatprep.mubr.f32.mxu0 0.0
      %6555 = vmatmul.mubr.f32.gmra.mrb[0].mxu0 %v6435
      %v6556 = vpop.f32.mrb[0].mxu0
      %v6557 = vadd.f32 %v6420, %v6556
      %v6558 = vpop.f32.mrb[0].mxu0
      %6559 = vmatprep.mubr.f32.mxu0 0.0
      %6560 = vmatmul.mubr.f32.gmra.mrb[0].mxu0 %v6438
      %v6561 = vpop.f32.mrb[0].mxu0
      %v6562 = vadd.f32 %v6420, %v6561
      %v6563 = vpop.f32.mrb[0].mxu0
      %6564 = vmatprep.mubr.f32.mxu0 0.0
      %6565 = vmatmul.mubr.f32.gmra.mrb[0].mxu0 %v6441
      %v6566 = vpop.f32.mrb[0].mxu0
      %v6567 = vadd.f32 %v6420, %v6566
      %v6568 = vpop.f32.mrb[0].mxu0
      %6569 = vmatprep.mubr.f32.mxu0 0.0
      %6570 = vmatmul.mubr.f32.gmra.mrb[0].mxu0 %v6444
      %v6571 = vpop.f32.mrb[0].mxu0
      %v6572 = vadd.f32 %v6420, %v6571
      %v6573 = vpop.f32.mrb[0].mxu0
      %6574 = vmatprep.mubr.f32.mxu0 0.0
      %6575 = vmatmul.mubr.f32.gmra.mrb[0].mxu0 %v6447
      %v6576 = vpop.f32.mrb[0].mxu0
      %v6577 = vadd.f32 %v6420, %v6576
      %v6578 = vpop.f32.mrb[0].mxu0
      %6579 = vmatprep.mubr.f32.mxu0 0.0
      %6580 = vmatmul.mubr.f32.gmra.mrb[0].mxu0 %v6450
      %v6581 = vpop.f32.mrb[0].mxu0
      %v6582 = vadd.f32 %v6420, %v6581
      %v6583 = vpop.f32.mrb[0].mxu0
      %6584 = vmatprep.mubr.f32.mxu0 0.0
      %6585 = vmatmul.mubr.f32.gmra.mrb[0].mxu0 %v6453
      %v6586 = vpop.f32.mrb[0].mxu0
      %v6587 = vadd.f32 %v6420, %v6586
      %v6588 = vpop.f32.mrb[0].mxu0
      %6589 = vmatprep.mubr.f32.mxu0 0.0
      %6590 = vmatmul.mubr.f32.gmra.mrb[0].mxu0 %v6456
      %v6591 = vpop.f32.mrb[0].mxu0
      %v6592 = vadd.f32 %v6420, %v6591
      %v6593 = vpop.f32.mrb[0].mxu0
      %6594 = vmatprep.mubr.f32.mxu0 0.0
      %6595 = vmatmul.mubr.f32.gmra.mrb[0].mxu0 %v6459
      %v6596 = vpop.f32.mrb[0].mxu0
      %v6597 = vadd.f32 %v6420, %v6596
      %v6598 = vpop.f32.mrb[0].mxu0
      %6599 = vmatprep.mubr.f32.mxu0 0.0
      %6600 = vmatmul.mubr.f32.gmra.mrb[0].mxu0 %v6462
      %v6601 = vpop.f32.mrb[0].mxu0
      %v6602 = vadd.f32 %v6420, %v6601
      %v6603 = vpop.f32.mrb[0].mxu0
      %6604 = vmatprep.mubr.f32.mxu0 0.0
      %6605 = vmatmul.mubr.f32.gmra.mrb[0].mxu0 %v6465
      %v6606 = vpop.f32.mrb[0].mxu0
      %v6607 = vadd.f32 %v6420, %v6606
      %v6608 = vpop.f32.mrb[0].mxu0
      %6609 = vdwg.mxu0
      %vm6610 = vcmp.ge.f32.partialorder %v6537, 0.0
      %vm6611 = vcmp.ge.f32.partialorder %v6542, 0.0
      %vm6612 = vcmp.ge.f32.partialorder %v6547, 0.0
      %vm6613 = vcmp.ge.f32.partialorder %v6552, 0.0
      %vm6614 = vcmp.ge.f32.partialorder %v6557, 0.0
      %vm6615 = vcmp.ge.f32.partialorder %v6562, 0.0
      %vm6616 = vcmp.ge.f32.partialorder %v6567, 0.0
      %vm6617 = vcmp.ge.f32.partialorder %v6572, 0.0
      %vm6618 = vcmp.ge.f32.partialorder %v6577, 0.0
      %vm6619 = vcmp.ge.f32.partialorder %v6582, 0.0
      %vm6620 = vcmp.ge.f32.partialorder %v6587, 0.0
      %vm6621 = vcmp.ge.f32.partialorder %v6592, 0.0
      %vm6622 = vcmp.ge.f32.partialorder %v6597, 0.0
      %vm6623 = vcmp.ge.f32.partialorder %v6602, 0.0
      %vm6624 = vcmp.ge.f32.partialorder %v6607, 0.0
      %v6625 = vmul.f32 %v6537, 0.01
      %v6626 = vmul.f32 %v6542, 0.01
      %v6627 = vmul.f32 %v6547, 0.01
      %v6628 = vmul.f32 %v6552, 0.01
      %v6629 = vmul.f32 %v6557, 0.01
      %v6630 = vmul.f32 %v6562, 0.01
      %v6631 = vmul.f32 %v6567, 0.01
      %v6632 = vmul.f32 %v6572, 0.01
      %v6633 = vmul.f32 %v6577, 0.01
      %v6634 = vmul.f32 %v6582, 0.01
      %v6635 = vmul.f32 %v6587, 0.01
      %v6636 = vmul.f32 %v6592, 0.01
      %v6637 = vmul.f32 %v6597, 0.01
      %v6638 = vmul.f32 %v6602, 0.01
      %v6639 = vmul.f32 %v6607, 0.01
      %v6640 = vsel %vm6610, %v6537, %v6625
      %v6641 = vsel %vm6611, %v6542, %v6626
      %v6642 = vsel %vm6612, %v6547, %v6627
      %v6643 = vsel %vm6613, %v6552, %v6628
      %v6644 = vsel %vm6614, %v6557, %v6629
      %v6645 = vsel %vm6615, %v6562, %v6630
      %v6646 = vsel %vm6616, %v6567, %v6631
      %v6647 = vsel %vm6617, %v6572, %v6632
      %v6648 = vsel %vm6618, %v6577, %v6633
      %v6649 = vsel %vm6619, %v6582, %v6634
      %v6650 = vsel %vm6620, %v6587, %v6635
      %v6651 = vsel %vm6621, %v6592, %v6636
      %v6652 = vsel %vm6622, %v6597, %v6637
      %v6653 = vsel %vm6623, %v6602, %v6638
      %v6654 = vsel %vm6624, %v6607, %v6639
      %v6655 = vld [vmem:[%s8] sm:$0xff]
      %v6656 = vld [vmem:[%s8 + $0x8] sm:$0xff]
      %v6657 = vld [vmem:[%s8 + $0x10] sm:$0xff]
      %v6658 = vld [vmem:[%s8 + $0x18] sm:$0xff]
      %v6659 = vld [vmem:[%s8 + $0x20] sm:$0xff]
      %v6660 = vld [vmem:[%s8 + $0x28] sm:$0xff]
      %v6661 = vld [vmem:[%s8 + $0x30] sm:$0xff]
      %v6662 = vld [vmem:[%s8 + $0x38] sm:$0xff]
      %v6663 = vld [vmem:[%s8 + $0x40] sm:$0xff]
      %v6664 = vld [vmem:[%s8 + $0x48] sm:$0xff]
      %v6665 = vld [vmem:[%s8 + $0x50] sm:$0xff]
      %v6666 = vld [vmem:[%s8 + $0x58] sm:$0xff]
      %v6667 = vld [vmem:[%s8 + $0x60] sm:$0xff]
      %v6668 = vld [vmem:[%s8 + $0x68] sm:$0xff]
      %v6669 = vld [vmem:[%s8 + $0x70] sm:$0x7]
      %6671 = vset.pattern.permute.xlu0 0
      %6672 = vperm.xlu0 %6671, %v6655
      %v6673 = vpop.permute.xlu0 %6672
      %6676 = vset.pattern.permute.xlu0 0
      %6677 = vperm.xlu0 %6676, %v6656
      %v6678 = vpop.permute.xlu0 %6677
      %6681 = vset.pattern.permute.xlu0 0
      %6682 = vperm.xlu0 %6681, %v6657
      %v6683 = vpop.permute.xlu0 %6682
      %6686 = vset.pattern.permute.xlu0 0
      %6687 = vperm.xlu0 %6686, %v6658
      %v6688 = vpop.permute.xlu0 %6687
      %6691 = vset.pattern.permute.xlu0 0
      %6692 = vperm.xlu0 %6691, %v6659
      %v6693 = vpop.permute.xlu0 %6692
      %6696 = vset.pattern.permute.xlu0 0
      %6697 = vperm.xlu0 %6696, %v6660
      %v6698 = vpop.permute.xlu0 %6697
      %6701 = vset.pattern.permute.xlu0 0
      %6702 = vperm.xlu0 %6701, %v6661
      %v6703 = vpop.permute.xlu0 %6702
      %6706 = vset.pattern.permute.xlu0 0
      %6707 = vperm.xlu0 %6706, %v6662
      %v6708 = vpop.permute.xlu0 %6707
      %6711 = vset.pattern.permute.xlu0 0
      %6712 = vperm.xlu0 %6711, %v6663
      %v6713 = vpop.permute.xlu0 %6712
      %6716 = vset.pattern.permute.xlu0 0
      %6717 = vperm.xlu0 %6716, %v6664
      %v6718 = vpop.permute.xlu0 %6717
      %6721 = vset.pattern.permute.xlu0 0
      %6722 = vperm.xlu0 %6721, %v6665
      %v6723 = vpop.permute.xlu0 %6722
      %6726 = vset.pattern.permute.xlu0 0
      %6727 = vperm.xlu0 %6726, %v6666
      %v6728 = vpop.permute.xlu0 %6727
      %6731 = vset.pattern.permute.xlu0 0
      %6732 = vperm.xlu0 %6731, %v6667
      %v6733 = vpop.permute.xlu0 %6732
      %6736 = vset.pattern.permute.xlu0 0
      %6737 = vperm.xlu0 %6736, %v6668
      %v6738 = vpop.permute.xlu0 %6737
      %6741 = vset.pattern.permute.xlu0 0
      %6742 = vperm.xlu0 %6741, %v6669
      %v6743 = vpop.permute.xlu0 %6742
      %v6745 = vmul.f32 %v6640, %v6673
      %v6746 = vmul.f32 %v6641, %v6678
      %v6747 = vmul.f32 %v6642, %v6683
      %v6748 = vmul.f32 %v6643, %v6688
      %v6749 = vmul.f32 %v6644, %v6693
      %v6750 = vmul.f32 %v6645, %v6698
      %v6751 = vmul.f32 %v6646, %v6703
      %v6752 = vmul.f32 %v6647, %v6708
      %v6753 = vmul.f32 %v6648, %v6713
      %v6754 = vmul.f32 %v6649, %v6718
      %v6755 = vmul.f32 %v6650, %v6723
      %v6756 = vmul.f32 %v6651, %v6728
      %v6757 = vmul.f32 %v6652, %v6733
      %v6758 = vmul.f32 %v6653, %v6738
      %v6759 = vmul.f32 %v6654, %v6743
      %vm6760 = vcmask 64512
      %6761 = vst.msk [vmem:[%s519] sm:$0xff] %vm6760, %v6745
      %6762 = vst.msk [vmem:[%s519 + $0x8] sm:$0xff] %vm6760, %v6746
      %6763 = vst.msk [vmem:[%s519 + $0x10] sm:$0xff] %vm6760, %v6747
      %6764 = vst.msk [vmem:[%s519 + $0x18] sm:$0xff] %vm6760, %v6748
      %6765 = vst.msk [vmem:[%s519 + $0x20] sm:$0xff] %vm6760, %v6749
      %6766 = vst.msk [vmem:[%s519 + $0x28] sm:$0xff] %vm6760, %v6750
      %6767 = vst.msk [vmem:[%s519 + $0x30] sm:$0xff] %vm6760, %v6751
      %6768 = vst.msk [vmem:[%s519 + $0x38] sm:$0xff] %vm6760, %v6752
      %6769 = vst.msk [vmem:[%s519 + $0x40] sm:$0xff] %vm6760, %v6753
      %6770 = vst.msk [vmem:[%s519 + $0x48] sm:$0xff] %vm6760, %v6754
      %6771 = vst.msk [vmem:[%s519 + $0x50] sm:$0xff] %vm6760, %v6755
      %6772 = vst.msk [vmem:[%s519 + $0x58] sm:$0xff] %vm6760, %v6756
      %6773 = vst.msk [vmem:[%s519 + $0x60] sm:$0xff] %vm6760, %v6757
      %6774 = vst.msk [vmem:[%s519 + $0x68] sm:$0xff] %vm6760, %v6758
      %vm6775 = vcmask 59392
      %6776 = vst.msk [vmem:[%s519 + $0x70] sm:$0x7] %vm6775, %v6759
      %6777 = vst.msk [vmem:[#allocation2] sm:$0xff] %vm6760, 0.0
      %6778 = vst.msk [vmem:[#allocation2 + $0x8] sm:$0xff] %vm6760, 0.0
      %6779 = vst.msk [vmem:[#allocation2 + $0x10] sm:$0x7] %vm6775, 0.0
      %6780 = vst.msk [vmem:[#allocation2 + $0x13] sm:$0xff] %vm6760, %v6745
      %6781 = vst.msk [vmem:[#allocation2 + $0x1b] sm:$0xff] %vm6760, %v6746
      %6782 = vst.msk [vmem:[#allocation2 + $0x23] sm:$0xff] %vm6760, %v6747
      %6783 = vst.msk [vmem:[#allocation2 + $0x2b] sm:$0xff] %vm6760, %v6748
      %6784 = vst.msk [vmem:[#allocation2 + $0x33] sm:$0xff] %vm6760, %v6749
      %6785 = vst.msk [vmem:[#allocation2 + $0x3b] sm:$0xff] %vm6760, %v6750
      %6786 = vst.msk [vmem:[#allocation2 + $0x43] sm:$0xff] %vm6760, %v6751
      %6787 = vst.msk [vmem:[#allocation2 + $0x4b] sm:$0xff] %vm6760, %v6752
      %6788 = vst.msk [vmem:[#allocation2 + $0x53] sm:$0xff] %vm6760, %v6753
      %6789 = vst.msk [vmem:[#allocation2 + $0x5b] sm:$0xff] %vm6760, %v6754
      %6790 = vst.msk [vmem:[#allocation2 + $0x63] sm:$0xff] %vm6760, %v6755
      %6791 = vst.msk [vmem:[#allocation2 + $0x6b] sm:$0xff] %vm6760, %v6756
      %6792 = vst.msk [vmem:[#allocation2 + $0x73] sm:$0xff] %vm6760, %v6757
      %6793 = vst.msk [vmem:[#allocation2 + $0x7b] sm:$0xff] %vm6760, %v6758
      %6794 = vst.msk [vmem:[#allocation2 + $0x83] sm:$0x7] %vm6775, %v6759
      %6795 = vst.msk [vmem:[#allocation2 + $0x86] sm:$0xff] %vm6760, 0.0
      %6796 = vst.msk [vmem:[#allocation2 + $0x8e] sm:$0xff] %vm6760, 0.0
      %6797 = vst.msk [vmem:[#allocation2 + $0x96] sm:$0x7] %vm6775, 0.0
      %v6798 = vld [vmem:[#allocation2] sm:$0xff]
      %v6799 = vld [vmem:[#allocation2 + $0x8] sm:$0xff]
      %v6800 = vld [vmem:[#allocation2 + $0x10] sm:$0xff]
      %v6801 = vld [vmem:[#allocation2 + $0x18] sm:$0xff]
      %v6802 = vld [vmem:[#allocation2 + $0x20] sm:$0xff]
      %v6803 = vld [vmem:[#allocation2 + $0x28] sm:$0xff]
      %v6804 = vld [vmem:[#allocation2 + $0x30] sm:$0xff]
      %v6805 = vld [vmem:[#allocation2 + $0x38] sm:$0xff]
      %v6806 = vld [vmem:[#allocation2 + $0x40] sm:$0xff]
      %v6807 = vld [vmem:[#allocation2 + $0x48] sm:$0xff]
      %v6808 = vld [vmem:[#allocation2 + $0x50] sm:$0xff]
      %v6809 = vld [vmem:[#allocation2 + $0x58] sm:$0xff]
      %v6810 = vld [vmem:[#allocation2 + $0x60] sm:$0xff]
      %v6811 = vld [vmem:[#allocation2 + $0x68] sm:$0xff]
      %v6812 = vld [vmem:[#allocation2 + $0x70] sm:$0x7]
      %6813 = vst.msk [vmem:[#allocation3] sm:$0xff] %vm6760, %v6798
      %6814 = vst.msk [vmem:[#allocation3 + $0x10] sm:$0xff] %vm6760, %v6799
      %6815 = vst.msk [vmem:[#allocation3 + $0x20] sm:$0xff] %vm6760, %v6800
      %6816 = vst.msk [vmem:[#allocation3 + $0x30] sm:$0xff] %vm6760, %v6801
      %6817 = vst.msk [vmem:[#allocation3 + $0x40] sm:$0xff] %vm6760, %v6802
      %6818 = vst.msk [vmem:[#allocation3 + $0x50] sm:$0xff] %vm6760, %v6803
      %6819 = vst.msk [vmem:[#allocation3 + $0x60] sm:$0xff] %vm6760, %v6804
      %6820 = vst.msk [vmem:[#allocation3 + $0x70] sm:$0xff] %vm6760, %v6805
      %6821 = vst.msk [vmem:[#allocation3 + $0x80] sm:$0xff] %vm6760, %v6806
      %6822 = vst.msk [vmem:[#allocation3 + $0x90] sm:$0xff] %vm6760, %v6807
      %6823 = vst.msk [vmem:[#allocation3 + $0xa0] sm:$0xff] %vm6760, %v6808
      %6824 = vst.msk [vmem:[#allocation3 + $0xb0] sm:$0xff] %vm6760, %v6809
      %6825 = vst.msk [vmem:[#allocation3 + $0xc0] sm:$0xff] %vm6760, %v6810
      %6826 = vst.msk [vmem:[#allocation3 + $0xd0] sm:$0xff] %vm6760, %v6811
      %6827 = vst.msk [vmem:[#allocation3 + $0xe0] sm:$0x7] %vm6775, %v6812
      %v6828 = vld [vmem:[#allocation2 + $0x1] sm:$0xff]
      %v6829 = vld [vmem:[#allocation2 + $0x9] sm:$0xff]
      %v6830 = vld [vmem:[#allocation2 + $0x11] sm:$0xff]
      %v6831 = vld [vmem:[#allocation2 + $0x19] sm:$0xff]
      %v6832 = vld [vmem:[#allocation2 + $0x21] sm:$0xff]
      %v6833 = vld [vmem:[#allocation2 + $0x29] sm:$0xff]
      %v6834 = vld [vmem:[#allocation2 + $0x31] sm:$0xff]
      %v6835 = vld [vmem:[#allocation2 + $0x39] sm:$0xff]
      %v6836 = vld [vmem:[#allocation2 + $0x41] sm:$0xff]
      %v6837 = vld [vmem:[#allocation2 + $0x49] sm:$0xff]
      %v6838 = vld [vmem:[#allocation2 + $0x51] sm:$0xff]
      %v6839 = vld [vmem:[#allocation2 + $0x59] sm:$0xff]
      %v6840 = vld [vmem:[#allocation2 + $0x61] sm:$0xff]
      %v6841 = vld [vmem:[#allocation2 + $0x69] sm:$0xff]
      %v6842 = vld [vmem:[#allocation2 + $0x71] sm:$0x7]
      %6858 = vrot.lane.b32.xlu0 %v6828, 8
      %v6859 = vpop.permute.xlu0 %6858
      %6860 = vrot.lane.b32.xlu0 %v6829, 8
      %v6861 = vpop.permute.xlu0 %6860
      %6862 = vrot.lane.b32.xlu0 %v6830, 8
      %v6863 = vpop.permute.xlu0 %6862
      %6864 = vrot.lane.b32.xlu0 %v6831, 8
      %v6865 = vpop.permute.xlu0 %6864
      %6866 = vrot.lane.b32.xlu0 %v6832, 8
      %v6867 = vpop.permute.xlu0 %6866
      %6868 = vrot.lane.b32.xlu0 %v6833, 8
      %v6869 = vpop.permute.xlu0 %6868
      %6870 = vrot.lane.b32.xlu0 %v6834, 8
      %v6871 = vpop.permute.xlu0 %6870
      %6872 = vrot.lane.b32.xlu0 %v6835, 8
      %v6873 = vpop.permute.xlu0 %6872
      %6874 = vrot.lane.b32.xlu0 %v6836, 8
      %v6875 = vpop.permute.xlu0 %6874
      %6876 = vrot.lane.b32.xlu0 %v6837, 8
      %v6877 = vpop.permute.xlu0 %6876
      %6878 = vrot.lane.b32.xlu0 %v6838, 8
      %v6879 = vpop.permute.xlu0 %6878
      %6880 = vrot.lane.b32.xlu0 %v6839, 8
      %v6881 = vpop.permute.xlu0 %6880
      %6882 = vrot.lane.b32.xlu0 %v6840, 8
      %v6883 = vpop.permute.xlu0 %6882
      %6884 = vrot.lane.b32.xlu0 %v6841, 8
      %v6885 = vpop.permute.xlu0 %6884
      %6886 = vrot.lane.b32.xlu0 %v6842, 8
      %v6887 = vpop.permute.xlu0 %6886
      %vm6903 = vcmask 130112
      %6904 = vst.msk [vmem:[#allocation3] sm:$0xff] %vm6903, %v6859
      %6905 = vst.msk [vmem:[#allocation3 + $0x10] sm:$0xff] %vm6903, %v6861
      %6906 = vst.msk [vmem:[#allocation3 + $0x20] sm:$0xff] %vm6903, %v6863
      %6907 = vst.msk [vmem:[#allocation3 + $0x30] sm:$0xff] %vm6903, %v6865
      %6908 = vst.msk [vmem:[#allocation3 + $0x40] sm:$0xff] %vm6903, %v6867
      %6909 = vst.msk [vmem:[#allocation3 + $0x50] sm:$0xff] %vm6903, %v6869
      %6910 = vst.msk [vmem:[#allocation3 + $0x60] sm:$0xff] %vm6903, %v6871
      %6911 = vst.msk [vmem:[#allocation3 + $0x70] sm:$0xff] %vm6903, %v6873
      %6912 = vst.msk [vmem:[#allocation3 + $0x80] sm:$0xff] %vm6903, %v6875
      %6913 = vst.msk [vmem:[#allocation3 + $0x90] sm:$0xff] %vm6903, %v6877
      %6914 = vst.msk [vmem:[#allocation3 + $0xa0] sm:$0xff] %vm6903, %v6879
      %6915 = vst.msk [vmem:[#allocation3 + $0xb0] sm:$0xff] %vm6903, %v6881
      %6916 = vst.msk [vmem:[#allocation3 + $0xc0] sm:$0xff] %vm6903, %v6883
      %6917 = vst.msk [vmem:[#allocation3 + $0xd0] sm:$0xff] %vm6903, %v6885
      %vm6918 = vcmask 124992
      %6919 = vst.msk [vmem:[#allocation3 + $0xe0] sm:$0x7] %vm6918, %v6887
      %v6920 = vld [vmem:[#allocation2 + $0x2] sm:$0xff]
      %v6921 = vld [vmem:[#allocation2 + $0xa] sm:$0xff]
      %v6922 = vld [vmem:[#allocation2 + $0x12] sm:$0xff]
      %v6923 = vld [vmem:[#allocation2 + $0x1a] sm:$0xff]
      %v6924 = vld [vmem:[#allocation2 + $0x22] sm:$0xff]
      %v6925 = vld [vmem:[#allocation2 + $0x2a] sm:$0xff]
      %v6926 = vld [vmem:[#allocation2 + $0x32] sm:$0xff]
      %v6927 = vld [vmem:[#allocation2 + $0x3a] sm:$0xff]
      %v6928 = vld [vmem:[#allocation2 + $0x42] sm:$0xff]
      %v6929 = vld [vmem:[#allocation2 + $0x4a] sm:$0xff]
      %v6930 = vld [vmem:[#allocation2 + $0x52] sm:$0xff]
      %v6931 = vld [vmem:[#allocation2 + $0x5a] sm:$0xff]
      %v6932 = vld [vmem:[#allocation2 + $0x62] sm:$0xff]
      %v6933 = vld [vmem:[#allocation2 + $0x6a] sm:$0xff]
      %v6934 = vld [vmem:[#allocation2 + $0x72] sm:$0x7]
      %6950 = vrot.lane.b32.xlu0 %v6920, 16
      %v6951 = vpop.permute.xlu0 %6950
      %6952 = vrot.lane.b32.xlu0 %v6921, 16
      %v6953 = vpop.permute.xlu0 %6952
      %6954 = vrot.lane.b32.xlu0 %v6922, 16
      %v6955 = vpop.permute.xlu0 %6954
      %6956 = vrot.lane.b32.xlu0 %v6923, 16
      %v6957 = vpop.permute.xlu0 %6956
      %6958 = vrot.lane.b32.xlu0 %v6924, 16
      %v6959 = vpop.permute.xlu0 %6958
      %6960 = vrot.lane.b32.xlu0 %v6925, 16
      %v6961 = vpop.permute.xlu0 %6960
      %6962 = vrot.lane.b32.xlu0 %v6926, 16
      %v6963 = vpop.permute.xlu0 %6962
      %6964 = vrot.lane.b32.xlu0 %v6927, 16
      %v6965 = vpop.permute.xlu0 %6964
      %6966 = vrot.lane.b32.xlu0 %v6928, 16
      %v6967 = vpop.permute.xlu0 %6966
      %6968 = vrot.lane.b32.xlu0 %v6929, 16
      %v6969 = vpop.permute.xlu0 %6968
      %6970 = vrot.lane.b32.xlu0 %v6930, 16
      %v6971 = vpop.permute.xlu0 %6970
      %6972 = vrot.lane.b32.xlu0 %v6931, 16
      %v6973 = vpop.permute.xlu0 %6972
      %6974 = vrot.lane.b32.xlu0 %v6932, 16
      %v6975 = vpop.permute.xlu0 %6974
      %6976 = vrot.lane.b32.xlu0 %v6933, 16
      %v6977 = vpop.permute.xlu0 %6976
      %6978 = vrot.lane.b32.xlu0 %v6934, 16
      %v6979 = vpop.permute.xlu0 %6978
      %vm6995 = vcmask 195712
      %6996 = vst.msk [vmem:[#allocation3] sm:$0xff] %vm6995, %v6951
      %6997 = vst.msk [vmem:[#allocation3 + $0x10] sm:$0xff] %vm6995, %v6953
      %6998 = vst.msk [vmem:[#allocation3 + $0x20] sm:$0xff] %vm6995, %v6955
      %6999 = vst.msk [vmem:[#allocation3 + $0x30] sm:$0xff] %vm6995, %v6957
      %7000 = vst.msk [vmem:[#allocation3 + $0x40] sm:$0xff] %vm6995, %v6959
      %7001 = vst.msk [vmem:[#allocation3 + $0x50] sm:$0xff] %vm6995, %v6961
      %7002 = vst.msk [vmem:[#allocation3 + $0x60] sm:$0xff] %vm6995, %v6963
      %7003 = vst.msk [vmem:[#allocation3 + $0x70] sm:$0xff] %vm6995, %v6965
      %7004 = vst.msk [vmem:[#allocation3 + $0x80] sm:$0xff] %vm6995, %v6967
      %7005 = vst.msk [vmem:[#allocation3 + $0x90] sm:$0xff] %vm6995, %v6969
      %7006 = vst.msk [vmem:[#allocation3 + $0xa0] sm:$0xff] %vm6995, %v6971
      %7007 = vst.msk [vmem:[#allocation3 + $0xb0] sm:$0xff] %vm6995, %v6973
      %7008 = vst.msk [vmem:[#allocation3 + $0xc0] sm:$0xff] %vm6995, %v6975
      %7009 = vst.msk [vmem:[#allocation3 + $0xd0] sm:$0xff] %vm6995, %v6977
      %vm7010 = vcmask 190592
      %7011 = vst.msk [vmem:[#allocation3 + $0xe0] sm:$0x7] %vm7010, %v6979
      %v7012 = vld [vmem:[#allocation2 + $0x12] sm:$0xff]
      %v7013 = vld [vmem:[#allocation2 + $0x1a] sm:$0xff]
      %v7014 = vld [vmem:[#allocation2 + $0x22] sm:$0xff]
      %v7015 = vld [vmem:[#allocation2 + $0x2a] sm:$0xff]
      %v7016 = vld [vmem:[#allocation2 + $0x32] sm:$0xff]
      %v7017 = vld [vmem:[#allocation2 + $0x3a] sm:$0xff]
      %v7018 = vld [vmem:[#allocation2 + $0x42] sm:$0xff]
      %v7019 = vld [vmem:[#allocation2 + $0x4a] sm:$0xff]
      %v7020 = vld [vmem:[#allocation2 + $0x52] sm:$0xff]
      %v7021 = vld [vmem:[#allocation2 + $0x5a] sm:$0xff]
      %v7022 = vld [vmem:[#allocation2 + $0x62] sm:$0xff]
      %v7023 = vld [vmem:[#allocation2 + $0x6a] sm:$0xff]
      %v7024 = vld [vmem:[#allocation2 + $0x72] sm:$0xff]
      %v7025 = vld [vmem:[#allocation2 + $0x7a] sm:$0xff]
      %v7026 = vld [vmem:[#allocation2 + $0x82] sm:$0x7]
      %7042 = vrot.lane.b32.xlu0 %v7012, 24
      %v7043 = vpop.permute.xlu0 %7042
      %7044 = vrot.lane.b32.xlu0 %v7013, 24
      %v7045 = vpop.permute.xlu0 %7044
      %7046 = vrot.lane.b32.xlu0 %v7014, 24
      %v7047 = vpop.permute.xlu0 %7046
      %7048 = vrot.lane.b32.xlu0 %v7015, 24
      %v7049 = vpop.permute.xlu0 %7048
      %7050 = vrot.lane.b32.xlu0 %v7016, 24
      %v7051 = vpop.permute.xlu0 %7050
      %7052 = vrot.lane.b32.xlu0 %v7017, 24
      %v7053 = vpop.permute.xlu0 %7052
      %7054 = vrot.lane.b32.xlu0 %v7018, 24
      %v7055 = vpop.permute.xlu0 %7054
      %7056 = vrot.lane.b32.xlu0 %v7019, 24
      %v7057 = vpop.permute.xlu0 %7056
      %7058 = vrot.lane.b32.xlu0 %v7020, 24
      %v7059 = vpop.permute.xlu0 %7058
      %7060 = vrot.lane.b32.xlu0 %v7021, 24
      %v7061 = vpop.permute.xlu0 %7060
      %7062 = vrot.lane.b32.xlu0 %v7022, 24
      %v7063 = vpop.permute.xlu0 %7062
      %7064 = vrot.lane.b32.xlu0 %v7023, 24
      %v7065 = vpop.permute.xlu0 %7064
      %7066 = vrot.lane.b32.xlu0 %v7024, 24
      %v7067 = vpop.permute.xlu0 %7066
      %7068 = vrot.lane.b32.xlu0 %v7025, 24
      %v7069 = vpop.permute.xlu0 %7068
      %7070 = vrot.lane.b32.xlu0 %v7026, 24
      %v7071 = vpop.permute.xlu0 %7070
      %vm7087 = vcmask 261312
      %7088 = vst.msk [vmem:[#allocation3] sm:$0xff] %vm7087, %v7043
      %7089 = vst.msk [vmem:[#allocation3 + $0x10] sm:$0xff] %vm7087, %v7045
      %7090 = vst.msk [vmem:[#allocation3 + $0x20] sm:$0xff] %vm7087, %v7047
      %7091 = vst.msk [vmem:[#allocation3 + $0x30] sm:$0xff] %vm7087, %v7049
      %7092 = vst.msk [vmem:[#allocation3 + $0x40] sm:$0xff] %vm7087, %v7051
      %7093 = vst.msk [vmem:[#allocation3 + $0x50] sm:$0xff] %vm7087, %v7053
      %7094 = vst.msk [vmem:[#allocation3 + $0x60] sm:$0xff] %vm7087, %v7055
      %7095 = vst.msk [vmem:[#allocation3 + $0x70] sm:$0xff] %vm7087, %v7057
      %7096 = vst.msk [vmem:[#allocation3 + $0x80] sm:$0xff] %vm7087, %v7059
      %7097 = vst.msk [vmem:[#allocation3 + $0x90] sm:$0xff] %vm7087, %v7061
      %7098 = vst.msk [vmem:[#allocation3 + $0xa0] sm:$0xff] %vm7087, %v7063
      %7099 = vst.msk [vmem:[#allocation3 + $0xb0] sm:$0xff] %vm7087, %v7065
      %7100 = vst.msk [vmem:[#allocation3 + $0xc0] sm:$0xff] %vm7087, %v7067
      %7101 = vst.msk [vmem:[#allocation3 + $0xd0] sm:$0xff] %vm7087, %v7069
      %vm7102 = vcmask 256192
      %7103 = vst.msk [vmem:[#allocation3 + $0xe0] sm:$0x7] %vm7102, %v7071
      %v7104 = vld [vmem:[#allocation2 + $0x13] sm:$0xff]
      %v7105 = vld [vmem:[#allocation2 + $0x1b] sm:$0xff]
      %v7106 = vld [vmem:[#allocation2 + $0x23] sm:$0xff]
      %v7107 = vld [vmem:[#allocation2 + $0x2b] sm:$0xff]
      %v7108 = vld [vmem:[#allocation2 + $0x33] sm:$0xff]
      %v7109 = vld [vmem:[#allocation2 + $0x3b] sm:$0xff]
      %v7110 = vld [vmem:[#allocation2 + $0x43] sm:$0xff]
      %v7111 = vld [vmem:[#allocation2 + $0x4b] sm:$0xff]
      %v7112 = vld [vmem:[#allocation2 + $0x53] sm:$0xff]
      %v7113 = vld [vmem:[#allocation2 + $0x5b] sm:$0xff]
      %v7114 = vld [vmem:[#allocation2 + $0x63] sm:$0xff]
      %v7115 = vld [vmem:[#allocation2 + $0x6b] sm:$0xff]
      %v7116 = vld [vmem:[#allocation2 + $0x73] sm:$0xff]
      %v7117 = vld [vmem:[#allocation2 + $0x7b] sm:$0xff]
      %v7118 = vld [vmem:[#allocation2 + $0x83] sm:$0x7]
      %7134 = vrot.lane.b32.xlu0 %v7104, 32
      %v7135 = vpop.permute.xlu0 %7134
      %7136 = vrot.lane.b32.xlu0 %v7105, 32
      %v7137 = vpop.permute.xlu0 %7136
      %7138 = vrot.lane.b32.xlu0 %v7106, 32
      %v7139 = vpop.permute.xlu0 %7138
      %7140 = vrot.lane.b32.xlu0 %v7107, 32
      %v7141 = vpop.permute.xlu0 %7140
      %7142 = vrot.lane.b32.xlu0 %v7108, 32
      %v7143 = vpop.permute.xlu0 %7142
      %7144 = vrot.lane.b32.xlu0 %v7109, 32
      %v7145 = vpop.permute.xlu0 %7144
      %7146 = vrot.lane.b32.xlu0 %v7110, 32
      %v7147 = vpop.permute.xlu0 %7146
      %7148 = vrot.lane.b32.xlu0 %v7111, 32
      %v7149 = vpop.permute.xlu0 %7148
      %7150 = vrot.lane.b32.xlu0 %v7112, 32
      %v7151 = vpop.permute.xlu0 %7150
      %7152 = vrot.lane.b32.xlu0 %v7113, 32
      %v7153 = vpop.permute.xlu0 %7152
      %7154 = vrot.lane.b32.xlu0 %v7114, 32
      %v7155 = vpop.permute.xlu0 %7154
      %7156 = vrot.lane.b32.xlu0 %v7115, 32
      %v7157 = vpop.permute.xlu0 %7156
      %7158 = vrot.lane.b32.xlu0 %v7116, 32
      %v7159 = vpop.permute.xlu0 %7158
      %7160 = vrot.lane.b32.xlu0 %v7117, 32
      %v7161 = vpop.permute.xlu0 %7160
      %7162 = vrot.lane.b32.xlu0 %v7118, 32
      %v7163 = vpop.permute.xlu0 %7162
      %vm7179 = vcmask 326912
      %7180 = vst.msk [vmem:[#allocation3] sm:$0xff] %vm7179, %v7135
      %7181 = vst.msk [vmem:[#allocation3 + $0x10] sm:$0xff] %vm7179, %v7137
      %7182 = vst.msk [vmem:[#allocation3 + $0x20] sm:$0xff] %vm7179, %v7139
      %7183 = vst.msk [vmem:[#allocation3 + $0x30] sm:$0xff] %vm7179, %v7141
      %7184 = vst.msk [vmem:[#allocation3 + $0x40] sm:$0xff] %vm7179, %v7143
      %7185 = vst.msk [vmem:[#allocation3 + $0x50] sm:$0xff] %vm7179, %v7145
      %7186 = vst.msk [vmem:[#allocation3 + $0x60] sm:$0xff] %vm7179, %v7147
      %7187 = vst.msk [vmem:[#allocation3 + $0x70] sm:$0xff] %vm7179, %v7149
      %7188 = vst.msk [vmem:[#allocation3 + $0x80] sm:$0xff] %vm7179, %v7151
      %7189 = vst.msk [vmem:[#allocation3 + $0x90] sm:$0xff] %vm7179, %v7153
      %7190 = vst.msk [vmem:[#allocation3 + $0xa0] sm:$0xff] %vm7179, %v7155
      %7191 = vst.msk [vmem:[#allocation3 + $0xb0] sm:$0xff] %vm7179, %v7157
      %7192 = vst.msk [vmem:[#allocation3 + $0xc0] sm:$0xff] %vm7179, %v7159
      %7193 = vst.msk [vmem:[#allocation3 + $0xd0] sm:$0xff] %vm7179, %v7161
      %vm7194 = vcmask 321792
      %7195 = vst.msk [vmem:[#allocation3 + $0xe0] sm:$0x7] %vm7194, %v7163
      %v7196 = vld [vmem:[#allocation2 + $0x14] sm:$0xff]
      %v7197 = vld [vmem:[#allocation2 + $0x1c] sm:$0xff]
      %v7198 = vld [vmem:[#allocation2 + $0x24] sm:$0xff]
      %v7199 = vld [vmem:[#allocation2 + $0x2c] sm:$0xff]
      %v7200 = vld [vmem:[#allocation2 + $0x34] sm:$0xff]
      %v7201 = vld [vmem:[#allocation2 + $0x3c] sm:$0xff]
      %v7202 = vld [vmem:[#allocation2 + $0x44] sm:$0xff]
      %v7203 = vld [vmem:[#allocation2 + $0x4c] sm:$0xff]
      %v7204 = vld [vmem:[#allocation2 + $0x54] sm:$0xff]
      %v7205 = vld [vmem:[#allocation2 + $0x5c] sm:$0xff]
      %v7206 = vld [vmem:[#allocation2 + $0x64] sm:$0xff]
      %v7207 = vld [vmem:[#allocation2 + $0x6c] sm:$0xff]
      %v7208 = vld [vmem:[#allocation2 + $0x74] sm:$0xff]
      %v7209 = vld [vmem:[#allocation2 + $0x7c] sm:$0xff]
      %v7210 = vld [vmem:[#allocation2 + $0x84] sm:$0x7]
      %7226 = vrot.lane.b32.xlu0 %v7196, 40
      %v7227 = vpop.permute.xlu0 %7226
      %7228 = vrot.lane.b32.xlu0 %v7197, 40
      %v7229 = vpop.permute.xlu0 %7228
      %7230 = vrot.lane.b32.xlu0 %v7198, 40
      %v7231 = vpop.permute.xlu0 %7230
      %7232 = vrot.lane.b32.xlu0 %v7199, 40
      %v7233 = vpop.permute.xlu0 %7232
      %7234 = vrot.lane.b32.xlu0 %v7200, 40
      %v7235 = vpop.permute.xlu0 %7234
      %7236 = vrot.lane.b32.xlu0 %v7201, 40
      %v7237 = vpop.permute.xlu0 %7236
      %7238 = vrot.lane.b32.xlu0 %v7202, 40
      %v7239 = vpop.permute.xlu0 %7238
      %7240 = vrot.lane.b32.xlu0 %v7203, 40
      %v7241 = vpop.permute.xlu0 %7240
      %7242 = vrot.lane.b32.xlu0 %v7204, 40
      %v7243 = vpop.permute.xlu0 %7242
      %7244 = vrot.lane.b32.xlu0 %v7205, 40
      %v7245 = vpop.permute.xlu0 %7244
      %7246 = vrot.lane.b32.xlu0 %v7206, 40
      %v7247 = vpop.permute.xlu0 %7246
      %7248 = vrot.lane.b32.xlu0 %v7207, 40
      %v7249 = vpop.permute.xlu0 %7248
      %7250 = vrot.lane.b32.xlu0 %v7208, 40
      %v7251 = vpop.permute.xlu0 %7250
      %7252 = vrot.lane.b32.xlu0 %v7209, 40
      %v7253 = vpop.permute.xlu0 %7252
      %7254 = vrot.lane.b32.xlu0 %v7210, 40
      %v7255 = vpop.permute.xlu0 %7254
      %vm7271 = vcmask 392512
      %7272 = vst.msk [vmem:[#allocation3] sm:$0xff] %vm7271, %v7227
      %7273 = vst.msk [vmem:[#allocation3 + $0x10] sm:$0xff] %vm7271, %v7229
      %7274 = vst.msk [vmem:[#allocation3 + $0x20] sm:$0xff] %vm7271, %v7231
      %7275 = vst.msk [vmem:[#allocation3 + $0x30] sm:$0xff] %vm7271, %v7233
      %7276 = vst.msk [vmem:[#allocation3 + $0x40] sm:$0xff] %vm7271, %v7235
      %7277 = vst.msk [vmem:[#allocation3 + $0x50] sm:$0xff] %vm7271, %v7237
      %7278 = vst.msk [vmem:[#allocation3 + $0x60] sm:$0xff] %vm7271, %v7239
      %7279 = vst.msk [vmem:[#allocation3 + $0x70] sm:$0xff] %vm7271, %v7241
      %7280 = vst.msk [vmem:[#allocation3 + $0x80] sm:$0xff] %vm7271, %v7243
      %7281 = vst.msk [vmem:[#allocation3 + $0x90] sm:$0xff] %vm7271, %v7245
      %7282 = vst.msk [vmem:[#allocation3 + $0xa0] sm:$0xff] %vm7271, %v7247
      %7283 = vst.msk [vmem:[#allocation3 + $0xb0] sm:$0xff] %vm7271, %v7249
      %7284 = vst.msk [vmem:[#allocation3 + $0xc0] sm:$0xff] %vm7271, %v7251
      %7285 = vst.msk [vmem:[#allocation3 + $0xd0] sm:$0xff] %vm7271, %v7253
      %vm7286 = vcmask 387392
      %7287 = vst.msk [vmem:[#allocation3 + $0xe0] sm:$0x7] %vm7286, %v7255
      %v7288 = vld [vmem:[#allocation2 + $0x24] sm:$0xff]
      %v7289 = vld [vmem:[#allocation2 + $0x2c] sm:$0xff]
      %v7290 = vld [vmem:[#allocation2 + $0x34] sm:$0xff]
      %v7291 = vld [vmem:[#allocation2 + $0x3c] sm:$0xff]
      %v7292 = vld [vmem:[#allocation2 + $0x44] sm:$0xff]
      %v7293 = vld [vmem:[#allocation2 + $0x4c] sm:$0xff]
      %v7294 = vld [vmem:[#allocation2 + $0x54] sm:$0xff]
      %v7295 = vld [vmem:[#allocation2 + $0x5c] sm:$0xff]
      %v7296 = vld [vmem:[#allocation2 + $0x64] sm:$0xff]
      %v7297 = vld [vmem:[#allocation2 + $0x6c] sm:$0xff]
      %v7298 = vld [vmem:[#allocation2 + $0x74] sm:$0xff]
      %v7299 = vld [vmem:[#allocation2 + $0x7c] sm:$0xff]
      %v7300 = vld [vmem:[#allocation2 + $0x84] sm:$0xff]
      %v7301 = vld [vmem:[#allocation2 + $0x8c] sm:$0xff]
      %v7302 = vld [vmem:[#allocation2 + $0x94] sm:$0x7]
      %7318 = vrot.lane.b32.xlu0 %v7288, 48
      %v7319 = vpop.permute.xlu0 %7318
      %7320 = vrot.lane.b32.xlu0 %v7289, 48
      %v7321 = vpop.permute.xlu0 %7320
      %7322 = vrot.lane.b32.xlu0 %v7290, 48
      %v7323 = vpop.permute.xlu0 %7322
      %7324 = vrot.lane.b32.xlu0 %v7291, 48
      %v7325 = vpop.permute.xlu0 %7324
      %7326 = vrot.lane.b32.xlu0 %v7292, 48
      %v7327 = vpop.permute.xlu0 %7326
      %7328 = vrot.lane.b32.xlu0 %v7293, 48
      %v7329 = vpop.permute.xlu0 %7328
      %7330 = vrot.lane.b32.xlu0 %v7294, 48
      %v7331 = vpop.permute.xlu0 %7330
      %7332 = vrot.lane.b32.xlu0 %v7295, 48
      %v7333 = vpop.permute.xlu0 %7332
      %7334 = vrot.lane.b32.xlu0 %v7296, 48
      %v7335 = vpop.permute.xlu0 %7334
      %7336 = vrot.lane.b32.xlu0 %v7297, 48
      %v7337 = vpop.permute.xlu0 %7336
      %7338 = vrot.lane.b32.xlu0 %v7298, 48
      %v7339 = vpop.permute.xlu0 %7338
      %7340 = vrot.lane.b32.xlu0 %v7299, 48
      %v7341 = vpop.permute.xlu0 %7340
      %7342 = vrot.lane.b32.xlu0 %v7300, 48
      %v7343 = vpop.permute.xlu0 %7342
      %7344 = vrot.lane.b32.xlu0 %v7301, 48
      %v7345 = vpop.permute.xlu0 %7344
      %7346 = vrot.lane.b32.xlu0 %v7302, 48
      %v7347 = vpop.permute.xlu0 %7346
      %vm7363 = vcmask 458112
      %7364 = vst.msk [vmem:[#allocation3] sm:$0xff] %vm7363, %v7319
      %7365 = vst.msk [vmem:[#allocation3 + $0x10] sm:$0xff] %vm7363, %v7321
      %7366 = vst.msk [vmem:[#allocation3 + $0x20] sm:$0xff] %vm7363, %v7323
      %7367 = vst.msk [vmem:[#allocation3 + $0x30] sm:$0xff] %vm7363, %v7325
      %7368 = vst.msk [vmem:[#allocation3 + $0x40] sm:$0xff] %vm7363, %v7327
      %7369 = vst.msk [vmem:[#allocation3 + $0x50] sm:$0xff] %vm7363, %v7329
      %7370 = vst.msk [vmem:[#allocation3 + $0x60] sm:$0xff] %vm7363, %v7331
      %7371 = vst.msk [vmem:[#allocation3 + $0x70] sm:$0xff] %vm7363, %v7333
      %7372 = vst.msk [vmem:[#allocation3 + $0x80] sm:$0xff] %vm7363, %v7335
      %7373 = vst.msk [vmem:[#allocation3 + $0x90] sm:$0xff] %vm7363, %v7337
      %7374 = vst.msk [vmem:[#allocation3 + $0xa0] sm:$0xff] %vm7363, %v7339
      %7375 = vst.msk [vmem:[#allocation3 + $0xb0] sm:$0xff] %vm7363, %v7341
      %7376 = vst.msk [vmem:[#allocation3 + $0xc0] sm:$0xff] %vm7363, %v7343
      %7377 = vst.msk [vmem:[#allocation3 + $0xd0] sm:$0xff] %vm7363, %v7345
      %vm7378 = vcmask 452992
      %7379 = vst.msk [vmem:[#allocation3 + $0xe0] sm:$0x7] %vm7378, %v7347
      %v7380 = vld [vmem:[#allocation2 + $0x25] sm:$0xff]
      %v7381 = vld [vmem:[#allocation2 + $0x2d] sm:$0xff]
      %v7382 = vld [vmem:[#allocation2 + $0x35] sm:$0xff]
      %v7383 = vld [vmem:[#allocation2 + $0x3d] sm:$0xff]
      %v7384 = vld [vmem:[#allocation2 + $0x45] sm:$0xff]
      %v7385 = vld [vmem:[#allocation2 + $0x4d] sm:$0xff]
      %v7386 = vld [vmem:[#allocation2 + $0x55] sm:$0xff]
      %v7387 = vld [vmem:[#allocation2 + $0x5d] sm:$0xff]
      %v7388 = vld [vmem:[#allocation2 + $0x65] sm:$0xff]
      %v7389 = vld [vmem:[#allocation2 + $0x6d] sm:$0xff]
      %v7390 = vld [vmem:[#allocation2 + $0x75] sm:$0xff]
      %v7391 = vld [vmem:[#allocation2 + $0x7d] sm:$0xff]
      %v7392 = vld [vmem:[#allocation2 + $0x85] sm:$0xff]
      %v7393 = vld [vmem:[#allocation2 + $0x8d] sm:$0xff]
      %v7394 = vld [vmem:[#allocation2 + $0x95] sm:$0x7]
      %7410 = vrot.lane.b32.xlu0 %v7380, 56
      %v7411 = vpop.permute.xlu0 %7410
      %7412 = vrot.lane.b32.xlu0 %v7381, 56
      %v7413 = vpop.permute.xlu0 %7412
      %7414 = vrot.lane.b32.xlu0 %v7382, 56
      %v7415 = vpop.permute.xlu0 %7414
      %7416 = vrot.lane.b32.xlu0 %v7383, 56
      %v7417 = vpop.permute.xlu0 %7416
      %7418 = vrot.lane.b32.xlu0 %v7384, 56
      %v7419 = vpop.permute.xlu0 %7418
      %7420 = vrot.lane.b32.xlu0 %v7385, 56
      %v7421 = vpop.permute.xlu0 %7420
      %7422 = vrot.lane.b32.xlu0 %v7386, 56
      %v7423 = vpop.permute.xlu0 %7422
      %7424 = vrot.lane.b32.xlu0 %v7387, 56
      %v7425 = vpop.permute.xlu0 %7424
      %7426 = vrot.lane.b32.xlu0 %v7388, 56
      %v7427 = vpop.permute.xlu0 %7426
      %7428 = vrot.lane.b32.xlu0 %v7389, 56
      %v7429 = vpop.permute.xlu0 %7428
      %7430 = vrot.lane.b32.xlu0 %v7390, 56
      %v7431 = vpop.permute.xlu0 %7430
      %7432 = vrot.lane.b32.xlu0 %v7391, 56
      %v7433 = vpop.permute.xlu0 %7432
      %7434 = vrot.lane.b32.xlu0 %v7392, 56
      %v7435 = vpop.permute.xlu0 %7434
      %7436 = vrot.lane.b32.xlu0 %v7393, 56
      %v7437 = vpop.permute.xlu0 %7436
      %7438 = vrot.lane.b32.xlu0 %v7394, 56
      %v7439 = vpop.permute.xlu0 %7438
      %vm7455 = vcmask 523712
      %7456 = vst.msk [vmem:[#allocation3] sm:$0xff] %vm7455, %v7411
      %7457 = vst.msk [vmem:[#allocation3 + $0x10] sm:$0xff] %vm7455, %v7413
      %7458 = vst.msk [vmem:[#allocation3 + $0x20] sm:$0xff] %vm7455, %v7415
      %7459 = vst.msk [vmem:[#allocation3 + $0x30] sm:$0xff] %vm7455, %v7417
      %7460 = vst.msk [vmem:[#allocation3 + $0x40] sm:$0xff] %vm7455, %v7419
      %7461 = vst.msk [vmem:[#allocation3 + $0x50] sm:$0xff] %vm7455, %v7421
      %7462 = vst.msk [vmem:[#allocation3 + $0x60] sm:$0xff] %vm7455, %v7423
      %7463 = vst.msk [vmem:[#allocation3 + $0x70] sm:$0xff] %vm7455, %v7425
      %7464 = vst.msk [vmem:[#allocation3 + $0x80] sm:$0xff] %vm7455, %v7427
      %7465 = vst.msk [vmem:[#allocation3 + $0x90] sm:$0xff] %vm7455, %v7429
      %7466 = vst.msk [vmem:[#allocation3 + $0xa0] sm:$0xff] %vm7455, %v7431
      %7467 = vst.msk [vmem:[#allocation3 + $0xb0] sm:$0xff] %vm7455, %v7433
      %7468 = vst.msk [vmem:[#allocation3 + $0xc0] sm:$0xff] %vm7455, %v7435
      %7469 = vst.msk [vmem:[#allocation3 + $0xd0] sm:$0xff] %vm7455, %v7437
      %vm7470 = vcmask 518592
      %7471 = vst.msk [vmem:[#allocation3 + $0xe0] sm:$0x7] %vm7470, %v7439
      %v7472 = vld [vmem:[#allocation2 + $0x26] sm:$0xff]
      %v7473 = vld [vmem:[#allocation2 + $0x2e] sm:$0xff]
      %v7474 = vld [vmem:[#allocation2 + $0x36] sm:$0xff]
      %v7475 = vld [vmem:[#allocation2 + $0x3e] sm:$0xff]
      %v7476 = vld [vmem:[#allocation2 + $0x46] sm:$0xff]
      %v7477 = vld [vmem:[#allocation2 + $0x4e] sm:$0xff]
      %v7478 = vld [vmem:[#allocation2 + $0x56] sm:$0xff]
      %v7479 = vld [vmem:[#allocation2 + $0x5e] sm:$0xff]
      %v7480 = vld [vmem:[#allocation2 + $0x66] sm:$0xff]
      %v7481 = vld [vmem:[#allocation2 + $0x6e] sm:$0xff]
      %v7482 = vld [vmem:[#allocation2 + $0x76] sm:$0xff]
      %v7483 = vld [vmem:[#allocation2 + $0x7e] sm:$0xff]
      %v7484 = vld [vmem:[#allocation2 + $0x86] sm:$0xff]
      %v7485 = vld [vmem:[#allocation2 + $0x8e] sm:$0xff]
      %v7486 = vld [vmem:[#allocation2 + $0x96] sm:$0x7]
      %7502 = vrot.lane.b32.xlu0 %v7472, 64
      %v7503 = vpop.permute.xlu0 %7502
      %7504 = vrot.lane.b32.xlu0 %v7473, 64
      %v7505 = vpop.permute.xlu0 %7504
      %7506 = vrot.lane.b32.xlu0 %v7474, 64
      %v7507 = vpop.permute.xlu0 %7506
      %7508 = vrot.lane.b32.xlu0 %v7475, 64
      %v7509 = vpop.permute.xlu0 %7508
      %7510 = vrot.lane.b32.xlu0 %v7476, 64
      %v7511 = vpop.permute.xlu0 %7510
      %7512 = vrot.lane.b32.xlu0 %v7477, 64
      %v7513 = vpop.permute.xlu0 %7512
      %7514 = vrot.lane.b32.xlu0 %v7478, 64
      %v7515 = vpop.permute.xlu0 %7514
      %7516 = vrot.lane.b32.xlu0 %v7479, 64
      %v7517 = vpop.permute.xlu0 %7516
      %7518 = vrot.lane.b32.xlu0 %v7480, 64
      %v7519 = vpop.permute.xlu0 %7518
      %7520 = vrot.lane.b32.xlu0 %v7481, 64
      %v7521 = vpop.permute.xlu0 %7520
      %7522 = vrot.lane.b32.xlu0 %v7482, 64
      %v7523 = vpop.permute.xlu0 %7522
      %7524 = vrot.lane.b32.xlu0 %v7483, 64
      %v7525 = vpop.permute.xlu0 %7524
      %7526 = vrot.lane.b32.xlu0 %v7484, 64
      %v7527 = vpop.permute.xlu0 %7526
      %7528 = vrot.lane.b32.xlu0 %v7485, 64
      %v7529 = vpop.permute.xlu0 %7528
      %7530 = vrot.lane.b32.xlu0 %v7486, 64
      %v7531 = vpop.permute.xlu0 %7530
      %vm7547 = vcmask 589312
      %7548 = vst.msk [vmem:[#allocation3] sm:$0xff] %vm7547, %v7503
      %7549 = vst.msk [vmem:[#allocation3 + $0x10] sm:$0xff] %vm7547, %v7505
      %7550 = vst.msk [vmem:[#allocation3 + $0x20] sm:$0xff] %vm7547, %v7507
      %7551 = vst.msk [vmem:[#allocation3 + $0x30] sm:$0xff] %vm7547, %v7509
      %7552 = vst.msk [vmem:[#allocation3 + $0x40] sm:$0xff] %vm7547, %v7511
      %7553 = vst.msk [vmem:[#allocation3 + $0x50] sm:$0xff] %vm7547, %v7513
      %7554 = vst.msk [vmem:[#allocation3 + $0x60] sm:$0xff] %vm7547, %v7515
      %7555 = vst.msk [vmem:[#allocation3 + $0x70] sm:$0xff] %vm7547, %v7517
      %7556 = vst.msk [vmem:[#allocation3 + $0x80] sm:$0xff] %vm7547, %v7519
      %7557 = vst.msk [vmem:[#allocation3 + $0x90] sm:$0xff] %vm7547, %v7521
      %7558 = vst.msk [vmem:[#allocation3 + $0xa0] sm:$0xff] %vm7547, %v7523
      %7559 = vst.msk [vmem:[#allocation3 + $0xb0] sm:$0xff] %vm7547, %v7525
      %7560 = vst.msk [vmem:[#allocation3 + $0xc0] sm:$0xff] %vm7547, %v7527
      %7561 = vst.msk [vmem:[#allocation3 + $0xd0] sm:$0xff] %vm7547, %v7529
      %vm7562 = vcmask 584192
      %7563 = vst.msk [vmem:[#allocation3 + $0xe0] sm:$0x7] %vm7562, %v7531
      %v7564 = vld [vmem:[#allocation3] sm:$0xff]
      %v7565 = vld [vmem:[#allocation3 + $0x10] sm:$0xff]
      %v7566 = vld [vmem:[#allocation3 + $0x20] sm:$0xff]
      %v7567 = vld [vmem:[#allocation3 + $0x30] sm:$0xff]
      %v7568 = vld [vmem:[#allocation3 + $0x40] sm:$0xff]
      %v7569 = vld [vmem:[#allocation3 + $0x50] sm:$0xff]
      %v7570 = vld [vmem:[#allocation3 + $0x60] sm:$0xff]
      %v7571 = vld [vmem:[#allocation3 + $0x70] sm:$0xff]
      %v7572 = vld [vmem:[#allocation3 + $0x80] sm:$0xff]
      %v7573 = vld [vmem:[#allocation3 + $0x90] sm:$0xff]
      %v7574 = vld [vmem:[#allocation3 + $0xa0] sm:$0xff]
      %v7575 = vld [vmem:[#allocation3 + $0xb0] sm:$0xff]
      %v7576 = vld [vmem:[#allocation3 + $0xc0] sm:$0xff]
      %v7577 = vld [vmem:[#allocation3 + $0xd0] sm:$0xff]
      %v7578 = vld [vmem:[#allocation3 + $0xe0] sm:$0x7]
      %v7579 = vld [vmem:[%s9] sm:$0xff]
      %v7580 = vld [vmem:[%s9 + $0x8] sm:$0xff]
      %v7581 = vld [vmem:[%s9 + $0x10] sm:$0xff]
      %v7582 = vld [vmem:[%s9 + $0x18] sm:$0xff]
      %v7583 = vld [vmem:[%s9 + $0x20] sm:$0xff]
      %v7584 = vld [vmem:[%s9 + $0x28] sm:$0xff]
      %v7585 = vld [vmem:[%s9 + $0x30] sm:$0xff]
      %v7586 = vld [vmem:[%s9 + $0x38] sm:$0xff]
      %v7587 = vld [vmem:[%s9 + $0x40] sm:$0xff]
      %v7588 = vld [vmem:[%s10] sm:$0x1]
      %v7590 = vlaneseq
      %v7591 = vshrl.u32 %v7590, 7
      %v7592 = vsub.s32 0, %v7591
      %v7593 = vrot.slane %v7588, %v7592
      %vm7595 = vcmask 588800
      %v7597 = vsel %vm7595, %v7564, 0
      %v7600 = vsel %vm7595, %v7565, 0
      %v7603 = vsel %vm7595, %v7566, 0
      %v7606 = vsel %vm7595, %v7567, 0
      %v7609 = vsel %vm7595, %v7568, 0
      %v7612 = vsel %vm7595, %v7569, 0
      %v7615 = vsel %vm7595, %v7570, 0
      %v7618 = vsel %vm7595, %v7571, 0
      %v7621 = vsel %vm7595, %v7572, 0
      %v7624 = vsel %vm7595, %v7573, 0
      %v7627 = vsel %vm7595, %v7574, 0
      %v7630 = vsel %vm7595, %v7575, 0
      %v7633 = vsel %vm7595, %v7576, 0
      %v7636 = vsel %vm7595, %v7577, 0
      %v7639 = vsel %vm7595, %v7578, 0
      %7641 = vmatprep.subr.mxu0 0.0
      %7642 = vmatpush1.msra.mxu0 %v7579
      %7643 = vmatprep.subr.mxu0 0.0
      %7644 = vmatpush1.msra.mxu0 %v7580
      %7645 = vmatprep.subr.mxu0 0.0
      %7646 = vmatpush1.msra.mxu0 %v7581
      %7647 = vmatprep.subr.mxu0 0.0
      %7648 = vmatpush1.msra.mxu0 %v7582
      %7649 = vmatprep.subr.mxu0 0.0
      %7650 = vmatpush1.msra.mxu0 %v7583
      %7651 = vmatprep.subr.mxu0 0.0
      %7652 = vmatpush1.msra.mxu0 %v7584
      %7653 = vmatprep.subr.mxu0 0.0
      %7654 = vmatpush1.msra.mxu0 %v7585
      %7655 = vmatprep.subr.mxu0 0.0
      %7656 = vmatpush1.msra.mxu0 %v7586
      %7657 = vmatprep.subr.mxu0 0.0
      %7658 = vmatpush1.msra.mxu0 %v7587
      %7659 = vmatprep.subr.mxu0 0.0
      %7660 = vmatpush1.msra.mxu0 0.0
      %7661 = vmatprep.subr.mxu0 0.0
      %7662 = vmatpush1.msra.mxu0 0.0
      %7663 = vmatprep.subr.mxu0 0.0
      %7664 = vmatpush1.msra.mxu0 0.0
      %7665 = vmatprep.subr.mxu0 0.0
      %7666 = vmatpush1.msra.mxu0 0.0
      %7667 = vmatprep.subr.mxu0 0.0
      %7668 = vmatpush1.msra.mxu0 0.0
      %7669 = vmatprep.subr.mxu0 0.0
      %7670 = vmatpush1.msra.mxu0 0.0
      %7671 = vmatprep.subr.mxu0 0.0
      %7672 = vmatpush1.msra.mxu0 0.0
      %7673 = vmatprep.subr.mxu0 0.0
      %7674 = vmatpush1.msra.mxu0 0.0
      %7675 = vmatprep.subr.mxu0 0.0
      %7676 = vmatpush1.msra.mxu0 0.0
      %7677 = vmatprep.subr.mxu0 0.0
      %7678 = vmatpush1.msra.mxu0 0.0
      %7679 = vmatprep.subr.mxu0 0.0
      %7680 = vmatpush1.msra.mxu0 0.0
      %7681 = vmatprep.subr.mxu0 0.0
      %7682 = vmatpush1.msra.mxu0 0.0
      %7683 = vmatprep.subr.mxu0 0.0
      %7684 = vmatpush1.msra.mxu0 0.0
      %7685 = vmatprep.subr.mxu0 0.0
      %7686 = vmatpush1.msra.mxu0 0.0
      %7687 = vmatprep.subr.mxu0 0.0
      %7688 = vmatpush1.msra.mxu0 0.0
      %7689 = vmatprep.subr.mxu0 0.0
      %7690 = vmatpush1.msra.mxu0 0.0
      %7691 = vmatprep.subr.mxu0 0.0
      %7692 = vmatpush1.msra.mxu0 0.0
      %7693 = vmatprep.subr.mxu0 0.0
      %7694 = vmatpush1.msra.mxu0 0.0
      %7695 = vmatprep.subr.mxu0 0.0
      %7696 = vmatpush1.msra.mxu0 0.0
      %7697 = vmatprep.subr.mxu0 0.0
      %7698 = vmatpush1.msra.mxu0 0.0
      %7699 = vmatprep.subr.mxu0 0.0
      %7700 = vmatpush1.msra.mxu0 0.0
      %7701 = vmatprep.subr.mxu0 0.0
      %7702 = vmatpush1.msra.mxu0 0.0
      %7703 = vmatprep.subr.mxu0 0.0
      %7704 = vmatpush1.msra.mxu0 0.0
      %7705 = vmatprep.mubr.f32.mxu0 0.0
      %7706 = vmatmul.mubr.f32.gmra.mrb[0].mxu0 %v7597
      %v7707 = vpop.f32.mrb[0].mxu0
      %v7708 = vadd.f32 %v7593, %v7707
      %v7709 = vpop.f32.mrb[0].mxu0
      %7710 = vmatprep.mubr.f32.mxu0 0.0
      %7711 = vmatmul.mubr.f32.gmra.mrb[0].mxu0 %v7600
      %v7712 = vpop.f32.mrb[0].mxu0
      %v7713 = vadd.f32 %v7593, %v7712
      %v7714 = vpop.f32.mrb[0].mxu0
      %7715 = vmatprep.mubr.f32.mxu0 0.0
      %7716 = vmatmul.mubr.f32.gmra.mrb[0].mxu0 %v7603
      %v7717 = vpop.f32.mrb[0].mxu0
      %v7718 = vadd.f32 %v7593, %v7717
      %v7719 = vpop.f32.mrb[0].mxu0
      %7720 = vmatprep.mubr.f32.mxu0 0.0
      %7721 = vmatmul.mubr.f32.gmra.mrb[0].mxu0 %v7606
      %v7722 = vpop.f32.mrb[0].mxu0
      %v7723 = vadd.f32 %v7593, %v7722
      %v7724 = vpop.f32.mrb[0].mxu0
      %7725 = vmatprep.mubr.f32.mxu0 0.0
      %7726 = vmatmul.mubr.f32.gmra.mrb[0].mxu0 %v7609
      %v7727 = vpop.f32.mrb[0].mxu0
      %v7728 = vadd.f32 %v7593, %v7727
      %v7729 = vpop.f32.mrb[0].mxu0
      %7730 = vmatprep.mubr.f32.mxu0 0.0
      %7731 = vmatmul.mubr.f32.gmra.mrb[0].mxu0 %v7612
      %v7732 = vpop.f32.mrb[0].mxu0
      %v7733 = vadd.f32 %v7593, %v7732
      %v7734 = vpop.f32.mrb[0].mxu0
      %7735 = vmatprep.mubr.f32.mxu0 0.0
      %7736 = vmatmul.mubr.f32.gmra.mrb[0].mxu0 %v7615
      %v7737 = vpop.f32.mrb[0].mxu0
      %v7738 = vadd.f32 %v7593, %v7737
      %v7739 = vpop.f32.mrb[0].mxu0
      %7740 = vmatprep.mubr.f32.mxu0 0.0
      %7741 = vmatmul.mubr.f32.gmra.mrb[0].mxu0 %v7618
      %v7742 = vpop.f32.mrb[0].mxu0
      %v7743 = vadd.f32 %v7593, %v7742
      %v7744 = vpop.f32.mrb[0].mxu0
      %7745 = vmatprep.mubr.f32.mxu0 0.0
      %7746 = vmatmul.mubr.f32.gmra.mrb[0].mxu0 %v7621
      %v7747 = vpop.f32.mrb[0].mxu0
      %v7748 = vadd.f32 %v7593, %v7747
      %v7749 = vpop.f32.mrb[0].mxu0
      %7750 = vmatprep.mubr.f32.mxu0 0.0
      %7751 = vmatmul.mubr.f32.gmra.mrb[0].mxu0 %v7624
      %v7752 = vpop.f32.mrb[0].mxu0
      %v7753 = vadd.f32 %v7593, %v7752
      %v7754 = vpop.f32.mrb[0].mxu0
      %7755 = vmatprep.mubr.f32.mxu0 0.0
      %7756 = vmatmul.mubr.f32.gmra.mrb[0].mxu0 %v7627
      %v7757 = vpop.f32.mrb[0].mxu0
      %v7758 = vadd.f32 %v7593, %v7757
      %v7759 = vpop.f32.mrb[0].mxu0
      %7760 = vmatprep.mubr.f32.mxu0 0.0
      %7761 = vmatmul.mubr.f32.gmra.mrb[0].mxu0 %v7630
      %v7762 = vpop.f32.mrb[0].mxu0
      %v7763 = vadd.f32 %v7593, %v7762
      %v7764 = vpop.f32.mrb[0].mxu0
      %7765 = vmatprep.mubr.f32.mxu0 0.0
      %7766 = vmatmul.mubr.f32.gmra.mrb[0].mxu0 %v7633
      %v7767 = vpop.f32.mrb[0].mxu0
      %v7768 = vadd.f32 %v7593, %v7767
      %v7769 = vpop.f32.mrb[0].mxu0
      %7770 = vmatprep.mubr.f32.mxu0 0.0
      %7771 = vmatmul.mubr.f32.gmra.mrb[0].mxu0 %v7636
      %v7772 = vpop.f32.mrb[0].mxu0
      %v7773 = vadd.f32 %v7593, %v7772
      %v7774 = vpop.f32.mrb[0].mxu0
      %7775 = vmatprep.mubr.f32.mxu0 0.0
      %7776 = vmatmul.mubr.f32.gmra.mrb[0].mxu0 %v7639
      %v7777 = vpop.f32.mrb[0].mxu0
      %v7778 = vadd.f32 %v7593, %v7777
      %v7779 = vpop.f32.mrb[0].mxu0
      %7780 = vdwg.mxu0
      %vm7781 = vcmp.ge.f32.partialorder %v7708, 0.0
      %vm7782 = vcmp.ge.f32.partialorder %v7713, 0.0
      %vm7783 = vcmp.ge.f32.partialorder %v7718, 0.0
      %vm7784 = vcmp.ge.f32.partialorder %v7723, 0.0
      %vm7785 = vcmp.ge.f32.partialorder %v7728, 0.0
      %vm7786 = vcmp.ge.f32.partialorder %v7733, 0.0
      %vm7787 = vcmp.ge.f32.partialorder %v7738, 0.0
      %vm7788 = vcmp.ge.f32.partialorder %v7743, 0.0
      %vm7789 = vcmp.ge.f32.partialorder %v7748, 0.0
      %vm7790 = vcmp.ge.f32.partialorder %v7753, 0.0
      %vm7791 = vcmp.ge.f32.partialorder %v7758, 0.0
      %vm7792 = vcmp.ge.f32.partialorder %v7763, 0.0
      %vm7793 = vcmp.ge.f32.partialorder %v7768, 0.0
      %vm7794 = vcmp.ge.f32.partialorder %v7773, 0.0
      %vm7795 = vcmp.ge.f32.partialorder %v7778, 0.0
      %v7796 = vmul.f32 %v7708, 0.01
      %v7797 = vmul.f32 %v7713, 0.01
      %v7798 = vmul.f32 %v7718, 0.01
      %v7799 = vmul.f32 %v7723, 0.01
      %v7800 = vmul.f32 %v7728, 0.01
      %v7801 = vmul.f32 %v7733, 0.01
      %v7802 = vmul.f32 %v7738, 0.01
      %v7803 = vmul.f32 %v7743, 0.01
      %v7804 = vmul.f32 %v7748, 0.01
      %v7805 = vmul.f32 %v7753, 0.01
      %v7806 = vmul.f32 %v7758, 0.01
      %v7807 = vmul.f32 %v7763, 0.01
      %v7808 = vmul.f32 %v7768, 0.01
      %v7809 = vmul.f32 %v7773, 0.01
      %v7810 = vmul.f32 %v7778, 0.01
      %v7811 = vsel %vm7781, %v7708, %v7796
      %v7812 = vsel %vm7782, %v7713, %v7797
      %v7813 = vsel %vm7783, %v7718, %v7798
      %v7814 = vsel %vm7784, %v7723, %v7799
      %v7815 = vsel %vm7785, %v7728, %v7800
      %v7816 = vsel %vm7786, %v7733, %v7801
      %v7817 = vsel %vm7787, %v7738, %v7802
      %v7818 = vsel %vm7788, %v7743, %v7803
      %v7819 = vsel %vm7789, %v7748, %v7804
      %v7820 = vsel %vm7790, %v7753, %v7805
      %v7821 = vsel %vm7791, %v7758, %v7806
      %v7822 = vsel %vm7792, %v7763, %v7807
      %v7823 = vsel %vm7793, %v7768, %v7808
      %v7824 = vsel %vm7794, %v7773, %v7809
      %v7825 = vsel %vm7795, %v7778, %v7810
      %7826 = vst.msk [vmem:[#allocation4] sm:$0xff] %vm6760, %v7811
      %7827 = vst.msk [vmem:[#allocation4 + $0x8] sm:$0xff] %vm6760, %v7812
      %7828 = vst.msk [vmem:[#allocation4 + $0x10] sm:$0xff] %vm6760, %v7813
      %7829 = vst.msk [vmem:[#allocation4 + $0x18] sm:$0xff] %vm6760, %v7814
      %7830 = vst.msk [vmem:[#allocation4 + $0x20] sm:$0xff] %vm6760, %v7815
      %7831 = vst.msk [vmem:[#allocation4 + $0x28] sm:$0xff] %vm6760, %v7816
      %7832 = vst.msk [vmem:[#allocation4 + $0x30] sm:$0xff] %vm6760, %v7817
      %7833 = vst.msk [vmem:[#allocation4 + $0x38] sm:$0xff] %vm6760, %v7818
      %7834 = vst.msk [vmem:[#allocation4 + $0x40] sm:$0xff] %vm6760, %v7819
      %7835 = vst.msk [vmem:[#allocation4 + $0x48] sm:$0xff] %vm6760, %v7820
      %7836 = vst.msk [vmem:[#allocation4 + $0x50] sm:$0xff] %vm6760, %v7821
      %7837 = vst.msk [vmem:[#allocation4 + $0x58] sm:$0xff] %vm6760, %v7822
      %7838 = vst.msk [vmem:[#allocation4 + $0x60] sm:$0xff] %vm6760, %v7823
      %7839 = vst.msk [vmem:[#allocation4 + $0x68] sm:$0xff] %vm6760, %v7824
      %7840 = vst.msk [vmem:[#allocation4 + $0x70] sm:$0x7] %vm6775, %v7825
      %v7841 = vld [vmem:[#allocation4] ss:$2 sm:$0xff]
      %v7842 = vld [vmem:[%s5532] ss:$2 sm:$0xff]
      %v7843 = vld [vmem:[%s5534] ss:$2 sm:$0xff]
      %v7844 = vld [vmem:[%s5536] ss:$2 sm:$0xff]
      %v7845 = vld [vmem:[%s5538] ss:$2 sm:$0x7f]
      %7846 = vst.msk [vmem:[#allocation3] sm:$0xff] %vm6760, %v7841
      %7847 = vst.msk [vmem:[#allocation3 + $0x10] sm:$0xff] %vm6760, %v7842
      %7848 = vst.msk [vmem:[#allocation3 + $0x20] sm:$0xff] %vm6760, %v7843
      %7849 = vst.msk [vmem:[#allocation3 + $0x30] sm:$0xff] %vm6760, %v7844
      %vm7850 = vcmask 63488
      %7851 = vst.msk [vmem:[#allocation3 + $0x40] sm:$0x7f] %vm7850, %v7845
      %v7852 = vld [vmem:[%s5575] ss:$2 sm:$0xff]
      %v7853 = vld [vmem:[%s5577] ss:$2 sm:$0xff]
      %v7854 = vld [vmem:[%s5579] ss:$2 sm:$0xff]
      %v7855 = vld [vmem:[%s5581] ss:$2 sm:$0xff]
      %v7856 = vld [vmem:[%s5583] ss:$2 sm:$0x7f]
      %7862 = vrot.lane.b32.xlu0 %v7852, 8
      %v7863 = vpop.permute.xlu0 %7862
      %7864 = vrot.lane.b32.xlu0 %v7853, 8
      %v7865 = vpop.permute.xlu0 %7864
      %7866 = vrot.lane.b32.xlu0 %v7854, 8
      %v7867 = vpop.permute.xlu0 %7866
      %7868 = vrot.lane.b32.xlu0 %v7855, 8
      %v7869 = vpop.permute.xlu0 %7868
      %7870 = vrot.lane.b32.xlu0 %v7856, 8
      %v7871 = vpop.permute.xlu0 %7870
      %7877 = vst.msk [vmem:[#allocation3] sm:$0xff] %vm6903, %v7863
      %7878 = vst.msk [vmem:[#allocation3 + $0x10] sm:$0xff] %vm6903, %v7865
      %7879 = vst.msk [vmem:[#allocation3 + $0x20] sm:$0xff] %vm6903, %v7867
      %7880 = vst.msk [vmem:[#allocation3 + $0x30] sm:$0xff] %vm6903, %v7869
      %vm7881 = vcmask 129088
      %7882 = vst.msk [vmem:[#allocation3 + $0x40] sm:$0x7f] %vm7881, %v7871
      %v7883 = vld [vmem:[%s5681] ss:$2 sm:$0xff]
      %v7884 = vld [vmem:[%s5683] ss:$2 sm:$0xff]
      %v7885 = vld [vmem:[%s5685] ss:$2 sm:$0xff]
      %v7886 = vld [vmem:[%s5687] ss:$2 sm:$0xff]
      %v7887 = vld [vmem:[%s5689] ss:$2 sm:$0x7f]
      %7893 = vrot.lane.b32.xlu0 %v7883, 16
      %v7894 = vpop.permute.xlu0 %7893
      %7895 = vrot.lane.b32.xlu0 %v7884, 16
      %v7896 = vpop.permute.xlu0 %7895
      %7897 = vrot.lane.b32.xlu0 %v7885, 16
      %v7898 = vpop.permute.xlu0 %7897
      %7899 = vrot.lane.b32.xlu0 %v7886, 16
      %v7900 = vpop.permute.xlu0 %7899
      %7901 = vrot.lane.b32.xlu0 %v7887, 16
      %v7902 = vpop.permute.xlu0 %7901
      %7908 = vst.msk [vmem:[#allocation3] sm:$0xff] %vm6995, %v7894
      %7909 = vst.msk [vmem:[#allocation3 + $0x10] sm:$0xff] %vm6995, %v7896
      %7910 = vst.msk [vmem:[#allocation3 + $0x20] sm:$0xff] %vm6995, %v7898
      %7911 = vst.msk [vmem:[#allocation3 + $0x30] sm:$0xff] %vm6995, %v7900
      %vm7912 = vcmask 194688
      %7913 = vst.msk [vmem:[#allocation3 + $0x40] sm:$0x7f] %vm7912, %v7902
      %v7914 = vld [vmem:[%s5683] ss:$2 sm:$0xff]
      %v7915 = vld [vmem:[%s5685] ss:$2 sm:$0xff]
      %v7916 = vld [vmem:[%s5687] ss:$2 sm:$0xff]
      %v7917 = vld [vmem:[%s5689] ss:$2 sm:$0xff]
      %v7918 = vld [vmem:[%s5691] ss:$2 sm:$0x7f]
      %7924 = vrot.lane.b32.xlu0 %v7914, 24
      %v7925 = vpop.permute.xlu0 %7924
      %7926 = vrot.lane.b32.xlu0 %v7915, 24
      %v7927 = vpop.permute.xlu0 %7926
      %7928 = vrot.lane.b32.xlu0 %v7916, 24
      %v7929 = vpop.permute.xlu0 %7928
      %7930 = vrot.lane.b32.xlu0 %v7917, 24
      %v7931 = vpop.permute.xlu0 %7930
      %7932 = vrot.lane.b32.xlu0 %v7918, 24
      %v7933 = vpop.permute.xlu0 %7932
      %7939 = vst.msk [vmem:[#allocation3] sm:$0xff] %vm7087, %v7925
      %7940 = vst.msk [vmem:[#allocation3 + $0x10] sm:$0xff] %vm7087, %v7927
      %7941 = vst.msk [vmem:[#allocation3 + $0x20] sm:$0xff] %vm7087, %v7929
      %7942 = vst.msk [vmem:[#allocation3 + $0x30] sm:$0xff] %vm7087, %v7931
      %vm7943 = vcmask 260288
      %7944 = vst.msk [vmem:[#allocation3 + $0x40] sm:$0x7f] %vm7943, %v7933
      %v7945 = vld [vmem:[%s5879] ss:$2 sm:$0xff]
      %v7946 = vld [vmem:[%s5881] ss:$2 sm:$0xff]
      %v7947 = vld [vmem:[%s5883] ss:$2 sm:$0xff]
      %v7948 = vld [vmem:[%s5885] ss:$2 sm:$0xff]
      %v7949 = vld [vmem:[%s5887] ss:$2 sm:$0x7f]
      %7955 = vrot.lane.b32.xlu0 %v7945, 32
      %v7956 = vpop.permute.xlu0 %7955
      %7957 = vrot.lane.b32.xlu0 %v7946, 32
      %v7958 = vpop.permute.xlu0 %7957
      %7959 = vrot.lane.b32.xlu0 %v7947, 32
      %v7960 = vpop.permute.xlu0 %7959
      %7961 = vrot.lane.b32.xlu0 %v7948, 32
      %v7962 = vpop.permute.xlu0 %7961
      %7963 = vrot.lane.b32.xlu0 %v7949, 32
      %v7964 = vpop.permute.xlu0 %7963
      %7970 = vst.msk [vmem:[#allocation3] sm:$0xff] %vm7179, %v7956
      %7971 = vst.msk [vmem:[#allocation3 + $0x10] sm:$0xff] %vm7179, %v7958
      %7972 = vst.msk [vmem:[#allocation3 + $0x20] sm:$0xff] %vm7179, %v7960
      %7973 = vst.msk [vmem:[#allocation3 + $0x30] sm:$0xff] %vm7179, %v7962
      %vm7974 = vcmask 325888
      %7975 = vst.msk [vmem:[#allocation3 + $0x40] sm:$0x7f] %vm7974, %v7964
      %v7976 = vld [vmem:[%s5985] ss:$2 sm:$0xff]
      %v7977 = vld [vmem:[%s5987] ss:$2 sm:$0xff]
      %v7978 = vld [vmem:[%s5989] ss:$2 sm:$0xff]
      %v7979 = vld [vmem:[%s5991] ss:$2 sm:$0xff]
      %v7980 = vld [vmem:[%s5993] ss:$2 sm:$0x7f]
      %7986 = vrot.lane.b32.xlu0 %v7976, 40
      %v7987 = vpop.permute.xlu0 %7986
      %7988 = vrot.lane.b32.xlu0 %v7977, 40
      %v7989 = vpop.permute.xlu0 %7988
      %7990 = vrot.lane.b32.xlu0 %v7978, 40
      %v7991 = vpop.permute.xlu0 %7990
      %7992 = vrot.lane.b32.xlu0 %v7979, 40
      %v7993 = vpop.permute.xlu0 %7992
      %7994 = vrot.lane.b32.xlu0 %v7980, 40
      %v7995 = vpop.permute.xlu0 %7994
      %8001 = vst.msk [vmem:[#allocation3] sm:$0xff] %vm7271, %v7987
      %8002 = vst.msk [vmem:[#allocation3 + $0x10] sm:$0xff] %vm7271, %v7989
      %8003 = vst.msk [vmem:[#allocation3 + $0x20] sm:$0xff] %vm7271, %v7991
      %8004 = vst.msk [vmem:[#allocation3 + $0x30] sm:$0xff] %vm7271, %v7993
      %vm8005 = vcmask 391488
      %8006 = vst.msk [vmem:[#allocation3 + $0x40] sm:$0x7f] %vm8005, %v7995
      %v8007 = vld [vmem:[%s5987] ss:$2 sm:$0xff]
      %v8008 = vld [vmem:[%s5989] ss:$2 sm:$0xff]
      %v8009 = vld [vmem:[%s5991] ss:$2 sm:$0xff]
      %v8010 = vld [vmem:[%s5993] ss:$2 sm:$0xff]
      %v8011 = vld [vmem:[%s5995] ss:$2 sm:$0x7f]
      %8017 = vrot.lane.b32.xlu0 %v8007, 48
      %v8018 = vpop.permute.xlu0 %8017
      %8019 = vrot.lane.b32.xlu0 %v8008, 48
      %v8020 = vpop.permute.xlu0 %8019
      %8021 = vrot.lane.b32.xlu0 %v8009, 48
      %v8022 = vpop.permute.xlu0 %8021
      %8023 = vrot.lane.b32.xlu0 %v8010, 48
      %v8024 = vpop.permute.xlu0 %8023
      %8025 = vrot.lane.b32.xlu0 %v8011, 48
      %v8026 = vpop.permute.xlu0 %8025
      %8032 = vst.msk [vmem:[#allocation3] sm:$0xff] %vm7363, %v8018
      %8033 = vst.msk [vmem:[#allocation3 + $0x10] sm:$0xff] %vm7363, %v8020
      %8034 = vst.msk [vmem:[#allocation3 + $0x20] sm:$0xff] %vm7363, %v8022
      %8035 = vst.msk [vmem:[#allocation3 + $0x30] sm:$0xff] %vm7363, %v8024
      %vm8036 = vcmask 457088
      %8037 = vst.msk [vmem:[#allocation3 + $0x40] sm:$0x7f] %vm8036, %v8026
      %v8038 = vld [vmem:[%s6183] ss:$2 sm:$0xff]
      %v8039 = vld [vmem:[%s6185] ss:$2 sm:$0xff]
      %v8040 = vld [vmem:[%s6187] ss:$2 sm:$0xff]
      %v8041 = vld [vmem:[%s6189] ss:$2 sm:$0xff]
      %v8042 = vld [vmem:[%s6191] ss:$2 sm:$0x7f]
      %8048 = vrot.lane.b32.xlu0 %v8038, 56
      %v8049 = vpop.permute.xlu0 %8048
      %8050 = vrot.lane.b32.xlu0 %v8039, 56
      %v8051 = vpop.permute.xlu0 %8050
      %8052 = vrot.lane.b32.xlu0 %v8040, 56
      %v8053 = vpop.permute.xlu0 %8052
      %8054 = vrot.lane.b32.xlu0 %v8041, 56
      %v8055 = vpop.permute.xlu0 %8054
      %8056 = vrot.lane.b32.xlu0 %v8042, 56
      %v8057 = vpop.permute.xlu0 %8056
      %8063 = vst.msk [vmem:[#allocation3] sm:$0xff] %vm7455, %v8049
      %8064 = vst.msk [vmem:[#allocation3 + $0x10] sm:$0xff] %vm7455, %v8051
      %8065 = vst.msk [vmem:[#allocation3 + $0x20] sm:$0xff] %vm7455, %v8053
      %8066 = vst.msk [vmem:[#allocation3 + $0x30] sm:$0xff] %vm7455, %v8055
      %vm8067 = vcmask 522688
      %8068 = vst.msk [vmem:[#allocation3 + $0x40] sm:$0x7f] %vm8067, %v8057
      %v8069 = vld [vmem:[%s6289] ss:$2 sm:$0xff]
      %v8070 = vld [vmem:[%s6291] ss:$2 sm:$0xff]
      %v8071 = vld [vmem:[%s6293] ss:$2 sm:$0xff]
      %v8072 = vld [vmem:[%s6295] ss:$2 sm:$0xff]
      %v8073 = vld [vmem:[%s6297] ss:$2 sm:$0x7f]
      %8079 = vrot.lane.b32.xlu0 %v8069, 64
      %v8080 = vpop.permute.xlu0 %8079
      %8081 = vrot.lane.b32.xlu0 %v8070, 64
      %v8082 = vpop.permute.xlu0 %8081
      %8083 = vrot.lane.b32.xlu0 %v8071, 64
      %v8084 = vpop.permute.xlu0 %8083
      %8085 = vrot.lane.b32.xlu0 %v8072, 64
      %v8086 = vpop.permute.xlu0 %8085
      %8087 = vrot.lane.b32.xlu0 %v8073, 64
      %v8088 = vpop.permute.xlu0 %8087
      %8094 = vst.msk [vmem:[#allocation3] sm:$0xff] %vm7547, %v8080
      %8095 = vst.msk [vmem:[#allocation3 + $0x10] sm:$0xff] %vm7547, %v8082
      %8096 = vst.msk [vmem:[#allocation3 + $0x20] sm:$0xff] %vm7547, %v8084
      %8097 = vst.msk [vmem:[#allocation3 + $0x30] sm:$0xff] %vm7547, %v8086
      %vm8098 = vcmask 588288
      %8099 = vst.msk [vmem:[#allocation3 + $0x40] sm:$0x7f] %vm8098, %v8088
      %v8100 = vld [vmem:[#allocation3] sm:$0xff]
      %v8101 = vld [vmem:[#allocation3 + $0x10] sm:$0xff]
      %v8102 = vld [vmem:[#allocation3 + $0x20] sm:$0xff]
      %v8103 = vld [vmem:[#allocation3 + $0x30] sm:$0xff]
      %v8104 = vld [vmem:[#allocation3 + $0x40] sm:$0x7f]
      %v8105 = vld [vmem:[%s11] sm:$0xff]
      %v8106 = vld [vmem:[%s11 + $0x8] sm:$0xff]
      %v8107 = vld [vmem:[%s11 + $0x10] sm:$0xff]
      %v8108 = vld [vmem:[%s11 + $0x18] sm:$0xff]
      %v8109 = vld [vmem:[%s11 + $0x20] sm:$0xff]
      %v8110 = vld [vmem:[%s11 + $0x28] sm:$0xff]
      %v8111 = vld [vmem:[%s11 + $0x30] sm:$0xff]
      %v8112 = vld [vmem:[%s11 + $0x38] sm:$0xff]
      %v8113 = vld [vmem:[%s11 + $0x40] sm:$0xff]
      %v8114 = vld [vmem:[%s12] sm:$0x1]
      %v8116 = vlaneseq
      %v8117 = vshrl.u32 %v8116, 7
      %v8118 = vsub.s32 0, %v8117
      %v8119 = vrot.slane %v8114, %v8118
      %v8122 = vsel %vm7595, %v8100, 0
      %v8125 = vsel %vm7595, %v8101, 0
      %v8128 = vsel %vm7595, %v8102, 0
      %v8131 = vsel %vm7595, %v8103, 0
      %v8134 = vsel %vm7595, %v8104, 0
      %8136 = vmatprep.subr.mxu0 0.0
      %8137 = vmatpush1.msra.mxu0 %v8105
      %8138 = vmatprep.subr.mxu0 0.0
      %8139 = vmatpush1.msra.mxu0 %v8106
      %8140 = vmatprep.subr.mxu0 0.0
      %8141 = vmatpush1.msra.mxu0 %v8107
      %8142 = vmatprep.subr.mxu0 0.0
      %8143 = vmatpush1.msra.mxu0 %v8108
      %8144 = vmatprep.subr.mxu0 0.0
      %8145 = vmatpush1.msra.mxu0 %v8109
      %8146 = vmatprep.subr.mxu0 0.0
      %8147 = vmatpush1.msra.mxu0 %v8110
      %8148 = vmatprep.subr.mxu0 0.0
      %8149 = vmatpush1.msra.mxu0 %v8111
      %8150 = vmatprep.subr.mxu0 0.0
      %8151 = vmatpush1.msra.mxu0 %v8112
      %8152 = vmatprep.subr.mxu0 0.0
      %8153 = vmatpush1.msra.mxu0 %v8113
      %8154 = vmatprep.subr.mxu0 0.0
      %8155 = vmatpush1.msra.mxu0 0.0
      %8156 = vmatprep.subr.mxu0 0.0
      %8157 = vmatpush1.msra.mxu0 0.0
      %8158 = vmatprep.subr.mxu0 0.0
      %8159 = vmatpush1.msra.mxu0 0.0
      %8160 = vmatprep.subr.mxu0 0.0
      %8161 = vmatpush1.msra.mxu0 0.0
      %8162 = vmatprep.subr.mxu0 0.0
      %8163 = vmatpush1.msra.mxu0 0.0
      %8164 = vmatprep.subr.mxu0 0.0
      %8165 = vmatpush1.msra.mxu0 0.0
      %8166 = vmatprep.subr.mxu0 0.0
      %8167 = vmatpush1.msra.mxu0 0.0
      %8168 = vmatprep.subr.mxu0 0.0
      %8169 = vmatpush1.msra.mxu0 0.0
      %8170 = vmatprep.subr.mxu0 0.0
      %8171 = vmatpush1.msra.mxu0 0.0
      %8172 = vmatprep.subr.mxu0 0.0
      %8173 = vmatpush1.msra.mxu0 0.0
      %8174 = vmatprep.subr.mxu0 0.0
      %8175 = vmatpush1.msra.mxu0 0.0
      %8176 = vmatprep.subr.mxu0 0.0
      %8177 = vmatpush1.msra.mxu0 0.0
      %8178 = vmatprep.subr.mxu0 0.0
      %8179 = vmatpush1.msra.mxu0 0.0
      %8180 = vmatprep.subr.mxu0 0.0
      %8181 = vmatpush1.msra.mxu0 0.0
      %8182 = vmatprep.subr.mxu0 0.0
      %8183 = vmatpush1.msra.mxu0 0.0
      %8184 = vmatprep.subr.mxu0 0.0
      %8185 = vmatpush1.msra.mxu0 0.0
      %8186 = vmatprep.subr.mxu0 0.0
      %8187 = vmatpush1.msra.mxu0 0.0
      %8188 = vmatprep.subr.mxu0 0.0
      %8189 = vmatpush1.msra.mxu0 0.0
      %8190 = vmatprep.subr.mxu0 0.0
      %8191 = vmatpush1.msra.mxu0 0.0
      %8192 = vmatprep.subr.mxu0 0.0
      %8193 = vmatpush1.msra.mxu0 0.0
      %8194 = vmatprep.subr.mxu0 0.0
      %8195 = vmatpush1.msra.mxu0 0.0
      %8196 = vmatprep.subr.mxu0 0.0
      %8197 = vmatpush1.msra.mxu0 0.0
      %8198 = vmatprep.subr.mxu0 0.0
      %8199 = vmatpush1.msra.mxu0 0.0
      %8200 = vmatprep.mubr.f32.mxu0 0.0
      %8201 = vmatmul.mubr.f32.gmra.mrb[0].mxu0 %v8122
      %v8202 = vpop.f32.mrb[0].mxu0
      %v8203 = vadd.f32 %v8119, %v8202
      %v8204 = vpop.f32.mrb[0].mxu0
      %8205 = vmatprep.mubr.f32.mxu0 0.0
      %8206 = vmatmul.mubr.f32.gmra.mrb[0].mxu0 %v8125
      %v8207 = vpop.f32.mrb[0].mxu0
      %v8208 = vadd.f32 %v8119, %v8207
      %v8209 = vpop.f32.mrb[0].mxu0
      %8210 = vmatprep.mubr.f32.mxu0 0.0
      %8211 = vmatmul.mubr.f32.gmra.mrb[0].mxu0 %v8128
      %v8212 = vpop.f32.mrb[0].mxu0
      %v8213 = vadd.f32 %v8119, %v8212
      %v8214 = vpop.f32.mrb[0].mxu0
      %8215 = vmatprep.mubr.f32.mxu0 0.0
      %8216 = vmatmul.mubr.f32.gmra.mrb[0].mxu0 %v8131
      %v8217 = vpop.f32.mrb[0].mxu0
      %v8218 = vadd.f32 %v8119, %v8217
      %v8219 = vpop.f32.mrb[0].mxu0
      %8220 = vmatprep.mubr.f32.mxu0 0.0
      %8221 = vmatmul.mubr.f32.gmra.mrb[0].mxu0 %v8134
      %v8222 = vpop.f32.mrb[0].mxu0
      %v8223 = vadd.f32 %v8119, %v8222
      %v8224 = vpop.f32.mrb[0].mxu0
      %8225 = vdwg.mxu0
      %vm8226 = vcmp.ge.f32.partialorder %v8203, 0.0
      %vm8227 = vcmp.ge.f32.partialorder %v8208, 0.0
      %vm8228 = vcmp.ge.f32.partialorder %v8213, 0.0
      %vm8229 = vcmp.ge.f32.partialorder %v8218, 0.0
      %vm8230 = vcmp.ge.f32.partialorder %v8223, 0.0
      %v8231 = vmul.f32 %v8203, 0.01
      %v8232 = vmul.f32 %v8208, 0.01
      %v8233 = vmul.f32 %v8213, 0.01
      %v8234 = vmul.f32 %v8218, 0.01
      %v8235 = vmul.f32 %v8223, 0.01
      %v8236 = vsel %vm8226, %v8203, %v8231
      %v8237 = vsel %vm8227, %v8208, %v8232
      %v8238 = vsel %vm8228, %v8213, %v8233
      %v8239 = vsel %vm8229, %v8218, %v8234
      %v8240 = vsel %vm8230, %v8223, %v8235
      %vm8241 = vcmask 130048
      %8242 = vst.msk [vmem:[%s509] sm:$0xff] %vm8241, %v8236
      %8243 = vst.msk [vmem:[%s509 + $0x8] sm:$0xff] %vm8241, %v8237
      %8244 = vst.msk [vmem:[%s509 + $0x10] sm:$0xff] %vm8241, %v8238
      %8245 = vst.msk [vmem:[%s509 + $0x18] sm:$0xff] %vm8241, %v8239
      %vm8246 = vcmask 129024
      %8247 = vst.msk [vmem:[%s509 + $0x20] sm:$0x7f] %vm8246, %v8240
      %p8248 = scmp.lt.s32.totalorder %s27, 1
      %s8249 = scalar_select %p8248, %s27, 1
      %s8250 = smul.addr %s8249, 5
      %s8251 = smul.addr %s8250, 8
      %s8252 = scalar_lea.vmem %s13, %s8251
      %p8253 = scmp.lt.s32.totalorder %s27, 1
      %s8254 = scalar_select %p8253, %s27, 1
      %s8255 = smul.addr %s8254, 36
      %s8256 = smul.addr %s8255, 8
      %s8257 = scalar_lea.vmem %s14, %s8256
      %p8258 = scmp.lt.s32.totalorder %s27, 1
      %s8259 = scalar_select %p8258, %s27, 1
      %s8260 = smul.addr %s8259, 15
      %s8261 = smul.addr %s8260, 8
      %s8262 = scalar_lea.vmem %s15, %s8261
      // Predicated region
      $region73: #{encoder_forward.1} parent=71 // pred_check
        %p8263 = pneg %p323
      $region74: #{encoder_forward.1} parent=71 // pred_check_branch
        %8265 = sbr.rel (%p8263) target = $region76
      $region75: #{encoder_forward.1} parent=71 // pred_region
        _
      $region76: #{encoder_forward.1} parent=71 // pred_fallthru
        _
      // Predicated region
      $region77: #{encoder_forward.1} parent=71 // pred_check
        %p8266 = pneg %p349
      $region78: #{encoder_forward.1} parent=71 // pred_check_branch
        %8268 = sbr.rel (%p8266) target = $region80
      $region79: #{encoder_forward.1} parent=71 // pred_region
        _
      $region80: #{encoder_forward.1} parent=71 // pred_fallthru
        _
      // Predicated region
      $region81: #{encoder_forward.1} parent=71 // pred_check
        %p8269 = pneg %p375
      $region82: #{encoder_forward.1} parent=71 // pred_check_branch
        %8271 = sbr.rel (%p8269) target = $region84
      $region83: #{encoder_forward.1} parent=71 // pred_region
        _
      $region84: #{encoder_forward.1} parent=71 // pred_fallthru
        _
    $region72: #{encoder_forward.1} parent=5 // pred_fallthru
      _
    %p8272 = scmp.le.s32.totalorder 2, %s22
    // Predicated region
    $region85: #{encoder_forward.1} parent=5 // pred_check
      %p8273 = pneg %p8272
    $region86: #{encoder_forward.1} parent=5 // pred_check_branch
      %8275 = sbr.rel (%p8273) target = $region88
    $region87: #{encoder_forward.1} parent=5 // pred_region
      %s8276 = ssub.s32 %s22, 2
      // Predicated region
      $region89: #{encoder_forward.1} parent=87 // pred_check
        %p8277 = pneg %p329
      $region90: #{encoder_forward.1} parent=87 // pred_check_branch
        %8279 = sbr.rel (%p8277) target = $region92
      $region91: #{encoder_forward.1} parent=87 // pred_region
        %p8280 = scmp.lt.s32.totalorder %s28, 1
        %s8281 = scalar_select %p8280, %s28, 1
        %s8282 = smul.addr %s8281, 5
        %s8283 = smul.addr %s8282, 8
        %s8284 = scalar_lea.vmem %s13, %s8283
      $region92: #{encoder_forward.1} parent=87 // pred_fallthru
        _
      // Predicated region
      $region93: #{encoder_forward.1} parent=87 // pred_check
        %p8285 = pneg %p355
      $region94: #{encoder_forward.1} parent=87 // pred_check_branch
        %8287 = sbr.rel (%p8285) target = $region96
      $region95: #{encoder_forward.1} parent=87 // pred_region
        %p8288 = scmp.lt.s32.totalorder %s28, 1
        %s8289 = scalar_select %p8288, %s28, 1
        %s8290 = smul.addr %s8289, 36
        %s8291 = smul.addr %s8290, 8
        %s8292 = scalar_lea.vmem %s14, %s8291
      $region96: #{encoder_forward.1} parent=87 // pred_fallthru
        _
      // Predicated region
      $region97: #{encoder_forward.1} parent=87 // pred_check
        %p8293 = pneg %p381
      $region98: #{encoder_forward.1} parent=87 // pred_check_branch
        %8295 = sbr.rel (%p8293) target = $region100
      $region99: #{encoder_forward.1} parent=87 // pred_region
        %p8296 = scmp.lt.s32.totalorder %s28, 1
        %s8297 = scalar_select %p8296, %s28, 1
        %s8298 = smul.addr %s8297, 15
        %s8299 = smul.addr %s8298, 8
        %s8300 = scalar_lea.vmem %s15, %s8299
      $region100: #{encoder_forward.1} parent=87 // pred_fallthru
        _
    $region88: #{encoder_forward.1} parent=5 // pred_fallthru
      _
  $region6: #{encoder_forward.1} parent=0 // loop_footer
    %s26 = sadd.s32 1, %s22
  $region7: #{encoder_forward.1} parent=0 // loop_footer_branch
    %21 = sbr.rel target = $region3
  $region8: #{encoder_forward.1} parent=0 // loop_exit
    _

</llo_original>
